<compile_context>
chip_gen: v6e
topology: v6e:2x2x1
jax: 0.10.0
libtpu: 0.0.40
codegen_flags: <defaults>
</compile_context>

<pallas_src>
import functools
import math

import numpy as np
import jax
import jax.numpy as jnp
from jax.experimental import pallas as pl
from jax.experimental.pallas import tpu as pltpu

NEG_SLOPE = 0.01   # nn.LeakyReLU default negative_slope
BN_EPS = 1e-5      # nn.BatchNorm2d default eps
KSIZE = 5          # conv kernel size
CPAD = 2           # conv padding


def _round_up(x, m):
    return ((x + m - 1) // m) * m


# ---------------------------------------------------------------------------
# Fused DoubleConv kernel (single VMEM-resident block)
#   xin_ref    : (CP, MP_EXT) f32   zero-padded, channels-first, flattened input
#   w*_ref     : (25, CP, CP) bf16  packed conv weights, tap t = ky*5 + kx
#   g*/b*_ref  : (CP, 1) f32        BN affine params (padded ch: gamma=1, beta=0)
#   mask_ref   : (1, MV) f32        1.0 at valid output positions, 0.0 elsewhere
#   o_ref      : (CP, MV) f32       lane-dense output (MV multiple of 128)
#   xpad2_ref  : (CP, MP_EXT) f32   VMEM scratch: re-padded input of conv2
# ---------------------------------------------------------------------------
def _up_doubleconv_kernel(xin_ref, w1_ref, g1_ref, b1_ref,
                          w2_ref, g2_ref, b2_ref, mask_ref,
                          o_ref, xpad2_ref,
                          *, shifts, mv, padoff, mp_ext,
                          inv_count, neg_slope, eps):
    mask = mask_ref[...]                                         # (1, MV)

    def conv_lrelu_bn(src_ref, w_ref, g_ref, b_ref):
        # Per-tap matmul accumulation (review item 1): no (25*CP, MV) patch
        # scratch, no 25-row store stream. Each tap is a small bf16 MXU
        # matmul accumulated in f32; the MXU has huge slack at CP=8 so the
        # extra matmuls are effectively free while the vst traffic vanishes.
        acc = None
        for t, s in enumerate(shifts):                           # 25 static taps
            lhs = w_ref[t]                                       # (CP, CP) bf16
            rhs = src_ref[:, s:s + mv].astype(jnp.bfloat16)      # (CP, MV) bf16
            part = jnp.dot(lhs, rhs, preferred_element_type=jnp.float32)
            acc = part if acc is None else acc + part            # (CP, MV) f32
        # LeakyReLU (f32)
        y = jnp.where(acc > 0, acc, neg_slope * acc)
        # Training-mode BatchNorm2d batch stats (biased variance) over valid
        # positions only, fused into a single traversal of y:
        #   var = E[y^2] - mean^2   (all accumulation in f32).
        ym = y * mask
        s1 = jnp.sum(ym, axis=1, keepdims=True)                  # (CP, 1)
        s2 = jnp.sum(ym * y, axis=1, keepdims=True)              # (CP, 1)
        mean = s1 * inv_count
        var = jnp.maximum(s2 * inv_count - mean * mean, 0.0)
        return (y - mean) * jax.lax.rsqrt(var + eps) * g_ref[...] + b_ref[...]

    # conv1 -> LeakyReLU -> BN1
    y1 = conv_lrelu_bn(xin_ref, w1_ref, g1_ref, b1_ref)          # (CP, MV)

    # Re-apply the conv zero padding for conv2. Zero ONLY the padding regions
    # [0, padoff) and [padoff+mv, mp_ext); the masked interior write provides
    # zeros at every other padding-ring position (review item 7).
    cp = xpad2_ref.shape[0]
    xpad2_ref[:, 0:padoff] = jnp.zeros((cp, padoff), jnp.float32)
    if mp_ext > padoff + mv:
        xpad2_ref[:, padoff + mv:mp_ext] = jnp.zeros(
            (cp, mp_ext - padoff - mv), jnp.float32)
    xpad2_ref[:, padoff:padoff + mv] = y1 * mask

    # conv2 -> LeakyReLU -> BN2
    o_ref[...] = conv_lrelu_bn(xpad2_ref, w2_ref, g2_ref, b2_ref)


# ---------------------------------------------------------------------------
# Wrapper glue (upsample matrices, packing, mask) — tiny, trace-time / XLA
# ---------------------------------------------------------------------------
def _upsample_matrix(n_in, n_out):
    """Linear-interp matrix for bilinear upsampling with align_corners=True."""
    m = np.zeros((n_out, n_in), dtype=np.float32)
    if n_in == 1 or n_out == 1:
        m[:, 0] = 1.0
        return m
    for i in range(n_out):
        src = (i * (n_in - 1)) / (n_out - 1)
        i0 = min(int(np.floor(src)), n_in - 1)
        i1 = min(i0 + 1, n_in - 1)
        frac = src - i0
        m[i, i0] += 1.0 - frac
        m[i, i1] += frac
    return m


def _pack_conv_weight(w, cp):
    """torch (Cout, Cin, 5, 5) -> (25, CP, CP) bf16, tap index t = ky*5 + kx."""
    cout, cin = w.shape[0], w.shape[1]
    w = jnp.pad(w, ((0, cp - cout), (0, cp - cin), (0, 0), (0, 0)))
    w = jnp.transpose(w, (2, 3, 0, 1)).reshape(KSIZE * KSIZE, cp, cp)
    return w.astype(jnp.bfloat16)


def _pack_bn(gamma, beta, cp):
    g = jnp.pad(gamma, (0, cp - gamma.shape[0]), constant_values=1.0).reshape(cp, 1)
    b = jnp.pad(beta, (0, cp - beta.shape[0])).reshape(cp, 1)
    return g, b


def up_forward(params, x1, x2):
    """Forward pass of `Up(in_channels, out_channels, bilinear=True)`.

    x1: (N, C1, H1, W1) low-res feature, x2: (N, C2, H, W) skip connection,
    with C1 + C2 == in_channels. Returns (N, out_channels, H, W).
    """
    x1 = x1.astype(jnp.float32)
    x2 = x2.astype(jnp.float32)
    n, c1, h1, w1 = x1.shape
    n2, c2, h, w = x2.shape
    assert n == n2

    # Upsample (bilinear x2, align_corners=True) as two small interpolation
    # matmuls, then F.pad to x2's spatial size, then torch.cat([x2, x1], dim=1).
    mh = jnp.asarray(_upsample_matrix(h1, 2 * h1))
    mw = jnp.asarray(_upsample_matrix(w1, 2 * w1))
    x1u = jnp.einsum('Hh,nchw,Ww->ncHW', mh, x1, mw)
    dy, dx = h - 2 * h1, w - 2 * w1
    x1u = jnp.pad(x1u, ((0, 0), (0, 0),
                        (dy // 2, dy - dy // 2), (dx // 2, dx - dx // 2)))
    xcat = jnp.concatenate([x2, x1u], axis=1)                   # (N, Cin, H, W)

    # Static geometry for the channels-first flattened-padded layout.
    cin = c1 + c2
    cmid = params['w1'].shape[0]
    cout = params['w2'].shape[0]
    assert params['w1'].shape[1] == cin
    cp = max(_round_up(cin, 8), _round_up(cmid, 8), _round_up(cout, 8))
    hp, wp = h + 2 * CPAD, w + 2 * CPAD                         # padded spatial
    mp = n * hp * wp                                            # real flat length
    q_max = (n - 1) * hp * wp + (h - 1) * wp + (w - 1)          # last valid pos
    mv = _round_up(q_max + 1, 128)                              # lane-dense width
    smax = (KSIZE - 1) * wp + (KSIZE - 1)                       # largest tap shift
    mp_ext = _round_up(mv + smax, 128)                          # padded src width
    padoff = CPAD * wp + CPAD                                   # interior offset
    shifts = [ky * wp + kx for ky in range(KSIZE) for kx in range(KSIZE)]

    # Layout invariants (review correctness concern: make them explicit).
    assert mv % 128 == 0 and mp_ext % 128 == 0
    assert mp_ext >= mv + smax      # every tap slice read stays in bounds
    assert mp_ext >= mp             # real flattened data fits the extended buf
    assert smax >= padoff           # interior offset lies within the halo span

    # Kernel input: conv-padded, channels-first, flattened, zero-extended.
    xpad = jnp.pad(xcat, ((0, 0), (0, 0), (CPAD, CPAD), (CPAD, CPAD)))
    xflat = jnp.transpose(xpad, (1, 0, 2, 3)).reshape(cin, mp)
    xin = jnp.pad(xflat, ((0, cp - cin), (0, mp_ext - mp)))

    # Packed weights (bf16) / BN params (f32, channel-padded).
    w1m = _pack_conv_weight(params['w1'], cp)
    w2m = _pack_conv_weight(params['w2'], cp)
    g1, b1 = _pack_bn(params['g1'], params['b1'], cp)
    g2, b2 = _pack_bn(params['g2'], params['b2'], cp)

    # Valid-position mask for the BN batch statistics (built at trace time).
    q = np.arange(mv)
    hq = (q % (hp * wp)) // wp
    wq = q % wp
    nq = q // (hp * wp)
    mask = jnp.asarray(((nq < n) & (hq < h) & (wq < w)).astype(np.float32)[None, :])
    inv_count = 1.0 / float(n * h * w)

    # Explicit VMEM budget, sized for v7x (64 MiB physical) rather than the
    # 128 MiB of v5e/v6e. Everything below is resident simultaneously.
    resident = (cp * mp_ext * 4            # xin (f32)
                + cp * mp_ext * 4          # xpad2 scratch (f32)
                + cp * mv * 4              # output (f32)
                + mv * 4                   # mask
                + 2 * KSIZE * KSIZE * cp * cp * 2   # bf16 weights
                + 4 * cp * 4)              # BN params
    vmem_budget = 48 * 1024 * 1024
    assert 2 * resident <= vmem_budget, (
        "activation too large for the fused single-block kernel; "
        "restructure with an M-axis grid + streaming BN stats (see TODO)")

    kernel = functools.partial(
        _up_doubleconv_kernel,
        shifts=shifts, mv=mv, padoff=padoff, mp_ext=mp_ext,
        inv_count=inv_count, neg_slope=NEG_SLOPE, eps=BN_EPS)

    vmem = pl.BlockSpec(memory_space=pltpu.MemorySpace.VMEM)
    y = pl.pallas_call(
        kernel,
        out_shape=jax.ShapeDtypeStruct((cp, mv), jnp.float32),
        in_specs=[vmem] * 8,
        out_specs=vmem,
        scratch_shapes=[
            pltpu.VMEM((cp, mp_ext), jnp.float32),   # conv2 padded input
        ],
        compiler_params=pltpu.CompilerParams(vmem_limit_bytes=vmem_budget),
    )(xin, w1m, g1, b1, w2m, g2, b2, mask)

    # Unflatten the lane-dense (Cout, M) output back to NCHW.
    y = y[:cout, :]
    if mv >= mp:
        y = y[:, :mp]
    else:
        y = jnp.pad(y, ((0, 0), (0, mp - mv)))
    y = y.reshape(cout, n, hp, wp)[:, :, :h, :w]
    return jnp.transpose(y, (1, 0, 2, 3))


# ---------------------------------------------------------------------------
# Parameters (deterministic, torch-default scales; torch weight layout)
# ---------------------------------------------------------------------------
def init_params(key, in_channels, out_channels):
    mid = in_channels // 2                 # DoubleConv(in, out, in // 2)
    k1, k2 = jax.random.split(key)

    def conv_w(k, cout, cin):
        bound = 1.0 / math.sqrt(cin * KSIZE * KSIZE)
        return jax.random.uniform(k, (cout, cin, KSIZE, KSIZE),
                                  jnp.float32, -bound, bound)

    return {
        'w1': conv_w(k1, mid, in_channels),
        'g1': jnp.ones((mid,), jnp.float32),
        'b1': jnp.zeros((mid,), jnp.float32),
        'w2': conv_w(k2, out_channels, mid),
        'g2': jnp.ones((out_channels,), jnp.float32),
        'b2': jnp.zeros((out_channels,), jnp.float32),
    }


if __name__ == "__main__":
    key = jax.random.PRNGKey(0)
    pkey, k1, k2 = jax.random.split(key, 3)
    in_channels, out_channels = 8, 4
    params = init_params(pkey, in_channels, out_channels)
    # x1: low-res decoder feature (N, in//2, 8, 8); x2: skip feature (N, in//2, 16, 16)
    # -> cat gives in_channels = 8 channels at 16x16, matching Up(8, 4).
    x1 = jax.random.normal(k1, (2, in_channels // 2, 8, 8), jnp.float32)
    x2 = jax.random.normal(k2, (2, in_channels // 2, 16, 16), jnp.float32)
    out = jax.jit(up_forward)(params, x1, x2)
    jax.block_until_ready(out)
    assert out.shape == (2, out_channels, 16, 16) and out.dtype == jnp.float32
    print("KERNEL_OK")
</pallas_src>

<mosaic_0001>
module attributes {stable_mosaic.version = 11 : i64} {
  func.func @_up_doubleconv_kernel(%arg0: memref<8x896xf32, #tpu.memory_space<vmem>>, %arg1: memref<25x8x8xbf16, #tpu.memory_space<vmem>>, %arg2: memref<8x1xf32, #tpu.memory_space<vmem>>, %arg3: memref<8x1xf32, #tpu.memory_space<vmem>>, %arg4: memref<25x8x8xbf16, #tpu.memory_space<vmem>>, %arg5: memref<8x1xf32, #tpu.memory_space<vmem>>, %arg6: memref<8x1xf32, #tpu.memory_space<vmem>>, %arg7: memref<1x768xf32, #tpu.memory_space<vmem>>, %arg8: memref<8x768xf32, #tpu.memory_space<vmem>>, %arg9: memref<8x896xf32, #tpu.memory_space<vmem>>) attributes {dimension_semantics = [], scalar_prefetch = 0 : i64, scratch_operands = 1 : i64, tpu.core_type = #tpu.core_type<tc>} {
    %c0 = arith.constant 0 : index
    %c0_0 = arith.constant 0 : index
    %0 = vector.load %arg7[%c0, %c0_0] : memref<1x768xf32, #tpu.memory_space<vmem>>, vector<1x768xf32>
    %c0_1 = arith.constant 0 : index
    %c0_2 = arith.constant 0 : index
    %c0_3 = arith.constant 0 : index
    %1 = vector.load %arg1[%c0_1, %c0_2, %c0_3] : memref<25x8x8xbf16, #tpu.memory_space<vmem>>, vector<1x8x8xbf16>
    %2 = vector.shape_cast %1 : vector<1x8x8xbf16> to vector<8x8xbf16>
    %c0_4 = arith.constant 0 : index
    %c0_5 = arith.constant 0 : index
    %3 = vector.load %arg0[%c0_4, %c0_5] : memref<8x896xf32, #tpu.memory_space<vmem>>, vector<8x768xf32>
    %4 = arith.truncf %3 : vector<8x768xf32> to vector<8x768xbf16>
    %cst = arith.constant dense<0.000000e+00> : vector<8x768xf32>
    %5 = tpu.matmul %2, %4, %cst {dimension_numbers = #tpu.dot_dimension_numbers<[1], [0], [0], [1], [0, 0, 1, 1], [], []>} : vector<8x8xbf16>, vector<8x768xbf16>, vector<8x768xf32> -> vector<8x768xf32>
    %c1 = arith.constant 1 : index
    %c0_6 = arith.constant 0 : index
    %c0_7 = arith.constant 0 : index
    %6 = vector.load %arg1[%c1, %c0_6, %c0_7] : memref<25x8x8xbf16, #tpu.memory_space<vmem>>, vector<1x8x8xbf16>
    %7 = vector.shape_cast %6 : vector<1x8x8xbf16> to vector<8x8xbf16>
    %c0_8 = arith.constant 0 : index
    %c1_9 = arith.constant 1 : index
    %8 = vector.load %arg0[%c0_8, %c1_9] : memref<8x896xf32, #tpu.memory_space<vmem>>, vector<8x768xf32>
    %9 = arith.truncf %8 : vector<8x768xf32> to vector<8x768xbf16>
    %cst_10 = arith.constant dense<0.000000e+00> : vector<8x768xf32>
    %10 = tpu.matmul %7, %9, %cst_10 {dimension_numbers = #tpu.dot_dimension_numbers<[1], [0], [0], [1], [0, 0, 1, 1], [], []>} : vector<8x8xbf16>, vector<8x768xbf16>, vector<8x768xf32> -> vector<8x768xf32>
    %11 = arith.addf %5, %10 : vector<8x768xf32>
    %c2 = arith.constant 2 : index
    %c0_11 = arith.constant 0 : index
    %c0_12 = arith.constant 0 : index
    %12 = vector.load %arg1[%c2, %c0_11, %c0_12] : memref<25x8x8xbf16, #tpu.memory_space<vmem>>, vector<1x8x8xbf16>
    %13 = vector.shape_cast %12 : vector<1x8x8xbf16> to vector<8x8xbf16>
    %c0_13 = arith.constant 0 : index
    %c2_14 = arith.constant 2 : index
    %14 = vector.load %arg0[%c0_13, %c2_14] : memref<8x896xf32, #tpu.memory_space<vmem>>, vector<8x768xf32>
    %15 = arith.truncf %14 : vector<8x768xf32> to vector<8x768xbf16>
    %cst_15 = arith.constant dense<0.000000e+00> : vector<8x768xf32>
    %16 = tpu.matmul %13, %15, %cst_15 {dimension_numbers = #tpu.dot_dimension_numbers<[1], [0], [0], [1], [0, 0, 1, 1], [], []>} : vector<8x8xbf16>, vector<8x768xbf16>, vector<8x768xf32> -> vector<8x768xf32>
    %17 = arith.addf %11, %16 : vector<8x768xf32>
    %c3 = arith.constant 3 : index
    %c0_16 = arith.constant 0 : index
    %c0_17 = arith.constant 0 : index
    %18 = vector.load %arg1[%c3, %c0_16, %c0_17] : memref<25x8x8xbf16, #tpu.memory_space<vmem>>, vector<1x8x8xbf16>
    %19 = vector.shape_cast %18 : vector<1x8x8xbf16> to vector<8x8xbf16>
    %c0_18 = arith.constant 0 : index
    %c3_19 = arith.constant 3 : index
    %20 = vector.load %arg0[%c0_18, %c3_19] : memref<8x896xf32, #tpu.memory_space<vmem>>, vector<8x768xf32>
    %21 = arith.truncf %20 : vector<8x768xf32> to vector<8x768xbf16>
    %cst_20 = arith.constant dense<0.000000e+00> : vector<8x768xf32>
    %22 = tpu.matmul %19, %21, %cst_20 {dimension_numbers = #tpu.dot_dimension_numbers<[1], [0], [0], [1], [0, 0, 1, 1], [], []>} : vector<8x8xbf16>, vector<8x768xbf16>, vector<8x768xf32> -> vector<8x768xf32>
    %23 = arith.addf %17, %22 : vector<8x768xf32>
    %c4 = arith.constant 4 : index
    %c0_21 = arith.constant 0 : index
    %c0_22 = arith.constant 0 : index
    %24 = vector.load %arg1[%c4, %c0_21, %c0_22] : memref<25x8x8xbf16, #tpu.memory_space<vmem>>, vector<1x8x8xbf16>
    %25 = vector.shape_cast %24 : vector<1x8x8xbf16> to vector<8x8xbf16>
    %c0_23 = arith.constant 0 : index
    %c4_24 = arith.constant 4 : index
    %26 = vector.load %arg0[%c0_23, %c4_24] : memref<8x896xf32, #tpu.memory_space<vmem>>, vector<8x768xf32>
    %27 = arith.truncf %26 : vector<8x768xf32> to vector<8x768xbf16>
    %cst_25 = arith.constant dense<0.000000e+00> : vector<8x768xf32>
    %28 = tpu.matmul %25, %27, %cst_25 {dimension_numbers = #tpu.dot_dimension_numbers<[1], [0], [0], [1], [0, 0, 1, 1], [], []>} : vector<8x8xbf16>, vector<8x768xbf16>, vector<8x768xf32> -> vector<8x768xf32>
    %29 = arith.addf %23, %28 : vector<8x768xf32>
    %c5 = arith.constant 5 : index
    %c0_26 = arith.constant 0 : index
    %c0_27 = arith.constant 0 : index
    %30 = vector.load %arg1[%c5, %c0_26, %c0_27] : memref<25x8x8xbf16, #tpu.memory_space<vmem>>, vector<1x8x8xbf16>
    %31 = vector.shape_cast %30 : vector<1x8x8xbf16> to vector<8x8xbf16>
    %c0_28 = arith.constant 0 : index
    %c20 = arith.constant 20 : index
    %32 = vector.load %arg0[%c0_28, %c20] : memref<8x896xf32, #tpu.memory_space<vmem>>, vector<8x768xf32>
    %33 = arith.truncf %32 : vector<8x768xf32> to vector<8x768xbf16>
    %cst_29 = arith.constant dense<0.000000e+00> : vector<8x768xf32>
    %34 = tpu.matmul %31, %33, %cst_29 {dimension_numbers = #tpu.dot_dimension_numbers<[1], [0], [0], [1], [0, 0, 1, 1], [], []>} : vector<8x8xbf16>, vector<8x768xbf16>, vector<8x768xf32> -> vector<8x768xf32>
    %35 = arith.addf %29, %34 : vector<8x768xf32>
    %c6 = arith.constant 6 : index
    %c0_30 = arith.constant 0 : index
    %c0_31 = arith.constant 0 : index
    %36 = vector.load %arg1[%c6, %c0_30, %c0_31] : memref<25x8x8xbf16, #tpu.memory_space<vmem>>, vector<1x8x8xbf16>
    %37 = vector.shape_cast %36 : vector<1x8x8xbf16> to vector<8x8xbf16>
    %c0_32 = arith.constant 0 : index
    %c21 = arith.constant 21 : index
    %38 = vector.load %arg0[%c0_32, %c21] : memref<8x896xf32, #tpu.memory_space<vmem>>, vector<8x768xf32>
    %39 = arith.truncf %38 : vector<8x768xf32> to vector<8x768xbf16>
    %cst_33 = arith.constant dense<0.000000e+00> : vector<8x768xf32>
    %40 = tpu.matmul %37, %39, %cst_33 {dimension_numbers = #tpu.dot_dimension_numbers<[1], [0], [0], [1], [0, 0, 1, 1], [], []>} : vector<8x8xbf16>, vector<8x768xbf16>, vector<8x768xf32> -> vector<8x768xf32>
    %41 = arith.addf %35, %40 : vector<8x768xf32>
    %c7 = arith.constant 7 : index
    %c0_34 = arith.constant 0 : index
    %c0_35 = arith.constant 0 : index
    %42 = vector.load %arg1[%c7, %c0_34, %c0_35] : memref<25x8x8xbf16, #tpu.memory_space<vmem>>, vector<1x8x8xbf16>
    %43 = vector.shape_cast %42 : vector<1x8x8xbf16> to vector<8x8xbf16>
    %c0_36 = arith.constant 0 : index
    %c22 = arith.constant 22 : index
    %44 = vector.load %arg0[%c0_36, %c22] : memref<8x896xf32, #tpu.memory_space<vmem>>, vector<8x768xf32>
    %45 = arith.truncf %44 : vector<8x768xf32> to vector<8x768xbf16>
    %cst_37 = arith.constant dense<0.000000e+00> : vector<8x768xf32>
    %46 = tpu.matmul %43, %45, %cst_37 {dimension_numbers = #tpu.dot_dimension_numbers<[1], [0], [0], [1], [0, 0, 1, 1], [], []>} : vector<8x8xbf16>, vector<8x768xbf16>, vector<8x768xf32> -> vector<8x768xf32>
    %47 = arith.addf %41, %46 : vector<8x768xf32>
    %c8 = arith.constant 8 : index
    %c0_38 = arith.constant 0 : index
    %c0_39 = arith.constant 0 : index
    %48 = vector.load %arg1[%c8, %c0_38, %c0_39] : memref<25x8x8xbf16, #tpu.memory_space<vmem>>, vector<1x8x8xbf16>
    %49 = vector.shape_cast %48 : vector<1x8x8xbf16> to vector<8x8xbf16>
    %c0_40 = arith.constant 0 : index
    %c23 = arith.constant 23 : index
    %50 = vector.load %arg0[%c0_40, %c23] : memref<8x896xf32, #tpu.memory_space<vmem>>, vector<8x768xf32>
    %51 = arith.truncf %50 : vector<8x768xf32> to vector<8x768xbf16>
    %cst_41 = arith.constant dense<0.000000e+00> : vector<8x768xf32>
    %52 = tpu.matmul %49, %51, %cst_41 {dimension_numbers = #tpu.dot_dimension_numbers<[1], [0], [0], [1], [0, 0, 1, 1], [], []>} : vector<8x8xbf16>, vector<8x768xbf16>, vector<8x768xf32> -> vector<8x768xf32>
    %53 = arith.addf %47, %52 : vector<8x768xf32>
    %c9 = arith.constant 9 : index
    %c0_42 = arith.constant 0 : index
    %c0_43 = arith.constant 0 : index
    %54 = vector.load %arg1[%c9, %c0_42, %c0_43] : memref<25x8x8xbf16, #tpu.memory_space<vmem>>, vector<1x8x8xbf16>
    %55 = vector.shape_cast %54 : vector<1x8x8xbf16> to vector<8x8xbf16>
    %c0_44 = arith.constant 0 : index
    %c24 = arith.constant 24 : index
    %56 = vector.load %arg0[%c0_44, %c24] : memref<8x896xf32, #tpu.memory_space<vmem>>, vector<8x768xf32>
    %57 = arith.truncf %56 : vector<8x768xf32> to vector<8x768xbf16>
    %cst_45 = arith.constant dense<0.000000e+00> : vector<8x768xf32>
    %58 = tpu.matmul %55, %57, %cst_45 {dimension_numbers = #tpu.dot_dimension_numbers<[1], [0], [0], [1], [0, 0, 1, 1], [], []>} : vector<8x8xbf16>, vector<8x768xbf16>, vector<8x768xf32> -> vector<8x768xf32>
    %59 = arith.addf %53, %58 : vector<8x768xf32>
    %c10 = arith.constant 10 : index
    %c0_46 = arith.constant 0 : index
    %c0_47 = arith.constant 0 : index
    %60 = vector.load %arg1[%c10, %c0_46, %c0_47] : memref<25x8x8xbf16, #tpu.memory_space<vmem>>, vector<1x8x8xbf16>
    %61 = vector.shape_cast %60 : vector<1x8x8xbf16> to vector<8x8xbf16>
    %c0_48 = arith.constant 0 : index
    %c40 = arith.constant 40 : index
    %62 = vector.load %arg0[%c0_48, %c40] : memref<8x896xf32, #tpu.memory_space<vmem>>, vector<8x768xf32>
    %63 = arith.truncf %62 : vector<8x768xf32> to vector<8x768xbf16>
    %cst_49 = arith.constant dense<0.000000e+00> : vector<8x768xf32>
    %64 = tpu.matmul %61, %63, %cst_49 {dimension_numbers = #tpu.dot_dimension_numbers<[1], [0], [0], [1], [0, 0, 1, 1], [], []>} : vector<8x8xbf16>, vector<8x768xbf16>, vector<8x768xf32> -> vector<8x768xf32>
    %65 = arith.addf %59, %64 : vector<8x768xf32>
    %c11 = arith.constant 11 : index
    %c0_50 = arith.constant 0 : index
    %c0_51 = arith.constant 0 : index
    %66 = vector.load %arg1[%c11, %c0_50, %c0_51] : memref<25x8x8xbf16, #tpu.memory_space<vmem>>, vector<1x8x8xbf16>
    %67 = vector.shape_cast %66 : vector<1x8x8xbf16> to vector<8x8xbf16>
    %c0_52 = arith.constant 0 : index
    %c41 = arith.constant 41 : index
    %68 = vector.load %arg0[%c0_52, %c41] : memref<8x896xf32, #tpu.memory_space<vmem>>, vector<8x768xf32>
    %69 = arith.truncf %68 : vector<8x768xf32> to vector<8x768xbf16>
    %cst_53 = arith.constant dense<0.000000e+00> : vector<8x768xf32>
    %70 = tpu.matmul %67, %69, %cst_53 {dimension_numbers = #tpu.dot_dimension_numbers<[1], [0], [0], [1], [0, 0, 1, 1], [], []>} : vector<8x8xbf16>, vector<8x768xbf16>, vector<8x768xf32> -> vector<8x768xf32>
    %71 = arith.addf %65, %70 : vector<8x768xf32>
    %c12 = arith.constant 12 : index
    %c0_54 = arith.constant 0 : index
    %c0_55 = arith.constant 0 : index
    %72 = vector.load %arg1[%c12, %c0_54, %c0_55] : memref<25x8x8xbf16, #tpu.memory_space<vmem>>, vector<1x8x8xbf16>
    %73 = vector.shape_cast %72 : vector<1x8x8xbf16> to vector<8x8xbf16>
    %c0_56 = arith.constant 0 : index
    %c42 = arith.constant 42 : index
    %74 = vector.load %arg0[%c0_56, %c42] : memref<8x896xf32, #tpu.memory_space<vmem>>, vector<8x768xf32>
    %75 = arith.truncf %74 : vector<8x768xf32> to vector<8x768xbf16>
    %cst_57 = arith.constant dense<0.000000e+00> : vector<8x768xf32>
    %76 = tpu.matmul %73, %75, %cst_57 {dimension_numbers = #tpu.dot_dimension_numbers<[1], [0], [0], [1], [0, 0, 1, 1], [], []>} : vector<8x8xbf16>, vector<8x768xbf16>, vector<8x768xf32> -> vector<8x768xf32>
    %77 = arith.addf %71, %76 : vector<8x768xf32>
    %c13 = arith.constant 13 : index
    %c0_58 = arith.constant 0 : index
    %c0_59 = arith.constant 0 : index
    %78 = vector.load %arg1[%c13, %c0_58, %c0_59] : memref<25x8x8xbf16, #tpu.memory_space<vmem>>, vector<1x8x8xbf16>
    %79 = vector.shape_cast %78 : vector<1x8x8xbf16> to vector<8x8xbf16>
    %c0_60 = arith.constant 0 : index
    %c43 = arith.constant 43 : index
    %80 = vector.load %arg0[%c0_60, %c43] : memref<8x896xf32, #tpu.memory_space<vmem>>, vector<8x768xf32>
    %81 = arith.truncf %80 : vector<8x768xf32> to vector<8x768xbf16>
    %cst_61 = arith.constant dense<0.000000e+00> : vector<8x768xf32>
    %82 = tpu.matmul %79, %81, %cst_61 {dimension_numbers = #tpu.dot_dimension_numbers<[1], [0], [0], [1], [0, 0, 1, 1], [], []>} : vector<8x8xbf16>, vector<8x768xbf16>, vector<8x768xf32> -> vector<8x768xf32>
    %83 = arith.addf %77, %82 : vector<8x768xf32>
    %c14 = arith.constant 14 : index
    %c0_62 = arith.constant 0 : index
    %c0_63 = arith.constant 0 : index
    %84 = vector.load %arg1[%c14, %c0_62, %c0_63] : memref<25x8x8xbf16, #tpu.memory_space<vmem>>, vector<1x8x8xbf16>
    %85 = vector.shape_cast %84 : vector<1x8x8xbf16> to vector<8x8xbf16>
    %c0_64 = arith.constant 0 : index
    %c44 = arith.constant 44 : index
    %86 = vector.load %arg0[%c0_64, %c44] : memref<8x896xf32, #tpu.memory_space<vmem>>, vector<8x768xf32>
    %87 = arith.truncf %86 : vector<8x768xf32> to vector<8x768xbf16>
    %cst_65 = arith.constant dense<0.000000e+00> : vector<8x768xf32>
    %88 = tpu.matmul %85, %87, %cst_65 {dimension_numbers = #tpu.dot_dimension_numbers<[1], [0], [0], [1], [0, 0, 1, 1], [], []>} : vector<8x8xbf16>, vector<8x768xbf16>, vector<8x768xf32> -> vector<8x768xf32>
    %89 = arith.addf %83, %88 : vector<8x768xf32>
    %c15 = arith.constant 15 : index
    %c0_66 = arith.constant 0 : index
    %c0_67 = arith.constant 0 : index
    %90 = vector.load %arg1[%c15, %c0_66, %c0_67] : memref<25x8x8xbf16, #tpu.memory_space<vmem>>, vector<1x8x8xbf16>
    %91 = vector.shape_cast %90 : vector<1x8x8xbf16> to vector<8x8xbf16>
    %c0_68 = arith.constant 0 : index
    %c60 = arith.constant 60 : index
    %92 = vector.load %arg0[%c0_68, %c60] : memref<8x896xf32, #tpu.memory_space<vmem>>, vector<8x768xf32>
    %93 = arith.truncf %92 : vector<8x768xf32> to vector<8x768xbf16>
    %cst_69 = arith.constant dense<0.000000e+00> : vector<8x768xf32>
    %94 = tpu.matmul %91, %93, %cst_69 {dimension_numbers = #tpu.dot_dimension_numbers<[1], [0], [0], [1], [0, 0, 1, 1], [], []>} : vector<8x8xbf16>, vector<8x768xbf16>, vector<8x768xf32> -> vector<8x768xf32>
    %95 = arith.addf %89, %94 : vector<8x768xf32>
    %c16 = arith.constant 16 : index
    %c0_70 = arith.constant 0 : index
    %c0_71 = arith.constant 0 : index
    %96 = vector.load %arg1[%c16, %c0_70, %c0_71] : memref<25x8x8xbf16, #tpu.memory_space<vmem>>, vector<1x8x8xbf16>
    %97 = vector.shape_cast %96 : vector<1x8x8xbf16> to vector<8x8xbf16>
    %c0_72 = arith.constant 0 : index
    %c61 = arith.constant 61 : index
    %98 = vector.load %arg0[%c0_72, %c61] : memref<8x896xf32, #tpu.memory_space<vmem>>, vector<8x768xf32>
    %99 = arith.truncf %98 : vector<8x768xf32> to vector<8x768xbf16>
    %cst_73 = arith.constant dense<0.000000e+00> : vector<8x768xf32>
    %100 = tpu.matmul %97, %99, %cst_73 {dimension_numbers = #tpu.dot_dimension_numbers<[1], [0], [0], [1], [0, 0, 1, 1], [], []>} : vector<8x8xbf16>, vector<8x768xbf16>, vector<8x768xf32> -> vector<8x768xf32>
    %101 = arith.addf %95, %100 : vector<8x768xf32>
    %c17 = arith.constant 17 : index
    %c0_74 = arith.constant 0 : index
    %c0_75 = arith.constant 0 : index
    %102 = vector.load %arg1[%c17, %c0_74, %c0_75] : memref<25x8x8xbf16, #tpu.memory_space<vmem>>, vector<1x8x8xbf16>
    %103 = vector.shape_cast %102 : vector<1x8x8xbf16> to vector<8x8xbf16>
    %c0_76 = arith.constant 0 : index
    %c62 = arith.constant 62 : index
    %104 = vector.load %arg0[%c0_76, %c62] : memref<8x896xf32, #tpu.memory_space<vmem>>, vector<8x768xf32>
    %105 = arith.truncf %104 : vector<8x768xf32> to vector<8x768xbf16>
    %cst_77 = arith.constant dense<0.000000e+00> : vector<8x768xf32>
    %106 = tpu.matmul %103, %105, %cst_77 {dimension_numbers = #tpu.dot_dimension_numbers<[1], [0], [0], [1], [0, 0, 1, 1], [], []>} : vector<8x8xbf16>, vector<8x768xbf16>, vector<8x768xf32> -> vector<8x768xf32>
    %107 = arith.addf %101, %106 : vector<8x768xf32>
    %c18 = arith.constant 18 : index
    %c0_78 = arith.constant 0 : index
    %c0_79 = arith.constant 0 : index
    %108 = vector.load %arg1[%c18, %c0_78, %c0_79] : memref<25x8x8xbf16, #tpu.memory_space<vmem>>, vector<1x8x8xbf16>
    %109 = vector.shape_cast %108 : vector<1x8x8xbf16> to vector<8x8xbf16>
    %c0_80 = arith.constant 0 : index
    %c63 = arith.constant 63 : index
    %110 = vector.load %arg0[%c0_80, %c63] : memref<8x896xf32, #tpu.memory_space<vmem>>, vector<8x768xf32>
    %111 = arith.truncf %110 : vector<8x768xf32> to vector<8x768xbf16>
    %cst_81 = arith.constant dense<0.000000e+00> : vector<8x768xf32>
    %112 = tpu.matmul %109, %111, %cst_81 {dimension_numbers = #tpu.dot_dimension_numbers<[1], [0], [0], [1], [0, 0, 1, 1], [], []>} : vector<8x8xbf16>, vector<8x768xbf16>, vector<8x768xf32> -> vector<8x768xf32>
    %113 = arith.addf %107, %112 : vector<8x768xf32>
    %c19 = arith.constant 19 : index
    %c0_82 = arith.constant 0 : index
    %c0_83 = arith.constant 0 : index
    %114 = vector.load %arg1[%c19, %c0_82, %c0_83] : memref<25x8x8xbf16, #tpu.memory_space<vmem>>, vector<1x8x8xbf16>
    %115 = vector.shape_cast %114 : vector<1x8x8xbf16> to vector<8x8xbf16>
    %c0_84 = arith.constant 0 : index
    %c64 = arith.constant 64 : index
    %116 = vector.load %arg0[%c0_84, %c64] : memref<8x896xf32, #tpu.memory_space<vmem>>, vector<8x768xf32>
    %117 = arith.truncf %116 : vector<8x768xf32> to vector<8x768xbf16>
    %cst_85 = arith.constant dense<0.000000e+00> : vector<8x768xf32>
    %118 = tpu.matmul %115, %117, %cst_85 {dimension_numbers = #tpu.dot_dimension_numbers<[1], [0], [0], [1], [0, 0, 1, 1], [], []>} : vector<8x8xbf16>, vector<8x768xbf16>, vector<8x768xf32> -> vector<8x768xf32>
    %119 = arith.addf %113, %118 : vector<8x768xf32>
    %c20_86 = arith.constant 20 : index
    %c0_87 = arith.constant 0 : index
    %c0_88 = arith.constant 0 : index
    %120 = vector.load %arg1[%c20_86, %c0_87, %c0_88] : memref<25x8x8xbf16, #tpu.memory_space<vmem>>, vector<1x8x8xbf16>
    %121 = vector.shape_cast %120 : vector<1x8x8xbf16> to vector<8x8xbf16>
    %c0_89 = arith.constant 0 : index
    %c80 = arith.constant 80 : index
    %122 = vector.load %arg0[%c0_89, %c80] : memref<8x896xf32, #tpu.memory_space<vmem>>, vector<8x768xf32>
    %123 = arith.truncf %122 : vector<8x768xf32> to vector<8x768xbf16>
    %cst_90 = arith.constant dense<0.000000e+00> : vector<8x768xf32>
    %124 = tpu.matmul %121, %123, %cst_90 {dimension_numbers = #tpu.dot_dimension_numbers<[1], [0], [0], [1], [0, 0, 1, 1], [], []>} : vector<8x8xbf16>, vector<8x768xbf16>, vector<8x768xf32> -> vector<8x768xf32>
    %125 = arith.addf %119, %124 : vector<8x768xf32>
    %c21_91 = arith.constant 21 : index
    %c0_92 = arith.constant 0 : index
    %c0_93 = arith.constant 0 : index
    %126 = vector.load %arg1[%c21_91, %c0_92, %c0_93] : memref<25x8x8xbf16, #tpu.memory_space<vmem>>, vector<1x8x8xbf16>
    %127 = vector.shape_cast %126 : vector<1x8x8xbf16> to vector<8x8xbf16>
    %c0_94 = arith.constant 0 : index
    %c81 = arith.constant 81 : index
    %128 = vector.load %arg0[%c0_94, %c81] : memref<8x896xf32, #tpu.memory_space<vmem>>, vector<8x768xf32>
    %129 = arith.truncf %128 : vector<8x768xf32> to vector<8x768xbf16>
    %cst_95 = arith.constant dense<0.000000e+00> : vector<8x768xf32>
    %130 = tpu.matmul %127, %129, %cst_95 {dimension_numbers = #tpu.dot_dimension_numbers<[1], [0], [0], [1], [0, 0, 1, 1], [], []>} : vector<8x8xbf16>, vector<8x768xbf16>, vector<8x768xf32> -> vector<8x768xf32>
    %131 = arith.addf %125, %130 : vector<8x768xf32>
    %c22_96 = arith.constant 22 : index
    %c0_97 = arith.constant 0 : index
    %c0_98 = arith.constant 0 : index
    %132 = vector.load %arg1[%c22_96, %c0_97, %c0_98] : memref<25x8x8xbf16, #tpu.memory_space<vmem>>, vector<1x8x8xbf16>
    %133 = vector.shape_cast %132 : vector<1x8x8xbf16> to vector<8x8xbf16>
    %c0_99 = arith.constant 0 : index
    %c82 = arith.constant 82 : index
    %134 = vector.load %arg0[%c0_99, %c82] : memref<8x896xf32, #tpu.memory_space<vmem>>, vector<8x768xf32>
    %135 = arith.truncf %134 : vector<8x768xf32> to vector<8x768xbf16>
    %cst_100 = arith.constant dense<0.000000e+00> : vector<8x768xf32>
    %136 = tpu.matmul %133, %135, %cst_100 {dimension_numbers = #tpu.dot_dimension_numbers<[1], [0], [0], [1], [0, 0, 1, 1], [], []>} : vector<8x8xbf16>, vector<8x768xbf16>, vector<8x768xf32> -> vector<8x768xf32>
    %137 = arith.addf %131, %136 : vector<8x768xf32>
    %c23_101 = arith.constant 23 : index
    %c0_102 = arith.constant 0 : index
    %c0_103 = arith.constant 0 : index
    %138 = vector.load %arg1[%c23_101, %c0_102, %c0_103] : memref<25x8x8xbf16, #tpu.memory_space<vmem>>, vector<1x8x8xbf16>
    %139 = vector.shape_cast %138 : vector<1x8x8xbf16> to vector<8x8xbf16>
    %c0_104 = arith.constant 0 : index
    %c83 = arith.constant 83 : index
    %140 = vector.load %arg0[%c0_104, %c83] : memref<8x896xf32, #tpu.memory_space<vmem>>, vector<8x768xf32>
    %141 = arith.truncf %140 : vector<8x768xf32> to vector<8x768xbf16>
    %cst_105 = arith.constant dense<0.000000e+00> : vector<8x768xf32>
    %142 = tpu.matmul %139, %141, %cst_105 {dimension_numbers = #tpu.dot_dimension_numbers<[1], [0], [0], [1], [0, 0, 1, 1], [], []>} : vector<8x8xbf16>, vector<8x768xbf16>, vector<8x768xf32> -> vector<8x768xf32>
    %143 = arith.addf %137, %142 : vector<8x768xf32>
    %c24_106 = arith.constant 24 : index
    %c0_107 = arith.constant 0 : index
    %c0_108 = arith.constant 0 : index
    %144 = vector.load %arg1[%c24_106, %c0_107, %c0_108] : memref<25x8x8xbf16, #tpu.memory_space<vmem>>, vector<1x8x8xbf16>
    %145 = vector.shape_cast %144 : vector<1x8x8xbf16> to vector<8x8xbf16>
    %c0_109 = arith.constant 0 : index
    %c84 = arith.constant 84 : index
    %146 = vector.load %arg0[%c0_109, %c84] : memref<8x896xf32, #tpu.memory_space<vmem>>, vector<8x768xf32>
    %147 = arith.truncf %146 : vector<8x768xf32> to vector<8x768xbf16>
    %cst_110 = arith.constant dense<0.000000e+00> : vector<8x768xf32>
    %148 = tpu.matmul %145, %147, %cst_110 {dimension_numbers = #tpu.dot_dimension_numbers<[1], [0], [0], [1], [0, 0, 1, 1], [], []>} : vector<8x8xbf16>, vector<8x768xbf16>, vector<8x768xf32> -> vector<8x768xf32>
    %149 = arith.addf %143, %148 : vector<8x768xf32>
    %cst_111 = arith.constant 0.000000e+00 : f32
    %150 = vector.broadcast %cst_111 : f32 to vector<8x768xf32>
    %151 = arith.cmpf ogt, %149, %150 : vector<8x768xf32>
    %cst_112 = arith.constant 0.00999999977 : f32
    %152 = vector.broadcast %cst_112 : f32 to vector<8x768xf32>
    %153 = arith.mulf %152, %149 : vector<8x768xf32>
    %154 = arith.select %151, %149, %153 : vector<8x768xi1>, vector<8x768xf32>
    %155 = vector.broadcast %0 : vector<1x768xf32> to vector<8x768xf32>
    %156 = arith.mulf %154, %155 : vector<8x768xf32>
    %cst_113 = arith.constant dense<0.000000e+00> : vector<8xf32>
    %157 = vector.multi_reduction <add>, %156, %cst_113 [1] : vector<8x768xf32> to vector<8xf32>
    %158 = vector.shape_cast %157 : vector<8xf32> to vector<8x1xf32>
    %159 = arith.mulf %156, %154 : vector<8x768xf32>
    %cst_114 = arith.constant dense<0.000000e+00> : vector<8xf32>
    %160 = vector.multi_reduction <add>, %159, %cst_114 [1] : vector<8x768xf32> to vector<8xf32>
    %161 = vector.shape_cast %160 : vector<8xf32> to vector<8x1xf32>
    %cst_115 = arith.constant 0.001953125 : f32
    %162 = vector.broadcast %cst_115 : f32 to vector<8x1xf32>
    %163 = arith.mulf %158, %162 : vector<8x1xf32>
    %cst_116 = arith.constant 0.001953125 : f32
    %164 = vector.broadcast %cst_116 : f32 to vector<8x1xf32>
    %165 = arith.mulf %161, %164 : vector<8x1xf32>
    %166 = arith.mulf %163, %163 : vector<8x1xf32>
    %167 = arith.subf %165, %166 : vector<8x1xf32>
    %cst_117 = arith.constant 0.000000e+00 : f32
    %168 = vector.broadcast %cst_117 : f32 to vector<8x1xf32>
    %169 = arith.maximumf %167, %168 : vector<8x1xf32>
    %170 = vector.broadcast %163 : vector<8x1xf32> to vector<8x768xf32>
    %171 = arith.subf %154, %170 : vector<8x768xf32>
    %cst_118 = arith.constant 9.99999974E-6 : f32
    %172 = vector.broadcast %cst_118 : f32 to vector<8x1xf32>
    %173 = arith.addf %169, %172 : vector<8x1xf32>
    %174 = math.rsqrt %173 : vector<8x1xf32>
    %175 = vector.broadcast %174 : vector<8x1xf32> to vector<8x768xf32>
    %176 = arith.mulf %171, %175 : vector<8x768xf32>
    %c0_119 = arith.constant 0 : index
    %c0_120 = arith.constant 0 : index
    %177 = vector.load %arg2[%c0_119, %c0_120] : memref<8x1xf32, #tpu.memory_space<vmem>>, vector<8x1xf32>
    %178 = vector.broadcast %177 : vector<8x1xf32> to vector<8x768xf32>
    %179 = arith.mulf %176, %178 : vector<8x768xf32>
    %c0_121 = arith.constant 0 : index
    %c0_122 = arith.constant 0 : index
    %180 = vector.load %arg3[%c0_121, %c0_122] : memref<8x1xf32, #tpu.memory_space<vmem>>, vector<8x1xf32>
    %181 = vector.broadcast %180 : vector<8x1xf32> to vector<8x768xf32>
    %182 = arith.addf %179, %181 : vector<8x768xf32>
    %cst_123 = arith.constant 0.000000e+00 : f32
    %183 = vector.broadcast %cst_123 : f32 to vector<8x42xf32>
    %c0_124 = arith.constant 0 : index
    %c0_125 = arith.constant 0 : index
    %184 = vector.load %arg9[%c0_124, %c0_125] : memref<8x896xf32, #tpu.memory_space<vmem>>, vector<8x42xf32>
    tpu.vector_store %arg9[%c0_124, %c0_125], %183 {strides = array<i32>} : memref<8x896xf32, #tpu.memory_space<vmem>>, vector<8x42xf32>,
    %cst_126 = arith.constant 0.000000e+00 : f32
    %185 = vector.broadcast %cst_126 : f32 to vector<8x86xf32>
    %c0_127 = arith.constant 0 : index
    %c810 = arith.constant 810 : index
    %186 = vector.load %arg9[%c0_127, %c810] : memref<8x896xf32, #tpu.memory_space<vmem>>, vector<8x86xf32>
    tpu.vector_store %arg9[%c0_127, %c810], %185 {strides = array<i32>} : memref<8x896xf32, #tpu.memory_space<vmem>>, vector<8x86xf32>,
    %187 = vector.broadcast %0 : vector<1x768xf32> to vector<8x768xf32>
    %188 = arith.mulf %182, %187 : vector<8x768xf32>
    %c0_128 = arith.constant 0 : index
    %c42_129 = arith.constant 42 : index
    %189 = vector.load %arg9[%c0_128, %c42_129] : memref<8x896xf32, #tpu.memory_space<vmem>>, vector<8x768xf32>
    tpu.vector_store %arg9[%c0_128, %c42_129], %188 {strides = array<i32>} : memref<8x896xf32, #tpu.memory_space<vmem>>, vector<8x768xf32>,
    %c0_130 = arith.constant 0 : index
    %c0_131 = arith.constant 0 : index
    %c0_132 = arith.constant 0 : index
    %190 = vector.load %arg4[%c0_130, %c0_131, %c0_132] : memref<25x8x8xbf16, #tpu.memory_space<vmem>>, vector<1x8x8xbf16>
    %191 = vector.shape_cast %190 : vector<1x8x8xbf16> to vector<8x8xbf16>
    %c0_133 = arith.constant 0 : index
    %c0_134 = arith.constant 0 : index
    %192 = vector.load %arg9[%c0_133, %c0_134] : memref<8x896xf32, #tpu.memory_space<vmem>>, vector<8x768xf32>
    %193 = arith.truncf %192 : vector<8x768xf32> to vector<8x768xbf16>
    %cst_135 = arith.constant dense<0.000000e+00> : vector<8x768xf32>
    %194 = tpu.matmul %191, %193, %cst_135 {dimension_numbers = #tpu.dot_dimension_numbers<[1], [0], [0], [1], [0, 0, 1, 1], [], []>} : vector<8x8xbf16>, vector<8x768xbf16>, vector<8x768xf32> -> vector<8x768xf32>
    %c1_136 = arith.constant 1 : index
    %c0_137 = arith.constant 0 : index
    %c0_138 = arith.constant 0 : index
    %195 = vector.load %arg4[%c1_136, %c0_137, %c0_138] : memref<25x8x8xbf16, #tpu.memory_space<vmem>>, vector<1x8x8xbf16>
    %196 = vector.shape_cast %195 : vector<1x8x8xbf16> to vector<8x8xbf16>
    %c0_139 = arith.constant 0 : index
    %c1_140 = arith.constant 1 : index
    %197 = vector.load %arg9[%c0_139, %c1_140] : memref<8x896xf32, #tpu.memory_space<vmem>>, vector<8x768xf32>
    %198 = arith.truncf %197 : vector<8x768xf32> to vector<8x768xbf16>
    %cst_141 = arith.constant dense<0.000000e+00> : vector<8x768xf32>
    %199 = tpu.matmul %196, %198, %cst_141 {dimension_numbers = #tpu.dot_dimension_numbers<[1], [0], [0], [1], [0, 0, 1, 1], [], []>} : vector<8x8xbf16>, vector<8x768xbf16>, vector<8x768xf32> -> vector<8x768xf32>
    %200 = arith.addf %194, %199 : vector<8x768xf32>
    %c2_142 = arith.constant 2 : index
    %c0_143 = arith.constant 0 : index
    %c0_144 = arith.constant 0 : index
    %201 = vector.load %arg4[%c2_142, %c0_143, %c0_144] : memref<25x8x8xbf16, #tpu.memory_space<vmem>>, vector<1x8x8xbf16>
    %202 = vector.shape_cast %201 : vector<1x8x8xbf16> to vector<8x8xbf16>
    %c0_145 = arith.constant 0 : index
    %c2_146 = arith.constant 2 : index
    %203 = vector.load %arg9[%c0_145, %c2_146] : memref<8x896xf32, #tpu.memory_space<vmem>>, vector<8x768xf32>
    %204 = arith.truncf %203 : vector<8x768xf32> to vector<8x768xbf16>
    %cst_147 = arith.constant dense<0.000000e+00> : vector<8x768xf32>
    %205 = tpu.matmul %202, %204, %cst_147 {dimension_numbers = #tpu.dot_dimension_numbers<[1], [0], [0], [1], [0, 0, 1, 1], [], []>} : vector<8x8xbf16>, vector<8x768xbf16>, vector<8x768xf32> -> vector<8x768xf32>
    %206 = arith.addf %200, %205 : vector<8x768xf32>
    %c3_148 = arith.constant 3 : index
    %c0_149 = arith.constant 0 : index
    %c0_150 = arith.constant 0 : index
    %207 = vector.load %arg4[%c3_148, %c0_149, %c0_150] : memref<25x8x8xbf16, #tpu.memory_space<vmem>>, vector<1x8x8xbf16>
    %208 = vector.shape_cast %207 : vector<1x8x8xbf16> to vector<8x8xbf16>
    %c0_151 = arith.constant 0 : index
    %c3_152 = arith.constant 3 : index
    %209 = vector.load %arg9[%c0_151, %c3_152] : memref<8x896xf32, #tpu.memory_space<vmem>>, vector<8x768xf32>
    %210 = arith.truncf %209 : vector<8x768xf32> to vector<8x768xbf16>
    %cst_153 = arith.constant dense<0.000000e+00> : vector<8x768xf32>
    %211 = tpu.matmul %208, %210, %cst_153 {dimension_numbers = #tpu.dot_dimension_numbers<[1], [0], [0], [1], [0, 0, 1, 1], [], []>} : vector<8x8xbf16>, vector<8x768xbf16>, vector<8x768xf32> -> vector<8x768xf32>
    %212 = arith.addf %206, %211 : vector<8x768xf32>
    %c4_154 = arith.constant 4 : index
    %c0_155 = arith.constant 0 : index
    %c0_156 = arith.constant 0 : index
    %213 = vector.load %arg4[%c4_154, %c0_155, %c0_156] : memref<25x8x8xbf16, #tpu.memory_space<vmem>>, vector<1x8x8xbf16>
    %214 = vector.shape_cast %213 : vector<1x8x8xbf16> to vector<8x8xbf16>
    %c0_157 = arith.constant 0 : index
    %c4_158 = arith.constant 4 : index
    %215 = vector.load %arg9[%c0_157, %c4_158] : memref<8x896xf32, #tpu.memory_space<vmem>>, vector<8x768xf32>
    %216 = arith.truncf %215 : vector<8x768xf32> to vector<8x768xbf16>
    %cst_159 = arith.constant dense<0.000000e+00> : vector<8x768xf32>
    %217 = tpu.matmul %214, %216, %cst_159 {dimension_numbers = #tpu.dot_dimension_numbers<[1], [0], [0], [1], [0, 0, 1, 1], [], []>} : vector<8x8xbf16>, vector<8x768xbf16>, vector<8x768xf32> -> vector<8x768xf32>
    %218 = arith.addf %212, %217 : vector<8x768xf32>
    %c5_160 = arith.constant 5 : index
    %c0_161 = arith.constant 0 : index
    %c0_162 = arith.constant 0 : index
    %219 = vector.load %arg4[%c5_160, %c0_161, %c0_162] : memref<25x8x8xbf16, #tpu.memory_space<vmem>>, vector<1x8x8xbf16>
    %220 = vector.shape_cast %219 : vector<1x8x8xbf16> to vector<8x8xbf16>
    %c0_163 = arith.constant 0 : index
    %c20_164 = arith.constant 20 : index
    %221 = vector.load %arg9[%c0_163, %c20_164] : memref<8x896xf32, #tpu.memory_space<vmem>>, vector<8x768xf32>
    %222 = arith.truncf %221 : vector<8x768xf32> to vector<8x768xbf16>
    %cst_165 = arith.constant dense<0.000000e+00> : vector<8x768xf32>
    %223 = tpu.matmul %220, %222, %cst_165 {dimension_numbers = #tpu.dot_dimension_numbers<[1], [0], [0], [1], [0, 0, 1, 1], [], []>} : vector<8x8xbf16>, vector<8x768xbf16>, vector<8x768xf32> -> vector<8x768xf32>
    %224 = arith.addf %218, %223 : vector<8x768xf32>
    %c6_166 = arith.constant 6 : index
    %c0_167 = arith.constant 0 : index
    %c0_168 = arith.constant 0 : index
    %225 = vector.load %arg4[%c6_166, %c0_167, %c0_168] : memref<25x8x8xbf16, #tpu.memory_space<vmem>>, vector<1x8x8xbf16>
    %226 = vector.shape_cast %225 : vector<1x8x8xbf16> to vector<8x8xbf16>
    %c0_169 = arith.constant 0 : index
    %c21_170 = arith.constant 21 : index
    %227 = vector.load %arg9[%c0_169, %c21_170] : memref<8x896xf32, #tpu.memory_space<vmem>>, vector<8x768xf32>
    %228 = arith.truncf %227 : vector<8x768xf32> to vector<8x768xbf16>
    %cst_171 = arith.constant dense<0.000000e+00> : vector<8x768xf32>
    %229 = tpu.matmul %226, %228, %cst_171 {dimension_numbers = #tpu.dot_dimension_numbers<[1], [0], [0], [1], [0, 0, 1, 1], [], []>} : vector<8x8xbf16>, vector<8x768xbf16>, vector<8x768xf32> -> vector<8x768xf32>
    %230 = arith.addf %224, %229 : vector<8x768xf32>
    %c7_172 = arith.constant 7 : index
    %c0_173 = arith.constant 0 : index
    %c0_174 = arith.constant 0 : index
    %231 = vector.load %arg4[%c7_172, %c0_173, %c0_174] : memref<25x8x8xbf16, #tpu.memory_space<vmem>>, vector<1x8x8xbf16>
    %232 = vector.shape_cast %231 : vector<1x8x8xbf16> to vector<8x8xbf16>
    %c0_175 = arith.constant 0 : index
    %c22_176 = arith.constant 22 : index
    %233 = vector.load %arg9[%c0_175, %c22_176] : memref<8x896xf32, #tpu.memory_space<vmem>>, vector<8x768xf32>
    %234 = arith.truncf %233 : vector<8x768xf32> to vector<8x768xbf16>
    %cst_177 = arith.constant dense<0.000000e+00> : vector<8x768xf32>
    %235 = tpu.matmul %232, %234, %cst_177 {dimension_numbers = #tpu.dot_dimension_numbers<[1], [0], [0], [1], [0, 0, 1, 1], [], []>} : vector<8x8xbf16>, vector<8x768xbf16>, vector<8x768xf32> -> vector<8x768xf32>
    %236 = arith.addf %230, %235 : vector<8x768xf32>
    %c8_178 = arith.constant 8 : index
    %c0_179 = arith.constant 0 : index
    %c0_180 = arith.constant 0 : index
    %237 = vector.load %arg4[%c8_178, %c0_179, %c0_180] : memref<25x8x8xbf16, #tpu.memory_space<vmem>>, vector<1x8x8xbf16>
    %238 = vector.shape_cast %237 : vector<1x8x8xbf16> to vector<8x8xbf16>
    %c0_181 = arith.constant 0 : index
    %c23_182 = arith.constant 23 : index
    %239 = vector.load %arg9[%c0_181, %c23_182] : memref<8x896xf32, #tpu.memory_space<vmem>>, vector<8x768xf32>
    %240 = arith.truncf %239 : vector<8x768xf32> to vector<8x768xbf16>
    %cst_183 = arith.constant dense<0.000000e+00> : vector<8x768xf32>
    %241 = tpu.matmul %238, %240, %cst_183 {dimension_numbers = #tpu.dot_dimension_numbers<[1], [0], [0], [1], [0, 0, 1, 1], [], []>} : vector<8x8xbf16>, vector<8x768xbf16>, vector<8x768xf32> -> vector<8x768xf32>
    %242 = arith.addf %236, %241 : vector<8x768xf32>
    %c9_184 = arith.constant 9 : index
    %c0_185 = arith.constant 0 : index
    %c0_186 = arith.constant 0 : index
    %243 = vector.load %arg4[%c9_184, %c0_185, %c0_186] : memref<25x8x8xbf16, #tpu.memory_space<vmem>>, vector<1x8x8xbf16>
    %244 = vector.shape_cast %243 : vector<1x8x8xbf16> to vector<8x8xbf16>
    %c0_187 = arith.constant 0 : index
    %c24_188 = arith.constant 24 : index
    %245 = vector.load %arg9[%c0_187, %c24_188] : memref<8x896xf32, #tpu.memory_space<vmem>>, vector<8x768xf32>
    %246 = arith.truncf %245 : vector<8x768xf32> to vector<8x768xbf16>
    %cst_189 = arith.constant dense<0.000000e+00> : vector<8x768xf32>
    %247 = tpu.matmul %244, %246, %cst_189 {dimension_numbers = #tpu.dot_dimension_numbers<[1], [0], [0], [1], [0, 0, 1, 1], [], []>} : vector<8x8xbf16>, vector<8x768xbf16>, vector<8x768xf32> -> vector<8x768xf32>
    %248 = arith.addf %242, %247 : vector<8x768xf32>
    %c10_190 = arith.constant 10 : index
    %c0_191 = arith.constant 0 : index
    %c0_192 = arith.constant 0 : index
    %249 = vector.load %arg4[%c10_190, %c0_191, %c0_192] : memref<25x8x8xbf16, #tpu.memory_space<vmem>>, vector<1x8x8xbf16>
    %250 = vector.shape_cast %249 : vector<1x8x8xbf16> to vector<8x8xbf16>
    %c0_193 = arith.constant 0 : index
    %c40_194 = arith.constant 40 : index
    %251 = vector.load %arg9[%c0_193, %c40_194] : memref<8x896xf32, #tpu.memory_space<vmem>>, vector<8x768xf32>
    %252 = arith.truncf %251 : vector<8x768xf32> to vector<8x768xbf16>
    %cst_195 = arith.constant dense<0.000000e+00> : vector<8x768xf32>
    %253 = tpu.matmul %250, %252, %cst_195 {dimension_numbers = #tpu.dot_dimension_numbers<[1], [0], [0], [1], [0, 0, 1, 1], [], []>} : vector<8x8xbf16>, vector<8x768xbf16>, vector<8x768xf32> -> vector<8x768xf32>
    %254 = arith.addf %248, %253 : vector<8x768xf32>
    %c11_196 = arith.constant 11 : index
    %c0_197 = arith.constant 0 : index
    %c0_198 = arith.constant 0 : index
    %255 = vector.load %arg4[%c11_196, %c0_197, %c0_198] : memref<25x8x8xbf16, #tpu.memory_space<vmem>>, vector<1x8x8xbf16>
    %256 = vector.shape_cast %255 : vector<1x8x8xbf16> to vector<8x8xbf16>
    %c0_199 = arith.constant 0 : index
    %c41_200 = arith.constant 41 : index
    %257 = vector.load %arg9[%c0_199, %c41_200] : memref<8x896xf32, #tpu.memory_space<vmem>>, vector<8x768xf32>
    %258 = arith.truncf %257 : vector<8x768xf32> to vector<8x768xbf16>
    %cst_201 = arith.constant dense<0.000000e+00> : vector<8x768xf32>
    %259 = tpu.matmul %256, %258, %cst_201 {dimension_numbers = #tpu.dot_dimension_numbers<[1], [0], [0], [1], [0, 0, 1, 1], [], []>} : vector<8x8xbf16>, vector<8x768xbf16>, vector<8x768xf32> -> vector<8x768xf32>
    %260 = arith.addf %254, %259 : vector<8x768xf32>
    %c12_202 = arith.constant 12 : index
    %c0_203 = arith.constant 0 : index
    %c0_204 = arith.constant 0 : index
    %261 = vector.load %arg4[%c12_202, %c0_203, %c0_204] : memref<25x8x8xbf16, #tpu.memory_space<vmem>>, vector<1x8x8xbf16>
    %262 = vector.shape_cast %261 : vector<1x8x8xbf16> to vector<8x8xbf16>
    %c0_205 = arith.constant 0 : index
    %c42_206 = arith.constant 42 : index
    %263 = vector.load %arg9[%c0_205, %c42_206] : memref<8x896xf32, #tpu.memory_space<vmem>>, vector<8x768xf32>
    %264 = arith.truncf %263 : vector<8x768xf32> to vector<8x768xbf16>
    %cst_207 = arith.constant dense<0.000000e+00> : vector<8x768xf32>
    %265 = tpu.matmul %262, %264, %cst_207 {dimension_numbers = #tpu.dot_dimension_numbers<[1], [0], [0], [1], [0, 0, 1, 1], [], []>} : vector<8x8xbf16>, vector<8x768xbf16>, vector<8x768xf32> -> vector<8x768xf32>
    %266 = arith.addf %260, %265 : vector<8x768xf32>
    %c13_208 = arith.constant 13 : index
    %c0_209 = arith.constant 0 : index
    %c0_210 = arith.constant 0 : index
    %267 = vector.load %arg4[%c13_208, %c0_209, %c0_210] : memref<25x8x8xbf16, #tpu.memory_space<vmem>>, vector<1x8x8xbf16>
    %268 = vector.shape_cast %267 : vector<1x8x8xbf16> to vector<8x8xbf16>
    %c0_211 = arith.constant 0 : index
    %c43_212 = arith.constant 43 : index
    %269 = vector.load %arg9[%c0_211, %c43_212] : memref<8x896xf32, #tpu.memory_space<vmem>>, vector<8x768xf32>
    %270 = arith.truncf %269 : vector<8x768xf32> to vector<8x768xbf16>
    %cst_213 = arith.constant dense<0.000000e+00> : vector<8x768xf32>
    %271 = tpu.matmul %268, %270, %cst_213 {dimension_numbers = #tpu.dot_dimension_numbers<[1], [0], [0], [1], [0, 0, 1, 1], [], []>} : vector<8x8xbf16>, vector<8x768xbf16>, vector<8x768xf32> -> vector<8x768xf32>
    %272 = arith.addf %266, %271 : vector<8x768xf32>
    %c14_214 = arith.constant 14 : index
    %c0_215 = arith.constant 0 : index
    %c0_216 = arith.constant 0 : index
    %273 = vector.load %arg4[%c14_214, %c0_215, %c0_216] : memref<25x8x8xbf16, #tpu.memory_space<vmem>>, vector<1x8x8xbf16>
    %274 = vector.shape_cast %273 : vector<1x8x8xbf16> to vector<8x8xbf16>
    %c0_217 = arith.constant 0 : index
    %c44_218 = arith.constant 44 : index
    %275 = vector.load %arg9[%c0_217, %c44_218] : memref<8x896xf32, #tpu.memory_space<vmem>>, vector<8x768xf32>
    %276 = arith.truncf %275 : vector<8x768xf32> to vector<8x768xbf16>
    %cst_219 = arith.constant dense<0.000000e+00> : vector<8x768xf32>
    %277 = tpu.matmul %274, %276, %cst_219 {dimension_numbers = #tpu.dot_dimension_numbers<[1], [0], [0], [1], [0, 0, 1, 1], [], []>} : vector<8x8xbf16>, vector<8x768xbf16>, vector<8x768xf32> -> vector<8x768xf32>
    %278 = arith.addf %272, %277 : vector<8x768xf32>
    %c15_220 = arith.constant 15 : index
    %c0_221 = arith.constant 0 : index
    %c0_222 = arith.constant 0 : index
    %279 = vector.load %arg4[%c15_220, %c0_221, %c0_222] : memref<25x8x8xbf16, #tpu.memory_space<vmem>>, vector<1x8x8xbf16>
    %280 = vector.shape_cast %279 : vector<1x8x8xbf16> to vector<8x8xbf16>
    %c0_223 = arith.constant 0 : index
    %c60_224 = arith.constant 60 : index
    %281 = vector.load %arg9[%c0_223, %c60_224] : memref<8x896xf32, #tpu.memory_space<vmem>>, vector<8x768xf32>
    %282 = arith.truncf %281 : vector<8x768xf32> to vector<8x768xbf16>
    %cst_225 = arith.constant dense<0.000000e+00> : vector<8x768xf32>
    %283 = tpu.matmul %280, %282, %cst_225 {dimension_numbers = #tpu.dot_dimension_numbers<[1], [0], [0], [1], [0, 0, 1, 1], [], []>} : vector<8x8xbf16>, vector<8x768xbf16>, vector<8x768xf32> -> vector<8x768xf32>
    %284 = arith.addf %278, %283 : vector<8x768xf32>
    %c16_226 = arith.constant 16 : index
    %c0_227 = arith.constant 0 : index
    %c0_228 = arith.constant 0 : index
    %285 = vector.load %arg4[%c16_226, %c0_227, %c0_228] : memref<25x8x8xbf16, #tpu.memory_space<vmem>>, vector<1x8x8xbf16>
    %286 = vector.shape_cast %285 : vector<1x8x8xbf16> to vector<8x8xbf16>
    %c0_229 = arith.constant 0 : index
    %c61_230 = arith.constant 61 : index
    %287 = vector.load %arg9[%c0_229, %c61_230] : memref<8x896xf32, #tpu.memory_space<vmem>>, vector<8x768xf32>
    %288 = arith.truncf %287 : vector<8x768xf32> to vector<8x768xbf16>
    %cst_231 = arith.constant dense<0.000000e+00> : vector<8x768xf32>
    %289 = tpu.matmul %286, %288, %cst_231 {dimension_numbers = #tpu.dot_dimension_numbers<[1], [0], [0], [1], [0, 0, 1, 1], [], []>} : vector<8x8xbf16>, vector<8x768xbf16>, vector<8x768xf32> -> vector<8x768xf32>
    %290 = arith.addf %284, %289 : vector<8x768xf32>
    %c17_232 = arith.constant 17 : index
    %c0_233 = arith.constant 0 : index
    %c0_234 = arith.constant 0 : index
    %291 = vector.load %arg4[%c17_232, %c0_233, %c0_234] : memref<25x8x8xbf16, #tpu.memory_space<vmem>>, vector<1x8x8xbf16>
    %292 = vector.shape_cast %291 : vector<1x8x8xbf16> to vector<8x8xbf16>
    %c0_235 = arith.constant 0 : index
    %c62_236 = arith.constant 62 : index
    %293 = vector.load %arg9[%c0_235, %c62_236] : memref<8x896xf32, #tpu.memory_space<vmem>>, vector<8x768xf32>
    %294 = arith.truncf %293 : vector<8x768xf32> to vector<8x768xbf16>
    %cst_237 = arith.constant dense<0.000000e+00> : vector<8x768xf32>
    %295 = tpu.matmul %292, %294, %cst_237 {dimension_numbers = #tpu.dot_dimension_numbers<[1], [0], [0], [1], [0, 0, 1, 1], [], []>} : vector<8x8xbf16>, vector<8x768xbf16>, vector<8x768xf32> -> vector<8x768xf32>
    %296 = arith.addf %290, %295 : vector<8x768xf32>
    %c18_238 = arith.constant 18 : index
    %c0_239 = arith.constant 0 : index
    %c0_240 = arith.constant 0 : index
    %297 = vector.load %arg4[%c18_238, %c0_239, %c0_240] : memref<25x8x8xbf16, #tpu.memory_space<vmem>>, vector<1x8x8xbf16>
    %298 = vector.shape_cast %297 : vector<1x8x8xbf16> to vector<8x8xbf16>
    %c0_241 = arith.constant 0 : index
    %c63_242 = arith.constant 63 : index
    %299 = vector.load %arg9[%c0_241, %c63_242] : memref<8x896xf32, #tpu.memory_space<vmem>>, vector<8x768xf32>
    %300 = arith.truncf %299 : vector<8x768xf32> to vector<8x768xbf16>
    %cst_243 = arith.constant dense<0.000000e+00> : vector<8x768xf32>
    %301 = tpu.matmul %298, %300, %cst_243 {dimension_numbers = #tpu.dot_dimension_numbers<[1], [0], [0], [1], [0, 0, 1, 1], [], []>} : vector<8x8xbf16>, vector<8x768xbf16>, vector<8x768xf32> -> vector<8x768xf32>
    %302 = arith.addf %296, %301 : vector<8x768xf32>
    %c19_244 = arith.constant 19 : index
    %c0_245 = arith.constant 0 : index
    %c0_246 = arith.constant 0 : index
    %303 = vector.load %arg4[%c19_244, %c0_245, %c0_246] : memref<25x8x8xbf16, #tpu.memory_space<vmem>>, vector<1x8x8xbf16>
    %304 = vector.shape_cast %303 : vector<1x8x8xbf16> to vector<8x8xbf16>
    %c0_247 = arith.constant 0 : index
    %c64_248 = arith.constant 64 : index
    %305 = vector.load %arg9[%c0_247, %c64_248] : memref<8x896xf32, #tpu.memory_space<vmem>>, vector<8x768xf32>
    %306 = arith.truncf %305 : vector<8x768xf32> to vector<8x768xbf16>
    %cst_249 = arith.constant dense<0.000000e+00> : vector<8x768xf32>
    %307 = tpu.matmul %304, %306, %cst_249 {dimension_numbers = #tpu.dot_dimension_numbers<[1], [0], [0], [1], [0, 0, 1, 1], [], []>} : vector<8x8xbf16>, vector<8x768xbf16>, vector<8x768xf32> -> vector<8x768xf32>
    %308 = arith.addf %302, %307 : vector<8x768xf32>
    %c20_250 = arith.constant 20 : index
    %c0_251 = arith.constant 0 : index
    %c0_252 = arith.constant 0 : index
    %309 = vector.load %arg4[%c20_250, %c0_251, %c0_252] : memref<25x8x8xbf16, #tpu.memory_space<vmem>>, vector<1x8x8xbf16>
    %310 = vector.shape_cast %309 : vector<1x8x8xbf16> to vector<8x8xbf16>
    %c0_253 = arith.constant 0 : index
    %c80_254 = arith.constant 80 : index
    %311 = vector.load %arg9[%c0_253, %c80_254] : memref<8x896xf32, #tpu.memory_space<vmem>>, vector<8x768xf32>
    %312 = arith.truncf %311 : vector<8x768xf32> to vector<8x768xbf16>
    %cst_255 = arith.constant dense<0.000000e+00> : vector<8x768xf32>
    %313 = tpu.matmul %310, %312, %cst_255 {dimension_numbers = #tpu.dot_dimension_numbers<[1], [0], [0], [1], [0, 0, 1, 1], [], []>} : vector<8x8xbf16>, vector<8x768xbf16>, vector<8x768xf32> -> vector<8x768xf32>
    %314 = arith.addf %308, %313 : vector<8x768xf32>
    %c21_256 = arith.constant 21 : index
    %c0_257 = arith.constant 0 : index
    %c0_258 = arith.constant 0 : index
    %315 = vector.load %arg4[%c21_256, %c0_257, %c0_258] : memref<25x8x8xbf16, #tpu.memory_space<vmem>>, vector<1x8x8xbf16>
    %316 = vector.shape_cast %315 : vector<1x8x8xbf16> to vector<8x8xbf16>
    %c0_259 = arith.constant 0 : index
    %c81_260 = arith.constant 81 : index
    %317 = vector.load %arg9[%c0_259, %c81_260] : memref<8x896xf32, #tpu.memory_space<vmem>>, vector<8x768xf32>
    %318 = arith.truncf %317 : vector<8x768xf32> to vector<8x768xbf16>
    %cst_261 = arith.constant dense<0.000000e+00> : vector<8x768xf32>
    %319 = tpu.matmul %316, %318, %cst_261 {dimension_numbers = #tpu.dot_dimension_numbers<[1], [0], [0], [1], [0, 0, 1, 1], [], []>} : vector<8x8xbf16>, vector<8x768xbf16>, vector<8x768xf32> -> vector<8x768xf32>
    %320 = arith.addf %314, %319 : vector<8x768xf32>
    %c22_262 = arith.constant 22 : index
    %c0_263 = arith.constant 0 : index
    %c0_264 = arith.constant 0 : index
    %321 = vector.load %arg4[%c22_262, %c0_263, %c0_264] : memref<25x8x8xbf16, #tpu.memory_space<vmem>>, vector<1x8x8xbf16>
    %322 = vector.shape_cast %321 : vector<1x8x8xbf16> to vector<8x8xbf16>
    %c0_265 = arith.constant 0 : index
    %c82_266 = arith.constant 82 : index
    %323 = vector.load %arg9[%c0_265, %c82_266] : memref<8x896xf32, #tpu.memory_space<vmem>>, vector<8x768xf32>
    %324 = arith.truncf %323 : vector<8x768xf32> to vector<8x768xbf16>
    %cst_267 = arith.constant dense<0.000000e+00> : vector<8x768xf32>
    %325 = tpu.matmul %322, %324, %cst_267 {dimension_numbers = #tpu.dot_dimension_numbers<[1], [0], [0], [1], [0, 0, 1, 1], [], []>} : vector<8x8xbf16>, vector<8x768xbf16>, vector<8x768xf32> -> vector<8x768xf32>
    %326 = arith.addf %320, %325 : vector<8x768xf32>
    %c23_268 = arith.constant 23 : index
    %c0_269 = arith.constant 0 : index
    %c0_270 = arith.constant 0 : index
    %327 = vector.load %arg4[%c23_268, %c0_269, %c0_270] : memref<25x8x8xbf16, #tpu.memory_space<vmem>>, vector<1x8x8xbf16>
    %328 = vector.shape_cast %327 : vector<1x8x8xbf16> to vector<8x8xbf16>
    %c0_271 = arith.constant 0 : index
    %c83_272 = arith.constant 83 : index
    %329 = vector.load %arg9[%c0_271, %c83_272] : memref<8x896xf32, #tpu.memory_space<vmem>>, vector<8x768xf32>
    %330 = arith.truncf %329 : vector<8x768xf32> to vector<8x768xbf16>
    %cst_273 = arith.constant dense<0.000000e+00> : vector<8x768xf32>
    %331 = tpu.matmul %328, %330, %cst_273 {dimension_numbers = #tpu.dot_dimension_numbers<[1], [0], [0], [1], [0, 0, 1, 1], [], []>} : vector<8x8xbf16>, vector<8x768xbf16>, vector<8x768xf32> -> vector<8x768xf32>
    %332 = arith.addf %326, %331 : vector<8x768xf32>
    %c24_274 = arith.constant 24 : index
    %c0_275 = arith.constant 0 : index
    %c0_276 = arith.constant 0 : index
    %333 = vector.load %arg4[%c24_274, %c0_275, %c0_276] : memref<25x8x8xbf16, #tpu.memory_space<vmem>>, vector<1x8x8xbf16>
    %334 = vector.shape_cast %333 : vector<1x8x8xbf16> to vector<8x8xbf16>
    %c0_277 = arith.constant 0 : index
    %c84_278 = arith.constant 84 : index
    %335 = vector.load %arg9[%c0_277, %c84_278] : memref<8x896xf32, #tpu.memory_space<vmem>>, vector<8x768xf32>
    %336 = arith.truncf %335 : vector<8x768xf32> to vector<8x768xbf16>
    %cst_279 = arith.constant dense<0.000000e+00> : vector<8x768xf32>
    %337 = tpu.matmul %334, %336, %cst_279 {dimension_numbers = #tpu.dot_dimension_numbers<[1], [0], [0], [1], [0, 0, 1, 1], [], []>} : vector<8x8xbf16>, vector<8x768xbf16>, vector<8x768xf32> -> vector<8x768xf32>
    %338 = arith.addf %332, %337 : vector<8x768xf32>
    %cst_280 = arith.constant 0.000000e+00 : f32
    %339 = vector.broadcast %cst_280 : f32 to vector<8x768xf32>
    %340 = arith.cmpf ogt, %338, %339 : vector<8x768xf32>
    %cst_281 = arith.constant 0.00999999977 : f32
    %341 = vector.broadcast %cst_281 : f32 to vector<8x768xf32>
    %342 = arith.mulf %341, %338 : vector<8x768xf32>
    %343 = arith.select %340, %338, %342 : vector<8x768xi1>, vector<8x768xf32>
    %344 = vector.broadcast %0 : vector<1x768xf32> to vector<8x768xf32>
    %345 = arith.mulf %343, %344 : vector<8x768xf32>
    %cst_282 = arith.constant dense<0.000000e+00> : vector<8xf32>
    %346 = vector.multi_reduction <add>, %345, %cst_282 [1] : vector<8x768xf32> to vector<8xf32>
    %347 = vector.shape_cast %346 : vector<8xf32> to vector<8x1xf32>
    %348 = arith.mulf %345, %343 : vector<8x768xf32>
    %cst_283 = arith.constant dense<0.000000e+00> : vector<8xf32>
    %349 = vector.multi_reduction <add>, %348, %cst_283 [1] : vector<8x768xf32> to vector<8xf32>
    %350 = vector.shape_cast %349 : vector<8xf32> to vector<8x1xf32>
    %cst_284 = arith.constant 0.001953125 : f32
    %351 = vector.broadcast %cst_284 : f32 to vector<8x1xf32>
    %352 = arith.mulf %347, %351 : vector<8x1xf32>
    %cst_285 = arith.constant 0.001953125 : f32
    %353 = vector.broadcast %cst_285 : f32 to vector<8x1xf32>
    %354 = arith.mulf %350, %353 : vector<8x1xf32>
    %355 = arith.mulf %352, %352 : vector<8x1xf32>
    %356 = arith.subf %354, %355 : vector<8x1xf32>
    %cst_286 = arith.constant 0.000000e+00 : f32
    %357 = vector.broadcast %cst_286 : f32 to vector<8x1xf32>
    %358 = arith.maximumf %356, %357 : vector<8x1xf32>
    %359 = vector.broadcast %352 : vector<8x1xf32> to vector<8x768xf32>
    %360 = arith.subf %343, %359 : vector<8x768xf32>
    %cst_287 = arith.constant 9.99999974E-6 : f32
    %361 = vector.broadcast %cst_287 : f32 to vector<8x1xf32>
    %362 = arith.addf %358, %361 : vector<8x1xf32>
    %363 = math.rsqrt %362 : vector<8x1xf32>
    %364 = vector.broadcast %363 : vector<8x1xf32> to vector<8x768xf32>
    %365 = arith.mulf %360, %364 : vector<8x768xf32>
    %c0_288 = arith.constant 0 : index
    %c0_289 = arith.constant 0 : index
    %366 = vector.load %arg5[%c0_288, %c0_289] : memref<8x1xf32, #tpu.memory_space<vmem>>, vector<8x1xf32>
    %367 = vector.broadcast %366 : vector<8x1xf32> to vector<8x768xf32>
    %368 = arith.mulf %365, %367 : vector<8x768xf32>
    %c0_290 = arith.constant 0 : index
    %c0_291 = arith.constant 0 : index
    %369 = vector.load %arg6[%c0_290, %c0_291] : memref<8x1xf32, #tpu.memory_space<vmem>>, vector<8x1xf32>
    %370 = vector.broadcast %369 : vector<8x1xf32> to vector<8x768xf32>
    %371 = arith.addf %368, %370 : vector<8x768xf32>
    %c0_292 = arith.constant 0 : index
    %c0_293 = arith.constant 0 : index
    %372 = vector.load %arg8[%c0_292, %c0_293] : memref<8x768xf32, #tpu.memory_space<vmem>>, vector<8x768xf32>
    tpu.vector_store %arg8[%c0_292, %c0_293], %371 {strides = array<i32>} : memref<8x768xf32, #tpu.memory_space<vmem>>, vector<8x768xf32>,
    return
  }
}

</mosaic_0001>

<llo_original>
// kernel: up_forward.1
$region0: #{up_forward.1}
  #allocation0 [shape = 'u32[]', space=smem, size = 0x4, offset = 0x4, fixed_abs, tag = 'smem constant byte address 0x4 - core index']
  #allocation1 [shape = 'u32[144,128]{1,0:T(1,128)}', space=vmem, size = 0x12000, scoped, tag = 'internal scratch']
  #allocation2 [shape = 'f32[8,896]{1,0:T(8,128)}', space=vmem, size = 0x7000, scoped, tag = 'scratch operand']
  %s0 = inlined_call_operand.vmem [shape: f32[8,896], index: 0, kind: input, shape index: {}]
  %s1 = inlined_call_operand.vmem [shape: bf16[25,8,8], index: 1, kind: input, shape index: {}]
  %s2 = inlined_call_operand.vmem [shape: f32[8,1], index: 2, kind: input, shape index: {}]
  %s3 = inlined_call_operand.vmem [shape: f32[8,1], index: 3, kind: input, shape index: {}]
  %s4 = inlined_call_operand.vmem [shape: bf16[25,8,8], index: 4, kind: input, shape index: {}]
  %s5 = inlined_call_operand.vmem [shape: f32[8,1], index: 5, kind: input, shape index: {}]
  %s6 = inlined_call_operand.vmem [shape: f32[8,1], index: 6, kind: input, shape index: {}]
  %s7 = inlined_call_operand.vmem [shape: f32[1,768], index: 7, kind: input, shape index: {}]
  %s8 = inlined_call_operand.vmem [shape: f32[8,768], index: 8, kind: output, shape index: {}]
  %s9 = sld [smem:[#allocation0]]
  $region42: #{up_forward.1} parent=0
    _
  %s11 = ssub.s32 1, %s9
  %s12 = scalar_select 0, %s11, %s9
  // Predicated region
  $region2: #{up_forward.1} parent=0 // pred_check
    _
  $region3: #{up_forward.1} parent=0 // pred_check_branch
    %14 = sbr.rel (0) target = $region5
  $region4: #{up_forward.1} parent=0 // pred_region
    _
  $region5: #{up_forward.1} parent=0 // pred_fallthru
    _
  // Predicated region
  $region6: #{up_forward.1} parent=0 // pred_check
    _
  $region7: #{up_forward.1} parent=0 // pred_check_branch
    %16 = sbr.rel (0) target = $region9
  $region8: #{up_forward.1} parent=0 // pred_region
    _
  $region9: #{up_forward.1} parent=0 // pred_fallthru
    _
  // Predicated region
  $region10: #{up_forward.1} parent=0 // pred_check
    _
  $region11: #{up_forward.1} parent=0 // pred_check_branch
    %18 = sbr.rel (0) target = $region13
  $region12: #{up_forward.1} parent=0 // pred_region
    _
  $region13: #{up_forward.1} parent=0 // pred_fallthru
    _
  // Predicated region
  $region14: #{up_forward.1} parent=0 // pred_check
    _
  $region15: #{up_forward.1} parent=0 // pred_check_branch
    %20 = sbr.rel (0) target = $region17
  $region16: #{up_forward.1} parent=0 // pred_region
    _
  $region17: #{up_forward.1} parent=0 // pred_fallthru
    _
  // Predicated region
  $region18: #{up_forward.1} parent=0 // pred_check
    _
  $region19: #{up_forward.1} parent=0 // pred_check_branch
    %22 = sbr.rel (0) target = $region21
  $region20: #{up_forward.1} parent=0 // pred_region
    _
  $region21: #{up_forward.1} parent=0 // pred_fallthru
    _
  // Predicated region
  $region22: #{up_forward.1} parent=0 // pred_check
    _
  $region23: #{up_forward.1} parent=0 // pred_check_branch
    %24 = sbr.rel (0) target = $region25
  $region24: #{up_forward.1} parent=0 // pred_region
    _
  $region25: #{up_forward.1} parent=0 // pred_fallthru
    _
  // Predicated region
  $region26: #{up_forward.1} parent=0 // pred_check
    _
  $region27: #{up_forward.1} parent=0 // pred_check_branch
    %26 = sbr.rel (0) target = $region29
  $region28: #{up_forward.1} parent=0 // pred_region
    _
  $region29: #{up_forward.1} parent=0 // pred_fallthru
    _
  // Predicated region
  $region30: #{up_forward.1} parent=0 // pred_check
    _
  $region31: #{up_forward.1} parent=0 // pred_check_branch
    %28 = sbr.rel (0) target = $region33
  $region32: #{up_forward.1} parent=0 // pred_region
    _
  $region33: #{up_forward.1} parent=0 // pred_fallthru
    _
  %v30 = vld [vmem:[%s7] sm:$0x3f]
  %v31 = vld [vmem:[%s1] sm:$0xf]
  %v32 = vld [vmem:[%s0] sm:$0xff]
  %v33 = vld [vmem:[%s0 + $0x8] sm:$0xff]
  %v34 = vld [vmem:[%s0 + $0x10] sm:$0xff]
  %v35 = vld [vmem:[%s0 + $0x18] sm:$0xff]
  %v36 = vld [vmem:[%s0 + $0x20] sm:$0xff]
  %v37 = vld [vmem:[%s0 + $0x28] sm:$0xff]
  %v38 = vpack.c.bf16 %v32, %v32
  %v39 = vpack.c.bf16 %v33, %v33
  %v40 = vpack.c.bf16 %v34, %v34
  %v41 = vpack.c.bf16 %v35, %v35
  %v42 = vpack.c.bf16 %v36, %v36
  %v43 = vpack.c.bf16 %v37, %v37
  %s44 = scalar_lea.vmem %s1, 4
  %v45 = vld [vmem:[%s44] sm:$0xf]
  %v46 = vld [vmem:[%s0] sm:$0xff]
  %v47 = vld [vmem:[%s0 + $0x8] sm:$0xff]
  %v48 = vld [vmem:[%s0 + $0x10] sm:$0xff]
  %v49 = vld [vmem:[%s0 + $0x18] sm:$0xff]
  %v50 = vld [vmem:[%s0 + $0x20] sm:$0xff]
  %v51 = vld [vmem:[%s0 + $0x28] sm:$0xff]
  %v52 = vld [vmem:[%s0 + $0x30] sm:$0xff]
  %v53 = vpack.c.bf16 %v46, %v46
  %v54 = vpack.c.bf16 %v47, %v47
  %v55 = vpack.c.bf16 %v48, %v48
  %v56 = vpack.c.bf16 %v49, %v49
  %v57 = vpack.c.bf16 %v50, %v50
  %v58 = vpack.c.bf16 %v51, %v51
  %v59 = vpack.c.bf16 %v52, %v52
  %67 = vrot.lane.b32.xlu0 %v53, 127
  %v68 = vpop.permute.xlu0 %67
  %69 = vrot.lane.b32.xlu0 %v54, 127
  %v70 = vpop.permute.xlu0 %69
  %71 = vrot.lane.b32.xlu0 %v55, 127
  %v72 = vpop.permute.xlu0 %71
  %73 = vrot.lane.b32.xlu0 %v56, 127
  %v74 = vpop.permute.xlu0 %73
  %75 = vrot.lane.b32.xlu0 %v57, 127
  %v76 = vpop.permute.xlu0 %75
  %77 = vrot.lane.b32.xlu0 %v58, 127
  %v78 = vpop.permute.xlu0 %77
  %79 = vrot.lane.b32.xlu0 %v59, 127
  %v80 = vpop.permute.xlu0 %79
  %vm81 = vcmask 1039360
  %v82 = vsel %vm81, %v68, %v70
  %v83 = vsel %vm81, %v70, %v72
  %v84 = vsel %vm81, %v72, %v74
  %v85 = vsel %vm81, %v74, %v76
  %v86 = vsel %vm81, %v76, %v78
  %v87 = vsel %vm81, %v78, %v80
  %vm88 = vcmask 64512
  %v90 = vsel %vm88, %v45, 0
  %vm92 = vcmask 1043456
  %v94 = vsel %vm92, %v82, 0
  %v97 = vsel %vm92, %v83, 0
  %v100 = vsel %vm92, %v84, 0
  %v103 = vsel %vm92, %v85, 0
  %v106 = vsel %vm92, %v86, 0
  %v109 = vsel %vm92, %v87, 0
  %111 = vmatprep.subr.bf16.mxu0 0
  %112 = vmatpush1.bf16.msra.mxu0 0
  %113 = vmatprep.subr.bf16.mxu0 0
  %114 = vmatpush1.bf16.msra.mxu0 0
  %115 = vmatprep.subr.bf16.mxu0 0
  %116 = vmatpush1.bf16.msra.mxu0 0
  %117 = vmatprep.subr.bf16.mxu0 0
  %118 = vmatpush1.bf16.msra.mxu0 0
  %119 = vmatprep.subr.bf16.mxu0 0
  %120 = vmatpush1.bf16.msra.mxu0 0
  %121 = vmatprep.subr.bf16.mxu0 0
  %122 = vmatpush1.bf16.msra.mxu0 0
  %123 = vmatprep.subr.bf16.mxu0 0
  %124 = vmatpush1.bf16.msra.mxu0 0
  %125 = vmatprep.subr.bf16.mxu0 %v97
  %126 = vmatpush1.bf16.msra.mxu0 %v94
  %127 = vmatprep.subr.bf16.mxu0 0
  %128 = vmatpush2.bf16.msra.mxu0 0
  %129 = vmatprep.subr.bf16.mxu0 0
  %130 = vmatpush2.bf16.msra.mxu0 0
  %131 = vmatprep.subr.bf16.mxu0 0
  %132 = vmatpush2.bf16.msra.mxu0 0
  %133 = vmatprep.subr.bf16.mxu0 0
  %134 = vmatpush2.bf16.msra.mxu0 0
  %135 = vmatprep.subr.bf16.mxu0 0
  %136 = vmatpush2.bf16.msra.mxu0 0
  %137 = vmatprep.subr.bf16.mxu0 0
  %138 = vmatpush2.bf16.msra.mxu0 0
  %139 = vmatprep.subr.bf16.mxu0 0
  %140 = vmatpush2.bf16.msra.mxu0 0
  %141 = vmatprep.subr.bf16.mxu0 0
  %142 = vmatpush2.bf16.msra.mxu0 0
  %143 = vmatprep.mubr.bf16.mxu0 0
  %144 = vmatmul.mubr.bf16.gmra.mxu0 %v90
  %v145 = vpop.f32.mrf.mxu0
  %v146 = vadd.f32 0.0, %v145
  %v147 = vpop.f32.mrf.mxu0
  %v148 = vadd.f32 0.0, %v147
  %v149 = vpop.f32.mrf.mxu0
  %v150 = vpop.f32.mrf.mxu0
  %151 = vdwg.mxu0
  %152 = vmatprep.subr.bf16.mxu0 0
  %153 = vmatpush1.bf16.msra.mxu0 0
  %154 = vmatprep.subr.bf16.mxu0 0
  %155 = vmatpush1.bf16.msra.mxu0 0
  %156 = vmatprep.subr.bf16.mxu0 0
  %157 = vmatpush1.bf16.msra.mxu0 0
  %158 = vmatprep.subr.bf16.mxu0 0
  %159 = vmatpush1.bf16.msra.mxu0 0
  %160 = vmatprep.subr.bf16.mxu0 0
  %161 = vmatpush1.bf16.msra.mxu0 0
  %162 = vmatprep.subr.bf16.mxu0 0
  %163 = vmatpush1.bf16.msra.mxu0 0
  %164 = vmatprep.subr.bf16.mxu0 0
  %165 = vmatpush1.bf16.msra.mxu0 0
  %166 = vmatprep.subr.bf16.mxu0 %v103
  %167 = vmatpush1.bf16.msra.mxu0 %v100
  %168 = vmatprep.subr.bf16.mxu0 0
  %169 = vmatpush2.bf16.msra.mxu0 0
  %170 = vmatprep.subr.bf16.mxu0 0
  %171 = vmatpush2.bf16.msra.mxu0 0
  %172 = vmatprep.subr.bf16.mxu0 0
  %173 = vmatpush2.bf16.msra.mxu0 0
  %174 = vmatprep.subr.bf16.mxu0 0
  %175 = vmatpush2.bf16.msra.mxu0 0
  %176 = vmatprep.subr.bf16.mxu0 0
  %177 = vmatpush2.bf16.msra.mxu0 0
  %178 = vmatprep.subr.bf16.mxu0 0
  %179 = vmatpush2.bf16.msra.mxu0 0
  %180 = vmatprep.subr.bf16.mxu0 0
  %181 = vmatpush2.bf16.msra.mxu0 0
  %182 = vmatprep.subr.bf16.mxu0 0
  %183 = vmatpush2.bf16.msra.mxu0 0
  %184 = vmatprep.mubr.bf16.mxu0 0
  %185 = vmatmul.mubr.bf16.gmra.mxu0 %v90
  %v186 = vpop.f32.mrf.mxu0
  %v187 = vadd.f32 0.0, %v186
  %v188 = vpop.f32.mrf.mxu0
  %v189 = vadd.f32 0.0, %v188
  %v190 = vpop.f32.mrf.mxu0
  %v191 = vpop.f32.mrf.mxu0
  %192 = vdwg.mxu0
  %193 = vmatprep.subr.bf16.mxu0 0
  %194 = vmatpush1.bf16.msra.mxu0 0
  %195 = vmatprep.subr.bf16.mxu0 0
  %196 = vmatpush1.bf16.msra.mxu0 0
  %197 = vmatprep.subr.bf16.mxu0 0
  %198 = vmatpush1.bf16.msra.mxu0 0
  %199 = vmatprep.subr.bf16.mxu0 0
  %200 = vmatpush1.bf16.msra.mxu0 0
  %201 = vmatprep.subr.bf16.mxu0 0
  %202 = vmatpush1.bf16.msra.mxu0 0
  %203 = vmatprep.subr.bf16.mxu0 0
  %204 = vmatpush1.bf16.msra.mxu0 0
  %205 = vmatprep.subr.bf16.mxu0 0
  %206 = vmatpush1.bf16.msra.mxu0 0
  %207 = vmatprep.subr.bf16.mxu0 %v109
  %208 = vmatpush1.bf16.msra.mxu0 %v106
  %209 = vmatprep.subr.bf16.mxu0 0
  %210 = vmatpush2.bf16.msra.mxu0 0
  %211 = vmatprep.subr.bf16.mxu0 0
  %212 = vmatpush2.bf16.msra.mxu0 0
  %213 = vmatprep.subr.bf16.mxu0 0
  %214 = vmatpush2.bf16.msra.mxu0 0
  %215 = vmatprep.subr.bf16.mxu0 0
  %216 = vmatpush2.bf16.msra.mxu0 0
  %217 = vmatprep.subr.bf16.mxu0 0
  %218 = vmatpush2.bf16.msra.mxu0 0
  %219 = vmatprep.subr.bf16.mxu0 0
  %220 = vmatpush2.bf16.msra.mxu0 0
  %221 = vmatprep.subr.bf16.mxu0 0
  %222 = vmatpush2.bf16.msra.mxu0 0
  %223 = vmatprep.subr.bf16.mxu0 0
  %224 = vmatpush2.bf16.msra.mxu0 0
  %225 = vmatprep.mubr.bf16.mxu0 0
  %226 = vmatmul.mubr.bf16.gmra.mxu0 %v90
  %v227 = vpop.f32.mrf.mxu0
  %v228 = vadd.f32 0.0, %v227
  %v229 = vpop.f32.mrf.mxu0
  %v230 = vadd.f32 0.0, %v229
  %v231 = vpop.f32.mrf.mxu0
  %v232 = vpop.f32.mrf.mxu0
  %233 = vdwg.mxu0
  %v235 = vsel %vm88, %v31, 0
  %v238 = vsel %vm92, %v38, 0
  %v241 = vsel %vm92, %v39, 0
  %v244 = vsel %vm92, %v40, 0
  %v247 = vsel %vm92, %v41, 0
  %v250 = vsel %vm92, %v42, 0
  %v253 = vsel %vm92, %v43, 0
  %255 = vmatprep.subr.bf16.mxu0 0
  %256 = vmatpush1.bf16.msra.mxu0 0
  %257 = vmatprep.subr.bf16.mxu0 0
  %258 = vmatpush1.bf16.msra.mxu0 0
  %259 = vmatprep.subr.bf16.mxu0 0
  %260 = vmatpush1.bf16.msra.mxu0 0
  %261 = vmatprep.subr.bf16.mxu0 0
  %262 = vmatpush1.bf16.msra.mxu0 0
  %263 = vmatprep.subr.bf16.mxu0 0
  %264 = vmatpush1.bf16.msra.mxu0 0
  %265 = vmatprep.subr.bf16.mxu0 0
  %266 = vmatpush1.bf16.msra.mxu0 0
  %267 = vmatprep.subr.bf16.mxu0 0
  %268 = vmatpush1.bf16.msra.mxu0 0
  %269 = vmatprep.subr.bf16.mxu0 %v241
  %270 = vmatpush1.bf16.msra.mxu0 %v238
  %271 = vmatprep.subr.bf16.mxu0 0
  %272 = vmatpush2.bf16.msra.mxu0 0
  %273 = vmatprep.subr.bf16.mxu0 0
  %274 = vmatpush2.bf16.msra.mxu0 0
  %275 = vmatprep.subr.bf16.mxu0 0
  %276 = vmatpush2.bf16.msra.mxu0 0
  %277 = vmatprep.subr.bf16.mxu0 0
  %278 = vmatpush2.bf16.msra.mxu0 0
  %279 = vmatprep.subr.bf16.mxu0 0
  %280 = vmatpush2.bf16.msra.mxu0 0
  %281 = vmatprep.subr.bf16.mxu0 0
  %282 = vmatpush2.bf16.msra.mxu0 0
  %283 = vmatprep.subr.bf16.mxu0 0
  %284 = vmatpush2.bf16.msra.mxu0 0
  %285 = vmatprep.subr.bf16.mxu0 0
  %286 = vmatpush2.bf16.msra.mxu0 0
  %287 = vmatprep.mubr.bf16.mxu0 0
  %288 = vmatmul.mubr.bf16.gmra.mxu0 %v235
  %v289 = vpop.f32.mrf.mxu0
  %v290 = vadd.f32 %v146, %v289
  %v291 = vpop.f32.mrf.mxu0
  %v292 = vadd.f32 %v148, %v291
  %v293 = vpop.f32.mrf.mxu0
  %v294 = vpop.f32.mrf.mxu0
  %295 = vdwg.mxu0
  %296 = vmatprep.subr.bf16.mxu0 0
  %297 = vmatpush1.bf16.msra.mxu0 0
  %298 = vmatprep.subr.bf16.mxu0 0
  %299 = vmatpush1.bf16.msra.mxu0 0
  %300 = vmatprep.subr.bf16.mxu0 0
  %301 = vmatpush1.bf16.msra.mxu0 0
  %302 = vmatprep.subr.bf16.mxu0 0
  %303 = vmatpush1.bf16.msra.mxu0 0
  %304 = vmatprep.subr.bf16.mxu0 0
  %305 = vmatpush1.bf16.msra.mxu0 0
  %306 = vmatprep.subr.bf16.mxu0 0
  %307 = vmatpush1.bf16.msra.mxu0 0
  %308 = vmatprep.subr.bf16.mxu0 0
  %309 = vmatpush1.bf16.msra.mxu0 0
  %310 = vmatprep.subr.bf16.mxu0 %v247
  %311 = vmatpush1.bf16.msra.mxu0 %v244
  %312 = vmatprep.subr.bf16.mxu0 0
  %313 = vmatpush2.bf16.msra.mxu0 0
  %314 = vmatprep.subr.bf16.mxu0 0
  %315 = vmatpush2.bf16.msra.mxu0 0
  %316 = vmatprep.subr.bf16.mxu0 0
  %317 = vmatpush2.bf16.msra.mxu0 0
  %318 = vmatprep.subr.bf16.mxu0 0
  %319 = vmatpush2.bf16.msra.mxu0 0
  %320 = vmatprep.subr.bf16.mxu0 0
  %321 = vmatpush2.bf16.msra.mxu0 0
  %322 = vmatprep.subr.bf16.mxu0 0
  %323 = vmatpush2.bf16.msra.mxu0 0
  %324 = vmatprep.subr.bf16.mxu0 0
  %325 = vmatpush2.bf16.msra.mxu0 0
  %326 = vmatprep.subr.bf16.mxu0 0
  %327 = vmatpush2.bf16.msra.mxu0 0
  %328 = vmatprep.mubr.bf16.mxu0 0
  %329 = vmatmul.mubr.bf16.gmra.mxu0 %v235
  %v330 = vpop.f32.mrf.mxu0
  %v331 = vadd.f32 %v187, %v330
  %v332 = vpop.f32.mrf.mxu0
  %v333 = vadd.f32 %v189, %v332
  %v334 = vpop.f32.mrf.mxu0
  %v335 = vpop.f32.mrf.mxu0
  %336 = vdwg.mxu0
  %337 = vmatprep.subr.bf16.mxu0 0
  %338 = vmatpush1.bf16.msra.mxu0 0
  %339 = vmatprep.subr.bf16.mxu0 0
  %340 = vmatpush1.bf16.msra.mxu0 0
  %341 = vmatprep.subr.bf16.mxu0 0
  %342 = vmatpush1.bf16.msra.mxu0 0
  %343 = vmatprep.subr.bf16.mxu0 0
  %344 = vmatpush1.bf16.msra.mxu0 0
  %345 = vmatprep.subr.bf16.mxu0 0
  %346 = vmatpush1.bf16.msra.mxu0 0
  %347 = vmatprep.subr.bf16.mxu0 0
  %348 = vmatpush1.bf16.msra.mxu0 0
  %349 = vmatprep.subr.bf16.mxu0 0
  %350 = vmatpush1.bf16.msra.mxu0 0
  %351 = vmatprep.subr.bf16.mxu0 %v253
  %352 = vmatpush1.bf16.msra.mxu0 %v250
  %353 = vmatprep.subr.bf16.mxu0 0
  %354 = vmatpush2.bf16.msra.mxu0 0
  %355 = vmatprep.subr.bf16.mxu0 0
  %356 = vmatpush2.bf16.msra.mxu0 0
  %357 = vmatprep.subr.bf16.mxu0 0
  %358 = vmatpush2.bf16.msra.mxu0 0
  %359 = vmatprep.subr.bf16.mxu0 0
  %360 = vmatpush2.bf16.msra.mxu0 0
  %361 = vmatprep.subr.bf16.mxu0 0
  %362 = vmatpush2.bf16.msra.mxu0 0
  %363 = vmatprep.subr.bf16.mxu0 0
  %364 = vmatpush2.bf16.msra.mxu0 0
  %365 = vmatprep.subr.bf16.mxu0 0
  %366 = vmatpush2.bf16.msra.mxu0 0
  %367 = vmatprep.subr.bf16.mxu0 0
  %368 = vmatpush2.bf16.msra.mxu0 0
  %369 = vmatprep.mubr.bf16.mxu0 0
  %370 = vmatmul.mubr.bf16.gmra.mxu0 %v235
  %v371 = vpop.f32.mrf.mxu0
  %v372 = vadd.f32 %v228, %v371
  %v373 = vpop.f32.mrf.mxu0
  %v374 = vadd.f32 %v230, %v373
  %v375 = vpop.f32.mrf.mxu0
  %v376 = vpop.f32.mrf.mxu0
  %377 = vdwg.mxu0
  %s378 = scalar_lea.vmem %s1, 8
  %v379 = vld [vmem:[%s378] sm:$0xf]
  %380 = vrot.lane.b32.xlu0 %v53, 126
  %v381 = vpop.permute.xlu0 %380
  %382 = vrot.lane.b32.xlu0 %v54, 126
  %v383 = vpop.permute.xlu0 %382
  %384 = vrot.lane.b32.xlu0 %v55, 126
  %v385 = vpop.permute.xlu0 %384
  %386 = vrot.lane.b32.xlu0 %v56, 126
  %v387 = vpop.permute.xlu0 %386
  %388 = vrot.lane.b32.xlu0 %v57, 126
  %v389 = vpop.permute.xlu0 %388
  %390 = vrot.lane.b32.xlu0 %v58, 126
  %v391 = vpop.permute.xlu0 %390
  %392 = vrot.lane.b32.xlu0 %v59, 126
  %v393 = vpop.permute.xlu0 %392
  %vm394 = vcmask 1031168
  %v395 = vsel %vm394, %v381, %v383
  %v396 = vsel %vm394, %v383, %v385
  %v397 = vsel %vm394, %v385, %v387
  %v398 = vsel %vm394, %v387, %v389
  %v399 = vsel %vm394, %v389, %v391
  %v400 = vsel %vm394, %v391, %v393
  %v402 = vsel %vm88, %v379, 0
  %v405 = vsel %vm92, %v395, 0
  %v408 = vsel %vm92, %v396, 0
  %v411 = vsel %vm92, %v397, 0
  %v414 = vsel %vm92, %v398, 0
  %v417 = vsel %vm92, %v399, 0
  %v420 = vsel %vm92, %v400, 0
  %422 = vmatprep.subr.bf16.mxu0 0
  %423 = vmatpush1.bf16.msra.mxu0 0
  %424 = vmatprep.subr.bf16.mxu0 0
  %425 = vmatpush1.bf16.msra.mxu0 0
  %426 = vmatprep.subr.bf16.mxu0 0
  %427 = vmatpush1.bf16.msra.mxu0 0
  %428 = vmatprep.subr.bf16.mxu0 0
  %429 = vmatpush1.bf16.msra.mxu0 0
  %430 = vmatprep.subr.bf16.mxu0 0
  %431 = vmatpush1.bf16.msra.mxu0 0
  %432 = vmatprep.subr.bf16.mxu0 0
  %433 = vmatpush1.bf16.msra.mxu0 0
  %434 = vmatprep.subr.bf16.mxu0 0
  %435 = vmatpush1.bf16.msra.mxu0 0
  %436 = vmatprep.subr.bf16.mxu0 %v408
  %437 = vmatpush1.bf16.msra.mxu0 %v405
  %438 = vmatprep.subr.bf16.mxu0 0
  %439 = vmatpush2.bf16.msra.mxu0 0
  %440 = vmatprep.subr.bf16.mxu0 0
  %441 = vmatpush2.bf16.msra.mxu0 0
  %442 = vmatprep.subr.bf16.mxu0 0
  %443 = vmatpush2.bf16.msra.mxu0 0
  %444 = vmatprep.subr.bf16.mxu0 0
  %445 = vmatpush2.bf16.msra.mxu0 0
  %446 = vmatprep.subr.bf16.mxu0 0
  %447 = vmatpush2.bf16.msra.mxu0 0
  %448 = vmatprep.subr.bf16.mxu0 0
  %449 = vmatpush2.bf16.msra.mxu0 0
  %450 = vmatprep.subr.bf16.mxu0 0
  %451 = vmatpush2.bf16.msra.mxu0 0
  %452 = vmatprep.subr.bf16.mxu0 0
  %453 = vmatpush2.bf16.msra.mxu0 0
  %454 = vmatprep.mubr.bf16.mxu0 0
  %455 = vmatmul.mubr.bf16.gmra.mxu0 %v402
  %v456 = vpop.f32.mrf.mxu0
  %v457 = vadd.f32 0.0, %v456
  %v458 = vpop.f32.mrf.mxu0
  %v459 = vadd.f32 0.0, %v458
  %v460 = vpop.f32.mrf.mxu0
  %v461 = vpop.f32.mrf.mxu0
  %462 = vdwg.mxu0
  %463 = vmatprep.subr.bf16.mxu0 0
  %464 = vmatpush1.bf16.msra.mxu0 0
  %465 = vmatprep.subr.bf16.mxu0 0
  %466 = vmatpush1.bf16.msra.mxu0 0
  %467 = vmatprep.subr.bf16.mxu0 0
  %468 = vmatpush1.bf16.msra.mxu0 0
  %469 = vmatprep.subr.bf16.mxu0 0
  %470 = vmatpush1.bf16.msra.mxu0 0
  %471 = vmatprep.subr.bf16.mxu0 0
  %472 = vmatpush1.bf16.msra.mxu0 0
  %473 = vmatprep.subr.bf16.mxu0 0
  %474 = vmatpush1.bf16.msra.mxu0 0
  %475 = vmatprep.subr.bf16.mxu0 0
  %476 = vmatpush1.bf16.msra.mxu0 0
  %477 = vmatprep.subr.bf16.mxu0 %v414
  %478 = vmatpush1.bf16.msra.mxu0 %v411
  %479 = vmatprep.subr.bf16.mxu0 0
  %480 = vmatpush2.bf16.msra.mxu0 0
  %481 = vmatprep.subr.bf16.mxu0 0
  %482 = vmatpush2.bf16.msra.mxu0 0
  %483 = vmatprep.subr.bf16.mxu0 0
  %484 = vmatpush2.bf16.msra.mxu0 0
  %485 = vmatprep.subr.bf16.mxu0 0
  %486 = vmatpush2.bf16.msra.mxu0 0
  %487 = vmatprep.subr.bf16.mxu0 0
  %488 = vmatpush2.bf16.msra.mxu0 0
  %489 = vmatprep.subr.bf16.mxu0 0
  %490 = vmatpush2.bf16.msra.mxu0 0
  %491 = vmatprep.subr.bf16.mxu0 0
  %492 = vmatpush2.bf16.msra.mxu0 0
  %493 = vmatprep.subr.bf16.mxu0 0
  %494 = vmatpush2.bf16.msra.mxu0 0
  %495 = vmatprep.mubr.bf16.mxu0 0
  %496 = vmatmul.mubr.bf16.gmra.mxu0 %v402
  %v497 = vpop.f32.mrf.mxu0
  %v498 = vadd.f32 0.0, %v497
  %v499 = vpop.f32.mrf.mxu0
  %v500 = vadd.f32 0.0, %v499
  %v501 = vpop.f32.mrf.mxu0
  %v502 = vpop.f32.mrf.mxu0
  %503 = vdwg.mxu0
  %504 = vmatprep.subr.bf16.mxu0 0
  %505 = vmatpush1.bf16.msra.mxu0 0
  %506 = vmatprep.subr.bf16.mxu0 0
  %507 = vmatpush1.bf16.msra.mxu0 0
  %508 = vmatprep.subr.bf16.mxu0 0
  %509 = vmatpush1.bf16.msra.mxu0 0
  %510 = vmatprep.subr.bf16.mxu0 0
  %511 = vmatpush1.bf16.msra.mxu0 0
  %512 = vmatprep.subr.bf16.mxu0 0
  %513 = vmatpush1.bf16.msra.mxu0 0
  %514 = vmatprep.subr.bf16.mxu0 0
  %515 = vmatpush1.bf16.msra.mxu0 0
  %516 = vmatprep.subr.bf16.mxu0 0
  %517 = vmatpush1.bf16.msra.mxu0 0
  %518 = vmatprep.subr.bf16.mxu0 %v420
  %519 = vmatpush1.bf16.msra.mxu0 %v417
  %520 = vmatprep.subr.bf16.mxu0 0
  %521 = vmatpush2.bf16.msra.mxu0 0
  %522 = vmatprep.subr.bf16.mxu0 0
  %523 = vmatpush2.bf16.msra.mxu0 0
  %524 = vmatprep.subr.bf16.mxu0 0
  %525 = vmatpush2.bf16.msra.mxu0 0
  %526 = vmatprep.subr.bf16.mxu0 0
  %527 = vmatpush2.bf16.msra.mxu0 0
  %528 = vmatprep.subr.bf16.mxu0 0
  %529 = vmatpush2.bf16.msra.mxu0 0
  %530 = vmatprep.subr.bf16.mxu0 0
  %531 = vmatpush2.bf16.msra.mxu0 0
  %532 = vmatprep.subr.bf16.mxu0 0
  %533 = vmatpush2.bf16.msra.mxu0 0
  %534 = vmatprep.subr.bf16.mxu0 0
  %535 = vmatpush2.bf16.msra.mxu0 0
  %536 = vmatprep.mubr.bf16.mxu0 0
  %537 = vmatmul.mubr.bf16.gmra.mxu0 %v402
  %v538 = vpop.f32.mrf.mxu0
  %v539 = vadd.f32 0.0, %v538
  %v540 = vpop.f32.mrf.mxu0
  %v541 = vadd.f32 0.0, %v540
  %v542 = vpop.f32.mrf.mxu0
  %v543 = vpop.f32.mrf.mxu0
  %544 = vdwg.mxu0
  %v545 = vadd.f32 %v290, %v457
  %v546 = vadd.f32 %v292, %v459
  %v547 = vadd.f32 %v331, %v498
  %v548 = vadd.f32 %v333, %v500
  %v549 = vadd.f32 %v372, %v539
  %v550 = vadd.f32 %v374, %v541
  %s551 = scalar_lea.vmem %s1, 12
  %v552 = vld [vmem:[%s551] sm:$0xf]
  %553 = vrot.lane.b32.xlu0 %v53, 125
  %v554 = vpop.permute.xlu0 %553
  %555 = vrot.lane.b32.xlu0 %v54, 125
  %v556 = vpop.permute.xlu0 %555
  %557 = vrot.lane.b32.xlu0 %v55, 125
  %v558 = vpop.permute.xlu0 %557
  %559 = vrot.lane.b32.xlu0 %v56, 125
  %v560 = vpop.permute.xlu0 %559
  %561 = vrot.lane.b32.xlu0 %v57, 125
  %v562 = vpop.permute.xlu0 %561
  %563 = vrot.lane.b32.xlu0 %v58, 125
  %v564 = vpop.permute.xlu0 %563
  %565 = vrot.lane.b32.xlu0 %v59, 125
  %v566 = vpop.permute.xlu0 %565
  %vm567 = vcmask 1022976
  %v568 = vsel %vm567, %v554, %v556
  %v569 = vsel %vm567, %v556, %v558
  %v570 = vsel %vm567, %v558, %v560
  %v571 = vsel %vm567, %v560, %v562
  %v572 = vsel %vm567, %v562, %v564
  %v573 = vsel %vm567, %v564, %v566
  %v575 = vsel %vm88, %v552, 0
  %v578 = vsel %vm92, %v568, 0
  %v581 = vsel %vm92, %v569, 0
  %v584 = vsel %vm92, %v570, 0
  %v587 = vsel %vm92, %v571, 0
  %v590 = vsel %vm92, %v572, 0
  %v593 = vsel %vm92, %v573, 0
  %595 = vmatprep.subr.bf16.mxu0 0
  %596 = vmatpush1.bf16.msra.mxu0 0
  %597 = vmatprep.subr.bf16.mxu0 0
  %598 = vmatpush1.bf16.msra.mxu0 0
  %599 = vmatprep.subr.bf16.mxu0 0
  %600 = vmatpush1.bf16.msra.mxu0 0
  %601 = vmatprep.subr.bf16.mxu0 0
  %602 = vmatpush1.bf16.msra.mxu0 0
  %603 = vmatprep.subr.bf16.mxu0 0
  %604 = vmatpush1.bf16.msra.mxu0 0
  %605 = vmatprep.subr.bf16.mxu0 0
  %606 = vmatpush1.bf16.msra.mxu0 0
  %607 = vmatprep.subr.bf16.mxu0 0
  %608 = vmatpush1.bf16.msra.mxu0 0
  %609 = vmatprep.subr.bf16.mxu0 %v581
  %610 = vmatpush1.bf16.msra.mxu0 %v578
  %611 = vmatprep.subr.bf16.mxu0 0
  %612 = vmatpush2.bf16.msra.mxu0 0
  %613 = vmatprep.subr.bf16.mxu0 0
  %614 = vmatpush2.bf16.msra.mxu0 0
  %615 = vmatprep.subr.bf16.mxu0 0
  %616 = vmatpush2.bf16.msra.mxu0 0
  %617 = vmatprep.subr.bf16.mxu0 0
  %618 = vmatpush2.bf16.msra.mxu0 0
  %619 = vmatprep.subr.bf16.mxu0 0
  %620 = vmatpush2.bf16.msra.mxu0 0
  %621 = vmatprep.subr.bf16.mxu0 0
  %622 = vmatpush2.bf16.msra.mxu0 0
  %623 = vmatprep.subr.bf16.mxu0 0
  %624 = vmatpush2.bf16.msra.mxu0 0
  %625 = vmatprep.subr.bf16.mxu0 0
  %626 = vmatpush2.bf16.msra.mxu0 0
  %627 = vmatprep.mubr.bf16.mxu0 0
  %628 = vmatmul.mubr.bf16.gmra.mxu0 %v575
  %v629 = vpop.f32.mrf.mxu0
  %v630 = vadd.f32 0.0, %v629
  %v631 = vpop.f32.mrf.mxu0
  %v632 = vadd.f32 0.0, %v631
  %v633 = vpop.f32.mrf.mxu0
  %v634 = vpop.f32.mrf.mxu0
  %635 = vdwg.mxu0
  %636 = vmatprep.subr.bf16.mxu0 0
  %637 = vmatpush1.bf16.msra.mxu0 0
  %638 = vmatprep.subr.bf16.mxu0 0
  %639 = vmatpush1.bf16.msra.mxu0 0
  %640 = vmatprep.subr.bf16.mxu0 0
  %641 = vmatpush1.bf16.msra.mxu0 0
  %642 = vmatprep.subr.bf16.mxu0 0
  %643 = vmatpush1.bf16.msra.mxu0 0
  %644 = vmatprep.subr.bf16.mxu0 0
  %645 = vmatpush1.bf16.msra.mxu0 0
  %646 = vmatprep.subr.bf16.mxu0 0
  %647 = vmatpush1.bf16.msra.mxu0 0
  %648 = vmatprep.subr.bf16.mxu0 0
  %649 = vmatpush1.bf16.msra.mxu0 0
  %650 = vmatprep.subr.bf16.mxu0 %v587
  %651 = vmatpush1.bf16.msra.mxu0 %v584
  %652 = vmatprep.subr.bf16.mxu0 0
  %653 = vmatpush2.bf16.msra.mxu0 0
  %654 = vmatprep.subr.bf16.mxu0 0
  %655 = vmatpush2.bf16.msra.mxu0 0
  %656 = vmatprep.subr.bf16.mxu0 0
  %657 = vmatpush2.bf16.msra.mxu0 0
  %658 = vmatprep.subr.bf16.mxu0 0
  %659 = vmatpush2.bf16.msra.mxu0 0
  %660 = vmatprep.subr.bf16.mxu0 0
  %661 = vmatpush2.bf16.msra.mxu0 0
  %662 = vmatprep.subr.bf16.mxu0 0
  %663 = vmatpush2.bf16.msra.mxu0 0
  %664 = vmatprep.subr.bf16.mxu0 0
  %665 = vmatpush2.bf16.msra.mxu0 0
  %666 = vmatprep.subr.bf16.mxu0 0
  %667 = vmatpush2.bf16.msra.mxu0 0
  %668 = vmatprep.mubr.bf16.mxu0 0
  %669 = vmatmul.mubr.bf16.gmra.mxu0 %v575
  %v670 = vpop.f32.mrf.mxu0
  %v671 = vadd.f32 0.0, %v670
  %v672 = vpop.f32.mrf.mxu0
  %v673 = vadd.f32 0.0, %v672
  %v674 = vpop.f32.mrf.mxu0
  %v675 = vpop.f32.mrf.mxu0
  %676 = vdwg.mxu0
  %677 = vmatprep.subr.bf16.mxu0 0
  %678 = vmatpush1.bf16.msra.mxu0 0
  %679 = vmatprep.subr.bf16.mxu0 0
  %680 = vmatpush1.bf16.msra.mxu0 0
  %681 = vmatprep.subr.bf16.mxu0 0
  %682 = vmatpush1.bf16.msra.mxu0 0
  %683 = vmatprep.subr.bf16.mxu0 0
  %684 = vmatpush1.bf16.msra.mxu0 0
  %685 = vmatprep.subr.bf16.mxu0 0
  %686 = vmatpush1.bf16.msra.mxu0 0
  %687 = vmatprep.subr.bf16.mxu0 0
  %688 = vmatpush1.bf16.msra.mxu0 0
  %689 = vmatprep.subr.bf16.mxu0 0
  %690 = vmatpush1.bf16.msra.mxu0 0
  %691 = vmatprep.subr.bf16.mxu0 %v593
  %692 = vmatpush1.bf16.msra.mxu0 %v590
  %693 = vmatprep.subr.bf16.mxu0 0
  %694 = vmatpush2.bf16.msra.mxu0 0
  %695 = vmatprep.subr.bf16.mxu0 0
  %696 = vmatpush2.bf16.msra.mxu0 0
  %697 = vmatprep.subr.bf16.mxu0 0
  %698 = vmatpush2.bf16.msra.mxu0 0
  %699 = vmatprep.subr.bf16.mxu0 0
  %700 = vmatpush2.bf16.msra.mxu0 0
  %701 = vmatprep.subr.bf16.mxu0 0
  %702 = vmatpush2.bf16.msra.mxu0 0
  %703 = vmatprep.subr.bf16.mxu0 0
  %704 = vmatpush2.bf16.msra.mxu0 0
  %705 = vmatprep.subr.bf16.mxu0 0
  %706 = vmatpush2.bf16.msra.mxu0 0
  %707 = vmatprep.subr.bf16.mxu0 0
  %708 = vmatpush2.bf16.msra.mxu0 0
  %709 = vmatprep.mubr.bf16.mxu0 0
  %710 = vmatmul.mubr.bf16.gmra.mxu0 %v575
  %v711 = vpop.f32.mrf.mxu0
  %v712 = vadd.f32 0.0, %v711
  %v713 = vpop.f32.mrf.mxu0
  %v714 = vadd.f32 0.0, %v713
  %v715 = vpop.f32.mrf.mxu0
  %v716 = vpop.f32.mrf.mxu0
  %717 = vdwg.mxu0
  %v718 = vadd.f32 %v545, %v630
  %v719 = vadd.f32 %v546, %v632
  %v720 = vadd.f32 %v547, %v671
  %v721 = vadd.f32 %v548, %v673
  %v722 = vadd.f32 %v549, %v712
  %v723 = vadd.f32 %v550, %v714
  %s724 = scalar_lea.vmem %s1, 16
  %v725 = vld [vmem:[%s724] sm:$0xf]
  %726 = vrot.lane.b32.xlu0 %v53, 124
  %v727 = vpop.permute.xlu0 %726
  %728 = vrot.lane.b32.xlu0 %v54, 124
  %v729 = vpop.permute.xlu0 %728
  %730 = vrot.lane.b32.xlu0 %v55, 124
  %v731 = vpop.permute.xlu0 %730
  %732 = vrot.lane.b32.xlu0 %v56, 124
  %v733 = vpop.permute.xlu0 %732
  %734 = vrot.lane.b32.xlu0 %v57, 124
  %v735 = vpop.permute.xlu0 %734
  %736 = vrot.lane.b32.xlu0 %v58, 124
  %v737 = vpop.permute.xlu0 %736
  %738 = vrot.lane.b32.xlu0 %v59, 124
  %v739 = vpop.permute.xlu0 %738
  %vm740 = vcmask 1014784
  %v741 = vsel %vm740, %v727, %v729
  %v742 = vsel %vm740, %v729, %v731
  %v743 = vsel %vm740, %v731, %v733
  %v744 = vsel %vm740, %v733, %v735
  %v745 = vsel %vm740, %v735, %v737
  %v746 = vsel %vm740, %v737, %v739
  %v748 = vsel %vm88, %v725, 0
  %v751 = vsel %vm92, %v741, 0
  %v754 = vsel %vm92, %v742, 0
  %v757 = vsel %vm92, %v743, 0
  %v760 = vsel %vm92, %v744, 0
  %v763 = vsel %vm92, %v745, 0
  %v766 = vsel %vm92, %v746, 0
  %768 = vmatprep.subr.bf16.mxu0 0
  %769 = vmatpush1.bf16.msra.mxu0 0
  %770 = vmatprep.subr.bf16.mxu0 0
  %771 = vmatpush1.bf16.msra.mxu0 0
  %772 = vmatprep.subr.bf16.mxu0 0
  %773 = vmatpush1.bf16.msra.mxu0 0
  %774 = vmatprep.subr.bf16.mxu0 0
  %775 = vmatpush1.bf16.msra.mxu0 0
  %776 = vmatprep.subr.bf16.mxu0 0
  %777 = vmatpush1.bf16.msra.mxu0 0
  %778 = vmatprep.subr.bf16.mxu0 0
  %779 = vmatpush1.bf16.msra.mxu0 0
  %780 = vmatprep.subr.bf16.mxu0 0
  %781 = vmatpush1.bf16.msra.mxu0 0
  %782 = vmatprep.subr.bf16.mxu0 %v754
  %783 = vmatpush1.bf16.msra.mxu0 %v751
  %784 = vmatprep.subr.bf16.mxu0 0
  %785 = vmatpush2.bf16.msra.mxu0 0
  %786 = vmatprep.subr.bf16.mxu0 0
  %787 = vmatpush2.bf16.msra.mxu0 0
  %788 = vmatprep.subr.bf16.mxu0 0
  %789 = vmatpush2.bf16.msra.mxu0 0
  %790 = vmatprep.subr.bf16.mxu0 0
  %791 = vmatpush2.bf16.msra.mxu0 0
  %792 = vmatprep.subr.bf16.mxu0 0
  %793 = vmatpush2.bf16.msra.mxu0 0
  %794 = vmatprep.subr.bf16.mxu0 0
  %795 = vmatpush2.bf16.msra.mxu0 0
  %796 = vmatprep.subr.bf16.mxu0 0
  %797 = vmatpush2.bf16.msra.mxu0 0
  %798 = vmatprep.subr.bf16.mxu0 0
  %799 = vmatpush2.bf16.msra.mxu0 0
  %800 = vmatprep.mubr.bf16.mxu0 0
  %801 = vmatmul.mubr.bf16.gmra.mxu0 %v748
  %v802 = vpop.f32.mrf.mxu0
  %v803 = vadd.f32 0.0, %v802
  %v804 = vpop.f32.mrf.mxu0
  %v805 = vadd.f32 0.0, %v804
  %v806 = vpop.f32.mrf.mxu0
  %v807 = vpop.f32.mrf.mxu0
  %808 = vdwg.mxu0
  %809 = vmatprep.subr.bf16.mxu0 0
  %810 = vmatpush1.bf16.msra.mxu0 0
  %811 = vmatprep.subr.bf16.mxu0 0
  %812 = vmatpush1.bf16.msra.mxu0 0
  %813 = vmatprep.subr.bf16.mxu0 0
  %814 = vmatpush1.bf16.msra.mxu0 0
  %815 = vmatprep.subr.bf16.mxu0 0
  %816 = vmatpush1.bf16.msra.mxu0 0
  %817 = vmatprep.subr.bf16.mxu0 0
  %818 = vmatpush1.bf16.msra.mxu0 0
  %819 = vmatprep.subr.bf16.mxu0 0
  %820 = vmatpush1.bf16.msra.mxu0 0
  %821 = vmatprep.subr.bf16.mxu0 0
  %822 = vmatpush1.bf16.msra.mxu0 0
  %823 = vmatprep.subr.bf16.mxu0 %v760
  %824 = vmatpush1.bf16.msra.mxu0 %v757
  %825 = vmatprep.subr.bf16.mxu0 0
  %826 = vmatpush2.bf16.msra.mxu0 0
  %827 = vmatprep.subr.bf16.mxu0 0
  %828 = vmatpush2.bf16.msra.mxu0 0
  %829 = vmatprep.subr.bf16.mxu0 0
  %830 = vmatpush2.bf16.msra.mxu0 0
  %831 = vmatprep.subr.bf16.mxu0 0
  %832 = vmatpush2.bf16.msra.mxu0 0
  %833 = vmatprep.subr.bf16.mxu0 0
  %834 = vmatpush2.bf16.msra.mxu0 0
  %835 = vmatprep.subr.bf16.mxu0 0
  %836 = vmatpush2.bf16.msra.mxu0 0
  %837 = vmatprep.subr.bf16.mxu0 0
  %838 = vmatpush2.bf16.msra.mxu0 0
  %839 = vmatprep.subr.bf16.mxu0 0
  %840 = vmatpush2.bf16.msra.mxu0 0
  %841 = vmatprep.mubr.bf16.mxu0 0
  %842 = vmatmul.mubr.bf16.gmra.mxu0 %v748
  %v843 = vpop.f32.mrf.mxu0
  %v844 = vadd.f32 0.0, %v843
  %v845 = vpop.f32.mrf.mxu0
  %v846 = vadd.f32 0.0, %v845
  %v847 = vpop.f32.mrf.mxu0
  %v848 = vpop.f32.mrf.mxu0
  %849 = vdwg.mxu0
  %850 = vmatprep.subr.bf16.mxu0 0
  %851 = vmatpush1.bf16.msra.mxu0 0
  %852 = vmatprep.subr.bf16.mxu0 0
  %853 = vmatpush1.bf16.msra.mxu0 0
  %854 = vmatprep.subr.bf16.mxu0 0
  %855 = vmatpush1.bf16.msra.mxu0 0
  %856 = vmatprep.subr.bf16.mxu0 0
  %857 = vmatpush1.bf16.msra.mxu0 0
  %858 = vmatprep.subr.bf16.mxu0 0
  %859 = vmatpush1.bf16.msra.mxu0 0
  %860 = vmatprep.subr.bf16.mxu0 0
  %861 = vmatpush1.bf16.msra.mxu0 0
  %862 = vmatprep.subr.bf16.mxu0 0
  %863 = vmatpush1.bf16.msra.mxu0 0
  %864 = vmatprep.subr.bf16.mxu0 %v766
  %865 = vmatpush1.bf16.msra.mxu0 %v763
  %866 = vmatprep.subr.bf16.mxu0 0
  %867 = vmatpush2.bf16.msra.mxu0 0
  %868 = vmatprep.subr.bf16.mxu0 0
  %869 = vmatpush2.bf16.msra.mxu0 0
  %870 = vmatprep.subr.bf16.mxu0 0
  %871 = vmatpush2.bf16.msra.mxu0 0
  %872 = vmatprep.subr.bf16.mxu0 0
  %873 = vmatpush2.bf16.msra.mxu0 0
  %874 = vmatprep.subr.bf16.mxu0 0
  %875 = vmatpush2.bf16.msra.mxu0 0
  %876 = vmatprep.subr.bf16.mxu0 0
  %877 = vmatpush2.bf16.msra.mxu0 0
  %878 = vmatprep.subr.bf16.mxu0 0
  %879 = vmatpush2.bf16.msra.mxu0 0
  %880 = vmatprep.subr.bf16.mxu0 0
  %881 = vmatpush2.bf16.msra.mxu0 0
  %882 = vmatprep.mubr.bf16.mxu0 0
  %883 = vmatmul.mubr.bf16.gmra.mxu0 %v748
  %v884 = vpop.f32.mrf.mxu0
  %v885 = vadd.f32 0.0, %v884
  %v886 = vpop.f32.mrf.mxu0
  %v887 = vadd.f32 0.0, %v886
  %v888 = vpop.f32.mrf.mxu0
  %v889 = vpop.f32.mrf.mxu0
  %890 = vdwg.mxu0
  %v891 = vadd.f32 %v718, %v803
  %v892 = vadd.f32 %v719, %v805
  %v893 = vadd.f32 %v720, %v844
  %v894 = vadd.f32 %v721, %v846
  %v895 = vadd.f32 %v722, %v885
  %v896 = vadd.f32 %v723, %v887
  %s897 = scalar_lea.vmem %s1, 20
  %v898 = vld [vmem:[%s897] sm:$0xf]
  %899 = vrot.lane.b32.xlu0 %v53, 108
  %v900 = vpop.permute.xlu0 %899
  %901 = vrot.lane.b32.xlu0 %v54, 108
  %v902 = vpop.permute.xlu0 %901
  %903 = vrot.lane.b32.xlu0 %v55, 108
  %v904 = vpop.permute.xlu0 %903
  %905 = vrot.lane.b32.xlu0 %v56, 108
  %v906 = vpop.permute.xlu0 %905
  %907 = vrot.lane.b32.xlu0 %v57, 108
  %v908 = vpop.permute.xlu0 %907
  %909 = vrot.lane.b32.xlu0 %v58, 108
  %v910 = vpop.permute.xlu0 %909
  %911 = vrot.lane.b32.xlu0 %v59, 108
  %v912 = vpop.permute.xlu0 %911
  %vm913 = vcmask 883712
  %v914 = vsel %vm913, %v900, %v902
  %v915 = vsel %vm913, %v902, %v904
  %v916 = vsel %vm913, %v904, %v906
  %v917 = vsel %vm913, %v906, %v908
  %v918 = vsel %vm913, %v908, %v910
  %v919 = vsel %vm913, %v910, %v912
  %v921 = vsel %vm88, %v898, 0
  %v924 = vsel %vm92, %v914, 0
  %v927 = vsel %vm92, %v915, 0
  %v930 = vsel %vm92, %v916, 0
  %v933 = vsel %vm92, %v917, 0
  %v936 = vsel %vm92, %v918, 0
  %v939 = vsel %vm92, %v919, 0
  %941 = vmatprep.subr.bf16.mxu0 0
  %942 = vmatpush1.bf16.msra.mxu0 0
  %943 = vmatprep.subr.bf16.mxu0 0
  %944 = vmatpush1.bf16.msra.mxu0 0
  %945 = vmatprep.subr.bf16.mxu0 0
  %946 = vmatpush1.bf16.msra.mxu0 0
  %947 = vmatprep.subr.bf16.mxu0 0
  %948 = vmatpush1.bf16.msra.mxu0 0
  %949 = vmatprep.subr.bf16.mxu0 0
  %950 = vmatpush1.bf16.msra.mxu0 0
  %951 = vmatprep.subr.bf16.mxu0 0
  %952 = vmatpush1.bf16.msra.mxu0 0
  %953 = vmatprep.subr.bf16.mxu0 0
  %954 = vmatpush1.bf16.msra.mxu0 0
  %955 = vmatprep.subr.bf16.mxu0 %v927
  %956 = vmatpush1.bf16.msra.mxu0 %v924
  %957 = vmatprep.subr.bf16.mxu0 0
  %958 = vmatpush2.bf16.msra.mxu0 0
  %959 = vmatprep.subr.bf16.mxu0 0
  %960 = vmatpush2.bf16.msra.mxu0 0
  %961 = vmatprep.subr.bf16.mxu0 0
  %962 = vmatpush2.bf16.msra.mxu0 0
  %963 = vmatprep.subr.bf16.mxu0 0
  %964 = vmatpush2.bf16.msra.mxu0 0
  %965 = vmatprep.subr.bf16.mxu0 0
  %966 = vmatpush2.bf16.msra.mxu0 0
  %967 = vmatprep.subr.bf16.mxu0 0
  %968 = vmatpush2.bf16.msra.mxu0 0
  %969 = vmatprep.subr.bf16.mxu0 0
  %970 = vmatpush2.bf16.msra.mxu0 0
  %971 = vmatprep.subr.bf16.mxu0 0
  %972 = vmatpush2.bf16.msra.mxu0 0
  %973 = vmatprep.mubr.bf16.mxu0 0
  %974 = vmatmul.mubr.bf16.gmra.mxu0 %v921
  %v975 = vpop.f32.mrf.mxu0
  %v976 = vadd.f32 0.0, %v975
  %v977 = vpop.f32.mrf.mxu0
  %v978 = vadd.f32 0.0, %v977
  %v979 = vpop.f32.mrf.mxu0
  %v980 = vpop.f32.mrf.mxu0
  %981 = vdwg.mxu0
  %982 = vmatprep.subr.bf16.mxu0 0
  %983 = vmatpush1.bf16.msra.mxu0 0
  %984 = vmatprep.subr.bf16.mxu0 0
  %985 = vmatpush1.bf16.msra.mxu0 0
  %986 = vmatprep.subr.bf16.mxu0 0
  %987 = vmatpush1.bf16.msra.mxu0 0
  %988 = vmatprep.subr.bf16.mxu0 0
  %989 = vmatpush1.bf16.msra.mxu0 0
  %990 = vmatprep.subr.bf16.mxu0 0
  %991 = vmatpush1.bf16.msra.mxu0 0
  %992 = vmatprep.subr.bf16.mxu0 0
  %993 = vmatpush1.bf16.msra.mxu0 0
  %994 = vmatprep.subr.bf16.mxu0 0
  %995 = vmatpush1.bf16.msra.mxu0 0
  %996 = vmatprep.subr.bf16.mxu0 %v933
  %997 = vmatpush1.bf16.msra.mxu0 %v930
  %998 = vmatprep.subr.bf16.mxu0 0
  %999 = vmatpush2.bf16.msra.mxu0 0
  %1000 = vmatprep.subr.bf16.mxu0 0
  %1001 = vmatpush2.bf16.msra.mxu0 0
  %1002 = vmatprep.subr.bf16.mxu0 0
  %1003 = vmatpush2.bf16.msra.mxu0 0
  %1004 = vmatprep.subr.bf16.mxu0 0
  %1005 = vmatpush2.bf16.msra.mxu0 0
  %1006 = vmatprep.subr.bf16.mxu0 0
  %1007 = vmatpush2.bf16.msra.mxu0 0
  %1008 = vmatprep.subr.bf16.mxu0 0
  %1009 = vmatpush2.bf16.msra.mxu0 0
  %1010 = vmatprep.subr.bf16.mxu0 0
  %1011 = vmatpush2.bf16.msra.mxu0 0
  %1012 = vmatprep.subr.bf16.mxu0 0
  %1013 = vmatpush2.bf16.msra.mxu0 0
  %1014 = vmatprep.mubr.bf16.mxu0 0
  %1015 = vmatmul.mubr.bf16.gmra.mxu0 %v921
  %v1016 = vpop.f32.mrf.mxu0
  %v1017 = vadd.f32 0.0, %v1016
  %v1018 = vpop.f32.mrf.mxu0
  %v1019 = vadd.f32 0.0, %v1018
  %v1020 = vpop.f32.mrf.mxu0
  %v1021 = vpop.f32.mrf.mxu0
  %1022 = vdwg.mxu0
  %1023 = vmatprep.subr.bf16.mxu0 0
  %1024 = vmatpush1.bf16.msra.mxu0 0
  %1025 = vmatprep.subr.bf16.mxu0 0
  %1026 = vmatpush1.bf16.msra.mxu0 0
  %1027 = vmatprep.subr.bf16.mxu0 0
  %1028 = vmatpush1.bf16.msra.mxu0 0
  %1029 = vmatprep.subr.bf16.mxu0 0
  %1030 = vmatpush1.bf16.msra.mxu0 0
  %1031 = vmatprep.subr.bf16.mxu0 0
  %1032 = vmatpush1.bf16.msra.mxu0 0
  %1033 = vmatprep.subr.bf16.mxu0 0
  %1034 = vmatpush1.bf16.msra.mxu0 0
  %1035 = vmatprep.subr.bf16.mxu0 0
  %1036 = vmatpush1.bf16.msra.mxu0 0
  %1037 = vmatprep.subr.bf16.mxu0 %v939
  %1038 = vmatpush1.bf16.msra.mxu0 %v936
  %1039 = vmatprep.subr.bf16.mxu0 0
  %1040 = vmatpush2.bf16.msra.mxu0 0
  %1041 = vmatprep.subr.bf16.mxu0 0
  %1042 = vmatpush2.bf16.msra.mxu0 0
  %1043 = vmatprep.subr.bf16.mxu0 0
  %1044 = vmatpush2.bf16.msra.mxu0 0
  %1045 = vmatprep.subr.bf16.mxu0 0
  %1046 = vmatpush2.bf16.msra.mxu0 0
  %1047 = vmatprep.subr.bf16.mxu0 0
  %1048 = vmatpush2.bf16.msra.mxu0 0
  %1049 = vmatprep.subr.bf16.mxu0 0
  %1050 = vmatpush2.bf16.msra.mxu0 0
  %1051 = vmatprep.subr.bf16.mxu0 0
  %1052 = vmatpush2.bf16.msra.mxu0 0
  %1053 = vmatprep.subr.bf16.mxu0 0
  %1054 = vmatpush2.bf16.msra.mxu0 0
  %1055 = vmatprep.mubr.bf16.mxu0 0
  %1056 = vmatmul.mubr.bf16.gmra.mxu0 %v921
  %v1057 = vpop.f32.mrf.mxu0
  %v1058 = vadd.f32 0.0, %v1057
  %v1059 = vpop.f32.mrf.mxu0
  %v1060 = vadd.f32 0.0, %v1059
  %v1061 = vpop.f32.mrf.mxu0
  %v1062 = vpop.f32.mrf.mxu0
  %1063 = vdwg.mxu0
  %v1064 = vadd.f32 %v891, %v976
  %v1065 = vadd.f32 %v892, %v978
  %v1066 = vadd.f32 %v893, %v1017
  %v1067 = vadd.f32 %v894, %v1019
  %v1068 = vadd.f32 %v895, %v1058
  %v1069 = vadd.f32 %v896, %v1060
  %s1070 = scalar_lea.vmem %s1, 24
  %v1071 = vld [vmem:[%s1070] sm:$0xf]
  %1072 = vrot.lane.b32.xlu0 %v53, 107
  %v1073 = vpop.permute.xlu0 %1072
  %1074 = vrot.lane.b32.xlu0 %v54, 107
  %v1075 = vpop.permute.xlu0 %1074
  %1076 = vrot.lane.b32.xlu0 %v55, 107
  %v1077 = vpop.permute.xlu0 %1076
  %1078 = vrot.lane.b32.xlu0 %v56, 107
  %v1079 = vpop.permute.xlu0 %1078
  %1080 = vrot.lane.b32.xlu0 %v57, 107
  %v1081 = vpop.permute.xlu0 %1080
  %1082 = vrot.lane.b32.xlu0 %v58, 107
  %v1083 = vpop.permute.xlu0 %1082
  %1084 = vrot.lane.b32.xlu0 %v59, 107
  %v1085 = vpop.permute.xlu0 %1084
  %vm1086 = vcmask 875520
  %v1087 = vsel %vm1086, %v1073, %v1075
  %v1088 = vsel %vm1086, %v1075, %v1077
  %v1089 = vsel %vm1086, %v1077, %v1079
  %v1090 = vsel %vm1086, %v1079, %v1081
  %v1091 = vsel %vm1086, %v1081, %v1083
  %v1092 = vsel %vm1086, %v1083, %v1085
  %v1094 = vsel %vm88, %v1071, 0
  %v1097 = vsel %vm92, %v1087, 0
  %v1100 = vsel %vm92, %v1088, 0
  %v1103 = vsel %vm92, %v1089, 0
  %v1106 = vsel %vm92, %v1090, 0
  %v1109 = vsel %vm92, %v1091, 0
  %v1112 = vsel %vm92, %v1092, 0
  %1114 = vmatprep.subr.bf16.mxu0 0
  %1115 = vmatpush1.bf16.msra.mxu0 0
  %1116 = vmatprep.subr.bf16.mxu0 0
  %1117 = vmatpush1.bf16.msra.mxu0 0
  %1118 = vmatprep.subr.bf16.mxu0 0
  %1119 = vmatpush1.bf16.msra.mxu0 0
  %1120 = vmatprep.subr.bf16.mxu0 0
  %1121 = vmatpush1.bf16.msra.mxu0 0
  %1122 = vmatprep.subr.bf16.mxu0 0
  %1123 = vmatpush1.bf16.msra.mxu0 0
  %1124 = vmatprep.subr.bf16.mxu0 0
  %1125 = vmatpush1.bf16.msra.mxu0 0
  %1126 = vmatprep.subr.bf16.mxu0 0
  %1127 = vmatpush1.bf16.msra.mxu0 0
  %1128 = vmatprep.subr.bf16.mxu0 %v1100
  %1129 = vmatpush1.bf16.msra.mxu0 %v1097
  %1130 = vmatprep.subr.bf16.mxu0 0
  %1131 = vmatpush2.bf16.msra.mxu0 0
  %1132 = vmatprep.subr.bf16.mxu0 0
  %1133 = vmatpush2.bf16.msra.mxu0 0
  %1134 = vmatprep.subr.bf16.mxu0 0
  %1135 = vmatpush2.bf16.msra.mxu0 0
  %1136 = vmatprep.subr.bf16.mxu0 0
  %1137 = vmatpush2.bf16.msra.mxu0 0
  %1138 = vmatprep.subr.bf16.mxu0 0
  %1139 = vmatpush2.bf16.msra.mxu0 0
  %1140 = vmatprep.subr.bf16.mxu0 0
  %1141 = vmatpush2.bf16.msra.mxu0 0
  %1142 = vmatprep.subr.bf16.mxu0 0
  %1143 = vmatpush2.bf16.msra.mxu0 0
  %1144 = vmatprep.subr.bf16.mxu0 0
  %1145 = vmatpush2.bf16.msra.mxu0 0
  %1146 = vmatprep.mubr.bf16.mxu0 0
  %1147 = vmatmul.mubr.bf16.gmra.mxu0 %v1094
  %v1148 = vpop.f32.mrf.mxu0
  %v1149 = vadd.f32 0.0, %v1148
  %v1150 = vpop.f32.mrf.mxu0
  %v1151 = vadd.f32 0.0, %v1150
  %v1152 = vpop.f32.mrf.mxu0
  %v1153 = vpop.f32.mrf.mxu0
  %1154 = vdwg.mxu0
  %1155 = vmatprep.subr.bf16.mxu0 0
  %1156 = vmatpush1.bf16.msra.mxu0 0
  %1157 = vmatprep.subr.bf16.mxu0 0
  %1158 = vmatpush1.bf16.msra.mxu0 0
  %1159 = vmatprep.subr.bf16.mxu0 0
  %1160 = vmatpush1.bf16.msra.mxu0 0
  %1161 = vmatprep.subr.bf16.mxu0 0
  %1162 = vmatpush1.bf16.msra.mxu0 0
  %1163 = vmatprep.subr.bf16.mxu0 0
  %1164 = vmatpush1.bf16.msra.mxu0 0
  %1165 = vmatprep.subr.bf16.mxu0 0
  %1166 = vmatpush1.bf16.msra.mxu0 0
  %1167 = vmatprep.subr.bf16.mxu0 0
  %1168 = vmatpush1.bf16.msra.mxu0 0
  %1169 = vmatprep.subr.bf16.mxu0 %v1106
  %1170 = vmatpush1.bf16.msra.mxu0 %v1103
  %1171 = vmatprep.subr.bf16.mxu0 0
  %1172 = vmatpush2.bf16.msra.mxu0 0
  %1173 = vmatprep.subr.bf16.mxu0 0
  %1174 = vmatpush2.bf16.msra.mxu0 0
  %1175 = vmatprep.subr.bf16.mxu0 0
  %1176 = vmatpush2.bf16.msra.mxu0 0
  %1177 = vmatprep.subr.bf16.mxu0 0
  %1178 = vmatpush2.bf16.msra.mxu0 0
  %1179 = vmatprep.subr.bf16.mxu0 0
  %1180 = vmatpush2.bf16.msra.mxu0 0
  %1181 = vmatprep.subr.bf16.mxu0 0
  %1182 = vmatpush2.bf16.msra.mxu0 0
  %1183 = vmatprep.subr.bf16.mxu0 0
  %1184 = vmatpush2.bf16.msra.mxu0 0
  %1185 = vmatprep.subr.bf16.mxu0 0
  %1186 = vmatpush2.bf16.msra.mxu0 0
  %1187 = vmatprep.mubr.bf16.mxu0 0
  %1188 = vmatmul.mubr.bf16.gmra.mxu0 %v1094
  %v1189 = vpop.f32.mrf.mxu0
  %v1190 = vadd.f32 0.0, %v1189
  %v1191 = vpop.f32.mrf.mxu0
  %v1192 = vadd.f32 0.0, %v1191
  %v1193 = vpop.f32.mrf.mxu0
  %v1194 = vpop.f32.mrf.mxu0
  %1195 = vdwg.mxu0
  %1196 = vmatprep.subr.bf16.mxu0 0
  %1197 = vmatpush1.bf16.msra.mxu0 0
  %1198 = vmatprep.subr.bf16.mxu0 0
  %1199 = vmatpush1.bf16.msra.mxu0 0
  %1200 = vmatprep.subr.bf16.mxu0 0
  %1201 = vmatpush1.bf16.msra.mxu0 0
  %1202 = vmatprep.subr.bf16.mxu0 0
  %1203 = vmatpush1.bf16.msra.mxu0 0
  %1204 = vmatprep.subr.bf16.mxu0 0
  %1205 = vmatpush1.bf16.msra.mxu0 0
  %1206 = vmatprep.subr.bf16.mxu0 0
  %1207 = vmatpush1.bf16.msra.mxu0 0
  %1208 = vmatprep.subr.bf16.mxu0 0
  %1209 = vmatpush1.bf16.msra.mxu0 0
  %1210 = vmatprep.subr.bf16.mxu0 %v1112
  %1211 = vmatpush1.bf16.msra.mxu0 %v1109
  %1212 = vmatprep.subr.bf16.mxu0 0
  %1213 = vmatpush2.bf16.msra.mxu0 0
  %1214 = vmatprep.subr.bf16.mxu0 0
  %1215 = vmatpush2.bf16.msra.mxu0 0
  %1216 = vmatprep.subr.bf16.mxu0 0
  %1217 = vmatpush2.bf16.msra.mxu0 0
  %1218 = vmatprep.subr.bf16.mxu0 0
  %1219 = vmatpush2.bf16.msra.mxu0 0
  %1220 = vmatprep.subr.bf16.mxu0 0
  %1221 = vmatpush2.bf16.msra.mxu0 0
  %1222 = vmatprep.subr.bf16.mxu0 0
  %1223 = vmatpush2.bf16.msra.mxu0 0
  %1224 = vmatprep.subr.bf16.mxu0 0
  %1225 = vmatpush2.bf16.msra.mxu0 0
  %1226 = vmatprep.subr.bf16.mxu0 0
  %1227 = vmatpush2.bf16.msra.mxu0 0
  %1228 = vmatprep.mubr.bf16.mxu0 0
  %1229 = vmatmul.mubr.bf16.gmra.mxu0 %v1094
  %v1230 = vpop.f32.mrf.mxu0
  %v1231 = vadd.f32 0.0, %v1230
  %v1232 = vpop.f32.mrf.mxu0
  %v1233 = vadd.f32 0.0, %v1232
  %v1234 = vpop.f32.mrf.mxu0
  %v1235 = vpop.f32.mrf.mxu0
  %1236 = vdwg.mxu0
  %v1237 = vadd.f32 %v1064, %v1149
  %v1238 = vadd.f32 %v1065, %v1151
  %v1239 = vadd.f32 %v1066, %v1190
  %v1240 = vadd.f32 %v1067, %v1192
  %v1241 = vadd.f32 %v1068, %v1231
  %v1242 = vadd.f32 %v1069, %v1233
  %s1243 = scalar_lea.vmem %s1, 28
  %v1244 = vld [vmem:[%s1243] sm:$0xf]
  %1245 = vrot.lane.b32.xlu0 %v53, 106
  %v1246 = vpop.permute.xlu0 %1245
  %1247 = vrot.lane.b32.xlu0 %v54, 106
  %v1248 = vpop.permute.xlu0 %1247
  %1249 = vrot.lane.b32.xlu0 %v55, 106
  %v1250 = vpop.permute.xlu0 %1249
  %1251 = vrot.lane.b32.xlu0 %v56, 106
  %v1252 = vpop.permute.xlu0 %1251
  %1253 = vrot.lane.b32.xlu0 %v57, 106
  %v1254 = vpop.permute.xlu0 %1253
  %1255 = vrot.lane.b32.xlu0 %v58, 106
  %v1256 = vpop.permute.xlu0 %1255
  %1257 = vrot.lane.b32.xlu0 %v59, 106
  %v1258 = vpop.permute.xlu0 %1257
  %vm1259 = vcmask 867328
  %v1260 = vsel %vm1259, %v1246, %v1248
  %v1261 = vsel %vm1259, %v1248, %v1250
  %v1262 = vsel %vm1259, %v1250, %v1252
  %v1263 = vsel %vm1259, %v1252, %v1254
  %v1264 = vsel %vm1259, %v1254, %v1256
  %v1265 = vsel %vm1259, %v1256, %v1258
  %v1267 = vsel %vm88, %v1244, 0
  %v1270 = vsel %vm92, %v1260, 0
  %v1273 = vsel %vm92, %v1261, 0
  %v1276 = vsel %vm92, %v1262, 0
  %v1279 = vsel %vm92, %v1263, 0
  %v1282 = vsel %vm92, %v1264, 0
  %v1285 = vsel %vm92, %v1265, 0
  %1287 = vmatprep.subr.bf16.mxu0 0
  %1288 = vmatpush1.bf16.msra.mxu0 0
  %1289 = vmatprep.subr.bf16.mxu0 0
  %1290 = vmatpush1.bf16.msra.mxu0 0
  %1291 = vmatprep.subr.bf16.mxu0 0
  %1292 = vmatpush1.bf16.msra.mxu0 0
  %1293 = vmatprep.subr.bf16.mxu0 0
  %1294 = vmatpush1.bf16.msra.mxu0 0
  %1295 = vmatprep.subr.bf16.mxu0 0
  %1296 = vmatpush1.bf16.msra.mxu0 0
  %1297 = vmatprep.subr.bf16.mxu0 0
  %1298 = vmatpush1.bf16.msra.mxu0 0
  %1299 = vmatprep.subr.bf16.mxu0 0
  %1300 = vmatpush1.bf16.msra.mxu0 0
  %1301 = vmatprep.subr.bf16.mxu0 %v1273
  %1302 = vmatpush1.bf16.msra.mxu0 %v1270
  %1303 = vmatprep.subr.bf16.mxu0 0
  %1304 = vmatpush2.bf16.msra.mxu0 0
  %1305 = vmatprep.subr.bf16.mxu0 0
  %1306 = vmatpush2.bf16.msra.mxu0 0
  %1307 = vmatprep.subr.bf16.mxu0 0
  %1308 = vmatpush2.bf16.msra.mxu0 0
  %1309 = vmatprep.subr.bf16.mxu0 0
  %1310 = vmatpush2.bf16.msra.mxu0 0
  %1311 = vmatprep.subr.bf16.mxu0 0
  %1312 = vmatpush2.bf16.msra.mxu0 0
  %1313 = vmatprep.subr.bf16.mxu0 0
  %1314 = vmatpush2.bf16.msra.mxu0 0
  %1315 = vmatprep.subr.bf16.mxu0 0
  %1316 = vmatpush2.bf16.msra.mxu0 0
  %1317 = vmatprep.subr.bf16.mxu0 0
  %1318 = vmatpush2.bf16.msra.mxu0 0
  %1319 = vmatprep.mubr.bf16.mxu0 0
  %1320 = vmatmul.mubr.bf16.gmra.mxu0 %v1267
  %v1321 = vpop.f32.mrf.mxu0
  %v1322 = vadd.f32 0.0, %v1321
  %v1323 = vpop.f32.mrf.mxu0
  %v1324 = vadd.f32 0.0, %v1323
  %v1325 = vpop.f32.mrf.mxu0
  %v1326 = vpop.f32.mrf.mxu0
  %1327 = vdwg.mxu0
  %1328 = vmatprep.subr.bf16.mxu0 0
  %1329 = vmatpush1.bf16.msra.mxu0 0
  %1330 = vmatprep.subr.bf16.mxu0 0
  %1331 = vmatpush1.bf16.msra.mxu0 0
  %1332 = vmatprep.subr.bf16.mxu0 0
  %1333 = vmatpush1.bf16.msra.mxu0 0
  %1334 = vmatprep.subr.bf16.mxu0 0
  %1335 = vmatpush1.bf16.msra.mxu0 0
  %1336 = vmatprep.subr.bf16.mxu0 0
  %1337 = vmatpush1.bf16.msra.mxu0 0
  %1338 = vmatprep.subr.bf16.mxu0 0
  %1339 = vmatpush1.bf16.msra.mxu0 0
  %1340 = vmatprep.subr.bf16.mxu0 0
  %1341 = vmatpush1.bf16.msra.mxu0 0
  %1342 = vmatprep.subr.bf16.mxu0 %v1279
  %1343 = vmatpush1.bf16.msra.mxu0 %v1276
  %1344 = vmatprep.subr.bf16.mxu0 0
  %1345 = vmatpush2.bf16.msra.mxu0 0
  %1346 = vmatprep.subr.bf16.mxu0 0
  %1347 = vmatpush2.bf16.msra.mxu0 0
  %1348 = vmatprep.subr.bf16.mxu0 0
  %1349 = vmatpush2.bf16.msra.mxu0 0
  %1350 = vmatprep.subr.bf16.mxu0 0
  %1351 = vmatpush2.bf16.msra.mxu0 0
  %1352 = vmatprep.subr.bf16.mxu0 0
  %1353 = vmatpush2.bf16.msra.mxu0 0
  %1354 = vmatprep.subr.bf16.mxu0 0
  %1355 = vmatpush2.bf16.msra.mxu0 0
  %1356 = vmatprep.subr.bf16.mxu0 0
  %1357 = vmatpush2.bf16.msra.mxu0 0
  %1358 = vmatprep.subr.bf16.mxu0 0
  %1359 = vmatpush2.bf16.msra.mxu0 0
  %1360 = vmatprep.mubr.bf16.mxu0 0
  %1361 = vmatmul.mubr.bf16.gmra.mxu0 %v1267
  %v1362 = vpop.f32.mrf.mxu0
  %v1363 = vadd.f32 0.0, %v1362
  %v1364 = vpop.f32.mrf.mxu0
  %v1365 = vadd.f32 0.0, %v1364
  %v1366 = vpop.f32.mrf.mxu0
  %v1367 = vpop.f32.mrf.mxu0
  %1368 = vdwg.mxu0
  %1369 = vmatprep.subr.bf16.mxu0 0
  %1370 = vmatpush1.bf16.msra.mxu0 0
  %1371 = vmatprep.subr.bf16.mxu0 0
  %1372 = vmatpush1.bf16.msra.mxu0 0
  %1373 = vmatprep.subr.bf16.mxu0 0
  %1374 = vmatpush1.bf16.msra.mxu0 0
  %1375 = vmatprep.subr.bf16.mxu0 0
  %1376 = vmatpush1.bf16.msra.mxu0 0
  %1377 = vmatprep.subr.bf16.mxu0 0
  %1378 = vmatpush1.bf16.msra.mxu0 0
  %1379 = vmatprep.subr.bf16.mxu0 0
  %1380 = vmatpush1.bf16.msra.mxu0 0
  %1381 = vmatprep.subr.bf16.mxu0 0
  %1382 = vmatpush1.bf16.msra.mxu0 0
  %1383 = vmatprep.subr.bf16.mxu0 %v1285
  %1384 = vmatpush1.bf16.msra.mxu0 %v1282
  %1385 = vmatprep.subr.bf16.mxu0 0
  %1386 = vmatpush2.bf16.msra.mxu0 0
  %1387 = vmatprep.subr.bf16.mxu0 0
  %1388 = vmatpush2.bf16.msra.mxu0 0
  %1389 = vmatprep.subr.bf16.mxu0 0
  %1390 = vmatpush2.bf16.msra.mxu0 0
  %1391 = vmatprep.subr.bf16.mxu0 0
  %1392 = vmatpush2.bf16.msra.mxu0 0
  %1393 = vmatprep.subr.bf16.mxu0 0
  %1394 = vmatpush2.bf16.msra.mxu0 0
  %1395 = vmatprep.subr.bf16.mxu0 0
  %1396 = vmatpush2.bf16.msra.mxu0 0
  %1397 = vmatprep.subr.bf16.mxu0 0
  %1398 = vmatpush2.bf16.msra.mxu0 0
  %1399 = vmatprep.subr.bf16.mxu0 0
  %1400 = vmatpush2.bf16.msra.mxu0 0
  %1401 = vmatprep.mubr.bf16.mxu0 0
  %1402 = vmatmul.mubr.bf16.gmra.mxu0 %v1267
  %v1403 = vpop.f32.mrf.mxu0
  %v1404 = vadd.f32 0.0, %v1403
  %v1405 = vpop.f32.mrf.mxu0
  %v1406 = vadd.f32 0.0, %v1405
  %v1407 = vpop.f32.mrf.mxu0
  %v1408 = vpop.f32.mrf.mxu0
  %1409 = vdwg.mxu0
  %v1410 = vadd.f32 %v1237, %v1322
  %v1411 = vadd.f32 %v1238, %v1324
  %v1412 = vadd.f32 %v1239, %v1363
  %v1413 = vadd.f32 %v1240, %v1365
  %v1414 = vadd.f32 %v1241, %v1404
  %v1415 = vadd.f32 %v1242, %v1406
  %s1416 = scalar_lea.vmem %s1, 32
  %v1417 = vld [vmem:[%s1416] sm:$0xf]
  %1418 = vrot.lane.b32.xlu0 %v53, 105
  %v1419 = vpop.permute.xlu0 %1418
  %1420 = vrot.lane.b32.xlu0 %v54, 105
  %v1421 = vpop.permute.xlu0 %1420
  %1422 = vrot.lane.b32.xlu0 %v55, 105
  %v1423 = vpop.permute.xlu0 %1422
  %1424 = vrot.lane.b32.xlu0 %v56, 105
  %v1425 = vpop.permute.xlu0 %1424
  %1426 = vrot.lane.b32.xlu0 %v57, 105
  %v1427 = vpop.permute.xlu0 %1426
  %1428 = vrot.lane.b32.xlu0 %v58, 105
  %v1429 = vpop.permute.xlu0 %1428
  %1430 = vrot.lane.b32.xlu0 %v59, 105
  %v1431 = vpop.permute.xlu0 %1430
  %vm1432 = vcmask 859136
  %v1433 = vsel %vm1432, %v1419, %v1421
  %v1434 = vsel %vm1432, %v1421, %v1423
  %v1435 = vsel %vm1432, %v1423, %v1425
  %v1436 = vsel %vm1432, %v1425, %v1427
  %v1437 = vsel %vm1432, %v1427, %v1429
  %v1438 = vsel %vm1432, %v1429, %v1431
  %v1440 = vsel %vm88, %v1417, 0
  %v1443 = vsel %vm92, %v1433, 0
  %v1446 = vsel %vm92, %v1434, 0
  %v1449 = vsel %vm92, %v1435, 0
  %v1452 = vsel %vm92, %v1436, 0
  %v1455 = vsel %vm92, %v1437, 0
  %v1458 = vsel %vm92, %v1438, 0
  %1460 = vmatprep.subr.bf16.mxu0 0
  %1461 = vmatpush1.bf16.msra.mxu0 0
  %1462 = vmatprep.subr.bf16.mxu0 0
  %1463 = vmatpush1.bf16.msra.mxu0 0
  %1464 = vmatprep.subr.bf16.mxu0 0
  %1465 = vmatpush1.bf16.msra.mxu0 0
  %1466 = vmatprep.subr.bf16.mxu0 0
  %1467 = vmatpush1.bf16.msra.mxu0 0
  %1468 = vmatprep.subr.bf16.mxu0 0
  %1469 = vmatpush1.bf16.msra.mxu0 0
  %1470 = vmatprep.subr.bf16.mxu0 0
  %1471 = vmatpush1.bf16.msra.mxu0 0
  %1472 = vmatprep.subr.bf16.mxu0 0
  %1473 = vmatpush1.bf16.msra.mxu0 0
  %1474 = vmatprep.subr.bf16.mxu0 %v1446
  %1475 = vmatpush1.bf16.msra.mxu0 %v1443
  %1476 = vmatprep.subr.bf16.mxu0 0
  %1477 = vmatpush2.bf16.msra.mxu0 0
  %1478 = vmatprep.subr.bf16.mxu0 0
  %1479 = vmatpush2.bf16.msra.mxu0 0
  %1480 = vmatprep.subr.bf16.mxu0 0
  %1481 = vmatpush2.bf16.msra.mxu0 0
  %1482 = vmatprep.subr.bf16.mxu0 0
  %1483 = vmatpush2.bf16.msra.mxu0 0
  %1484 = vmatprep.subr.bf16.mxu0 0
  %1485 = vmatpush2.bf16.msra.mxu0 0
  %1486 = vmatprep.subr.bf16.mxu0 0
  %1487 = vmatpush2.bf16.msra.mxu0 0
  %1488 = vmatprep.subr.bf16.mxu0 0
  %1489 = vmatpush2.bf16.msra.mxu0 0
  %1490 = vmatprep.subr.bf16.mxu0 0
  %1491 = vmatpush2.bf16.msra.mxu0 0
  %1492 = vmatprep.mubr.bf16.mxu0 0
  %1493 = vmatmul.mubr.bf16.gmra.mxu0 %v1440
  %v1494 = vpop.f32.mrf.mxu0
  %v1495 = vadd.f32 0.0, %v1494
  %v1496 = vpop.f32.mrf.mxu0
  %v1497 = vadd.f32 0.0, %v1496
  %v1498 = vpop.f32.mrf.mxu0
  %v1499 = vpop.f32.mrf.mxu0
  %1500 = vdwg.mxu0
  %1501 = vmatprep.subr.bf16.mxu0 0
  %1502 = vmatpush1.bf16.msra.mxu0 0
  %1503 = vmatprep.subr.bf16.mxu0 0
  %1504 = vmatpush1.bf16.msra.mxu0 0
  %1505 = vmatprep.subr.bf16.mxu0 0
  %1506 = vmatpush1.bf16.msra.mxu0 0
  %1507 = vmatprep.subr.bf16.mxu0 0
  %1508 = vmatpush1.bf16.msra.mxu0 0
  %1509 = vmatprep.subr.bf16.mxu0 0
  %1510 = vmatpush1.bf16.msra.mxu0 0
  %1511 = vmatprep.subr.bf16.mxu0 0
  %1512 = vmatpush1.bf16.msra.mxu0 0
  %1513 = vmatprep.subr.bf16.mxu0 0
  %1514 = vmatpush1.bf16.msra.mxu0 0
  %1515 = vmatprep.subr.bf16.mxu0 %v1452
  %1516 = vmatpush1.bf16.msra.mxu0 %v1449
  %1517 = vmatprep.subr.bf16.mxu0 0
  %1518 = vmatpush2.bf16.msra.mxu0 0
  %1519 = vmatprep.subr.bf16.mxu0 0
  %1520 = vmatpush2.bf16.msra.mxu0 0
  %1521 = vmatprep.subr.bf16.mxu0 0
  %1522 = vmatpush2.bf16.msra.mxu0 0
  %1523 = vmatprep.subr.bf16.mxu0 0
  %1524 = vmatpush2.bf16.msra.mxu0 0
  %1525 = vmatprep.subr.bf16.mxu0 0
  %1526 = vmatpush2.bf16.msra.mxu0 0
  %1527 = vmatprep.subr.bf16.mxu0 0
  %1528 = vmatpush2.bf16.msra.mxu0 0
  %1529 = vmatprep.subr.bf16.mxu0 0
  %1530 = vmatpush2.bf16.msra.mxu0 0
  %1531 = vmatprep.subr.bf16.mxu0 0
  %1532 = vmatpush2.bf16.msra.mxu0 0
  %1533 = vmatprep.mubr.bf16.mxu0 0
  %1534 = vmatmul.mubr.bf16.gmra.mxu0 %v1440
  %v1535 = vpop.f32.mrf.mxu0
  %v1536 = vadd.f32 0.0, %v1535
  %v1537 = vpop.f32.mrf.mxu0
  %v1538 = vadd.f32 0.0, %v1537
  %v1539 = vpop.f32.mrf.mxu0
  %v1540 = vpop.f32.mrf.mxu0
  %1541 = vdwg.mxu0
  %1542 = vmatprep.subr.bf16.mxu0 0
  %1543 = vmatpush1.bf16.msra.mxu0 0
  %1544 = vmatprep.subr.bf16.mxu0 0
  %1545 = vmatpush1.bf16.msra.mxu0 0
  %1546 = vmatprep.subr.bf16.mxu0 0
  %1547 = vmatpush1.bf16.msra.mxu0 0
  %1548 = vmatprep.subr.bf16.mxu0 0
  %1549 = vmatpush1.bf16.msra.mxu0 0
  %1550 = vmatprep.subr.bf16.mxu0 0
  %1551 = vmatpush1.bf16.msra.mxu0 0
  %1552 = vmatprep.subr.bf16.mxu0 0
  %1553 = vmatpush1.bf16.msra.mxu0 0
  %1554 = vmatprep.subr.bf16.mxu0 0
  %1555 = vmatpush1.bf16.msra.mxu0 0
  %1556 = vmatprep.subr.bf16.mxu0 %v1458
  %1557 = vmatpush1.bf16.msra.mxu0 %v1455
  %1558 = vmatprep.subr.bf16.mxu0 0
  %1559 = vmatpush2.bf16.msra.mxu0 0
  %1560 = vmatprep.subr.bf16.mxu0 0
  %1561 = vmatpush2.bf16.msra.mxu0 0
  %1562 = vmatprep.subr.bf16.mxu0 0
  %1563 = vmatpush2.bf16.msra.mxu0 0
  %1564 = vmatprep.subr.bf16.mxu0 0
  %1565 = vmatpush2.bf16.msra.mxu0 0
  %1566 = vmatprep.subr.bf16.mxu0 0
  %1567 = vmatpush2.bf16.msra.mxu0 0
  %1568 = vmatprep.subr.bf16.mxu0 0
  %1569 = vmatpush2.bf16.msra.mxu0 0
  %1570 = vmatprep.subr.bf16.mxu0 0
  %1571 = vmatpush2.bf16.msra.mxu0 0
  %1572 = vmatprep.subr.bf16.mxu0 0
  %1573 = vmatpush2.bf16.msra.mxu0 0
  %1574 = vmatprep.mubr.bf16.mxu0 0
  %1575 = vmatmul.mubr.bf16.gmra.mxu0 %v1440
  %v1576 = vpop.f32.mrf.mxu0
  %v1577 = vadd.f32 0.0, %v1576
  %v1578 = vpop.f32.mrf.mxu0
  %v1579 = vadd.f32 0.0, %v1578
  %v1580 = vpop.f32.mrf.mxu0
  %v1581 = vpop.f32.mrf.mxu0
  %1582 = vdwg.mxu0
  %v1583 = vadd.f32 %v1410, %v1495
  %v1584 = vadd.f32 %v1411, %v1497
  %v1585 = vadd.f32 %v1412, %v1536
  %v1586 = vadd.f32 %v1413, %v1538
  %v1587 = vadd.f32 %v1414, %v1577
  %v1588 = vadd.f32 %v1415, %v1579
  %s1589 = scalar_lea.vmem %s1, 36
  %v1590 = vld [vmem:[%s1589] sm:$0xf]
  %1591 = vrot.lane.b32.xlu0 %v53, 104
  %v1592 = vpop.permute.xlu0 %1591
  %1593 = vrot.lane.b32.xlu0 %v54, 104
  %v1594 = vpop.permute.xlu0 %1593
  %1595 = vrot.lane.b32.xlu0 %v55, 104
  %v1596 = vpop.permute.xlu0 %1595
  %1597 = vrot.lane.b32.xlu0 %v56, 104
  %v1598 = vpop.permute.xlu0 %1597
  %1599 = vrot.lane.b32.xlu0 %v57, 104
  %v1600 = vpop.permute.xlu0 %1599
  %1601 = vrot.lane.b32.xlu0 %v58, 104
  %v1602 = vpop.permute.xlu0 %1601
  %1603 = vrot.lane.b32.xlu0 %v59, 104
  %v1604 = vpop.permute.xlu0 %1603
  %vm1605 = vcmask 850944
  %v1606 = vsel %vm1605, %v1592, %v1594
  %v1607 = vsel %vm1605, %v1594, %v1596
  %v1608 = vsel %vm1605, %v1596, %v1598
  %v1609 = vsel %vm1605, %v1598, %v1600
  %v1610 = vsel %vm1605, %v1600, %v1602
  %v1611 = vsel %vm1605, %v1602, %v1604
  %v1613 = vsel %vm88, %v1590, 0
  %v1616 = vsel %vm92, %v1606, 0
  %v1619 = vsel %vm92, %v1607, 0
  %v1622 = vsel %vm92, %v1608, 0
  %v1625 = vsel %vm92, %v1609, 0
  %v1628 = vsel %vm92, %v1610, 0
  %v1631 = vsel %vm92, %v1611, 0
  %1633 = vmatprep.subr.bf16.mxu0 0
  %1634 = vmatpush1.bf16.msra.mxu0 0
  %1635 = vmatprep.subr.bf16.mxu0 0
  %1636 = vmatpush1.bf16.msra.mxu0 0
  %1637 = vmatprep.subr.bf16.mxu0 0
  %1638 = vmatpush1.bf16.msra.mxu0 0
  %1639 = vmatprep.subr.bf16.mxu0 0
  %1640 = vmatpush1.bf16.msra.mxu0 0
  %1641 = vmatprep.subr.bf16.mxu0 0
  %1642 = vmatpush1.bf16.msra.mxu0 0
  %1643 = vmatprep.subr.bf16.mxu0 0
  %1644 = vmatpush1.bf16.msra.mxu0 0
  %1645 = vmatprep.subr.bf16.mxu0 0
  %1646 = vmatpush1.bf16.msra.mxu0 0
  %1647 = vmatprep.subr.bf16.mxu0 %v1619
  %1648 = vmatpush1.bf16.msra.mxu0 %v1616
  %1649 = vmatprep.subr.bf16.mxu0 0
  %1650 = vmatpush2.bf16.msra.mxu0 0
  %1651 = vmatprep.subr.bf16.mxu0 0
  %1652 = vmatpush2.bf16.msra.mxu0 0
  %1653 = vmatprep.subr.bf16.mxu0 0
  %1654 = vmatpush2.bf16.msra.mxu0 0
  %1655 = vmatprep.subr.bf16.mxu0 0
  %1656 = vmatpush2.bf16.msra.mxu0 0
  %1657 = vmatprep.subr.bf16.mxu0 0
  %1658 = vmatpush2.bf16.msra.mxu0 0
  %1659 = vmatprep.subr.bf16.mxu0 0
  %1660 = vmatpush2.bf16.msra.mxu0 0
  %1661 = vmatprep.subr.bf16.mxu0 0
  %1662 = vmatpush2.bf16.msra.mxu0 0
  %1663 = vmatprep.subr.bf16.mxu0 0
  %1664 = vmatpush2.bf16.msra.mxu0 0
  %1665 = vmatprep.mubr.bf16.mxu0 0
  %1666 = vmatmul.mubr.bf16.gmra.mxu0 %v1613
  %v1667 = vpop.f32.mrf.mxu0
  %v1668 = vadd.f32 0.0, %v1667
  %v1669 = vpop.f32.mrf.mxu0
  %v1670 = vadd.f32 0.0, %v1669
  %v1671 = vpop.f32.mrf.mxu0
  %v1672 = vpop.f32.mrf.mxu0
  %1673 = vdwg.mxu0
  %1674 = vmatprep.subr.bf16.mxu0 0
  %1675 = vmatpush1.bf16.msra.mxu0 0
  %1676 = vmatprep.subr.bf16.mxu0 0
  %1677 = vmatpush1.bf16.msra.mxu0 0
  %1678 = vmatprep.subr.bf16.mxu0 0
  %1679 = vmatpush1.bf16.msra.mxu0 0
  %1680 = vmatprep.subr.bf16.mxu0 0
  %1681 = vmatpush1.bf16.msra.mxu0 0
  %1682 = vmatprep.subr.bf16.mxu0 0
  %1683 = vmatpush1.bf16.msra.mxu0 0
  %1684 = vmatprep.subr.bf16.mxu0 0
  %1685 = vmatpush1.bf16.msra.mxu0 0
  %1686 = vmatprep.subr.bf16.mxu0 0
  %1687 = vmatpush1.bf16.msra.mxu0 0
  %1688 = vmatprep.subr.bf16.mxu0 %v1625
  %1689 = vmatpush1.bf16.msra.mxu0 %v1622
  %1690 = vmatprep.subr.bf16.mxu0 0
  %1691 = vmatpush2.bf16.msra.mxu0 0
  %1692 = vmatprep.subr.bf16.mxu0 0
  %1693 = vmatpush2.bf16.msra.mxu0 0
  %1694 = vmatprep.subr.bf16.mxu0 0
  %1695 = vmatpush2.bf16.msra.mxu0 0
  %1696 = vmatprep.subr.bf16.mxu0 0
  %1697 = vmatpush2.bf16.msra.mxu0 0
  %1698 = vmatprep.subr.bf16.mxu0 0
  %1699 = vmatpush2.bf16.msra.mxu0 0
  %1700 = vmatprep.subr.bf16.mxu0 0
  %1701 = vmatpush2.bf16.msra.mxu0 0
  %1702 = vmatprep.subr.bf16.mxu0 0
  %1703 = vmatpush2.bf16.msra.mxu0 0
  %1704 = vmatprep.subr.bf16.mxu0 0
  %1705 = vmatpush2.bf16.msra.mxu0 0
  %1706 = vmatprep.mubr.bf16.mxu0 0
  %1707 = vmatmul.mubr.bf16.gmra.mxu0 %v1613
  %v1708 = vpop.f32.mrf.mxu0
  %v1709 = vadd.f32 0.0, %v1708
  %v1710 = vpop.f32.mrf.mxu0
  %v1711 = vadd.f32 0.0, %v1710
  %v1712 = vpop.f32.mrf.mxu0
  %v1713 = vpop.f32.mrf.mxu0
  %1714 = vdwg.mxu0
  %1715 = vmatprep.subr.bf16.mxu0 0
  %1716 = vmatpush1.bf16.msra.mxu0 0
  %1717 = vmatprep.subr.bf16.mxu0 0
  %1718 = vmatpush1.bf16.msra.mxu0 0
  %1719 = vmatprep.subr.bf16.mxu0 0
  %1720 = vmatpush1.bf16.msra.mxu0 0
  %1721 = vmatprep.subr.bf16.mxu0 0
  %1722 = vmatpush1.bf16.msra.mxu0 0
  %1723 = vmatprep.subr.bf16.mxu0 0
  %1724 = vmatpush1.bf16.msra.mxu0 0
  %1725 = vmatprep.subr.bf16.mxu0 0
  %1726 = vmatpush1.bf16.msra.mxu0 0
  %1727 = vmatprep.subr.bf16.mxu0 0
  %1728 = vmatpush1.bf16.msra.mxu0 0
  %1729 = vmatprep.subr.bf16.mxu0 %v1631
  %1730 = vmatpush1.bf16.msra.mxu0 %v1628
  %1731 = vmatprep.subr.bf16.mxu0 0
  %1732 = vmatpush2.bf16.msra.mxu0 0
  %1733 = vmatprep.subr.bf16.mxu0 0
  %1734 = vmatpush2.bf16.msra.mxu0 0
  %1735 = vmatprep.subr.bf16.mxu0 0
  %1736 = vmatpush2.bf16.msra.mxu0 0
  %1737 = vmatprep.subr.bf16.mxu0 0
  %1738 = vmatpush2.bf16.msra.mxu0 0
  %1739 = vmatprep.subr.bf16.mxu0 0
  %1740 = vmatpush2.bf16.msra.mxu0 0
  %1741 = vmatprep.subr.bf16.mxu0 0
  %1742 = vmatpush2.bf16.msra.mxu0 0
  %1743 = vmatprep.subr.bf16.mxu0 0
  %1744 = vmatpush2.bf16.msra.mxu0 0
  %1745 = vmatprep.subr.bf16.mxu0 0
  %1746 = vmatpush2.bf16.msra.mxu0 0
  %1747 = vmatprep.mubr.bf16.mxu0 0
  %1748 = vmatmul.mubr.bf16.gmra.mxu0 %v1613
  %v1749 = vpop.f32.mrf.mxu0
  %v1750 = vadd.f32 0.0, %v1749
  %v1751 = vpop.f32.mrf.mxu0
  %v1752 = vadd.f32 0.0, %v1751
  %v1753 = vpop.f32.mrf.mxu0
  %v1754 = vpop.f32.mrf.mxu0
  %1755 = vdwg.mxu0
  %v1756 = vadd.f32 %v1583, %v1668
  %v1757 = vadd.f32 %v1584, %v1670
  %v1758 = vadd.f32 %v1585, %v1709
  %v1759 = vadd.f32 %v1586, %v1711
  %v1760 = vadd.f32 %v1587, %v1750
  %v1761 = vadd.f32 %v1588, %v1752
  %s1762 = scalar_lea.vmem %s1, 40
  %v1763 = vld [vmem:[%s1762] sm:$0xf]
  %1764 = vrot.lane.b32.xlu0 %v53, 88
  %v1765 = vpop.permute.xlu0 %1764
  %1766 = vrot.lane.b32.xlu0 %v54, 88
  %v1767 = vpop.permute.xlu0 %1766
  %1768 = vrot.lane.b32.xlu0 %v55, 88
  %v1769 = vpop.permute.xlu0 %1768
  %1770 = vrot.lane.b32.xlu0 %v56, 88
  %v1771 = vpop.permute.xlu0 %1770
  %1772 = vrot.lane.b32.xlu0 %v57, 88
  %v1773 = vpop.permute.xlu0 %1772
  %1774 = vrot.lane.b32.xlu0 %v58, 88
  %v1775 = vpop.permute.xlu0 %1774
  %1776 = vrot.lane.b32.xlu0 %v59, 88
  %v1777 = vpop.permute.xlu0 %1776
  %vm1778 = vcmask 719872
  %v1779 = vsel %vm1778, %v1765, %v1767
  %v1780 = vsel %vm1778, %v1767, %v1769
  %v1781 = vsel %vm1778, %v1769, %v1771
  %v1782 = vsel %vm1778, %v1771, %v1773
  %v1783 = vsel %vm1778, %v1773, %v1775
  %v1784 = vsel %vm1778, %v1775, %v1777
  %v1786 = vsel %vm88, %v1763, 0
  %v1789 = vsel %vm92, %v1779, 0
  %v1792 = vsel %vm92, %v1780, 0
  %v1795 = vsel %vm92, %v1781, 0
  %v1798 = vsel %vm92, %v1782, 0
  %v1801 = vsel %vm92, %v1783, 0
  %v1804 = vsel %vm92, %v1784, 0
  %1806 = vmatprep.subr.bf16.mxu0 0
  %1807 = vmatpush1.bf16.msra.mxu0 0
  %1808 = vmatprep.subr.bf16.mxu0 0
  %1809 = vmatpush1.bf16.msra.mxu0 0
  %1810 = vmatprep.subr.bf16.mxu0 0
  %1811 = vmatpush1.bf16.msra.mxu0 0
  %1812 = vmatprep.subr.bf16.mxu0 0
  %1813 = vmatpush1.bf16.msra.mxu0 0
  %1814 = vmatprep.subr.bf16.mxu0 0
  %1815 = vmatpush1.bf16.msra.mxu0 0
  %1816 = vmatprep.subr.bf16.mxu0 0
  %1817 = vmatpush1.bf16.msra.mxu0 0
  %1818 = vmatprep.subr.bf16.mxu0 0
  %1819 = vmatpush1.bf16.msra.mxu0 0
  %1820 = vmatprep.subr.bf16.mxu0 %v1792
  %1821 = vmatpush1.bf16.msra.mxu0 %v1789
  %1822 = vmatprep.subr.bf16.mxu0 0
  %1823 = vmatpush2.bf16.msra.mxu0 0
  %1824 = vmatprep.subr.bf16.mxu0 0
  %1825 = vmatpush2.bf16.msra.mxu0 0
  %1826 = vmatprep.subr.bf16.mxu0 0
  %1827 = vmatpush2.bf16.msra.mxu0 0
  %1828 = vmatprep.subr.bf16.mxu0 0
  %1829 = vmatpush2.bf16.msra.mxu0 0
  %1830 = vmatprep.subr.bf16.mxu0 0
  %1831 = vmatpush2.bf16.msra.mxu0 0
  %1832 = vmatprep.subr.bf16.mxu0 0
  %1833 = vmatpush2.bf16.msra.mxu0 0
  %1834 = vmatprep.subr.bf16.mxu0 0
  %1835 = vmatpush2.bf16.msra.mxu0 0
  %1836 = vmatprep.subr.bf16.mxu0 0
  %1837 = vmatpush2.bf16.msra.mxu0 0
  %1838 = vmatprep.mubr.bf16.mxu0 0
  %1839 = vmatmul.mubr.bf16.gmra.mxu0 %v1786
  %v1840 = vpop.f32.mrf.mxu0
  %v1841 = vadd.f32 0.0, %v1840
  %v1842 = vpop.f32.mrf.mxu0
  %v1843 = vadd.f32 0.0, %v1842
  %v1844 = vpop.f32.mrf.mxu0
  %v1845 = vpop.f32.mrf.mxu0
  %1846 = vdwg.mxu0
  %1847 = vmatprep.subr.bf16.mxu0 0
  %1848 = vmatpush1.bf16.msra.mxu0 0
  %1849 = vmatprep.subr.bf16.mxu0 0
  %1850 = vmatpush1.bf16.msra.mxu0 0
  %1851 = vmatprep.subr.bf16.mxu0 0
  %1852 = vmatpush1.bf16.msra.mxu0 0
  %1853 = vmatprep.subr.bf16.mxu0 0
  %1854 = vmatpush1.bf16.msra.mxu0 0
  %1855 = vmatprep.subr.bf16.mxu0 0
  %1856 = vmatpush1.bf16.msra.mxu0 0
  %1857 = vmatprep.subr.bf16.mxu0 0
  %1858 = vmatpush1.bf16.msra.mxu0 0
  %1859 = vmatprep.subr.bf16.mxu0 0
  %1860 = vmatpush1.bf16.msra.mxu0 0
  %1861 = vmatprep.subr.bf16.mxu0 %v1798
  %1862 = vmatpush1.bf16.msra.mxu0 %v1795
  %1863 = vmatprep.subr.bf16.mxu0 0
  %1864 = vmatpush2.bf16.msra.mxu0 0
  %1865 = vmatprep.subr.bf16.mxu0 0
  %1866 = vmatpush2.bf16.msra.mxu0 0
  %1867 = vmatprep.subr.bf16.mxu0 0
  %1868 = vmatpush2.bf16.msra.mxu0 0
  %1869 = vmatprep.subr.bf16.mxu0 0
  %1870 = vmatpush2.bf16.msra.mxu0 0
  %1871 = vmatprep.subr.bf16.mxu0 0
  %1872 = vmatpush2.bf16.msra.mxu0 0
  %1873 = vmatprep.subr.bf16.mxu0 0
  %1874 = vmatpush2.bf16.msra.mxu0 0
  %1875 = vmatprep.subr.bf16.mxu0 0
  %1876 = vmatpush2.bf16.msra.mxu0 0
  %1877 = vmatprep.subr.bf16.mxu0 0
  %1878 = vmatpush2.bf16.msra.mxu0 0
  %1879 = vmatprep.mubr.bf16.mxu0 0
  %1880 = vmatmul.mubr.bf16.gmra.mxu0 %v1786
  %v1881 = vpop.f32.mrf.mxu0
  %v1882 = vadd.f32 0.0, %v1881
  %v1883 = vpop.f32.mrf.mxu0
  %v1884 = vadd.f32 0.0, %v1883
  %v1885 = vpop.f32.mrf.mxu0
  %v1886 = vpop.f32.mrf.mxu0
  %1887 = vdwg.mxu0
  %1888 = vmatprep.subr.bf16.mxu0 0
  %1889 = vmatpush1.bf16.msra.mxu0 0
  %1890 = vmatprep.subr.bf16.mxu0 0
  %1891 = vmatpush1.bf16.msra.mxu0 0
  %1892 = vmatprep.subr.bf16.mxu0 0
  %1893 = vmatpush1.bf16.msra.mxu0 0
  %1894 = vmatprep.subr.bf16.mxu0 0
  %1895 = vmatpush1.bf16.msra.mxu0 0
  %1896 = vmatprep.subr.bf16.mxu0 0
  %1897 = vmatpush1.bf16.msra.mxu0 0
  %1898 = vmatprep.subr.bf16.mxu0 0
  %1899 = vmatpush1.bf16.msra.mxu0 0
  %1900 = vmatprep.subr.bf16.mxu0 0
  %1901 = vmatpush1.bf16.msra.mxu0 0
  %1902 = vmatprep.subr.bf16.mxu0 %v1804
  %1903 = vmatpush1.bf16.msra.mxu0 %v1801
  %1904 = vmatprep.subr.bf16.mxu0 0
  %1905 = vmatpush2.bf16.msra.mxu0 0
  %1906 = vmatprep.subr.bf16.mxu0 0
  %1907 = vmatpush2.bf16.msra.mxu0 0
  %1908 = vmatprep.subr.bf16.mxu0 0
  %1909 = vmatpush2.bf16.msra.mxu0 0
  %1910 = vmatprep.subr.bf16.mxu0 0
  %1911 = vmatpush2.bf16.msra.mxu0 0
  %1912 = vmatprep.subr.bf16.mxu0 0
  %1913 = vmatpush2.bf16.msra.mxu0 0
  %1914 = vmatprep.subr.bf16.mxu0 0
  %1915 = vmatpush2.bf16.msra.mxu0 0
  %1916 = vmatprep.subr.bf16.mxu0 0
  %1917 = vmatpush2.bf16.msra.mxu0 0
  %1918 = vmatprep.subr.bf16.mxu0 0
  %1919 = vmatpush2.bf16.msra.mxu0 0
  %1920 = vmatprep.mubr.bf16.mxu0 0
  %1921 = vmatmul.mubr.bf16.gmra.mxu0 %v1786
  %v1922 = vpop.f32.mrf.mxu0
  %v1923 = vadd.f32 0.0, %v1922
  %v1924 = vpop.f32.mrf.mxu0
  %v1925 = vadd.f32 0.0, %v1924
  %v1926 = vpop.f32.mrf.mxu0
  %v1927 = vpop.f32.mrf.mxu0
  %1928 = vdwg.mxu0
  %v1929 = vadd.f32 %v1756, %v1841
  %v1930 = vadd.f32 %v1757, %v1843
  %v1931 = vadd.f32 %v1758, %v1882
  %v1932 = vadd.f32 %v1759, %v1884
  %v1933 = vadd.f32 %v1760, %v1923
  %v1934 = vadd.f32 %v1761, %v1925
  %s1935 = scalar_lea.vmem %s1, 44
  %v1936 = vld [vmem:[%s1935] sm:$0xf]
  %1937 = vrot.lane.b32.xlu0 %v53, 87
  %v1938 = vpop.permute.xlu0 %1937
  %1939 = vrot.lane.b32.xlu0 %v54, 87
  %v1940 = vpop.permute.xlu0 %1939
  %1941 = vrot.lane.b32.xlu0 %v55, 87
  %v1942 = vpop.permute.xlu0 %1941
  %1943 = vrot.lane.b32.xlu0 %v56, 87
  %v1944 = vpop.permute.xlu0 %1943
  %1945 = vrot.lane.b32.xlu0 %v57, 87
  %v1946 = vpop.permute.xlu0 %1945
  %1947 = vrot.lane.b32.xlu0 %v58, 87
  %v1948 = vpop.permute.xlu0 %1947
  %1949 = vrot.lane.b32.xlu0 %v59, 87
  %v1950 = vpop.permute.xlu0 %1949
  %vm1951 = vcmask 711680
  %v1952 = vsel %vm1951, %v1938, %v1940
  %v1953 = vsel %vm1951, %v1940, %v1942
  %v1954 = vsel %vm1951, %v1942, %v1944
  %v1955 = vsel %vm1951, %v1944, %v1946
  %v1956 = vsel %vm1951, %v1946, %v1948
  %v1957 = vsel %vm1951, %v1948, %v1950
  %v1959 = vsel %vm88, %v1936, 0
  %v1962 = vsel %vm92, %v1952, 0
  %v1965 = vsel %vm92, %v1953, 0
  %v1968 = vsel %vm92, %v1954, 0
  %v1971 = vsel %vm92, %v1955, 0
  %v1974 = vsel %vm92, %v1956, 0
  %v1977 = vsel %vm92, %v1957, 0
  %1979 = vmatprep.subr.bf16.mxu0 0
  %1980 = vmatpush1.bf16.msra.mxu0 0
  %1981 = vmatprep.subr.bf16.mxu0 0
  %1982 = vmatpush1.bf16.msra.mxu0 0
  %1983 = vmatprep.subr.bf16.mxu0 0
  %1984 = vmatpush1.bf16.msra.mxu0 0
  %1985 = vmatprep.subr.bf16.mxu0 0
  %1986 = vmatpush1.bf16.msra.mxu0 0
  %1987 = vmatprep.subr.bf16.mxu0 0
  %1988 = vmatpush1.bf16.msra.mxu0 0
  %1989 = vmatprep.subr.bf16.mxu0 0
  %1990 = vmatpush1.bf16.msra.mxu0 0
  %1991 = vmatprep.subr.bf16.mxu0 0
  %1992 = vmatpush1.bf16.msra.mxu0 0
  %1993 = vmatprep.subr.bf16.mxu0 %v1965
  %1994 = vmatpush1.bf16.msra.mxu0 %v1962
  %1995 = vmatprep.subr.bf16.mxu0 0
  %1996 = vmatpush2.bf16.msra.mxu0 0
  %1997 = vmatprep.subr.bf16.mxu0 0
  %1998 = vmatpush2.bf16.msra.mxu0 0
  %1999 = vmatprep.subr.bf16.mxu0 0
  %2000 = vmatpush2.bf16.msra.mxu0 0
  %2001 = vmatprep.subr.bf16.mxu0 0
  %2002 = vmatpush2.bf16.msra.mxu0 0
  %2003 = vmatprep.subr.bf16.mxu0 0
  %2004 = vmatpush2.bf16.msra.mxu0 0
  %2005 = vmatprep.subr.bf16.mxu0 0
  %2006 = vmatpush2.bf16.msra.mxu0 0
  %2007 = vmatprep.subr.bf16.mxu0 0
  %2008 = vmatpush2.bf16.msra.mxu0 0
  %2009 = vmatprep.subr.bf16.mxu0 0
  %2010 = vmatpush2.bf16.msra.mxu0 0
  %2011 = vmatprep.mubr.bf16.mxu0 0
  %2012 = vmatmul.mubr.bf16.gmra.mxu0 %v1959
  %v2013 = vpop.f32.mrf.mxu0
  %v2014 = vadd.f32 0.0, %v2013
  %v2015 = vpop.f32.mrf.mxu0
  %v2016 = vadd.f32 0.0, %v2015
  %v2017 = vpop.f32.mrf.mxu0
  %v2018 = vpop.f32.mrf.mxu0
  %2019 = vdwg.mxu0
  %2020 = vmatprep.subr.bf16.mxu0 0
  %2021 = vmatpush1.bf16.msra.mxu0 0
  %2022 = vmatprep.subr.bf16.mxu0 0
  %2023 = vmatpush1.bf16.msra.mxu0 0
  %2024 = vmatprep.subr.bf16.mxu0 0
  %2025 = vmatpush1.bf16.msra.mxu0 0
  %2026 = vmatprep.subr.bf16.mxu0 0
  %2027 = vmatpush1.bf16.msra.mxu0 0
  %2028 = vmatprep.subr.bf16.mxu0 0
  %2029 = vmatpush1.bf16.msra.mxu0 0
  %2030 = vmatprep.subr.bf16.mxu0 0
  %2031 = vmatpush1.bf16.msra.mxu0 0
  %2032 = vmatprep.subr.bf16.mxu0 0
  %2033 = vmatpush1.bf16.msra.mxu0 0
  %2034 = vmatprep.subr.bf16.mxu0 %v1971
  %2035 = vmatpush1.bf16.msra.mxu0 %v1968
  %2036 = vmatprep.subr.bf16.mxu0 0
  %2037 = vmatpush2.bf16.msra.mxu0 0
  %2038 = vmatprep.subr.bf16.mxu0 0
  %2039 = vmatpush2.bf16.msra.mxu0 0
  %2040 = vmatprep.subr.bf16.mxu0 0
  %2041 = vmatpush2.bf16.msra.mxu0 0
  %2042 = vmatprep.subr.bf16.mxu0 0
  %2043 = vmatpush2.bf16.msra.mxu0 0
  %2044 = vmatprep.subr.bf16.mxu0 0
  %2045 = vmatpush2.bf16.msra.mxu0 0
  %2046 = vmatprep.subr.bf16.mxu0 0
  %2047 = vmatpush2.bf16.msra.mxu0 0
  %2048 = vmatprep.subr.bf16.mxu0 0
  %2049 = vmatpush2.bf16.msra.mxu0 0
  %2050 = vmatprep.subr.bf16.mxu0 0
  %2051 = vmatpush2.bf16.msra.mxu0 0
  %2052 = vmatprep.mubr.bf16.mxu0 0
  %2053 = vmatmul.mubr.bf16.gmra.mxu0 %v1959
  %v2054 = vpop.f32.mrf.mxu0
  %v2055 = vadd.f32 0.0, %v2054
  %v2056 = vpop.f32.mrf.mxu0
  %v2057 = vadd.f32 0.0, %v2056
  %v2058 = vpop.f32.mrf.mxu0
  %v2059 = vpop.f32.mrf.mxu0
  %2060 = vdwg.mxu0
  %2061 = vmatprep.subr.bf16.mxu0 0
  %2062 = vmatpush1.bf16.msra.mxu0 0
  %2063 = vmatprep.subr.bf16.mxu0 0
  %2064 = vmatpush1.bf16.msra.mxu0 0
  %2065 = vmatprep.subr.bf16.mxu0 0
  %2066 = vmatpush1.bf16.msra.mxu0 0
  %2067 = vmatprep.subr.bf16.mxu0 0
  %2068 = vmatpush1.bf16.msra.mxu0 0
  %2069 = vmatprep.subr.bf16.mxu0 0
  %2070 = vmatpush1.bf16.msra.mxu0 0
  %2071 = vmatprep.subr.bf16.mxu0 0
  %2072 = vmatpush1.bf16.msra.mxu0 0
  %2073 = vmatprep.subr.bf16.mxu0 0
  %2074 = vmatpush1.bf16.msra.mxu0 0
  %2075 = vmatprep.subr.bf16.mxu0 %v1977
  %2076 = vmatpush1.bf16.msra.mxu0 %v1974
  %2077 = vmatprep.subr.bf16.mxu0 0
  %2078 = vmatpush2.bf16.msra.mxu0 0
  %2079 = vmatprep.subr.bf16.mxu0 0
  %2080 = vmatpush2.bf16.msra.mxu0 0
  %2081 = vmatprep.subr.bf16.mxu0 0
  %2082 = vmatpush2.bf16.msra.mxu0 0
  %2083 = vmatprep.subr.bf16.mxu0 0
  %2084 = vmatpush2.bf16.msra.mxu0 0
  %2085 = vmatprep.subr.bf16.mxu0 0
  %2086 = vmatpush2.bf16.msra.mxu0 0
  %2087 = vmatprep.subr.bf16.mxu0 0
  %2088 = vmatpush2.bf16.msra.mxu0 0
  %2089 = vmatprep.subr.bf16.mxu0 0
  %2090 = vmatpush2.bf16.msra.mxu0 0
  %2091 = vmatprep.subr.bf16.mxu0 0
  %2092 = vmatpush2.bf16.msra.mxu0 0
  %2093 = vmatprep.mubr.bf16.mxu0 0
  %2094 = vmatmul.mubr.bf16.gmra.mxu0 %v1959
  %v2095 = vpop.f32.mrf.mxu0
  %v2096 = vadd.f32 0.0, %v2095
  %v2097 = vpop.f32.mrf.mxu0
  %v2098 = vadd.f32 0.0, %v2097
  %v2099 = vpop.f32.mrf.mxu0
  %v2100 = vpop.f32.mrf.mxu0
  %2101 = vdwg.mxu0
  %v2102 = vadd.f32 %v1929, %v2014
  %v2103 = vadd.f32 %v1930, %v2016
  %v2104 = vadd.f32 %v1931, %v2055
  %v2105 = vadd.f32 %v1932, %v2057
  %v2106 = vadd.f32 %v1933, %v2096
  %v2107 = vadd.f32 %v1934, %v2098
  %s2108 = scalar_lea.vmem %s1, 48
  %v2109 = vld [vmem:[%s2108] sm:$0xf]
  %2110 = vrot.lane.b32.xlu0 %v53, 86
  %v2111 = vpop.permute.xlu0 %2110
  %2112 = vrot.lane.b32.xlu0 %v54, 86
  %v2113 = vpop.permute.xlu0 %2112
  %2114 = vrot.lane.b32.xlu0 %v55, 86
  %v2115 = vpop.permute.xlu0 %2114
  %2116 = vrot.lane.b32.xlu0 %v56, 86
  %v2117 = vpop.permute.xlu0 %2116
  %2118 = vrot.lane.b32.xlu0 %v57, 86
  %v2119 = vpop.permute.xlu0 %2118
  %2120 = vrot.lane.b32.xlu0 %v58, 86
  %v2121 = vpop.permute.xlu0 %2120
  %2122 = vrot.lane.b32.xlu0 %v59, 86
  %v2123 = vpop.permute.xlu0 %2122
  %vm2124 = vcmask 703488
  %v2125 = vsel %vm2124, %v2111, %v2113
  %v2126 = vsel %vm2124, %v2113, %v2115
  %v2127 = vsel %vm2124, %v2115, %v2117
  %v2128 = vsel %vm2124, %v2117, %v2119
  %v2129 = vsel %vm2124, %v2119, %v2121
  %v2130 = vsel %vm2124, %v2121, %v2123
  %v2132 = vsel %vm88, %v2109, 0
  %v2135 = vsel %vm92, %v2125, 0
  %v2138 = vsel %vm92, %v2126, 0
  %v2141 = vsel %vm92, %v2127, 0
  %v2144 = vsel %vm92, %v2128, 0
  %v2147 = vsel %vm92, %v2129, 0
  %v2150 = vsel %vm92, %v2130, 0
  %2152 = vmatprep.subr.bf16.mxu0 0
  %2153 = vmatpush1.bf16.msra.mxu0 0
  %2154 = vmatprep.subr.bf16.mxu0 0
  %2155 = vmatpush1.bf16.msra.mxu0 0
  %2156 = vmatprep.subr.bf16.mxu0 0
  %2157 = vmatpush1.bf16.msra.mxu0 0
  %2158 = vmatprep.subr.bf16.mxu0 0
  %2159 = vmatpush1.bf16.msra.mxu0 0
  %2160 = vmatprep.subr.bf16.mxu0 0
  %2161 = vmatpush1.bf16.msra.mxu0 0
  %2162 = vmatprep.subr.bf16.mxu0 0
  %2163 = vmatpush1.bf16.msra.mxu0 0
  %2164 = vmatprep.subr.bf16.mxu0 0
  %2165 = vmatpush1.bf16.msra.mxu0 0
  %2166 = vmatprep.subr.bf16.mxu0 %v2138
  %2167 = vmatpush1.bf16.msra.mxu0 %v2135
  %2168 = vmatprep.subr.bf16.mxu0 0
  %2169 = vmatpush2.bf16.msra.mxu0 0
  %2170 = vmatprep.subr.bf16.mxu0 0
  %2171 = vmatpush2.bf16.msra.mxu0 0
  %2172 = vmatprep.subr.bf16.mxu0 0
  %2173 = vmatpush2.bf16.msra.mxu0 0
  %2174 = vmatprep.subr.bf16.mxu0 0
  %2175 = vmatpush2.bf16.msra.mxu0 0
  %2176 = vmatprep.subr.bf16.mxu0 0
  %2177 = vmatpush2.bf16.msra.mxu0 0
  %2178 = vmatprep.subr.bf16.mxu0 0
  %2179 = vmatpush2.bf16.msra.mxu0 0
  %2180 = vmatprep.subr.bf16.mxu0 0
  %2181 = vmatpush2.bf16.msra.mxu0 0
  %2182 = vmatprep.subr.bf16.mxu0 0
  %2183 = vmatpush2.bf16.msra.mxu0 0
  %2184 = vmatprep.mubr.bf16.mxu0 0
  %2185 = vmatmul.mubr.bf16.gmra.mxu0 %v2132
  %v2186 = vpop.f32.mrf.mxu0
  %v2187 = vadd.f32 0.0, %v2186
  %v2188 = vpop.f32.mrf.mxu0
  %v2189 = vadd.f32 0.0, %v2188
  %v2190 = vpop.f32.mrf.mxu0
  %v2191 = vpop.f32.mrf.mxu0
  %2192 = vdwg.mxu0
  %2193 = vmatprep.subr.bf16.mxu0 0
  %2194 = vmatpush1.bf16.msra.mxu0 0
  %2195 = vmatprep.subr.bf16.mxu0 0
  %2196 = vmatpush1.bf16.msra.mxu0 0
  %2197 = vmatprep.subr.bf16.mxu0 0
  %2198 = vmatpush1.bf16.msra.mxu0 0
  %2199 = vmatprep.subr.bf16.mxu0 0
  %2200 = vmatpush1.bf16.msra.mxu0 0
  %2201 = vmatprep.subr.bf16.mxu0 0
  %2202 = vmatpush1.bf16.msra.mxu0 0
  %2203 = vmatprep.subr.bf16.mxu0 0
  %2204 = vmatpush1.bf16.msra.mxu0 0
  %2205 = vmatprep.subr.bf16.mxu0 0
  %2206 = vmatpush1.bf16.msra.mxu0 0
  %2207 = vmatprep.subr.bf16.mxu0 %v2144
  %2208 = vmatpush1.bf16.msra.mxu0 %v2141
  %2209 = vmatprep.subr.bf16.mxu0 0
  %2210 = vmatpush2.bf16.msra.mxu0 0
  %2211 = vmatprep.subr.bf16.mxu0 0
  %2212 = vmatpush2.bf16.msra.mxu0 0
  %2213 = vmatprep.subr.bf16.mxu0 0
  %2214 = vmatpush2.bf16.msra.mxu0 0
  %2215 = vmatprep.subr.bf16.mxu0 0
  %2216 = vmatpush2.bf16.msra.mxu0 0
  %2217 = vmatprep.subr.bf16.mxu0 0
  %2218 = vmatpush2.bf16.msra.mxu0 0
  %2219 = vmatprep.subr.bf16.mxu0 0
  %2220 = vmatpush2.bf16.msra.mxu0 0
  %2221 = vmatprep.subr.bf16.mxu0 0
  %2222 = vmatpush2.bf16.msra.mxu0 0
  %2223 = vmatprep.subr.bf16.mxu0 0
  %2224 = vmatpush2.bf16.msra.mxu0 0
  %2225 = vmatprep.mubr.bf16.mxu0 0
  %2226 = vmatmul.mubr.bf16.gmra.mxu0 %v2132
  %v2227 = vpop.f32.mrf.mxu0
  %v2228 = vadd.f32 0.0, %v2227
  %v2229 = vpop.f32.mrf.mxu0
  %v2230 = vadd.f32 0.0, %v2229
  %v2231 = vpop.f32.mrf.mxu0
  %v2232 = vpop.f32.mrf.mxu0
  %2233 = vdwg.mxu0
  %2234 = vmatprep.subr.bf16.mxu0 0
  %2235 = vmatpush1.bf16.msra.mxu0 0
  %2236 = vmatprep.subr.bf16.mxu0 0
  %2237 = vmatpush1.bf16.msra.mxu0 0
  %2238 = vmatprep.subr.bf16.mxu0 0
  %2239 = vmatpush1.bf16.msra.mxu0 0
  %2240 = vmatprep.subr.bf16.mxu0 0
  %2241 = vmatpush1.bf16.msra.mxu0 0
  %2242 = vmatprep.subr.bf16.mxu0 0
  %2243 = vmatpush1.bf16.msra.mxu0 0
  %2244 = vmatprep.subr.bf16.mxu0 0
  %2245 = vmatpush1.bf16.msra.mxu0 0
  %2246 = vmatprep.subr.bf16.mxu0 0
  %2247 = vmatpush1.bf16.msra.mxu0 0
  %2248 = vmatprep.subr.bf16.mxu0 %v2150
  %2249 = vmatpush1.bf16.msra.mxu0 %v2147
  %2250 = vmatprep.subr.bf16.mxu0 0
  %2251 = vmatpush2.bf16.msra.mxu0 0
  %2252 = vmatprep.subr.bf16.mxu0 0
  %2253 = vmatpush2.bf16.msra.mxu0 0
  %2254 = vmatprep.subr.bf16.mxu0 0
  %2255 = vmatpush2.bf16.msra.mxu0 0
  %2256 = vmatprep.subr.bf16.mxu0 0
  %2257 = vmatpush2.bf16.msra.mxu0 0
  %2258 = vmatprep.subr.bf16.mxu0 0
  %2259 = vmatpush2.bf16.msra.mxu0 0
  %2260 = vmatprep.subr.bf16.mxu0 0
  %2261 = vmatpush2.bf16.msra.mxu0 0
  %2262 = vmatprep.subr.bf16.mxu0 0
  %2263 = vmatpush2.bf16.msra.mxu0 0
  %2264 = vmatprep.subr.bf16.mxu0 0
  %2265 = vmatpush2.bf16.msra.mxu0 0
  %2266 = vmatprep.mubr.bf16.mxu0 0
  %2267 = vmatmul.mubr.bf16.gmra.mxu0 %v2132
  %v2268 = vpop.f32.mrf.mxu0
  %v2269 = vadd.f32 0.0, %v2268
  %v2270 = vpop.f32.mrf.mxu0
  %v2271 = vadd.f32 0.0, %v2270
  %v2272 = vpop.f32.mrf.mxu0
  %v2273 = vpop.f32.mrf.mxu0
  %2274 = vdwg.mxu0
  %v2275 = vadd.f32 %v2102, %v2187
  %v2276 = vadd.f32 %v2103, %v2189
  %v2277 = vadd.f32 %v2104, %v2228
  %v2278 = vadd.f32 %v2105, %v2230
  %v2279 = vadd.f32 %v2106, %v2269
  %v2280 = vadd.f32 %v2107, %v2271
  %s2281 = scalar_lea.vmem %s1, 52
  %v2282 = vld [vmem:[%s2281] sm:$0xf]
  %2283 = vrot.lane.b32.xlu0 %v53, 85
  %v2284 = vpop.permute.xlu0 %2283
  %2285 = vrot.lane.b32.xlu0 %v54, 85
  %v2286 = vpop.permute.xlu0 %2285
  %2287 = vrot.lane.b32.xlu0 %v55, 85
  %v2288 = vpop.permute.xlu0 %2287
  %2289 = vrot.lane.b32.xlu0 %v56, 85
  %v2290 = vpop.permute.xlu0 %2289
  %2291 = vrot.lane.b32.xlu0 %v57, 85
  %v2292 = vpop.permute.xlu0 %2291
  %2293 = vrot.lane.b32.xlu0 %v58, 85
  %v2294 = vpop.permute.xlu0 %2293
  %2295 = vrot.lane.b32.xlu0 %v59, 85
  %v2296 = vpop.permute.xlu0 %2295
  %vm2297 = vcmask 695296
  %v2298 = vsel %vm2297, %v2284, %v2286
  %v2299 = vsel %vm2297, %v2286, %v2288
  %v2300 = vsel %vm2297, %v2288, %v2290
  %v2301 = vsel %vm2297, %v2290, %v2292
  %v2302 = vsel %vm2297, %v2292, %v2294
  %v2303 = vsel %vm2297, %v2294, %v2296
  %v2305 = vsel %vm88, %v2282, 0
  %v2308 = vsel %vm92, %v2298, 0
  %v2311 = vsel %vm92, %v2299, 0
  %v2314 = vsel %vm92, %v2300, 0
  %v2317 = vsel %vm92, %v2301, 0
  %v2320 = vsel %vm92, %v2302, 0
  %v2323 = vsel %vm92, %v2303, 0
  %2325 = vmatprep.subr.bf16.mxu0 0
  %2326 = vmatpush1.bf16.msra.mxu0 0
  %2327 = vmatprep.subr.bf16.mxu0 0
  %2328 = vmatpush1.bf16.msra.mxu0 0
  %2329 = vmatprep.subr.bf16.mxu0 0
  %2330 = vmatpush1.bf16.msra.mxu0 0
  %2331 = vmatprep.subr.bf16.mxu0 0
  %2332 = vmatpush1.bf16.msra.mxu0 0
  %2333 = vmatprep.subr.bf16.mxu0 0
  %2334 = vmatpush1.bf16.msra.mxu0 0
  %2335 = vmatprep.subr.bf16.mxu0 0
  %2336 = vmatpush1.bf16.msra.mxu0 0
  %2337 = vmatprep.subr.bf16.mxu0 0
  %2338 = vmatpush1.bf16.msra.mxu0 0
  %2339 = vmatprep.subr.bf16.mxu0 %v2311
  %2340 = vmatpush1.bf16.msra.mxu0 %v2308
  %2341 = vmatprep.subr.bf16.mxu0 0
  %2342 = vmatpush2.bf16.msra.mxu0 0
  %2343 = vmatprep.subr.bf16.mxu0 0
  %2344 = vmatpush2.bf16.msra.mxu0 0
  %2345 = vmatprep.subr.bf16.mxu0 0
  %2346 = vmatpush2.bf16.msra.mxu0 0
  %2347 = vmatprep.subr.bf16.mxu0 0
  %2348 = vmatpush2.bf16.msra.mxu0 0
  %2349 = vmatprep.subr.bf16.mxu0 0
  %2350 = vmatpush2.bf16.msra.mxu0 0
  %2351 = vmatprep.subr.bf16.mxu0 0
  %2352 = vmatpush2.bf16.msra.mxu0 0
  %2353 = vmatprep.subr.bf16.mxu0 0
  %2354 = vmatpush2.bf16.msra.mxu0 0
  %2355 = vmatprep.subr.bf16.mxu0 0
  %2356 = vmatpush2.bf16.msra.mxu0 0
  %2357 = vmatprep.mubr.bf16.mxu0 0
  %2358 = vmatmul.mubr.bf16.gmra.mxu0 %v2305
  %v2359 = vpop.f32.mrf.mxu0
  %v2360 = vadd.f32 0.0, %v2359
  %v2361 = vpop.f32.mrf.mxu0
  %v2362 = vadd.f32 0.0, %v2361
  %v2363 = vpop.f32.mrf.mxu0
  %v2364 = vpop.f32.mrf.mxu0
  %2365 = vdwg.mxu0
  %2366 = vmatprep.subr.bf16.mxu0 0
  %2367 = vmatpush1.bf16.msra.mxu0 0
  %2368 = vmatprep.subr.bf16.mxu0 0
  %2369 = vmatpush1.bf16.msra.mxu0 0
  %2370 = vmatprep.subr.bf16.mxu0 0
  %2371 = vmatpush1.bf16.msra.mxu0 0
  %2372 = vmatprep.subr.bf16.mxu0 0
  %2373 = vmatpush1.bf16.msra.mxu0 0
  %2374 = vmatprep.subr.bf16.mxu0 0
  %2375 = vmatpush1.bf16.msra.mxu0 0
  %2376 = vmatprep.subr.bf16.mxu0 0
  %2377 = vmatpush1.bf16.msra.mxu0 0
  %2378 = vmatprep.subr.bf16.mxu0 0
  %2379 = vmatpush1.bf16.msra.mxu0 0
  %2380 = vmatprep.subr.bf16.mxu0 %v2317
  %2381 = vmatpush1.bf16.msra.mxu0 %v2314
  %2382 = vmatprep.subr.bf16.mxu0 0
  %2383 = vmatpush2.bf16.msra.mxu0 0
  %2384 = vmatprep.subr.bf16.mxu0 0
  %2385 = vmatpush2.bf16.msra.mxu0 0
  %2386 = vmatprep.subr.bf16.mxu0 0
  %2387 = vmatpush2.bf16.msra.mxu0 0
  %2388 = vmatprep.subr.bf16.mxu0 0
  %2389 = vmatpush2.bf16.msra.mxu0 0
  %2390 = vmatprep.subr.bf16.mxu0 0
  %2391 = vmatpush2.bf16.msra.mxu0 0
  %2392 = vmatprep.subr.bf16.mxu0 0
  %2393 = vmatpush2.bf16.msra.mxu0 0
  %2394 = vmatprep.subr.bf16.mxu0 0
  %2395 = vmatpush2.bf16.msra.mxu0 0
  %2396 = vmatprep.subr.bf16.mxu0 0
  %2397 = vmatpush2.bf16.msra.mxu0 0
  %2398 = vmatprep.mubr.bf16.mxu0 0
  %2399 = vmatmul.mubr.bf16.gmra.mxu0 %v2305
  %v2400 = vpop.f32.mrf.mxu0
  %v2401 = vadd.f32 0.0, %v2400
  %v2402 = vpop.f32.mrf.mxu0
  %v2403 = vadd.f32 0.0, %v2402
  %v2404 = vpop.f32.mrf.mxu0
  %v2405 = vpop.f32.mrf.mxu0
  %2406 = vdwg.mxu0
  %2407 = vmatprep.subr.bf16.mxu0 0
  %2408 = vmatpush1.bf16.msra.mxu0 0
  %2409 = vmatprep.subr.bf16.mxu0 0
  %2410 = vmatpush1.bf16.msra.mxu0 0
  %2411 = vmatprep.subr.bf16.mxu0 0
  %2412 = vmatpush1.bf16.msra.mxu0 0
  %2413 = vmatprep.subr.bf16.mxu0 0
  %2414 = vmatpush1.bf16.msra.mxu0 0
  %2415 = vmatprep.subr.bf16.mxu0 0
  %2416 = vmatpush1.bf16.msra.mxu0 0
  %2417 = vmatprep.subr.bf16.mxu0 0
  %2418 = vmatpush1.bf16.msra.mxu0 0
  %2419 = vmatprep.subr.bf16.mxu0 0
  %2420 = vmatpush1.bf16.msra.mxu0 0
  %2421 = vmatprep.subr.bf16.mxu0 %v2323
  %2422 = vmatpush1.bf16.msra.mxu0 %v2320
  %2423 = vmatprep.subr.bf16.mxu0 0
  %2424 = vmatpush2.bf16.msra.mxu0 0
  %2425 = vmatprep.subr.bf16.mxu0 0
  %2426 = vmatpush2.bf16.msra.mxu0 0
  %2427 = vmatprep.subr.bf16.mxu0 0
  %2428 = vmatpush2.bf16.msra.mxu0 0
  %2429 = vmatprep.subr.bf16.mxu0 0
  %2430 = vmatpush2.bf16.msra.mxu0 0
  %2431 = vmatprep.subr.bf16.mxu0 0
  %2432 = vmatpush2.bf16.msra.mxu0 0
  %2433 = vmatprep.subr.bf16.mxu0 0
  %2434 = vmatpush2.bf16.msra.mxu0 0
  %2435 = vmatprep.subr.bf16.mxu0 0
  %2436 = vmatpush2.bf16.msra.mxu0 0
  %2437 = vmatprep.subr.bf16.mxu0 0
  %2438 = vmatpush2.bf16.msra.mxu0 0
  %2439 = vmatprep.mubr.bf16.mxu0 0
  %2440 = vmatmul.mubr.bf16.gmra.mxu0 %v2305
  %v2441 = vpop.f32.mrf.mxu0
  %v2442 = vadd.f32 0.0, %v2441
  %v2443 = vpop.f32.mrf.mxu0
  %v2444 = vadd.f32 0.0, %v2443
  %v2445 = vpop.f32.mrf.mxu0
  %v2446 = vpop.f32.mrf.mxu0
  %2447 = vdwg.mxu0
  %v2448 = vadd.f32 %v2275, %v2360
  %v2449 = vadd.f32 %v2276, %v2362
  %v2450 = vadd.f32 %v2277, %v2401
  %v2451 = vadd.f32 %v2278, %v2403
  %v2452 = vadd.f32 %v2279, %v2442
  %v2453 = vadd.f32 %v2280, %v2444
  %s2454 = scalar_lea.vmem %s1, 56
  %v2455 = vld [vmem:[%s2454] sm:$0xf]
  %2456 = vrot.lane.b32.xlu0 %v53, 84
  %v2457 = vpop.permute.xlu0 %2456
  %2458 = vrot.lane.b32.xlu0 %v54, 84
  %v2459 = vpop.permute.xlu0 %2458
  %2460 = vrot.lane.b32.xlu0 %v55, 84
  %v2461 = vpop.permute.xlu0 %2460
  %2462 = vrot.lane.b32.xlu0 %v56, 84
  %v2463 = vpop.permute.xlu0 %2462
  %2464 = vrot.lane.b32.xlu0 %v57, 84
  %v2465 = vpop.permute.xlu0 %2464
  %2466 = vrot.lane.b32.xlu0 %v58, 84
  %v2467 = vpop.permute.xlu0 %2466
  %2468 = vrot.lane.b32.xlu0 %v59, 84
  %v2469 = vpop.permute.xlu0 %2468
  %vm2470 = vcmask 687104
  %v2471 = vsel %vm2470, %v2457, %v2459
  %v2472 = vsel %vm2470, %v2459, %v2461
  %v2473 = vsel %vm2470, %v2461, %v2463
  %v2474 = vsel %vm2470, %v2463, %v2465
  %v2475 = vsel %vm2470, %v2465, %v2467
  %v2476 = vsel %vm2470, %v2467, %v2469
  %v2478 = vsel %vm88, %v2455, 0
  %v2481 = vsel %vm92, %v2471, 0
  %v2484 = vsel %vm92, %v2472, 0
  %v2487 = vsel %vm92, %v2473, 0
  %v2490 = vsel %vm92, %v2474, 0
  %v2493 = vsel %vm92, %v2475, 0
  %v2496 = vsel %vm92, %v2476, 0
  %2498 = vmatprep.subr.bf16.mxu0 0
  %2499 = vmatpush1.bf16.msra.mxu0 0
  %2500 = vmatprep.subr.bf16.mxu0 0
  %2501 = vmatpush1.bf16.msra.mxu0 0
  %2502 = vmatprep.subr.bf16.mxu0 0
  %2503 = vmatpush1.bf16.msra.mxu0 0
  %2504 = vmatprep.subr.bf16.mxu0 0
  %2505 = vmatpush1.bf16.msra.mxu0 0
  %2506 = vmatprep.subr.bf16.mxu0 0
  %2507 = vmatpush1.bf16.msra.mxu0 0
  %2508 = vmatprep.subr.bf16.mxu0 0
  %2509 = vmatpush1.bf16.msra.mxu0 0
  %2510 = vmatprep.subr.bf16.mxu0 0
  %2511 = vmatpush1.bf16.msra.mxu0 0
  %2512 = vmatprep.subr.bf16.mxu0 %v2484
  %2513 = vmatpush1.bf16.msra.mxu0 %v2481
  %2514 = vmatprep.subr.bf16.mxu0 0
  %2515 = vmatpush2.bf16.msra.mxu0 0
  %2516 = vmatprep.subr.bf16.mxu0 0
  %2517 = vmatpush2.bf16.msra.mxu0 0
  %2518 = vmatprep.subr.bf16.mxu0 0
  %2519 = vmatpush2.bf16.msra.mxu0 0
  %2520 = vmatprep.subr.bf16.mxu0 0
  %2521 = vmatpush2.bf16.msra.mxu0 0
  %2522 = vmatprep.subr.bf16.mxu0 0
  %2523 = vmatpush2.bf16.msra.mxu0 0
  %2524 = vmatprep.subr.bf16.mxu0 0
  %2525 = vmatpush2.bf16.msra.mxu0 0
  %2526 = vmatprep.subr.bf16.mxu0 0
  %2527 = vmatpush2.bf16.msra.mxu0 0
  %2528 = vmatprep.subr.bf16.mxu0 0
  %2529 = vmatpush2.bf16.msra.mxu0 0
  %2530 = vmatprep.mubr.bf16.mxu0 0
  %2531 = vmatmul.mubr.bf16.gmra.mxu0 %v2478
  %v2532 = vpop.f32.mrf.mxu0
  %v2533 = vadd.f32 0.0, %v2532
  %v2534 = vpop.f32.mrf.mxu0
  %v2535 = vadd.f32 0.0, %v2534
  %v2536 = vpop.f32.mrf.mxu0
  %v2537 = vpop.f32.mrf.mxu0
  %2538 = vdwg.mxu0
  %2539 = vmatprep.subr.bf16.mxu0 0
  %2540 = vmatpush1.bf16.msra.mxu0 0
  %2541 = vmatprep.subr.bf16.mxu0 0
  %2542 = vmatpush1.bf16.msra.mxu0 0
  %2543 = vmatprep.subr.bf16.mxu0 0
  %2544 = vmatpush1.bf16.msra.mxu0 0
  %2545 = vmatprep.subr.bf16.mxu0 0
  %2546 = vmatpush1.bf16.msra.mxu0 0
  %2547 = vmatprep.subr.bf16.mxu0 0
  %2548 = vmatpush1.bf16.msra.mxu0 0
  %2549 = vmatprep.subr.bf16.mxu0 0
  %2550 = vmatpush1.bf16.msra.mxu0 0
  %2551 = vmatprep.subr.bf16.mxu0 0
  %2552 = vmatpush1.bf16.msra.mxu0 0
  %2553 = vmatprep.subr.bf16.mxu0 %v2490
  %2554 = vmatpush1.bf16.msra.mxu0 %v2487
  %2555 = vmatprep.subr.bf16.mxu0 0
  %2556 = vmatpush2.bf16.msra.mxu0 0
  %2557 = vmatprep.subr.bf16.mxu0 0
  %2558 = vmatpush2.bf16.msra.mxu0 0
  %2559 = vmatprep.subr.bf16.mxu0 0
  %2560 = vmatpush2.bf16.msra.mxu0 0
  %2561 = vmatprep.subr.bf16.mxu0 0
  %2562 = vmatpush2.bf16.msra.mxu0 0
  %2563 = vmatprep.subr.bf16.mxu0 0
  %2564 = vmatpush2.bf16.msra.mxu0 0
  %2565 = vmatprep.subr.bf16.mxu0 0
  %2566 = vmatpush2.bf16.msra.mxu0 0
  %2567 = vmatprep.subr.bf16.mxu0 0
  %2568 = vmatpush2.bf16.msra.mxu0 0
  %2569 = vmatprep.subr.bf16.mxu0 0
  %2570 = vmatpush2.bf16.msra.mxu0 0
  %2571 = vmatprep.mubr.bf16.mxu0 0
  %2572 = vmatmul.mubr.bf16.gmra.mxu0 %v2478
  %v2573 = vpop.f32.mrf.mxu0
  %v2574 = vadd.f32 0.0, %v2573
  %v2575 = vpop.f32.mrf.mxu0
  %v2576 = vadd.f32 0.0, %v2575
  %v2577 = vpop.f32.mrf.mxu0
  %v2578 = vpop.f32.mrf.mxu0
  %2579 = vdwg.mxu0
  %2580 = vmatprep.subr.bf16.mxu0 0
  %2581 = vmatpush1.bf16.msra.mxu0 0
  %2582 = vmatprep.subr.bf16.mxu0 0
  %2583 = vmatpush1.bf16.msra.mxu0 0
  %2584 = vmatprep.subr.bf16.mxu0 0
  %2585 = vmatpush1.bf16.msra.mxu0 0
  %2586 = vmatprep.subr.bf16.mxu0 0
  %2587 = vmatpush1.bf16.msra.mxu0 0
  %2588 = vmatprep.subr.bf16.mxu0 0
  %2589 = vmatpush1.bf16.msra.mxu0 0
  %2590 = vmatprep.subr.bf16.mxu0 0
  %2591 = vmatpush1.bf16.msra.mxu0 0
  %2592 = vmatprep.subr.bf16.mxu0 0
  %2593 = vmatpush1.bf16.msra.mxu0 0
  %2594 = vmatprep.subr.bf16.mxu0 %v2496
  %2595 = vmatpush1.bf16.msra.mxu0 %v2493
  %2596 = vmatprep.subr.bf16.mxu0 0
  %2597 = vmatpush2.bf16.msra.mxu0 0
  %2598 = vmatprep.subr.bf16.mxu0 0
  %2599 = vmatpush2.bf16.msra.mxu0 0
  %2600 = vmatprep.subr.bf16.mxu0 0
  %2601 = vmatpush2.bf16.msra.mxu0 0
  %2602 = vmatprep.subr.bf16.mxu0 0
  %2603 = vmatpush2.bf16.msra.mxu0 0
  %2604 = vmatprep.subr.bf16.mxu0 0
  %2605 = vmatpush2.bf16.msra.mxu0 0
  %2606 = vmatprep.subr.bf16.mxu0 0
  %2607 = vmatpush2.bf16.msra.mxu0 0
  %2608 = vmatprep.subr.bf16.mxu0 0
  %2609 = vmatpush2.bf16.msra.mxu0 0
  %2610 = vmatprep.subr.bf16.mxu0 0
  %2611 = vmatpush2.bf16.msra.mxu0 0
  %2612 = vmatprep.mubr.bf16.mxu0 0
  %2613 = vmatmul.mubr.bf16.gmra.mxu0 %v2478
  %v2614 = vpop.f32.mrf.mxu0
  %v2615 = vadd.f32 0.0, %v2614
  %v2616 = vpop.f32.mrf.mxu0
  %v2617 = vadd.f32 0.0, %v2616
  %v2618 = vpop.f32.mrf.mxu0
  %v2619 = vpop.f32.mrf.mxu0
  %2620 = vdwg.mxu0
  %v2621 = vadd.f32 %v2448, %v2533
  %v2622 = vadd.f32 %v2449, %v2535
  %v2623 = vadd.f32 %v2450, %v2574
  %v2624 = vadd.f32 %v2451, %v2576
  %v2625 = vadd.f32 %v2452, %v2615
  %v2626 = vadd.f32 %v2453, %v2617
  %s2627 = scalar_lea.vmem %s1, 60
  %v2628 = vld [vmem:[%s2627] sm:$0xf]
  %2629 = vrot.lane.b32.xlu0 %v53, 68
  %v2630 = vpop.permute.xlu0 %2629
  %2631 = vrot.lane.b32.xlu0 %v54, 68
  %v2632 = vpop.permute.xlu0 %2631
  %2633 = vrot.lane.b32.xlu0 %v55, 68
  %v2634 = vpop.permute.xlu0 %2633
  %2635 = vrot.lane.b32.xlu0 %v56, 68
  %v2636 = vpop.permute.xlu0 %2635
  %2637 = vrot.lane.b32.xlu0 %v57, 68
  %v2638 = vpop.permute.xlu0 %2637
  %2639 = vrot.lane.b32.xlu0 %v58, 68
  %v2640 = vpop.permute.xlu0 %2639
  %2641 = vrot.lane.b32.xlu0 %v59, 68
  %v2642 = vpop.permute.xlu0 %2641
  %vm2643 = vcmask 556032
  %v2644 = vsel %vm2643, %v2630, %v2632
  %v2645 = vsel %vm2643, %v2632, %v2634
  %v2646 = vsel %vm2643, %v2634, %v2636
  %v2647 = vsel %vm2643, %v2636, %v2638
  %v2648 = vsel %vm2643, %v2638, %v2640
  %v2649 = vsel %vm2643, %v2640, %v2642
  %v2651 = vsel %vm88, %v2628, 0
  %v2654 = vsel %vm92, %v2644, 0
  %v2657 = vsel %vm92, %v2645, 0
  %v2660 = vsel %vm92, %v2646, 0
  %v2663 = vsel %vm92, %v2647, 0
  %v2666 = vsel %vm92, %v2648, 0
  %v2669 = vsel %vm92, %v2649, 0
  %2671 = vmatprep.subr.bf16.mxu0 0
  %2672 = vmatpush1.bf16.msra.mxu0 0
  %2673 = vmatprep.subr.bf16.mxu0 0
  %2674 = vmatpush1.bf16.msra.mxu0 0
  %2675 = vmatprep.subr.bf16.mxu0 0
  %2676 = vmatpush1.bf16.msra.mxu0 0
  %2677 = vmatprep.subr.bf16.mxu0 0
  %2678 = vmatpush1.bf16.msra.mxu0 0
  %2679 = vmatprep.subr.bf16.mxu0 0
  %2680 = vmatpush1.bf16.msra.mxu0 0
  %2681 = vmatprep.subr.bf16.mxu0 0
  %2682 = vmatpush1.bf16.msra.mxu0 0
  %2683 = vmatprep.subr.bf16.mxu0 0
  %2684 = vmatpush1.bf16.msra.mxu0 0
  %2685 = vmatprep.subr.bf16.mxu0 %v2657
  %2686 = vmatpush1.bf16.msra.mxu0 %v2654
  %2687 = vmatprep.subr.bf16.mxu0 0
  %2688 = vmatpush2.bf16.msra.mxu0 0
  %2689 = vmatprep.subr.bf16.mxu0 0
  %2690 = vmatpush2.bf16.msra.mxu0 0
  %2691 = vmatprep.subr.bf16.mxu0 0
  %2692 = vmatpush2.bf16.msra.mxu0 0
  %2693 = vmatprep.subr.bf16.mxu0 0
  %2694 = vmatpush2.bf16.msra.mxu0 0
  %2695 = vmatprep.subr.bf16.mxu0 0
  %2696 = vmatpush2.bf16.msra.mxu0 0
  %2697 = vmatprep.subr.bf16.mxu0 0
  %2698 = vmatpush2.bf16.msra.mxu0 0
  %2699 = vmatprep.subr.bf16.mxu0 0
  %2700 = vmatpush2.bf16.msra.mxu0 0
  %2701 = vmatprep.subr.bf16.mxu0 0
  %2702 = vmatpush2.bf16.msra.mxu0 0
  %2703 = vmatprep.mubr.bf16.mxu0 0
  %2704 = vmatmul.mubr.bf16.gmra.mxu0 %v2651
  %v2705 = vpop.f32.mrf.mxu0
  %v2706 = vadd.f32 0.0, %v2705
  %v2707 = vpop.f32.mrf.mxu0
  %v2708 = vadd.f32 0.0, %v2707
  %v2709 = vpop.f32.mrf.mxu0
  %v2710 = vpop.f32.mrf.mxu0
  %2711 = vdwg.mxu0
  %2712 = vmatprep.subr.bf16.mxu0 0
  %2713 = vmatpush1.bf16.msra.mxu0 0
  %2714 = vmatprep.subr.bf16.mxu0 0
  %2715 = vmatpush1.bf16.msra.mxu0 0
  %2716 = vmatprep.subr.bf16.mxu0 0
  %2717 = vmatpush1.bf16.msra.mxu0 0
  %2718 = vmatprep.subr.bf16.mxu0 0
  %2719 = vmatpush1.bf16.msra.mxu0 0
  %2720 = vmatprep.subr.bf16.mxu0 0
  %2721 = vmatpush1.bf16.msra.mxu0 0
  %2722 = vmatprep.subr.bf16.mxu0 0
  %2723 = vmatpush1.bf16.msra.mxu0 0
  %2724 = vmatprep.subr.bf16.mxu0 0
  %2725 = vmatpush1.bf16.msra.mxu0 0
  %2726 = vmatprep.subr.bf16.mxu0 %v2663
  %2727 = vmatpush1.bf16.msra.mxu0 %v2660
  %2728 = vmatprep.subr.bf16.mxu0 0
  %2729 = vmatpush2.bf16.msra.mxu0 0
  %2730 = vmatprep.subr.bf16.mxu0 0
  %2731 = vmatpush2.bf16.msra.mxu0 0
  %2732 = vmatprep.subr.bf16.mxu0 0
  %2733 = vmatpush2.bf16.msra.mxu0 0
  %2734 = vmatprep.subr.bf16.mxu0 0
  %2735 = vmatpush2.bf16.msra.mxu0 0
  %2736 = vmatprep.subr.bf16.mxu0 0
  %2737 = vmatpush2.bf16.msra.mxu0 0
  %2738 = vmatprep.subr.bf16.mxu0 0
  %2739 = vmatpush2.bf16.msra.mxu0 0
  %2740 = vmatprep.subr.bf16.mxu0 0
  %2741 = vmatpush2.bf16.msra.mxu0 0
  %2742 = vmatprep.subr.bf16.mxu0 0
  %2743 = vmatpush2.bf16.msra.mxu0 0
  %2744 = vmatprep.mubr.bf16.mxu0 0
  %2745 = vmatmul.mubr.bf16.gmra.mxu0 %v2651
  %v2746 = vpop.f32.mrf.mxu0
  %v2747 = vadd.f32 0.0, %v2746
  %v2748 = vpop.f32.mrf.mxu0
  %v2749 = vadd.f32 0.0, %v2748
  %v2750 = vpop.f32.mrf.mxu0
  %v2751 = vpop.f32.mrf.mxu0
  %2752 = vdwg.mxu0
  %2753 = vmatprep.subr.bf16.mxu0 0
  %2754 = vmatpush1.bf16.msra.mxu0 0
  %2755 = vmatprep.subr.bf16.mxu0 0
  %2756 = vmatpush1.bf16.msra.mxu0 0
  %2757 = vmatprep.subr.bf16.mxu0 0
  %2758 = vmatpush1.bf16.msra.mxu0 0
  %2759 = vmatprep.subr.bf16.mxu0 0
  %2760 = vmatpush1.bf16.msra.mxu0 0
  %2761 = vmatprep.subr.bf16.mxu0 0
  %2762 = vmatpush1.bf16.msra.mxu0 0
  %2763 = vmatprep.subr.bf16.mxu0 0
  %2764 = vmatpush1.bf16.msra.mxu0 0
  %2765 = vmatprep.subr.bf16.mxu0 0
  %2766 = vmatpush1.bf16.msra.mxu0 0
  %2767 = vmatprep.subr.bf16.mxu0 %v2669
  %2768 = vmatpush1.bf16.msra.mxu0 %v2666
  %2769 = vmatprep.subr.bf16.mxu0 0
  %2770 = vmatpush2.bf16.msra.mxu0 0
  %2771 = vmatprep.subr.bf16.mxu0 0
  %2772 = vmatpush2.bf16.msra.mxu0 0
  %2773 = vmatprep.subr.bf16.mxu0 0
  %2774 = vmatpush2.bf16.msra.mxu0 0
  %2775 = vmatprep.subr.bf16.mxu0 0
  %2776 = vmatpush2.bf16.msra.mxu0 0
  %2777 = vmatprep.subr.bf16.mxu0 0
  %2778 = vmatpush2.bf16.msra.mxu0 0
  %2779 = vmatprep.subr.bf16.mxu0 0
  %2780 = vmatpush2.bf16.msra.mxu0 0
  %2781 = vmatprep.subr.bf16.mxu0 0
  %2782 = vmatpush2.bf16.msra.mxu0 0
  %2783 = vmatprep.subr.bf16.mxu0 0
  %2784 = vmatpush2.bf16.msra.mxu0 0
  %2785 = vmatprep.mubr.bf16.mxu0 0
  %2786 = vmatmul.mubr.bf16.gmra.mxu0 %v2651
  %v2787 = vpop.f32.mrf.mxu0
  %v2788 = vadd.f32 0.0, %v2787
  %v2789 = vpop.f32.mrf.mxu0
  %v2790 = vadd.f32 0.0, %v2789
  %v2791 = vpop.f32.mrf.mxu0
  %v2792 = vpop.f32.mrf.mxu0
  %2793 = vdwg.mxu0
  %v2794 = vadd.f32 %v2621, %v2706
  %v2795 = vadd.f32 %v2622, %v2708
  %v2796 = vadd.f32 %v2623, %v2747
  %v2797 = vadd.f32 %v2624, %v2749
  %v2798 = vadd.f32 %v2625, %v2788
  %v2799 = vadd.f32 %v2626, %v2790
  %s2800 = scalar_lea.vmem %s1, 64
  %v2801 = vld [vmem:[%s2800] sm:$0xf]
  %2802 = vrot.lane.b32.xlu0 %v53, 67
  %v2803 = vpop.permute.xlu0 %2802
  %2804 = vrot.lane.b32.xlu0 %v54, 67
  %v2805 = vpop.permute.xlu0 %2804
  %2806 = vrot.lane.b32.xlu0 %v55, 67
  %v2807 = vpop.permute.xlu0 %2806
  %2808 = vrot.lane.b32.xlu0 %v56, 67
  %v2809 = vpop.permute.xlu0 %2808
  %2810 = vrot.lane.b32.xlu0 %v57, 67
  %v2811 = vpop.permute.xlu0 %2810
  %2812 = vrot.lane.b32.xlu0 %v58, 67
  %v2813 = vpop.permute.xlu0 %2812
  %2814 = vrot.lane.b32.xlu0 %v59, 67
  %v2815 = vpop.permute.xlu0 %2814
  %vm2816 = vcmask 547840
  %v2817 = vsel %vm2816, %v2803, %v2805
  %v2818 = vsel %vm2816, %v2805, %v2807
  %v2819 = vsel %vm2816, %v2807, %v2809
  %v2820 = vsel %vm2816, %v2809, %v2811
  %v2821 = vsel %vm2816, %v2811, %v2813
  %v2822 = vsel %vm2816, %v2813, %v2815
  %v2824 = vsel %vm88, %v2801, 0
  %v2827 = vsel %vm92, %v2817, 0
  %v2830 = vsel %vm92, %v2818, 0
  %v2833 = vsel %vm92, %v2819, 0
  %v2836 = vsel %vm92, %v2820, 0
  %v2839 = vsel %vm92, %v2821, 0
  %v2842 = vsel %vm92, %v2822, 0
  %2844 = vmatprep.subr.bf16.mxu0 0
  %2845 = vmatpush1.bf16.msra.mxu0 0
  %2846 = vmatprep.subr.bf16.mxu0 0
  %2847 = vmatpush1.bf16.msra.mxu0 0
  %2848 = vmatprep.subr.bf16.mxu0 0
  %2849 = vmatpush1.bf16.msra.mxu0 0
  %2850 = vmatprep.subr.bf16.mxu0 0
  %2851 = vmatpush1.bf16.msra.mxu0 0
  %2852 = vmatprep.subr.bf16.mxu0 0
  %2853 = vmatpush1.bf16.msra.mxu0 0
  %2854 = vmatprep.subr.bf16.mxu0 0
  %2855 = vmatpush1.bf16.msra.mxu0 0
  %2856 = vmatprep.subr.bf16.mxu0 0
  %2857 = vmatpush1.bf16.msra.mxu0 0
  %2858 = vmatprep.subr.bf16.mxu0 %v2830
  %2859 = vmatpush1.bf16.msra.mxu0 %v2827
  %2860 = vmatprep.subr.bf16.mxu0 0
  %2861 = vmatpush2.bf16.msra.mxu0 0
  %2862 = vmatprep.subr.bf16.mxu0 0
  %2863 = vmatpush2.bf16.msra.mxu0 0
  %2864 = vmatprep.subr.bf16.mxu0 0
  %2865 = vmatpush2.bf16.msra.mxu0 0
  %2866 = vmatprep.subr.bf16.mxu0 0
  %2867 = vmatpush2.bf16.msra.mxu0 0
  %2868 = vmatprep.subr.bf16.mxu0 0
  %2869 = vmatpush2.bf16.msra.mxu0 0
  %2870 = vmatprep.subr.bf16.mxu0 0
  %2871 = vmatpush2.bf16.msra.mxu0 0
  %2872 = vmatprep.subr.bf16.mxu0 0
  %2873 = vmatpush2.bf16.msra.mxu0 0
  %2874 = vmatprep.subr.bf16.mxu0 0
  %2875 = vmatpush2.bf16.msra.mxu0 0
  %2876 = vmatprep.mubr.bf16.mxu0 0
  %2877 = vmatmul.mubr.bf16.gmra.mxu0 %v2824
  %v2878 = vpop.f32.mrf.mxu0
  %v2879 = vadd.f32 0.0, %v2878
  %v2880 = vpop.f32.mrf.mxu0
  %v2881 = vadd.f32 0.0, %v2880
  %v2882 = vpop.f32.mrf.mxu0
  %v2883 = vpop.f32.mrf.mxu0
  %2884 = vdwg.mxu0
  %2885 = vmatprep.subr.bf16.mxu0 0
  %2886 = vmatpush1.bf16.msra.mxu0 0
  %2887 = vmatprep.subr.bf16.mxu0 0
  %2888 = vmatpush1.bf16.msra.mxu0 0
  %2889 = vmatprep.subr.bf16.mxu0 0
  %2890 = vmatpush1.bf16.msra.mxu0 0
  %2891 = vmatprep.subr.bf16.mxu0 0
  %2892 = vmatpush1.bf16.msra.mxu0 0
  %2893 = vmatprep.subr.bf16.mxu0 0
  %2894 = vmatpush1.bf16.msra.mxu0 0
  %2895 = vmatprep.subr.bf16.mxu0 0
  %2896 = vmatpush1.bf16.msra.mxu0 0
  %2897 = vmatprep.subr.bf16.mxu0 0
  %2898 = vmatpush1.bf16.msra.mxu0 0
  %2899 = vmatprep.subr.bf16.mxu0 %v2836
  %2900 = vmatpush1.bf16.msra.mxu0 %v2833
  %2901 = vmatprep.subr.bf16.mxu0 0
  %2902 = vmatpush2.bf16.msra.mxu0 0
  %2903 = vmatprep.subr.bf16.mxu0 0
  %2904 = vmatpush2.bf16.msra.mxu0 0
  %2905 = vmatprep.subr.bf16.mxu0 0
  %2906 = vmatpush2.bf16.msra.mxu0 0
  %2907 = vmatprep.subr.bf16.mxu0 0
  %2908 = vmatpush2.bf16.msra.mxu0 0
  %2909 = vmatprep.subr.bf16.mxu0 0
  %2910 = vmatpush2.bf16.msra.mxu0 0
  %2911 = vmatprep.subr.bf16.mxu0 0
  %2912 = vmatpush2.bf16.msra.mxu0 0
  %2913 = vmatprep.subr.bf16.mxu0 0
  %2914 = vmatpush2.bf16.msra.mxu0 0
  %2915 = vmatprep.subr.bf16.mxu0 0
  %2916 = vmatpush2.bf16.msra.mxu0 0
  %2917 = vmatprep.mubr.bf16.mxu0 0
  %2918 = vmatmul.mubr.bf16.gmra.mxu0 %v2824
  %v2919 = vpop.f32.mrf.mxu0
  %v2920 = vadd.f32 0.0, %v2919
  %v2921 = vpop.f32.mrf.mxu0
  %v2922 = vadd.f32 0.0, %v2921
  %v2923 = vpop.f32.mrf.mxu0
  %v2924 = vpop.f32.mrf.mxu0
  %2925 = vdwg.mxu0
  %2926 = vmatprep.subr.bf16.mxu0 0
  %2927 = vmatpush1.bf16.msra.mxu0 0
  %2928 = vmatprep.subr.bf16.mxu0 0
  %2929 = vmatpush1.bf16.msra.mxu0 0
  %2930 = vmatprep.subr.bf16.mxu0 0
  %2931 = vmatpush1.bf16.msra.mxu0 0
  %2932 = vmatprep.subr.bf16.mxu0 0
  %2933 = vmatpush1.bf16.msra.mxu0 0
  %2934 = vmatprep.subr.bf16.mxu0 0
  %2935 = vmatpush1.bf16.msra.mxu0 0
  %2936 = vmatprep.subr.bf16.mxu0 0
  %2937 = vmatpush1.bf16.msra.mxu0 0
  %2938 = vmatprep.subr.bf16.mxu0 0
  %2939 = vmatpush1.bf16.msra.mxu0 0
  %2940 = vmatprep.subr.bf16.mxu0 %v2842
  %2941 = vmatpush1.bf16.msra.mxu0 %v2839
  %2942 = vmatprep.subr.bf16.mxu0 0
  %2943 = vmatpush2.bf16.msra.mxu0 0
  %2944 = vmatprep.subr.bf16.mxu0 0
  %2945 = vmatpush2.bf16.msra.mxu0 0
  %2946 = vmatprep.subr.bf16.mxu0 0
  %2947 = vmatpush2.bf16.msra.mxu0 0
  %2948 = vmatprep.subr.bf16.mxu0 0
  %2949 = vmatpush2.bf16.msra.mxu0 0
  %2950 = vmatprep.subr.bf16.mxu0 0
  %2951 = vmatpush2.bf16.msra.mxu0 0
  %2952 = vmatprep.subr.bf16.mxu0 0
  %2953 = vmatpush2.bf16.msra.mxu0 0
  %2954 = vmatprep.subr.bf16.mxu0 0
  %2955 = vmatpush2.bf16.msra.mxu0 0
  %2956 = vmatprep.subr.bf16.mxu0 0
  %2957 = vmatpush2.bf16.msra.mxu0 0
  %2958 = vmatprep.mubr.bf16.mxu0 0
  %2959 = vmatmul.mubr.bf16.gmra.mxu0 %v2824
  %v2960 = vpop.f32.mrf.mxu0
  %v2961 = vadd.f32 0.0, %v2960
  %v2962 = vpop.f32.mrf.mxu0
  %v2963 = vadd.f32 0.0, %v2962
  %v2964 = vpop.f32.mrf.mxu0
  %v2965 = vpop.f32.mrf.mxu0
  %2966 = vdwg.mxu0
  %v2967 = vadd.f32 %v2794, %v2879
  %v2968 = vadd.f32 %v2795, %v2881
  %v2969 = vadd.f32 %v2796, %v2920
  %v2970 = vadd.f32 %v2797, %v2922
  %v2971 = vadd.f32 %v2798, %v2961
  %v2972 = vadd.f32 %v2799, %v2963
  %s2973 = scalar_lea.vmem %s1, 68
  %v2974 = vld [vmem:[%s2973] sm:$0xf]
  %2975 = vrot.lane.b32.xlu0 %v53, 66
  %v2976 = vpop.permute.xlu0 %2975
  %2977 = vrot.lane.b32.xlu0 %v54, 66
  %v2978 = vpop.permute.xlu0 %2977
  %2979 = vrot.lane.b32.xlu0 %v55, 66
  %v2980 = vpop.permute.xlu0 %2979
  %2981 = vrot.lane.b32.xlu0 %v56, 66
  %v2982 = vpop.permute.xlu0 %2981
  %2983 = vrot.lane.b32.xlu0 %v57, 66
  %v2984 = vpop.permute.xlu0 %2983
  %2985 = vrot.lane.b32.xlu0 %v58, 66
  %v2986 = vpop.permute.xlu0 %2985
  %2987 = vrot.lane.b32.xlu0 %v59, 66
  %v2988 = vpop.permute.xlu0 %2987
  %vm2989 = vcmask 539648
  %v2990 = vsel %vm2989, %v2976, %v2978
  %v2991 = vsel %vm2989, %v2978, %v2980
  %v2992 = vsel %vm2989, %v2980, %v2982
  %v2993 = vsel %vm2989, %v2982, %v2984
  %v2994 = vsel %vm2989, %v2984, %v2986
  %v2995 = vsel %vm2989, %v2986, %v2988
  %v2997 = vsel %vm88, %v2974, 0
  %v3000 = vsel %vm92, %v2990, 0
  %v3003 = vsel %vm92, %v2991, 0
  %v3006 = vsel %vm92, %v2992, 0
  %v3009 = vsel %vm92, %v2993, 0
  %v3012 = vsel %vm92, %v2994, 0
  %v3015 = vsel %vm92, %v2995, 0
  %3017 = vmatprep.subr.bf16.mxu0 0
  %3018 = vmatpush1.bf16.msra.mxu0 0
  %3019 = vmatprep.subr.bf16.mxu0 0
  %3020 = vmatpush1.bf16.msra.mxu0 0
  %3021 = vmatprep.subr.bf16.mxu0 0
  %3022 = vmatpush1.bf16.msra.mxu0 0
  %3023 = vmatprep.subr.bf16.mxu0 0
  %3024 = vmatpush1.bf16.msra.mxu0 0
  %3025 = vmatprep.subr.bf16.mxu0 0
  %3026 = vmatpush1.bf16.msra.mxu0 0
  %3027 = vmatprep.subr.bf16.mxu0 0
  %3028 = vmatpush1.bf16.msra.mxu0 0
  %3029 = vmatprep.subr.bf16.mxu0 0
  %3030 = vmatpush1.bf16.msra.mxu0 0
  %3031 = vmatprep.subr.bf16.mxu0 %v3003
  %3032 = vmatpush1.bf16.msra.mxu0 %v3000
  %3033 = vmatprep.subr.bf16.mxu0 0
  %3034 = vmatpush2.bf16.msra.mxu0 0
  %3035 = vmatprep.subr.bf16.mxu0 0
  %3036 = vmatpush2.bf16.msra.mxu0 0
  %3037 = vmatprep.subr.bf16.mxu0 0
  %3038 = vmatpush2.bf16.msra.mxu0 0
  %3039 = vmatprep.subr.bf16.mxu0 0
  %3040 = vmatpush2.bf16.msra.mxu0 0
  %3041 = vmatprep.subr.bf16.mxu0 0
  %3042 = vmatpush2.bf16.msra.mxu0 0
  %3043 = vmatprep.subr.bf16.mxu0 0
  %3044 = vmatpush2.bf16.msra.mxu0 0
  %3045 = vmatprep.subr.bf16.mxu0 0
  %3046 = vmatpush2.bf16.msra.mxu0 0
  %3047 = vmatprep.subr.bf16.mxu0 0
  %3048 = vmatpush2.bf16.msra.mxu0 0
  %3049 = vmatprep.mubr.bf16.mxu0 0
  %3050 = vmatmul.mubr.bf16.gmra.mxu0 %v2997
  %v3051 = vpop.f32.mrf.mxu0
  %v3052 = vadd.f32 0.0, %v3051
  %v3053 = vpop.f32.mrf.mxu0
  %v3054 = vadd.f32 0.0, %v3053
  %v3055 = vpop.f32.mrf.mxu0
  %v3056 = vpop.f32.mrf.mxu0
  %3057 = vdwg.mxu0
  %3058 = vmatprep.subr.bf16.mxu0 0
  %3059 = vmatpush1.bf16.msra.mxu0 0
  %3060 = vmatprep.subr.bf16.mxu0 0
  %3061 = vmatpush1.bf16.msra.mxu0 0
  %3062 = vmatprep.subr.bf16.mxu0 0
  %3063 = vmatpush1.bf16.msra.mxu0 0
  %3064 = vmatprep.subr.bf16.mxu0 0
  %3065 = vmatpush1.bf16.msra.mxu0 0
  %3066 = vmatprep.subr.bf16.mxu0 0
  %3067 = vmatpush1.bf16.msra.mxu0 0
  %3068 = vmatprep.subr.bf16.mxu0 0
  %3069 = vmatpush1.bf16.msra.mxu0 0
  %3070 = vmatprep.subr.bf16.mxu0 0
  %3071 = vmatpush1.bf16.msra.mxu0 0
  %3072 = vmatprep.subr.bf16.mxu0 %v3009
  %3073 = vmatpush1.bf16.msra.mxu0 %v3006
  %3074 = vmatprep.subr.bf16.mxu0 0
  %3075 = vmatpush2.bf16.msra.mxu0 0
  %3076 = vmatprep.subr.bf16.mxu0 0
  %3077 = vmatpush2.bf16.msra.mxu0 0
  %3078 = vmatprep.subr.bf16.mxu0 0
  %3079 = vmatpush2.bf16.msra.mxu0 0
  %3080 = vmatprep.subr.bf16.mxu0 0
  %3081 = vmatpush2.bf16.msra.mxu0 0
  %3082 = vmatprep.subr.bf16.mxu0 0
  %3083 = vmatpush2.bf16.msra.mxu0 0
  %3084 = vmatprep.subr.bf16.mxu0 0
  %3085 = vmatpush2.bf16.msra.mxu0 0
  %3086 = vmatprep.subr.bf16.mxu0 0
  %3087 = vmatpush2.bf16.msra.mxu0 0
  %3088 = vmatprep.subr.bf16.mxu0 0
  %3089 = vmatpush2.bf16.msra.mxu0 0
  %3090 = vmatprep.mubr.bf16.mxu0 0
  %3091 = vmatmul.mubr.bf16.gmra.mxu0 %v2997
  %v3092 = vpop.f32.mrf.mxu0
  %v3093 = vadd.f32 0.0, %v3092
  %v3094 = vpop.f32.mrf.mxu0
  %v3095 = vadd.f32 0.0, %v3094
  %v3096 = vpop.f32.mrf.mxu0
  %v3097 = vpop.f32.mrf.mxu0
  %3098 = vdwg.mxu0
  %3099 = vmatprep.subr.bf16.mxu0 0
  %3100 = vmatpush1.bf16.msra.mxu0 0
  %3101 = vmatprep.subr.bf16.mxu0 0
  %3102 = vmatpush1.bf16.msra.mxu0 0
  %3103 = vmatprep.subr.bf16.mxu0 0
  %3104 = vmatpush1.bf16.msra.mxu0 0
  %3105 = vmatprep.subr.bf16.mxu0 0
  %3106 = vmatpush1.bf16.msra.mxu0 0
  %3107 = vmatprep.subr.bf16.mxu0 0
  %3108 = vmatpush1.bf16.msra.mxu0 0
  %3109 = vmatprep.subr.bf16.mxu0 0
  %3110 = vmatpush1.bf16.msra.mxu0 0
  %3111 = vmatprep.subr.bf16.mxu0 0
  %3112 = vmatpush1.bf16.msra.mxu0 0
  %3113 = vmatprep.subr.bf16.mxu0 %v3015
  %3114 = vmatpush1.bf16.msra.mxu0 %v3012
  %3115 = vmatprep.subr.bf16.mxu0 0
  %3116 = vmatpush2.bf16.msra.mxu0 0
  %3117 = vmatprep.subr.bf16.mxu0 0
  %3118 = vmatpush2.bf16.msra.mxu0 0
  %3119 = vmatprep.subr.bf16.mxu0 0
  %3120 = vmatpush2.bf16.msra.mxu0 0
  %3121 = vmatprep.subr.bf16.mxu0 0
  %3122 = vmatpush2.bf16.msra.mxu0 0
  %3123 = vmatprep.subr.bf16.mxu0 0
  %3124 = vmatpush2.bf16.msra.mxu0 0
  %3125 = vmatprep.subr.bf16.mxu0 0
  %3126 = vmatpush2.bf16.msra.mxu0 0
  %3127 = vmatprep.subr.bf16.mxu0 0
  %3128 = vmatpush2.bf16.msra.mxu0 0
  %3129 = vmatprep.subr.bf16.mxu0 0
  %3130 = vmatpush2.bf16.msra.mxu0 0
  %3131 = vmatprep.mubr.bf16.mxu0 0
  %3132 = vmatmul.mubr.bf16.gmra.mxu0 %v2997
  %v3133 = vpop.f32.mrf.mxu0
  %v3134 = vadd.f32 0.0, %v3133
  %v3135 = vpop.f32.mrf.mxu0
  %v3136 = vadd.f32 0.0, %v3135
  %v3137 = vpop.f32.mrf.mxu0
  %v3138 = vpop.f32.mrf.mxu0
  %3139 = vdwg.mxu0
  %v3140 = vadd.f32 %v2967, %v3052
  %v3141 = vadd.f32 %v2968, %v3054
  %v3142 = vadd.f32 %v2969, %v3093
  %v3143 = vadd.f32 %v2970, %v3095
  %v3144 = vadd.f32 %v2971, %v3134
  %v3145 = vadd.f32 %v2972, %v3136
  %s3146 = scalar_lea.vmem %s1, 72
  %v3147 = vld [vmem:[%s3146] sm:$0xf]
  %3148 = vrot.lane.b32.xlu0 %v53, 65
  %v3149 = vpop.permute.xlu0 %3148
  %3150 = vrot.lane.b32.xlu0 %v54, 65
  %v3151 = vpop.permute.xlu0 %3150
  %3152 = vrot.lane.b32.xlu0 %v55, 65
  %v3153 = vpop.permute.xlu0 %3152
  %3154 = vrot.lane.b32.xlu0 %v56, 65
  %v3155 = vpop.permute.xlu0 %3154
  %3156 = vrot.lane.b32.xlu0 %v57, 65
  %v3157 = vpop.permute.xlu0 %3156
  %3158 = vrot.lane.b32.xlu0 %v58, 65
  %v3159 = vpop.permute.xlu0 %3158
  %3160 = vrot.lane.b32.xlu0 %v59, 65
  %v3161 = vpop.permute.xlu0 %3160
  %vm3162 = vcmask 531456
  %v3163 = vsel %vm3162, %v3149, %v3151
  %v3164 = vsel %vm3162, %v3151, %v3153
  %v3165 = vsel %vm3162, %v3153, %v3155
  %v3166 = vsel %vm3162, %v3155, %v3157
  %v3167 = vsel %vm3162, %v3157, %v3159
  %v3168 = vsel %vm3162, %v3159, %v3161
  %v3170 = vsel %vm88, %v3147, 0
  %v3173 = vsel %vm92, %v3163, 0
  %v3176 = vsel %vm92, %v3164, 0
  %v3179 = vsel %vm92, %v3165, 0
  %v3182 = vsel %vm92, %v3166, 0
  %v3185 = vsel %vm92, %v3167, 0
  %v3188 = vsel %vm92, %v3168, 0
  %3190 = vmatprep.subr.bf16.mxu0 0
  %3191 = vmatpush1.bf16.msra.mxu0 0
  %3192 = vmatprep.subr.bf16.mxu0 0
  %3193 = vmatpush1.bf16.msra.mxu0 0
  %3194 = vmatprep.subr.bf16.mxu0 0
  %3195 = vmatpush1.bf16.msra.mxu0 0
  %3196 = vmatprep.subr.bf16.mxu0 0
  %3197 = vmatpush1.bf16.msra.mxu0 0
  %3198 = vmatprep.subr.bf16.mxu0 0
  %3199 = vmatpush1.bf16.msra.mxu0 0
  %3200 = vmatprep.subr.bf16.mxu0 0
  %3201 = vmatpush1.bf16.msra.mxu0 0
  %3202 = vmatprep.subr.bf16.mxu0 0
  %3203 = vmatpush1.bf16.msra.mxu0 0
  %3204 = vmatprep.subr.bf16.mxu0 %v3176
  %3205 = vmatpush1.bf16.msra.mxu0 %v3173
  %3206 = vmatprep.subr.bf16.mxu0 0
  %3207 = vmatpush2.bf16.msra.mxu0 0
  %3208 = vmatprep.subr.bf16.mxu0 0
  %3209 = vmatpush2.bf16.msra.mxu0 0
  %3210 = vmatprep.subr.bf16.mxu0 0
  %3211 = vmatpush2.bf16.msra.mxu0 0
  %3212 = vmatprep.subr.bf16.mxu0 0
  %3213 = vmatpush2.bf16.msra.mxu0 0
  %3214 = vmatprep.subr.bf16.mxu0 0
  %3215 = vmatpush2.bf16.msra.mxu0 0
  %3216 = vmatprep.subr.bf16.mxu0 0
  %3217 = vmatpush2.bf16.msra.mxu0 0
  %3218 = vmatprep.subr.bf16.mxu0 0
  %3219 = vmatpush2.bf16.msra.mxu0 0
  %3220 = vmatprep.subr.bf16.mxu0 0
  %3221 = vmatpush2.bf16.msra.mxu0 0
  %3222 = vmatprep.mubr.bf16.mxu0 0
  %3223 = vmatmul.mubr.bf16.gmra.mxu0 %v3170
  %v3224 = vpop.f32.mrf.mxu0
  %v3225 = vadd.f32 0.0, %v3224
  %v3226 = vpop.f32.mrf.mxu0
  %v3227 = vadd.f32 0.0, %v3226
  %v3228 = vpop.f32.mrf.mxu0
  %v3229 = vpop.f32.mrf.mxu0
  %3230 = vdwg.mxu0
  %3231 = vmatprep.subr.bf16.mxu0 0
  %3232 = vmatpush1.bf16.msra.mxu0 0
  %3233 = vmatprep.subr.bf16.mxu0 0
  %3234 = vmatpush1.bf16.msra.mxu0 0
  %3235 = vmatprep.subr.bf16.mxu0 0
  %3236 = vmatpush1.bf16.msra.mxu0 0
  %3237 = vmatprep.subr.bf16.mxu0 0
  %3238 = vmatpush1.bf16.msra.mxu0 0
  %3239 = vmatprep.subr.bf16.mxu0 0
  %3240 = vmatpush1.bf16.msra.mxu0 0
  %3241 = vmatprep.subr.bf16.mxu0 0
  %3242 = vmatpush1.bf16.msra.mxu0 0
  %3243 = vmatprep.subr.bf16.mxu0 0
  %3244 = vmatpush1.bf16.msra.mxu0 0
  %3245 = vmatprep.subr.bf16.mxu0 %v3182
  %3246 = vmatpush1.bf16.msra.mxu0 %v3179
  %3247 = vmatprep.subr.bf16.mxu0 0
  %3248 = vmatpush2.bf16.msra.mxu0 0
  %3249 = vmatprep.subr.bf16.mxu0 0
  %3250 = vmatpush2.bf16.msra.mxu0 0
  %3251 = vmatprep.subr.bf16.mxu0 0
  %3252 = vmatpush2.bf16.msra.mxu0 0
  %3253 = vmatprep.subr.bf16.mxu0 0
  %3254 = vmatpush2.bf16.msra.mxu0 0
  %3255 = vmatprep.subr.bf16.mxu0 0
  %3256 = vmatpush2.bf16.msra.mxu0 0
  %3257 = vmatprep.subr.bf16.mxu0 0
  %3258 = vmatpush2.bf16.msra.mxu0 0
  %3259 = vmatprep.subr.bf16.mxu0 0
  %3260 = vmatpush2.bf16.msra.mxu0 0
  %3261 = vmatprep.subr.bf16.mxu0 0
  %3262 = vmatpush2.bf16.msra.mxu0 0
  %3263 = vmatprep.mubr.bf16.mxu0 0
  %3264 = vmatmul.mubr.bf16.gmra.mxu0 %v3170
  %v3265 = vpop.f32.mrf.mxu0
  %v3266 = vadd.f32 0.0, %v3265
  %v3267 = vpop.f32.mrf.mxu0
  %v3268 = vadd.f32 0.0, %v3267
  %v3269 = vpop.f32.mrf.mxu0
  %v3270 = vpop.f32.mrf.mxu0
  %3271 = vdwg.mxu0
  %3272 = vmatprep.subr.bf16.mxu0 0
  %3273 = vmatpush1.bf16.msra.mxu0 0
  %3274 = vmatprep.subr.bf16.mxu0 0
  %3275 = vmatpush1.bf16.msra.mxu0 0
  %3276 = vmatprep.subr.bf16.mxu0 0
  %3277 = vmatpush1.bf16.msra.mxu0 0
  %3278 = vmatprep.subr.bf16.mxu0 0
  %3279 = vmatpush1.bf16.msra.mxu0 0
  %3280 = vmatprep.subr.bf16.mxu0 0
  %3281 = vmatpush1.bf16.msra.mxu0 0
  %3282 = vmatprep.subr.bf16.mxu0 0
  %3283 = vmatpush1.bf16.msra.mxu0 0
  %3284 = vmatprep.subr.bf16.mxu0 0
  %3285 = vmatpush1.bf16.msra.mxu0 0
  %3286 = vmatprep.subr.bf16.mxu0 %v3188
  %3287 = vmatpush1.bf16.msra.mxu0 %v3185
  %3288 = vmatprep.subr.bf16.mxu0 0
  %3289 = vmatpush2.bf16.msra.mxu0 0
  %3290 = vmatprep.subr.bf16.mxu0 0
  %3291 = vmatpush2.bf16.msra.mxu0 0
  %3292 = vmatprep.subr.bf16.mxu0 0
  %3293 = vmatpush2.bf16.msra.mxu0 0
  %3294 = vmatprep.subr.bf16.mxu0 0
  %3295 = vmatpush2.bf16.msra.mxu0 0
  %3296 = vmatprep.subr.bf16.mxu0 0
  %3297 = vmatpush2.bf16.msra.mxu0 0
  %3298 = vmatprep.subr.bf16.mxu0 0
  %3299 = vmatpush2.bf16.msra.mxu0 0
  %3300 = vmatprep.subr.bf16.mxu0 0
  %3301 = vmatpush2.bf16.msra.mxu0 0
  %3302 = vmatprep.subr.bf16.mxu0 0
  %3303 = vmatpush2.bf16.msra.mxu0 0
  %3304 = vmatprep.mubr.bf16.mxu0 0
  %3305 = vmatmul.mubr.bf16.gmra.mxu0 %v3170
  %v3306 = vpop.f32.mrf.mxu0
  %v3307 = vadd.f32 0.0, %v3306
  %v3308 = vpop.f32.mrf.mxu0
  %v3309 = vadd.f32 0.0, %v3308
  %v3310 = vpop.f32.mrf.mxu0
  %v3311 = vpop.f32.mrf.mxu0
  %3312 = vdwg.mxu0
  %v3313 = vadd.f32 %v3140, %v3225
  %v3314 = vadd.f32 %v3141, %v3227
  %v3315 = vadd.f32 %v3142, %v3266
  %v3316 = vadd.f32 %v3143, %v3268
  %v3317 = vadd.f32 %v3144, %v3307
  %v3318 = vadd.f32 %v3145, %v3309
  %s3319 = scalar_lea.vmem %s1, 76
  %v3320 = vld [vmem:[%s3319] sm:$0xf]
  %3321 = vrot.lane.b32.xlu0 %v53, 64
  %v3322 = vpop.permute.xlu0 %3321
  %3323 = vrot.lane.b32.xlu0 %v54, 64
  %v3324 = vpop.permute.xlu0 %3323
  %3325 = vrot.lane.b32.xlu0 %v55, 64
  %v3326 = vpop.permute.xlu0 %3325
  %3327 = vrot.lane.b32.xlu0 %v56, 64
  %v3328 = vpop.permute.xlu0 %3327
  %3329 = vrot.lane.b32.xlu0 %v57, 64
  %v3330 = vpop.permute.xlu0 %3329
  %3331 = vrot.lane.b32.xlu0 %v58, 64
  %v3332 = vpop.permute.xlu0 %3331
  %3333 = vrot.lane.b32.xlu0 %v59, 64
  %v3334 = vpop.permute.xlu0 %3333
  %vm3335 = vcmask 523264
  %v3336 = vsel %vm3335, %v3322, %v3324
  %v3337 = vsel %vm3335, %v3324, %v3326
  %v3338 = vsel %vm3335, %v3326, %v3328
  %v3339 = vsel %vm3335, %v3328, %v3330
  %v3340 = vsel %vm3335, %v3330, %v3332
  %v3341 = vsel %vm3335, %v3332, %v3334
  %v3343 = vsel %vm88, %v3320, 0
  %v3346 = vsel %vm92, %v3336, 0
  %v3349 = vsel %vm92, %v3337, 0
  %v3352 = vsel %vm92, %v3338, 0
  %v3355 = vsel %vm92, %v3339, 0
  %v3358 = vsel %vm92, %v3340, 0
  %v3361 = vsel %vm92, %v3341, 0
  %3363 = vmatprep.subr.bf16.mxu0 0
  %3364 = vmatpush1.bf16.msra.mxu0 0
  %3365 = vmatprep.subr.bf16.mxu0 0
  %3366 = vmatpush1.bf16.msra.mxu0 0
  %3367 = vmatprep.subr.bf16.mxu0 0
  %3368 = vmatpush1.bf16.msra.mxu0 0
  %3369 = vmatprep.subr.bf16.mxu0 0
  %3370 = vmatpush1.bf16.msra.mxu0 0
  %3371 = vmatprep.subr.bf16.mxu0 0
  %3372 = vmatpush1.bf16.msra.mxu0 0
  %3373 = vmatprep.subr.bf16.mxu0 0
  %3374 = vmatpush1.bf16.msra.mxu0 0
  %3375 = vmatprep.subr.bf16.mxu0 0
  %3376 = vmatpush1.bf16.msra.mxu0 0
  %3377 = vmatprep.subr.bf16.mxu0 %v3349
  %3378 = vmatpush1.bf16.msra.mxu0 %v3346
  %3379 = vmatprep.subr.bf16.mxu0 0
  %3380 = vmatpush2.bf16.msra.mxu0 0
  %3381 = vmatprep.subr.bf16.mxu0 0
  %3382 = vmatpush2.bf16.msra.mxu0 0
  %3383 = vmatprep.subr.bf16.mxu0 0
  %3384 = vmatpush2.bf16.msra.mxu0 0
  %3385 = vmatprep.subr.bf16.mxu0 0
  %3386 = vmatpush2.bf16.msra.mxu0 0
  %3387 = vmatprep.subr.bf16.mxu0 0
  %3388 = vmatpush2.bf16.msra.mxu0 0
  %3389 = vmatprep.subr.bf16.mxu0 0
  %3390 = vmatpush2.bf16.msra.mxu0 0
  %3391 = vmatprep.subr.bf16.mxu0 0
  %3392 = vmatpush2.bf16.msra.mxu0 0
  %3393 = vmatprep.subr.bf16.mxu0 0
  %3394 = vmatpush2.bf16.msra.mxu0 0
  %3395 = vmatprep.mubr.bf16.mxu0 0
  %3396 = vmatmul.mubr.bf16.gmra.mxu0 %v3343
  %v3397 = vpop.f32.mrf.mxu0
  %v3398 = vadd.f32 0.0, %v3397
  %v3399 = vpop.f32.mrf.mxu0
  %v3400 = vadd.f32 0.0, %v3399
  %v3401 = vpop.f32.mrf.mxu0
  %v3402 = vpop.f32.mrf.mxu0
  %3403 = vdwg.mxu0
  %3404 = vmatprep.subr.bf16.mxu0 0
  %3405 = vmatpush1.bf16.msra.mxu0 0
  %3406 = vmatprep.subr.bf16.mxu0 0
  %3407 = vmatpush1.bf16.msra.mxu0 0
  %3408 = vmatprep.subr.bf16.mxu0 0
  %3409 = vmatpush1.bf16.msra.mxu0 0
  %3410 = vmatprep.subr.bf16.mxu0 0
  %3411 = vmatpush1.bf16.msra.mxu0 0
  %3412 = vmatprep.subr.bf16.mxu0 0
  %3413 = vmatpush1.bf16.msra.mxu0 0
  %3414 = vmatprep.subr.bf16.mxu0 0
  %3415 = vmatpush1.bf16.msra.mxu0 0
  %3416 = vmatprep.subr.bf16.mxu0 0
  %3417 = vmatpush1.bf16.msra.mxu0 0
  %3418 = vmatprep.subr.bf16.mxu0 %v3355
  %3419 = vmatpush1.bf16.msra.mxu0 %v3352
  %3420 = vmatprep.subr.bf16.mxu0 0
  %3421 = vmatpush2.bf16.msra.mxu0 0
  %3422 = vmatprep.subr.bf16.mxu0 0
  %3423 = vmatpush2.bf16.msra.mxu0 0
  %3424 = vmatprep.subr.bf16.mxu0 0
  %3425 = vmatpush2.bf16.msra.mxu0 0
  %3426 = vmatprep.subr.bf16.mxu0 0
  %3427 = vmatpush2.bf16.msra.mxu0 0
  %3428 = vmatprep.subr.bf16.mxu0 0
  %3429 = vmatpush2.bf16.msra.mxu0 0
  %3430 = vmatprep.subr.bf16.mxu0 0
  %3431 = vmatpush2.bf16.msra.mxu0 0
  %3432 = vmatprep.subr.bf16.mxu0 0
  %3433 = vmatpush2.bf16.msra.mxu0 0
  %3434 = vmatprep.subr.bf16.mxu0 0
  %3435 = vmatpush2.bf16.msra.mxu0 0
  %3436 = vmatprep.mubr.bf16.mxu0 0
  %3437 = vmatmul.mubr.bf16.gmra.mxu0 %v3343
  %v3438 = vpop.f32.mrf.mxu0
  %v3439 = vadd.f32 0.0, %v3438
  %v3440 = vpop.f32.mrf.mxu0
  %v3441 = vadd.f32 0.0, %v3440
  %v3442 = vpop.f32.mrf.mxu0
  %v3443 = vpop.f32.mrf.mxu0
  %3444 = vdwg.mxu0
  %3445 = vmatprep.subr.bf16.mxu0 0
  %3446 = vmatpush1.bf16.msra.mxu0 0
  %3447 = vmatprep.subr.bf16.mxu0 0
  %3448 = vmatpush1.bf16.msra.mxu0 0
  %3449 = vmatprep.subr.bf16.mxu0 0
  %3450 = vmatpush1.bf16.msra.mxu0 0
  %3451 = vmatprep.subr.bf16.mxu0 0
  %3452 = vmatpush1.bf16.msra.mxu0 0
  %3453 = vmatprep.subr.bf16.mxu0 0
  %3454 = vmatpush1.bf16.msra.mxu0 0
  %3455 = vmatprep.subr.bf16.mxu0 0
  %3456 = vmatpush1.bf16.msra.mxu0 0
  %3457 = vmatprep.subr.bf16.mxu0 0
  %3458 = vmatpush1.bf16.msra.mxu0 0
  %3459 = vmatprep.subr.bf16.mxu0 %v3361
  %3460 = vmatpush1.bf16.msra.mxu0 %v3358
  %3461 = vmatprep.subr.bf16.mxu0 0
  %3462 = vmatpush2.bf16.msra.mxu0 0
  %3463 = vmatprep.subr.bf16.mxu0 0
  %3464 = vmatpush2.bf16.msra.mxu0 0
  %3465 = vmatprep.subr.bf16.mxu0 0
  %3466 = vmatpush2.bf16.msra.mxu0 0
  %3467 = vmatprep.subr.bf16.mxu0 0
  %3468 = vmatpush2.bf16.msra.mxu0 0
  %3469 = vmatprep.subr.bf16.mxu0 0
  %3470 = vmatpush2.bf16.msra.mxu0 0
  %3471 = vmatprep.subr.bf16.mxu0 0
  %3472 = vmatpush2.bf16.msra.mxu0 0
  %3473 = vmatprep.subr.bf16.mxu0 0
  %3474 = vmatpush2.bf16.msra.mxu0 0
  %3475 = vmatprep.subr.bf16.mxu0 0
  %3476 = vmatpush2.bf16.msra.mxu0 0
  %3477 = vmatprep.mubr.bf16.mxu0 0
  %3478 = vmatmul.mubr.bf16.gmra.mxu0 %v3343
  %v3479 = vpop.f32.mrf.mxu0
  %v3480 = vadd.f32 0.0, %v3479
  %v3481 = vpop.f32.mrf.mxu0
  %v3482 = vadd.f32 0.0, %v3481
  %v3483 = vpop.f32.mrf.mxu0
  %v3484 = vpop.f32.mrf.mxu0
  %3485 = vdwg.mxu0
  %v3486 = vadd.f32 %v3313, %v3398
  %v3487 = vadd.f32 %v3314, %v3400
  %v3488 = vadd.f32 %v3315, %v3439
  %v3489 = vadd.f32 %v3316, %v3441
  %v3490 = vadd.f32 %v3317, %v3480
  %v3491 = vadd.f32 %v3318, %v3482
  %s3492 = scalar_lea.vmem %s1, 80
  %v3493 = vld [vmem:[%s3492] sm:$0xf]
  %3494 = vrot.lane.b32.xlu0 %v53, 48
  %v3495 = vpop.permute.xlu0 %3494
  %3496 = vrot.lane.b32.xlu0 %v54, 48
  %v3497 = vpop.permute.xlu0 %3496
  %3498 = vrot.lane.b32.xlu0 %v55, 48
  %v3499 = vpop.permute.xlu0 %3498
  %3500 = vrot.lane.b32.xlu0 %v56, 48
  %v3501 = vpop.permute.xlu0 %3500
  %3502 = vrot.lane.b32.xlu0 %v57, 48
  %v3503 = vpop.permute.xlu0 %3502
  %3504 = vrot.lane.b32.xlu0 %v58, 48
  %v3505 = vpop.permute.xlu0 %3504
  %3506 = vrot.lane.b32.xlu0 %v59, 48
  %v3507 = vpop.permute.xlu0 %3506
  %vm3508 = vcmask 392192
  %v3509 = vsel %vm3508, %v3495, %v3497
  %v3510 = vsel %vm3508, %v3497, %v3499
  %v3511 = vsel %vm3508, %v3499, %v3501
  %v3512 = vsel %vm3508, %v3501, %v3503
  %v3513 = vsel %vm3508, %v3503, %v3505
  %v3514 = vsel %vm3508, %v3505, %v3507
  %v3516 = vsel %vm88, %v3493, 0
  %v3519 = vsel %vm92, %v3509, 0
  %v3522 = vsel %vm92, %v3510, 0
  %v3525 = vsel %vm92, %v3511, 0
  %v3528 = vsel %vm92, %v3512, 0
  %v3531 = vsel %vm92, %v3513, 0
  %v3534 = vsel %vm92, %v3514, 0
  %3536 = vmatprep.subr.bf16.mxu0 0
  %3537 = vmatpush1.bf16.msra.mxu0 0
  %3538 = vmatprep.subr.bf16.mxu0 0
  %3539 = vmatpush1.bf16.msra.mxu0 0
  %3540 = vmatprep.subr.bf16.mxu0 0
  %3541 = vmatpush1.bf16.msra.mxu0 0
  %3542 = vmatprep.subr.bf16.mxu0 0
  %3543 = vmatpush1.bf16.msra.mxu0 0
  %3544 = vmatprep.subr.bf16.mxu0 0
  %3545 = vmatpush1.bf16.msra.mxu0 0
  %3546 = vmatprep.subr.bf16.mxu0 0
  %3547 = vmatpush1.bf16.msra.mxu0 0
  %3548 = vmatprep.subr.bf16.mxu0 0
  %3549 = vmatpush1.bf16.msra.mxu0 0
  %3550 = vmatprep.subr.bf16.mxu0 %v3522
  %3551 = vmatpush1.bf16.msra.mxu0 %v3519
  %3552 = vmatprep.subr.bf16.mxu0 0
  %3553 = vmatpush2.bf16.msra.mxu0 0
  %3554 = vmatprep.subr.bf16.mxu0 0
  %3555 = vmatpush2.bf16.msra.mxu0 0
  %3556 = vmatprep.subr.bf16.mxu0 0
  %3557 = vmatpush2.bf16.msra.mxu0 0
  %3558 = vmatprep.subr.bf16.mxu0 0
  %3559 = vmatpush2.bf16.msra.mxu0 0
  %3560 = vmatprep.subr.bf16.mxu0 0
  %3561 = vmatpush2.bf16.msra.mxu0 0
  %3562 = vmatprep.subr.bf16.mxu0 0
  %3563 = vmatpush2.bf16.msra.mxu0 0
  %3564 = vmatprep.subr.bf16.mxu0 0
  %3565 = vmatpush2.bf16.msra.mxu0 0
  %3566 = vmatprep.subr.bf16.mxu0 0
  %3567 = vmatpush2.bf16.msra.mxu0 0
  %3568 = vmatprep.mubr.bf16.mxu0 0
  %3569 = vmatmul.mubr.bf16.gmra.mxu0 %v3516
  %v3570 = vpop.f32.mrf.mxu0
  %v3571 = vadd.f32 0.0, %v3570
  %v3572 = vpop.f32.mrf.mxu0
  %v3573 = vadd.f32 0.0, %v3572
  %v3574 = vpop.f32.mrf.mxu0
  %v3575 = vpop.f32.mrf.mxu0
  %3576 = vdwg.mxu0
  %3577 = vmatprep.subr.bf16.mxu0 0
  %3578 = vmatpush1.bf16.msra.mxu0 0
  %3579 = vmatprep.subr.bf16.mxu0 0
  %3580 = vmatpush1.bf16.msra.mxu0 0
  %3581 = vmatprep.subr.bf16.mxu0 0
  %3582 = vmatpush1.bf16.msra.mxu0 0
  %3583 = vmatprep.subr.bf16.mxu0 0
  %3584 = vmatpush1.bf16.msra.mxu0 0
  %3585 = vmatprep.subr.bf16.mxu0 0
  %3586 = vmatpush1.bf16.msra.mxu0 0
  %3587 = vmatprep.subr.bf16.mxu0 0
  %3588 = vmatpush1.bf16.msra.mxu0 0
  %3589 = vmatprep.subr.bf16.mxu0 0
  %3590 = vmatpush1.bf16.msra.mxu0 0
  %3591 = vmatprep.subr.bf16.mxu0 %v3528
  %3592 = vmatpush1.bf16.msra.mxu0 %v3525
  %3593 = vmatprep.subr.bf16.mxu0 0
  %3594 = vmatpush2.bf16.msra.mxu0 0
  %3595 = vmatprep.subr.bf16.mxu0 0
  %3596 = vmatpush2.bf16.msra.mxu0 0
  %3597 = vmatprep.subr.bf16.mxu0 0
  %3598 = vmatpush2.bf16.msra.mxu0 0
  %3599 = vmatprep.subr.bf16.mxu0 0
  %3600 = vmatpush2.bf16.msra.mxu0 0
  %3601 = vmatprep.subr.bf16.mxu0 0
  %3602 = vmatpush2.bf16.msra.mxu0 0
  %3603 = vmatprep.subr.bf16.mxu0 0
  %3604 = vmatpush2.bf16.msra.mxu0 0
  %3605 = vmatprep.subr.bf16.mxu0 0
  %3606 = vmatpush2.bf16.msra.mxu0 0
  %3607 = vmatprep.subr.bf16.mxu0 0
  %3608 = vmatpush2.bf16.msra.mxu0 0
  %3609 = vmatprep.mubr.bf16.mxu0 0
  %3610 = vmatmul.mubr.bf16.gmra.mxu0 %v3516
  %v3611 = vpop.f32.mrf.mxu0
  %v3612 = vadd.f32 0.0, %v3611
  %v3613 = vpop.f32.mrf.mxu0
  %v3614 = vadd.f32 0.0, %v3613
  %v3615 = vpop.f32.mrf.mxu0
  %v3616 = vpop.f32.mrf.mxu0
  %3617 = vdwg.mxu0
  %3618 = vmatprep.subr.bf16.mxu0 0
  %3619 = vmatpush1.bf16.msra.mxu0 0
  %3620 = vmatprep.subr.bf16.mxu0 0
  %3621 = vmatpush1.bf16.msra.mxu0 0
  %3622 = vmatprep.subr.bf16.mxu0 0
  %3623 = vmatpush1.bf16.msra.mxu0 0
  %3624 = vmatprep.subr.bf16.mxu0 0
  %3625 = vmatpush1.bf16.msra.mxu0 0
  %3626 = vmatprep.subr.bf16.mxu0 0
  %3627 = vmatpush1.bf16.msra.mxu0 0
  %3628 = vmatprep.subr.bf16.mxu0 0
  %3629 = vmatpush1.bf16.msra.mxu0 0
  %3630 = vmatprep.subr.bf16.mxu0 0
  %3631 = vmatpush1.bf16.msra.mxu0 0
  %3632 = vmatprep.subr.bf16.mxu0 %v3534
  %3633 = vmatpush1.bf16.msra.mxu0 %v3531
  %3634 = vmatprep.subr.bf16.mxu0 0
  %3635 = vmatpush2.bf16.msra.mxu0 0
  %3636 = vmatprep.subr.bf16.mxu0 0
  %3637 = vmatpush2.bf16.msra.mxu0 0
  %3638 = vmatprep.subr.bf16.mxu0 0
  %3639 = vmatpush2.bf16.msra.mxu0 0
  %3640 = vmatprep.subr.bf16.mxu0 0
  %3641 = vmatpush2.bf16.msra.mxu0 0
  %3642 = vmatprep.subr.bf16.mxu0 0
  %3643 = vmatpush2.bf16.msra.mxu0 0
  %3644 = vmatprep.subr.bf16.mxu0 0
  %3645 = vmatpush2.bf16.msra.mxu0 0
  %3646 = vmatprep.subr.bf16.mxu0 0
  %3647 = vmatpush2.bf16.msra.mxu0 0
  %3648 = vmatprep.subr.bf16.mxu0 0
  %3649 = vmatpush2.bf16.msra.mxu0 0
  %3650 = vmatprep.mubr.bf16.mxu0 0
  %3651 = vmatmul.mubr.bf16.gmra.mxu0 %v3516
  %v3652 = vpop.f32.mrf.mxu0
  %v3653 = vadd.f32 0.0, %v3652
  %v3654 = vpop.f32.mrf.mxu0
  %v3655 = vadd.f32 0.0, %v3654
  %v3656 = vpop.f32.mrf.mxu0
  %v3657 = vpop.f32.mrf.mxu0
  %3658 = vdwg.mxu0
  %v3659 = vadd.f32 %v3486, %v3571
  %v3660 = vadd.f32 %v3487, %v3573
  %v3661 = vadd.f32 %v3488, %v3612
  %v3662 = vadd.f32 %v3489, %v3614
  %v3663 = vadd.f32 %v3490, %v3653
  %v3664 = vadd.f32 %v3491, %v3655
  %s3665 = scalar_lea.vmem %s1, 84
  %v3666 = vld [vmem:[%s3665] sm:$0xf]
  %3667 = vrot.lane.b32.xlu0 %v53, 47
  %v3668 = vpop.permute.xlu0 %3667
  %3669 = vrot.lane.b32.xlu0 %v54, 47
  %v3670 = vpop.permute.xlu0 %3669
  %3671 = vrot.lane.b32.xlu0 %v55, 47
  %v3672 = vpop.permute.xlu0 %3671
  %3673 = vrot.lane.b32.xlu0 %v56, 47
  %v3674 = vpop.permute.xlu0 %3673
  %3675 = vrot.lane.b32.xlu0 %v57, 47
  %v3676 = vpop.permute.xlu0 %3675
  %3677 = vrot.lane.b32.xlu0 %v58, 47
  %v3678 = vpop.permute.xlu0 %3677
  %3679 = vrot.lane.b32.xlu0 %v59, 47
  %v3680 = vpop.permute.xlu0 %3679
  %vm3681 = vcmask 384000
  %v3682 = vsel %vm3681, %v3668, %v3670
  %v3683 = vsel %vm3681, %v3670, %v3672
  %v3684 = vsel %vm3681, %v3672, %v3674
  %v3685 = vsel %vm3681, %v3674, %v3676
  %v3686 = vsel %vm3681, %v3676, %v3678
  %v3687 = vsel %vm3681, %v3678, %v3680
  %v3689 = vsel %vm88, %v3666, 0
  %v3692 = vsel %vm92, %v3682, 0
  %v3695 = vsel %vm92, %v3683, 0
  %v3698 = vsel %vm92, %v3684, 0
  %v3701 = vsel %vm92, %v3685, 0
  %v3704 = vsel %vm92, %v3686, 0
  %v3707 = vsel %vm92, %v3687, 0
  %3709 = vmatprep.subr.bf16.mxu0 0
  %3710 = vmatpush1.bf16.msra.mxu0 0
  %3711 = vmatprep.subr.bf16.mxu0 0
  %3712 = vmatpush1.bf16.msra.mxu0 0
  %3713 = vmatprep.subr.bf16.mxu0 0
  %3714 = vmatpush1.bf16.msra.mxu0 0
  %3715 = vmatprep.subr.bf16.mxu0 0
  %3716 = vmatpush1.bf16.msra.mxu0 0
  %3717 = vmatprep.subr.bf16.mxu0 0
  %3718 = vmatpush1.bf16.msra.mxu0 0
  %3719 = vmatprep.subr.bf16.mxu0 0
  %3720 = vmatpush1.bf16.msra.mxu0 0
  %3721 = vmatprep.subr.bf16.mxu0 0
  %3722 = vmatpush1.bf16.msra.mxu0 0
  %3723 = vmatprep.subr.bf16.mxu0 %v3695
  %3724 = vmatpush1.bf16.msra.mxu0 %v3692
  %3725 = vmatprep.subr.bf16.mxu0 0
  %3726 = vmatpush2.bf16.msra.mxu0 0
  %3727 = vmatprep.subr.bf16.mxu0 0
  %3728 = vmatpush2.bf16.msra.mxu0 0
  %3729 = vmatprep.subr.bf16.mxu0 0
  %3730 = vmatpush2.bf16.msra.mxu0 0
  %3731 = vmatprep.subr.bf16.mxu0 0
  %3732 = vmatpush2.bf16.msra.mxu0 0
  %3733 = vmatprep.subr.bf16.mxu0 0
  %3734 = vmatpush2.bf16.msra.mxu0 0
  %3735 = vmatprep.subr.bf16.mxu0 0
  %3736 = vmatpush2.bf16.msra.mxu0 0
  %3737 = vmatprep.subr.bf16.mxu0 0
  %3738 = vmatpush2.bf16.msra.mxu0 0
  %3739 = vmatprep.subr.bf16.mxu0 0
  %3740 = vmatpush2.bf16.msra.mxu0 0
  %3741 = vmatprep.mubr.bf16.mxu0 0
  %3742 = vmatmul.mubr.bf16.gmra.mxu0 %v3689
  %v3743 = vpop.f32.mrf.mxu0
  %v3744 = vadd.f32 0.0, %v3743
  %v3745 = vpop.f32.mrf.mxu0
  %v3746 = vadd.f32 0.0, %v3745
  %v3747 = vpop.f32.mrf.mxu0
  %v3748 = vpop.f32.mrf.mxu0
  %3749 = vdwg.mxu0
  %3750 = vmatprep.subr.bf16.mxu0 0
  %3751 = vmatpush1.bf16.msra.mxu0 0
  %3752 = vmatprep.subr.bf16.mxu0 0
  %3753 = vmatpush1.bf16.msra.mxu0 0
  %3754 = vmatprep.subr.bf16.mxu0 0
  %3755 = vmatpush1.bf16.msra.mxu0 0
  %3756 = vmatprep.subr.bf16.mxu0 0
  %3757 = vmatpush1.bf16.msra.mxu0 0
  %3758 = vmatprep.subr.bf16.mxu0 0
  %3759 = vmatpush1.bf16.msra.mxu0 0
  %3760 = vmatprep.subr.bf16.mxu0 0
  %3761 = vmatpush1.bf16.msra.mxu0 0
  %3762 = vmatprep.subr.bf16.mxu0 0
  %3763 = vmatpush1.bf16.msra.mxu0 0
  %3764 = vmatprep.subr.bf16.mxu0 %v3701
  %3765 = vmatpush1.bf16.msra.mxu0 %v3698
  %3766 = vmatprep.subr.bf16.mxu0 0
  %3767 = vmatpush2.bf16.msra.mxu0 0
  %3768 = vmatprep.subr.bf16.mxu0 0
  %3769 = vmatpush2.bf16.msra.mxu0 0
  %3770 = vmatprep.subr.bf16.mxu0 0
  %3771 = vmatpush2.bf16.msra.mxu0 0
  %3772 = vmatprep.subr.bf16.mxu0 0
  %3773 = vmatpush2.bf16.msra.mxu0 0
  %3774 = vmatprep.subr.bf16.mxu0 0
  %3775 = vmatpush2.bf16.msra.mxu0 0
  %3776 = vmatprep.subr.bf16.mxu0 0
  %3777 = vmatpush2.bf16.msra.mxu0 0
  %3778 = vmatprep.subr.bf16.mxu0 0
  %3779 = vmatpush2.bf16.msra.mxu0 0
  %3780 = vmatprep.subr.bf16.mxu0 0
  %3781 = vmatpush2.bf16.msra.mxu0 0
  %3782 = vmatprep.mubr.bf16.mxu0 0
  %3783 = vmatmul.mubr.bf16.gmra.mxu0 %v3689
  %v3784 = vpop.f32.mrf.mxu0
  %v3785 = vadd.f32 0.0, %v3784
  %v3786 = vpop.f32.mrf.mxu0
  %v3787 = vadd.f32 0.0, %v3786
  %v3788 = vpop.f32.mrf.mxu0
  %v3789 = vpop.f32.mrf.mxu0
  %3790 = vdwg.mxu0
  %3791 = vmatprep.subr.bf16.mxu0 0
  %3792 = vmatpush1.bf16.msra.mxu0 0
  %3793 = vmatprep.subr.bf16.mxu0 0
  %3794 = vmatpush1.bf16.msra.mxu0 0
  %3795 = vmatprep.subr.bf16.mxu0 0
  %3796 = vmatpush1.bf16.msra.mxu0 0
  %3797 = vmatprep.subr.bf16.mxu0 0
  %3798 = vmatpush1.bf16.msra.mxu0 0
  %3799 = vmatprep.subr.bf16.mxu0 0
  %3800 = vmatpush1.bf16.msra.mxu0 0
  %3801 = vmatprep.subr.bf16.mxu0 0
  %3802 = vmatpush1.bf16.msra.mxu0 0
  %3803 = vmatprep.subr.bf16.mxu0 0
  %3804 = vmatpush1.bf16.msra.mxu0 0
  %3805 = vmatprep.subr.bf16.mxu0 %v3707
  %3806 = vmatpush1.bf16.msra.mxu0 %v3704
  %3807 = vmatprep.subr.bf16.mxu0 0
  %3808 = vmatpush2.bf16.msra.mxu0 0
  %3809 = vmatprep.subr.bf16.mxu0 0
  %3810 = vmatpush2.bf16.msra.mxu0 0
  %3811 = vmatprep.subr.bf16.mxu0 0
  %3812 = vmatpush2.bf16.msra.mxu0 0
  %3813 = vmatprep.subr.bf16.mxu0 0
  %3814 = vmatpush2.bf16.msra.mxu0 0
  %3815 = vmatprep.subr.bf16.mxu0 0
  %3816 = vmatpush2.bf16.msra.mxu0 0
  %3817 = vmatprep.subr.bf16.mxu0 0
  %3818 = vmatpush2.bf16.msra.mxu0 0
  %3819 = vmatprep.subr.bf16.mxu0 0
  %3820 = vmatpush2.bf16.msra.mxu0 0
  %3821 = vmatprep.subr.bf16.mxu0 0
  %3822 = vmatpush2.bf16.msra.mxu0 0
  %3823 = vmatprep.mubr.bf16.mxu0 0
  %3824 = vmatmul.mubr.bf16.gmra.mxu0 %v3689
  %v3825 = vpop.f32.mrf.mxu0
  %v3826 = vadd.f32 0.0, %v3825
  %v3827 = vpop.f32.mrf.mxu0
  %v3828 = vadd.f32 0.0, %v3827
  %v3829 = vpop.f32.mrf.mxu0
  %v3830 = vpop.f32.mrf.mxu0
  %3831 = vdwg.mxu0
  %v3832 = vadd.f32 %v3659, %v3744
  %v3833 = vadd.f32 %v3660, %v3746
  %v3834 = vadd.f32 %v3661, %v3785
  %v3835 = vadd.f32 %v3662, %v3787
  %v3836 = vadd.f32 %v3663, %v3826
  %v3837 = vadd.f32 %v3664, %v3828
  %s3838 = scalar_lea.vmem %s1, 88
  %v3839 = vld [vmem:[%s3838] sm:$0xf]
  %3840 = vrot.lane.b32.xlu0 %v53, 46
  %v3841 = vpop.permute.xlu0 %3840
  %3842 = vrot.lane.b32.xlu0 %v54, 46
  %v3843 = vpop.permute.xlu0 %3842
  %3844 = vrot.lane.b32.xlu0 %v55, 46
  %v3845 = vpop.permute.xlu0 %3844
  %3846 = vrot.lane.b32.xlu0 %v56, 46
  %v3847 = vpop.permute.xlu0 %3846
  %3848 = vrot.lane.b32.xlu0 %v57, 46
  %v3849 = vpop.permute.xlu0 %3848
  %3850 = vrot.lane.b32.xlu0 %v58, 46
  %v3851 = vpop.permute.xlu0 %3850
  %3852 = vrot.lane.b32.xlu0 %v59, 46
  %v3853 = vpop.permute.xlu0 %3852
  %vm3854 = vcmask 375808
  %v3855 = vsel %vm3854, %v3841, %v3843
  %v3856 = vsel %vm3854, %v3843, %v3845
  %v3857 = vsel %vm3854, %v3845, %v3847
  %v3858 = vsel %vm3854, %v3847, %v3849
  %v3859 = vsel %vm3854, %v3849, %v3851
  %v3860 = vsel %vm3854, %v3851, %v3853
  %v3862 = vsel %vm88, %v3839, 0
  %v3865 = vsel %vm92, %v3855, 0
  %v3868 = vsel %vm92, %v3856, 0
  %v3871 = vsel %vm92, %v3857, 0
  %v3874 = vsel %vm92, %v3858, 0
  %v3877 = vsel %vm92, %v3859, 0
  %v3880 = vsel %vm92, %v3860, 0
  %3882 = vmatprep.subr.bf16.mxu0 0
  %3883 = vmatpush1.bf16.msra.mxu0 0
  %3884 = vmatprep.subr.bf16.mxu0 0
  %3885 = vmatpush1.bf16.msra.mxu0 0
  %3886 = vmatprep.subr.bf16.mxu0 0
  %3887 = vmatpush1.bf16.msra.mxu0 0
  %3888 = vmatprep.subr.bf16.mxu0 0
  %3889 = vmatpush1.bf16.msra.mxu0 0
  %3890 = vmatprep.subr.bf16.mxu0 0
  %3891 = vmatpush1.bf16.msra.mxu0 0
  %3892 = vmatprep.subr.bf16.mxu0 0
  %3893 = vmatpush1.bf16.msra.mxu0 0
  %3894 = vmatprep.subr.bf16.mxu0 0
  %3895 = vmatpush1.bf16.msra.mxu0 0
  %3896 = vmatprep.subr.bf16.mxu0 %v3868
  %3897 = vmatpush1.bf16.msra.mxu0 %v3865
  %3898 = vmatprep.subr.bf16.mxu0 0
  %3899 = vmatpush2.bf16.msra.mxu0 0
  %3900 = vmatprep.subr.bf16.mxu0 0
  %3901 = vmatpush2.bf16.msra.mxu0 0
  %3902 = vmatprep.subr.bf16.mxu0 0
  %3903 = vmatpush2.bf16.msra.mxu0 0
  %3904 = vmatprep.subr.bf16.mxu0 0
  %3905 = vmatpush2.bf16.msra.mxu0 0
  %3906 = vmatprep.subr.bf16.mxu0 0
  %3907 = vmatpush2.bf16.msra.mxu0 0
  %3908 = vmatprep.subr.bf16.mxu0 0
  %3909 = vmatpush2.bf16.msra.mxu0 0
  %3910 = vmatprep.subr.bf16.mxu0 0
  %3911 = vmatpush2.bf16.msra.mxu0 0
  %3912 = vmatprep.subr.bf16.mxu0 0
  %3913 = vmatpush2.bf16.msra.mxu0 0
  %3914 = vmatprep.mubr.bf16.mxu0 0
  %3915 = vmatmul.mubr.bf16.gmra.mxu0 %v3862
  %v3916 = vpop.f32.mrf.mxu0
  %v3917 = vadd.f32 0.0, %v3916
  %v3918 = vpop.f32.mrf.mxu0
  %v3919 = vadd.f32 0.0, %v3918
  %v3920 = vpop.f32.mrf.mxu0
  %v3921 = vpop.f32.mrf.mxu0
  %3922 = vdwg.mxu0
  %3923 = vmatprep.subr.bf16.mxu0 0
  %3924 = vmatpush1.bf16.msra.mxu0 0
  %3925 = vmatprep.subr.bf16.mxu0 0
  %3926 = vmatpush1.bf16.msra.mxu0 0
  %3927 = vmatprep.subr.bf16.mxu0 0
  %3928 = vmatpush1.bf16.msra.mxu0 0
  %3929 = vmatprep.subr.bf16.mxu0 0
  %3930 = vmatpush1.bf16.msra.mxu0 0
  %3931 = vmatprep.subr.bf16.mxu0 0
  %3932 = vmatpush1.bf16.msra.mxu0 0
  %3933 = vmatprep.subr.bf16.mxu0 0
  %3934 = vmatpush1.bf16.msra.mxu0 0
  %3935 = vmatprep.subr.bf16.mxu0 0
  %3936 = vmatpush1.bf16.msra.mxu0 0
  %3937 = vmatprep.subr.bf16.mxu0 %v3874
  %3938 = vmatpush1.bf16.msra.mxu0 %v3871
  %3939 = vmatprep.subr.bf16.mxu0 0
  %3940 = vmatpush2.bf16.msra.mxu0 0
  %3941 = vmatprep.subr.bf16.mxu0 0
  %3942 = vmatpush2.bf16.msra.mxu0 0
  %3943 = vmatprep.subr.bf16.mxu0 0
  %3944 = vmatpush2.bf16.msra.mxu0 0
  %3945 = vmatprep.subr.bf16.mxu0 0
  %3946 = vmatpush2.bf16.msra.mxu0 0
  %3947 = vmatprep.subr.bf16.mxu0 0
  %3948 = vmatpush2.bf16.msra.mxu0 0
  %3949 = vmatprep.subr.bf16.mxu0 0
  %3950 = vmatpush2.bf16.msra.mxu0 0
  %3951 = vmatprep.subr.bf16.mxu0 0
  %3952 = vmatpush2.bf16.msra.mxu0 0
  %3953 = vmatprep.subr.bf16.mxu0 0
  %3954 = vmatpush2.bf16.msra.mxu0 0
  %3955 = vmatprep.mubr.bf16.mxu0 0
  %3956 = vmatmul.mubr.bf16.gmra.mxu0 %v3862
  %v3957 = vpop.f32.mrf.mxu0
  %v3958 = vadd.f32 0.0, %v3957
  %v3959 = vpop.f32.mrf.mxu0
  %v3960 = vadd.f32 0.0, %v3959
  %v3961 = vpop.f32.mrf.mxu0
  %v3962 = vpop.f32.mrf.mxu0
  %3963 = vdwg.mxu0
  %3964 = vmatprep.subr.bf16.mxu0 0
  %3965 = vmatpush1.bf16.msra.mxu0 0
  %3966 = vmatprep.subr.bf16.mxu0 0
  %3967 = vmatpush1.bf16.msra.mxu0 0
  %3968 = vmatprep.subr.bf16.mxu0 0
  %3969 = vmatpush1.bf16.msra.mxu0 0
  %3970 = vmatprep.subr.bf16.mxu0 0
  %3971 = vmatpush1.bf16.msra.mxu0 0
  %3972 = vmatprep.subr.bf16.mxu0 0
  %3973 = vmatpush1.bf16.msra.mxu0 0
  %3974 = vmatprep.subr.bf16.mxu0 0
  %3975 = vmatpush1.bf16.msra.mxu0 0
  %3976 = vmatprep.subr.bf16.mxu0 0
  %3977 = vmatpush1.bf16.msra.mxu0 0
  %3978 = vmatprep.subr.bf16.mxu0 %v3880
  %3979 = vmatpush1.bf16.msra.mxu0 %v3877
  %3980 = vmatprep.subr.bf16.mxu0 0
  %3981 = vmatpush2.bf16.msra.mxu0 0
  %3982 = vmatprep.subr.bf16.mxu0 0
  %3983 = vmatpush2.bf16.msra.mxu0 0
  %3984 = vmatprep.subr.bf16.mxu0 0
  %3985 = vmatpush2.bf16.msra.mxu0 0
  %3986 = vmatprep.subr.bf16.mxu0 0
  %3987 = vmatpush2.bf16.msra.mxu0 0
  %3988 = vmatprep.subr.bf16.mxu0 0
  %3989 = vmatpush2.bf16.msra.mxu0 0
  %3990 = vmatprep.subr.bf16.mxu0 0
  %3991 = vmatpush2.bf16.msra.mxu0 0
  %3992 = vmatprep.subr.bf16.mxu0 0
  %3993 = vmatpush2.bf16.msra.mxu0 0
  %3994 = vmatprep.subr.bf16.mxu0 0
  %3995 = vmatpush2.bf16.msra.mxu0 0
  %3996 = vmatprep.mubr.bf16.mxu0 0
  %3997 = vmatmul.mubr.bf16.gmra.mxu0 %v3862
  %v3998 = vpop.f32.mrf.mxu0
  %v3999 = vadd.f32 0.0, %v3998
  %v4000 = vpop.f32.mrf.mxu0
  %v4001 = vadd.f32 0.0, %v4000
  %v4002 = vpop.f32.mrf.mxu0
  %v4003 = vpop.f32.mrf.mxu0
  %4004 = vdwg.mxu0
  %v4005 = vadd.f32 %v3832, %v3917
  %v4006 = vadd.f32 %v3833, %v3919
  %v4007 = vadd.f32 %v3834, %v3958
  %v4008 = vadd.f32 %v3835, %v3960
  %v4009 = vadd.f32 %v3836, %v3999
  %v4010 = vadd.f32 %v3837, %v4001
  %s4011 = scalar_lea.vmem %s1, 92
  %v4012 = vld [vmem:[%s4011] sm:$0xf]
  %4013 = vrot.lane.b32.xlu0 %v53, 45
  %v4014 = vpop.permute.xlu0 %4013
  %4015 = vrot.lane.b32.xlu0 %v54, 45
  %v4016 = vpop.permute.xlu0 %4015
  %4017 = vrot.lane.b32.xlu0 %v55, 45
  %v4018 = vpop.permute.xlu0 %4017
  %4019 = vrot.lane.b32.xlu0 %v56, 45
  %v4020 = vpop.permute.xlu0 %4019
  %4021 = vrot.lane.b32.xlu0 %v57, 45
  %v4022 = vpop.permute.xlu0 %4021
  %4023 = vrot.lane.b32.xlu0 %v58, 45
  %v4024 = vpop.permute.xlu0 %4023
  %4025 = vrot.lane.b32.xlu0 %v59, 45
  %v4026 = vpop.permute.xlu0 %4025
  %vm4027 = vcmask 367616
  %v4028 = vsel %vm4027, %v4014, %v4016
  %v4029 = vsel %vm4027, %v4016, %v4018
  %v4030 = vsel %vm4027, %v4018, %v4020
  %v4031 = vsel %vm4027, %v4020, %v4022
  %v4032 = vsel %vm4027, %v4022, %v4024
  %v4033 = vsel %vm4027, %v4024, %v4026
  %v4035 = vsel %vm88, %v4012, 0
  %v4038 = vsel %vm92, %v4028, 0
  %v4041 = vsel %vm92, %v4029, 0
  %v4044 = vsel %vm92, %v4030, 0
  %v4047 = vsel %vm92, %v4031, 0
  %v4050 = vsel %vm92, %v4032, 0
  %v4053 = vsel %vm92, %v4033, 0
  %4055 = vmatprep.subr.bf16.mxu0 0
  %4056 = vmatpush1.bf16.msra.mxu0 0
  %4057 = vmatprep.subr.bf16.mxu0 0
  %4058 = vmatpush1.bf16.msra.mxu0 0
  %4059 = vmatprep.subr.bf16.mxu0 0
  %4060 = vmatpush1.bf16.msra.mxu0 0
  %4061 = vmatprep.subr.bf16.mxu0 0
  %4062 = vmatpush1.bf16.msra.mxu0 0
  %4063 = vmatprep.subr.bf16.mxu0 0
  %4064 = vmatpush1.bf16.msra.mxu0 0
  %4065 = vmatprep.subr.bf16.mxu0 0
  %4066 = vmatpush1.bf16.msra.mxu0 0
  %4067 = vmatprep.subr.bf16.mxu0 0
  %4068 = vmatpush1.bf16.msra.mxu0 0
  %4069 = vmatprep.subr.bf16.mxu0 %v4041
  %4070 = vmatpush1.bf16.msra.mxu0 %v4038
  %4071 = vmatprep.subr.bf16.mxu0 0
  %4072 = vmatpush2.bf16.msra.mxu0 0
  %4073 = vmatprep.subr.bf16.mxu0 0
  %4074 = vmatpush2.bf16.msra.mxu0 0
  %4075 = vmatprep.subr.bf16.mxu0 0
  %4076 = vmatpush2.bf16.msra.mxu0 0
  %4077 = vmatprep.subr.bf16.mxu0 0
  %4078 = vmatpush2.bf16.msra.mxu0 0
  %4079 = vmatprep.subr.bf16.mxu0 0
  %4080 = vmatpush2.bf16.msra.mxu0 0
  %4081 = vmatprep.subr.bf16.mxu0 0
  %4082 = vmatpush2.bf16.msra.mxu0 0
  %4083 = vmatprep.subr.bf16.mxu0 0
  %4084 = vmatpush2.bf16.msra.mxu0 0
  %4085 = vmatprep.subr.bf16.mxu0 0
  %4086 = vmatpush2.bf16.msra.mxu0 0
  %4087 = vmatprep.mubr.bf16.mxu0 0
  %4088 = vmatmul.mubr.bf16.gmra.mxu0 %v4035
  %v4089 = vpop.f32.mrf.mxu0
  %v4090 = vadd.f32 0.0, %v4089
  %v4091 = vpop.f32.mrf.mxu0
  %v4092 = vadd.f32 0.0, %v4091
  %v4093 = vpop.f32.mrf.mxu0
  %v4094 = vpop.f32.mrf.mxu0
  %4095 = vdwg.mxu0
  %4096 = vmatprep.subr.bf16.mxu0 0
  %4097 = vmatpush1.bf16.msra.mxu0 0
  %4098 = vmatprep.subr.bf16.mxu0 0
  %4099 = vmatpush1.bf16.msra.mxu0 0
  %4100 = vmatprep.subr.bf16.mxu0 0
  %4101 = vmatpush1.bf16.msra.mxu0 0
  %4102 = vmatprep.subr.bf16.mxu0 0
  %4103 = vmatpush1.bf16.msra.mxu0 0
  %4104 = vmatprep.subr.bf16.mxu0 0
  %4105 = vmatpush1.bf16.msra.mxu0 0
  %4106 = vmatprep.subr.bf16.mxu0 0
  %4107 = vmatpush1.bf16.msra.mxu0 0
  %4108 = vmatprep.subr.bf16.mxu0 0
  %4109 = vmatpush1.bf16.msra.mxu0 0
  %4110 = vmatprep.subr.bf16.mxu0 %v4047
  %4111 = vmatpush1.bf16.msra.mxu0 %v4044
  %4112 = vmatprep.subr.bf16.mxu0 0
  %4113 = vmatpush2.bf16.msra.mxu0 0
  %4114 = vmatprep.subr.bf16.mxu0 0
  %4115 = vmatpush2.bf16.msra.mxu0 0
  %4116 = vmatprep.subr.bf16.mxu0 0
  %4117 = vmatpush2.bf16.msra.mxu0 0
  %4118 = vmatprep.subr.bf16.mxu0 0
  %4119 = vmatpush2.bf16.msra.mxu0 0
  %4120 = vmatprep.subr.bf16.mxu0 0
  %4121 = vmatpush2.bf16.msra.mxu0 0
  %4122 = vmatprep.subr.bf16.mxu0 0
  %4123 = vmatpush2.bf16.msra.mxu0 0
  %4124 = vmatprep.subr.bf16.mxu0 0
  %4125 = vmatpush2.bf16.msra.mxu0 0
  %4126 = vmatprep.subr.bf16.mxu0 0
  %4127 = vmatpush2.bf16.msra.mxu0 0
  %4128 = vmatprep.mubr.bf16.mxu0 0
  %4129 = vmatmul.mubr.bf16.gmra.mxu0 %v4035
  %v4130 = vpop.f32.mrf.mxu0
  %v4131 = vadd.f32 0.0, %v4130
  %v4132 = vpop.f32.mrf.mxu0
  %v4133 = vadd.f32 0.0, %v4132
  %v4134 = vpop.f32.mrf.mxu0
  %v4135 = vpop.f32.mrf.mxu0
  %4136 = vdwg.mxu0
  %4137 = vmatprep.subr.bf16.mxu0 0
  %4138 = vmatpush1.bf16.msra.mxu0 0
  %4139 = vmatprep.subr.bf16.mxu0 0
  %4140 = vmatpush1.bf16.msra.mxu0 0
  %4141 = vmatprep.subr.bf16.mxu0 0
  %4142 = vmatpush1.bf16.msra.mxu0 0
  %4143 = vmatprep.subr.bf16.mxu0 0
  %4144 = vmatpush1.bf16.msra.mxu0 0
  %4145 = vmatprep.subr.bf16.mxu0 0
  %4146 = vmatpush1.bf16.msra.mxu0 0
  %4147 = vmatprep.subr.bf16.mxu0 0
  %4148 = vmatpush1.bf16.msra.mxu0 0
  %4149 = vmatprep.subr.bf16.mxu0 0
  %4150 = vmatpush1.bf16.msra.mxu0 0
  %4151 = vmatprep.subr.bf16.mxu0 %v4053
  %4152 = vmatpush1.bf16.msra.mxu0 %v4050
  %4153 = vmatprep.subr.bf16.mxu0 0
  %4154 = vmatpush2.bf16.msra.mxu0 0
  %4155 = vmatprep.subr.bf16.mxu0 0
  %4156 = vmatpush2.bf16.msra.mxu0 0
  %4157 = vmatprep.subr.bf16.mxu0 0
  %4158 = vmatpush2.bf16.msra.mxu0 0
  %4159 = vmatprep.subr.bf16.mxu0 0
  %4160 = vmatpush2.bf16.msra.mxu0 0
  %4161 = vmatprep.subr.bf16.mxu0 0
  %4162 = vmatpush2.bf16.msra.mxu0 0
  %4163 = vmatprep.subr.bf16.mxu0 0
  %4164 = vmatpush2.bf16.msra.mxu0 0
  %4165 = vmatprep.subr.bf16.mxu0 0
  %4166 = vmatpush2.bf16.msra.mxu0 0
  %4167 = vmatprep.subr.bf16.mxu0 0
  %4168 = vmatpush2.bf16.msra.mxu0 0
  %4169 = vmatprep.mubr.bf16.mxu0 0
  %4170 = vmatmul.mubr.bf16.gmra.mxu0 %v4035
  %v4171 = vpop.f32.mrf.mxu0
  %v4172 = vadd.f32 0.0, %v4171
  %v4173 = vpop.f32.mrf.mxu0
  %v4174 = vadd.f32 0.0, %v4173
  %v4175 = vpop.f32.mrf.mxu0
  %v4176 = vpop.f32.mrf.mxu0
  %4177 = vdwg.mxu0
  %v4178 = vadd.f32 %v4005, %v4090
  %v4179 = vadd.f32 %v4006, %v4092
  %v4180 = vadd.f32 %v4007, %v4131
  %v4181 = vadd.f32 %v4008, %v4133
  %v4182 = vadd.f32 %v4009, %v4172
  %v4183 = vadd.f32 %v4010, %v4174
  %s4184 = scalar_lea.vmem %s1, 96
  %v4185 = vld [vmem:[%s4184] sm:$0xf]
  %4186 = vrot.lane.b32.xlu0 %v53, 44
  %v4187 = vpop.permute.xlu0 %4186
  %4188 = vrot.lane.b32.xlu0 %v54, 44
  %v4189 = vpop.permute.xlu0 %4188
  %4190 = vrot.lane.b32.xlu0 %v55, 44
  %v4191 = vpop.permute.xlu0 %4190
  %4192 = vrot.lane.b32.xlu0 %v56, 44
  %v4193 = vpop.permute.xlu0 %4192
  %4194 = vrot.lane.b32.xlu0 %v57, 44
  %v4195 = vpop.permute.xlu0 %4194
  %4196 = vrot.lane.b32.xlu0 %v58, 44
  %v4197 = vpop.permute.xlu0 %4196
  %4198 = vrot.lane.b32.xlu0 %v59, 44
  %v4199 = vpop.permute.xlu0 %4198
  %vm4200 = vcmask 359424
  %v4201 = vsel %vm4200, %v4187, %v4189
  %v4202 = vsel %vm4200, %v4189, %v4191
  %v4203 = vsel %vm4200, %v4191, %v4193
  %v4204 = vsel %vm4200, %v4193, %v4195
  %v4205 = vsel %vm4200, %v4195, %v4197
  %v4206 = vsel %vm4200, %v4197, %v4199
  %v4208 = vsel %vm88, %v4185, 0
  %v4211 = vsel %vm92, %v4201, 0
  %v4214 = vsel %vm92, %v4202, 0
  %v4217 = vsel %vm92, %v4203, 0
  %v4220 = vsel %vm92, %v4204, 0
  %v4223 = vsel %vm92, %v4205, 0
  %v4226 = vsel %vm92, %v4206, 0
  %4228 = vmatprep.subr.bf16.mxu0 0
  %4229 = vmatpush1.bf16.msra.mxu0 0
  %4230 = vmatprep.subr.bf16.mxu0 0
  %4231 = vmatpush1.bf16.msra.mxu0 0
  %4232 = vmatprep.subr.bf16.mxu0 0
  %4233 = vmatpush1.bf16.msra.mxu0 0
  %4234 = vmatprep.subr.bf16.mxu0 0
  %4235 = vmatpush1.bf16.msra.mxu0 0
  %4236 = vmatprep.subr.bf16.mxu0 0
  %4237 = vmatpush1.bf16.msra.mxu0 0
  %4238 = vmatprep.subr.bf16.mxu0 0
  %4239 = vmatpush1.bf16.msra.mxu0 0
  %4240 = vmatprep.subr.bf16.mxu0 0
  %4241 = vmatpush1.bf16.msra.mxu0 0
  %4242 = vmatprep.subr.bf16.mxu0 %v4214
  %4243 = vmatpush1.bf16.msra.mxu0 %v4211
  %4244 = vmatprep.subr.bf16.mxu0 0
  %4245 = vmatpush2.bf16.msra.mxu0 0
  %4246 = vmatprep.subr.bf16.mxu0 0
  %4247 = vmatpush2.bf16.msra.mxu0 0
  %4248 = vmatprep.subr.bf16.mxu0 0
  %4249 = vmatpush2.bf16.msra.mxu0 0
  %4250 = vmatprep.subr.bf16.mxu0 0
  %4251 = vmatpush2.bf16.msra.mxu0 0
  %4252 = vmatprep.subr.bf16.mxu0 0
  %4253 = vmatpush2.bf16.msra.mxu0 0
  %4254 = vmatprep.subr.bf16.mxu0 0
  %4255 = vmatpush2.bf16.msra.mxu0 0
  %4256 = vmatprep.subr.bf16.mxu0 0
  %4257 = vmatpush2.bf16.msra.mxu0 0
  %4258 = vmatprep.subr.bf16.mxu0 0
  %4259 = vmatpush2.bf16.msra.mxu0 0
  %4260 = vmatprep.mubr.bf16.mxu0 0
  %4261 = vmatmul.mubr.bf16.gmra.mxu0 %v4208
  %v4262 = vpop.f32.mrf.mxu0
  %v4263 = vadd.f32 0.0, %v4262
  %v4264 = vpop.f32.mrf.mxu0
  %v4265 = vadd.f32 0.0, %v4264
  %v4266 = vpop.f32.mrf.mxu0
  %v4267 = vpop.f32.mrf.mxu0
  %4268 = vdwg.mxu0
  %4269 = vmatprep.subr.bf16.mxu0 0
  %4270 = vmatpush1.bf16.msra.mxu0 0
  %4271 = vmatprep.subr.bf16.mxu0 0
  %4272 = vmatpush1.bf16.msra.mxu0 0
  %4273 = vmatprep.subr.bf16.mxu0 0
  %4274 = vmatpush1.bf16.msra.mxu0 0
  %4275 = vmatprep.subr.bf16.mxu0 0
  %4276 = vmatpush1.bf16.msra.mxu0 0
  %4277 = vmatprep.subr.bf16.mxu0 0
  %4278 = vmatpush1.bf16.msra.mxu0 0
  %4279 = vmatprep.subr.bf16.mxu0 0
  %4280 = vmatpush1.bf16.msra.mxu0 0
  %4281 = vmatprep.subr.bf16.mxu0 0
  %4282 = vmatpush1.bf16.msra.mxu0 0
  %4283 = vmatprep.subr.bf16.mxu0 %v4220
  %4284 = vmatpush1.bf16.msra.mxu0 %v4217
  %4285 = vmatprep.subr.bf16.mxu0 0
  %4286 = vmatpush2.bf16.msra.mxu0 0
  %4287 = vmatprep.subr.bf16.mxu0 0
  %4288 = vmatpush2.bf16.msra.mxu0 0
  %4289 = vmatprep.subr.bf16.mxu0 0
  %4290 = vmatpush2.bf16.msra.mxu0 0
  %4291 = vmatprep.subr.bf16.mxu0 0
  %4292 = vmatpush2.bf16.msra.mxu0 0
  %4293 = vmatprep.subr.bf16.mxu0 0
  %4294 = vmatpush2.bf16.msra.mxu0 0
  %4295 = vmatprep.subr.bf16.mxu0 0
  %4296 = vmatpush2.bf16.msra.mxu0 0
  %4297 = vmatprep.subr.bf16.mxu0 0
  %4298 = vmatpush2.bf16.msra.mxu0 0
  %4299 = vmatprep.subr.bf16.mxu0 0
  %4300 = vmatpush2.bf16.msra.mxu0 0
  %4301 = vmatprep.mubr.bf16.mxu0 0
  %4302 = vmatmul.mubr.bf16.gmra.mxu0 %v4208
  %v4303 = vpop.f32.mrf.mxu0
  %v4304 = vadd.f32 0.0, %v4303
  %v4305 = vpop.f32.mrf.mxu0
  %v4306 = vadd.f32 0.0, %v4305
  %v4307 = vpop.f32.mrf.mxu0
  %v4308 = vpop.f32.mrf.mxu0
  %4309 = vdwg.mxu0
  %4310 = vmatprep.subr.bf16.mxu0 0
  %4311 = vmatpush1.bf16.msra.mxu0 0
  %4312 = vmatprep.subr.bf16.mxu0 0
  %4313 = vmatpush1.bf16.msra.mxu0 0
  %4314 = vmatprep.subr.bf16.mxu0 0
  %4315 = vmatpush1.bf16.msra.mxu0 0
  %4316 = vmatprep.subr.bf16.mxu0 0
  %4317 = vmatpush1.bf16.msra.mxu0 0
  %4318 = vmatprep.subr.bf16.mxu0 0
  %4319 = vmatpush1.bf16.msra.mxu0 0
  %4320 = vmatprep.subr.bf16.mxu0 0
  %4321 = vmatpush1.bf16.msra.mxu0 0
  %4322 = vmatprep.subr.bf16.mxu0 0
  %4323 = vmatpush1.bf16.msra.mxu0 0
  %4324 = vmatprep.subr.bf16.mxu0 %v4226
  %4325 = vmatpush1.bf16.msra.mxu0 %v4223
  %4326 = vmatprep.subr.bf16.mxu0 0
  %4327 = vmatpush2.bf16.msra.mxu0 0
  %4328 = vmatprep.subr.bf16.mxu0 0
  %4329 = vmatpush2.bf16.msra.mxu0 0
  %4330 = vmatprep.subr.bf16.mxu0 0
  %4331 = vmatpush2.bf16.msra.mxu0 0
  %4332 = vmatprep.subr.bf16.mxu0 0
  %4333 = vmatpush2.bf16.msra.mxu0 0
  %4334 = vmatprep.subr.bf16.mxu0 0
  %4335 = vmatpush2.bf16.msra.mxu0 0
  %4336 = vmatprep.subr.bf16.mxu0 0
  %4337 = vmatpush2.bf16.msra.mxu0 0
  %4338 = vmatprep.subr.bf16.mxu0 0
  %4339 = vmatpush2.bf16.msra.mxu0 0
  %4340 = vmatprep.subr.bf16.mxu0 0
  %4341 = vmatpush2.bf16.msra.mxu0 0
  %4342 = vmatprep.mubr.bf16.mxu0 0
  %4343 = vmatmul.mubr.bf16.gmra.mxu0 %v4208
  %v4344 = vpop.f32.mrf.mxu0
  %v4345 = vadd.f32 0.0, %v4344
  %v4346 = vpop.f32.mrf.mxu0
  %v4347 = vadd.f32 0.0, %v4346
  %v4348 = vpop.f32.mrf.mxu0
  %v4349 = vpop.f32.mrf.mxu0
  %4350 = vdwg.mxu0
  %v4351 = vadd.f32 %v4178, %v4263
  %v4352 = vadd.f32 %v4179, %v4265
  %v4353 = vadd.f32 %v4180, %v4304
  %v4354 = vadd.f32 %v4181, %v4306
  %v4355 = vadd.f32 %v4182, %v4345
  %v4356 = vadd.f32 %v4183, %v4347
  %vm4357 = vcmp.gt.f32.partialorder %v4351, 0.0
  %vm4358 = vcmp.gt.f32.partialorder %v4352, 0.0
  %vm4359 = vcmp.gt.f32.partialorder %v4353, 0.0
  %vm4360 = vcmp.gt.f32.partialorder %v4354, 0.0
  %vm4361 = vcmp.gt.f32.partialorder %v4355, 0.0
  %vm4362 = vcmp.gt.f32.partialorder %v4356, 0.0
  %v4363 = vmul.f32 %v4351, 0.01
  %v4364 = vmul.f32 %v4352, 0.01
  %v4365 = vmul.f32 %v4353, 0.01
  %v4366 = vmul.f32 %v4354, 0.01
  %v4367 = vmul.f32 %v4355, 0.01
  %v4368 = vmul.f32 %v4356, 0.01
  %v4369 = vsel %vm4357, %v4351, %v4363
  %v4370 = vsel %vm4358, %v4352, %v4364
  %v4371 = vsel %vm4359, %v4353, %v4365
  %v4372 = vsel %vm4360, %v4354, %v4366
  %v4373 = vsel %vm4361, %v4355, %v4367
  %v4374 = vsel %vm4362, %v4356, %v4368
  %v4376 = vlaneseq
  %v4377 = vshrl.u32 %v4376, 7
  %v4378 = vsub.s32 0, %v4377
  %v4379 = vrot.slane %v30, %v4378
  %v4380 = vlaneseq
  %v4381 = vshrl.u32 %v4380, 7
  %v4382 = vsub.s32 1, %v4381
  %v4383 = vrot.slane %v30, %v4382
  %v4384 = vlaneseq
  %v4385 = vshrl.u32 %v4384, 7
  %v4386 = vsub.s32 2, %v4385
  %v4387 = vrot.slane %v30, %v4386
  %v4388 = vlaneseq
  %v4389 = vshrl.u32 %v4388, 7
  %v4390 = vsub.s32 3, %v4389
  %v4391 = vrot.slane %v30, %v4390
  %v4392 = vlaneseq
  %v4393 = vshrl.u32 %v4392, 7
  %v4394 = vsub.s32 4, %v4393
  %v4395 = vrot.slane %v30, %v4394
  %v4396 = vlaneseq
  %v4397 = vshrl.u32 %v4396, 7
  %v4398 = vsub.s32 5, %v4397
  %v4399 = vrot.slane %v30, %v4398
  %v4406 = vmul.f32 %v4369, %v4379
  %v4407 = vmul.f32 %v4370, %v4383
  %v4408 = vmul.f32 %v4371, %v4387
  %v4409 = vmul.f32 %v4372, %v4391
  %v4410 = vmul.f32 %v4373, %v4395
  %v4411 = vmul.f32 %v4374, %v4399
  %v4412 = vadd.f32 %v4406, %v4407
  %v4413 = vadd.f32 %v4412, %v4408
  %v4414 = vadd.f32 %v4413, %v4409
  %v4415 = vadd.f32 %v4414, %v4410
  %v4416 = vadd.f32 %v4415, %v4411
  %4417 = vadd.xlane.f32.xlu0 %v4416
  %v4418 = vpop.xlane.xlu0 %4417
  %v4419 = vmul.f32 %v4406, %v4369
  %v4420 = vmul.f32 %v4407, %v4370
  %v4421 = vmul.f32 %v4408, %v4371
  %v4422 = vmul.f32 %v4409, %v4372
  %v4423 = vmul.f32 %v4410, %v4373
  %v4424 = vmul.f32 %v4411, %v4374
  %v4425 = vadd.f32 %v4419, %v4420
  %v4426 = vadd.f32 %v4425, %v4421
  %v4427 = vadd.f32 %v4426, %v4422
  %v4428 = vadd.f32 %v4427, %v4423
  %v4429 = vadd.f32 %v4428, %v4424
  %4430 = vadd.xlane.f32.xlu0 %v4429
  %v4431 = vpop.xlane.xlu0 %4430
  %v4432 = vmul.f32 %v4418, 0.001953125
  %v4433 = vmul.f32 %v4431, 0.001953125
  %v4434 = vmul.f32 %v4432, %v4432
  %v4435 = vsub.f32 %v4433, %v4434
  %v4436 = vmax.f32 %v4435, 0.0
  %v4437 = vsub.f32 %v4369, %v4432
  %v4438 = vsub.f32 %v4370, %v4432
  %v4439 = vsub.f32 %v4371, %v4432
  %v4440 = vsub.f32 %v4372, %v4432
  %v4441 = vsub.f32 %v4373, %v4432
  %v4442 = vsub.f32 %v4374, %v4432
  %v4443 = vadd.f32 %v4436, 1e-05
  %v4444 = vrsqrt.pop %v4443
  %v4445 = vmul.f32 %v4437, %v4444
  %v4446 = vmul.f32 %v4438, %v4444
  %v4447 = vmul.f32 %v4439, %v4444
  %v4448 = vmul.f32 %v4440, %v4444
  %v4449 = vmul.f32 %v4441, %v4444
  %v4450 = vmul.f32 %v4442, %v4444
  %v4451 = vld [vmem:[%s2] sm:$0xff]
  %4453 = vset.pattern.permute.xlu0 0
  %4454 = vperm.xlu0 %4453, %v4451
  %v4455 = vpop.permute.xlu0 %4454
  %v4457 = vmul.f32 %v4445, %v4455
  %v4458 = vmul.f32 %v4446, %v4455
  %v4459 = vmul.f32 %v4447, %v4455
  %v4460 = vmul.f32 %v4448, %v4455
  %v4461 = vmul.f32 %v4449, %v4455
  %v4462 = vmul.f32 %v4450, %v4455
  %v4463 = vld [vmem:[%s3] sm:$0xff]
  %4465 = vset.pattern.permute.xlu0 0
  %4466 = vperm.xlu0 %4465, %v4463
  %v4467 = vpop.permute.xlu0 %4466
  %v4469 = vadd.f32 %v4457, %v4467
  %v4470 = vadd.f32 %v4458, %v4467
  %v4471 = vadd.f32 %v4459, %v4467
  %v4472 = vadd.f32 %v4460, %v4467
  %v4473 = vadd.f32 %v4461, %v4467
  %v4474 = vadd.f32 %v4462, %v4467
  %vm4475 = vcmask 343040
  %4476 = vst.msk [vmem:[#allocation2] sm:$0xff] %vm4475, 0.0
  %vm4477 = vcmask 1047888
  %4478 = vst.msk [vmem:[#allocation2 + $0x30] sm:$0xff] %vm4477, 0.0
  %v4479 = vmul.f32 %v4469, %v4379
  %v4480 = vmul.f32 %v4470, %v4383
  %v4481 = vmul.f32 %v4471, %v4387
  %v4482 = vmul.f32 %v4472, %v4391
  %v4483 = vmul.f32 %v4473, %v4395
  %v4484 = vmul.f32 %v4474, %v4399
  %4491 = vrot.lane.b32.xlu0 %v4479, 42
  %v4492 = vpop.permute.xlu0 %4491
  %4493 = vrot.lane.b32.xlu0 %v4480, 42
  %v4494 = vpop.permute.xlu0 %4493
  %4495 = vrot.lane.b32.xlu0 %v4481, 42
  %v4496 = vpop.permute.xlu0 %4495
  %4497 = vrot.lane.b32.xlu0 %v4482, 42
  %v4498 = vpop.permute.xlu0 %4497
  %4499 = vrot.lane.b32.xlu0 %v4483, 42
  %v4500 = vpop.permute.xlu0 %4499
  %4501 = vrot.lane.b32.xlu0 %v4484, 42
  %v4502 = vpop.permute.xlu0 %4501
  %v4503 = vsel %vm4475, %v4492, %v4494
  %v4504 = vsel %vm4475, %v4494, %v4496
  %v4505 = vsel %vm4475, %v4496, %v4498
  %v4506 = vsel %vm4475, %v4498, %v4500
  %v4507 = vsel %vm4475, %v4500, %v4502
  %4515 = vst.msk [vmem:[#allocation2] sm:$0xff] %vm4477, %v4492
  %4516 = vst [vmem:[#allocation2 + $0x8] sm:$0xff] %v4503
  %4517 = vst [vmem:[#allocation2 + $0x10] sm:$0xff] %v4504
  %4518 = vst [vmem:[#allocation2 + $0x18] sm:$0xff] %v4505
  %4519 = vst [vmem:[#allocation2 + $0x20] sm:$0xff] %v4506
  %4520 = vst [vmem:[#allocation2 + $0x28] sm:$0xff] %v4507
  %4521 = vst.msk [vmem:[#allocation2 + $0x30] sm:$0xff] %vm4475, %v4502
  %v4522 = vld [vmem:[%s4] sm:$0xf]
  %v4523 = vld [vmem:[#allocation2] sm:$0xff]
  %v4524 = vld [vmem:[#allocation2 + $0x8] sm:$0xff]
  %v4525 = vld [vmem:[#allocation2 + $0x10] sm:$0xff]
  %v4526 = vld [vmem:[#allocation2 + $0x18] sm:$0xff]
  %v4527 = vld [vmem:[#allocation2 + $0x20] sm:$0xff]
  %v4528 = vld [vmem:[#allocation2 + $0x28] sm:$0xff]
  %v4529 = vpack.c.bf16 %v4523, %v4523
  %v4530 = vpack.c.bf16 %v4524, %v4524
  %v4531 = vpack.c.bf16 %v4525, %v4525
  %v4532 = vpack.c.bf16 %v4526, %v4526
  %v4533 = vpack.c.bf16 %v4527, %v4527
  %v4534 = vpack.c.bf16 %v4528, %v4528
  %s4535 = scalar_lea.vmem %s4, 4
  %v4536 = vld [vmem:[%s4535] sm:$0xf]
  %v4537 = vld [vmem:[#allocation2] sm:$0xff]
  %v4538 = vld [vmem:[#allocation2 + $0x8] sm:$0xff]
  %v4539 = vld [vmem:[#allocation2 + $0x10] sm:$0xff]
  %v4540 = vld [vmem:[#allocation2 + $0x18] sm:$0xff]
  %v4541 = vld [vmem:[#allocation2 + $0x20] sm:$0xff]
  %v4542 = vld [vmem:[#allocation2 + $0x28] sm:$0xff]
  %v4543 = vld [vmem:[#allocation2 + $0x30] sm:$0xff]
  %v4544 = vpack.c.bf16 %v4537, %v4537
  %v4545 = vpack.c.bf16 %v4538, %v4538
  %v4546 = vpack.c.bf16 %v4539, %v4539
  %v4547 = vpack.c.bf16 %v4540, %v4540
  %v4548 = vpack.c.bf16 %v4541, %v4541
  %v4549 = vpack.c.bf16 %v4542, %v4542
  %v4550 = vpack.c.bf16 %v4543, %v4543
  %4558 = vrot.lane.b32.xlu0 %v4544, 127
  %v4559 = vpop.permute.xlu0 %4558
  %4560 = vrot.lane.b32.xlu0 %v4545, 127
  %v4561 = vpop.permute.xlu0 %4560
  %4562 = vrot.lane.b32.xlu0 %v4546, 127
  %v4563 = vpop.permute.xlu0 %4562
  %4564 = vrot.lane.b32.xlu0 %v4547, 127
  %v4565 = vpop.permute.xlu0 %4564
  %4566 = vrot.lane.b32.xlu0 %v4548, 127
  %v4567 = vpop.permute.xlu0 %4566
  %4568 = vrot.lane.b32.xlu0 %v4549, 127
  %v4569 = vpop.permute.xlu0 %4568
  %4570 = vrot.lane.b32.xlu0 %v4550, 127
  %v4571 = vpop.permute.xlu0 %4570
  %v4572 = vsel %vm81, %v4559, %v4561
  %v4573 = vsel %vm81, %v4561, %v4563
  %v4574 = vsel %vm81, %v4563, %v4565
  %v4575 = vsel %vm81, %v4565, %v4567
  %v4576 = vsel %vm81, %v4567, %v4569
  %v4577 = vsel %vm81, %v4569, %v4571
  %v4579 = vsel %vm88, %v4536, 0
  %v4582 = vsel %vm92, %v4572, 0
  %v4585 = vsel %vm92, %v4573, 0
  %v4588 = vsel %vm92, %v4574, 0
  %v4591 = vsel %vm92, %v4575, 0
  %v4594 = vsel %vm92, %v4576, 0
  %v4597 = vsel %vm92, %v4577, 0
  %4599 = vmatprep.subr.bf16.mxu0 0
  %4600 = vmatpush1.bf16.msra.mxu0 0
  %4601 = vmatprep.subr.bf16.mxu0 0
  %4602 = vmatpush1.bf16.msra.mxu0 0
  %4603 = vmatprep.subr.bf16.mxu0 0
  %4604 = vmatpush1.bf16.msra.mxu0 0
  %4605 = vmatprep.subr.bf16.mxu0 0
  %4606 = vmatpush1.bf16.msra.mxu0 0
  %4607 = vmatprep.subr.bf16.mxu0 0
  %4608 = vmatpush1.bf16.msra.mxu0 0
  %4609 = vmatprep.subr.bf16.mxu0 0
  %4610 = vmatpush1.bf16.msra.mxu0 0
  %4611 = vmatprep.subr.bf16.mxu0 0
  %4612 = vmatpush1.bf16.msra.mxu0 0
  %4613 = vmatprep.subr.bf16.mxu0 %v4585
  %4614 = vmatpush1.bf16.msra.mxu0 %v4582
  %4615 = vmatprep.subr.bf16.mxu0 0
  %4616 = vmatpush2.bf16.msra.mxu0 0
  %4617 = vmatprep.subr.bf16.mxu0 0
  %4618 = vmatpush2.bf16.msra.mxu0 0
  %4619 = vmatprep.subr.bf16.mxu0 0
  %4620 = vmatpush2.bf16.msra.mxu0 0
  %4621 = vmatprep.subr.bf16.mxu0 0
  %4622 = vmatpush2.bf16.msra.mxu0 0
  %4623 = vmatprep.subr.bf16.mxu0 0
  %4624 = vmatpush2.bf16.msra.mxu0 0
  %4625 = vmatprep.subr.bf16.mxu0 0
  %4626 = vmatpush2.bf16.msra.mxu0 0
  %4627 = vmatprep.subr.bf16.mxu0 0
  %4628 = vmatpush2.bf16.msra.mxu0 0
  %4629 = vmatprep.subr.bf16.mxu0 0
  %4630 = vmatpush2.bf16.msra.mxu0 0
  %4631 = vmatprep.mubr.bf16.mxu0 0
  %4632 = vmatmul.mubr.bf16.gmra.mxu0 %v4579
  %v4633 = vpop.f32.mrf.mxu0
  %v4634 = vadd.f32 0.0, %v4633
  %v4635 = vpop.f32.mrf.mxu0
  %v4636 = vadd.f32 0.0, %v4635
  %v4637 = vpop.f32.mrf.mxu0
  %v4638 = vpop.f32.mrf.mxu0
  %4639 = vdwg.mxu0
  %4640 = vmatprep.subr.bf16.mxu0 0
  %4641 = vmatpush1.bf16.msra.mxu0 0
  %4642 = vmatprep.subr.bf16.mxu0 0
  %4643 = vmatpush1.bf16.msra.mxu0 0
  %4644 = vmatprep.subr.bf16.mxu0 0
  %4645 = vmatpush1.bf16.msra.mxu0 0
  %4646 = vmatprep.subr.bf16.mxu0 0
  %4647 = vmatpush1.bf16.msra.mxu0 0
  %4648 = vmatprep.subr.bf16.mxu0 0
  %4649 = vmatpush1.bf16.msra.mxu0 0
  %4650 = vmatprep.subr.bf16.mxu0 0
  %4651 = vmatpush1.bf16.msra.mxu0 0
  %4652 = vmatprep.subr.bf16.mxu0 0
  %4653 = vmatpush1.bf16.msra.mxu0 0
  %4654 = vmatprep.subr.bf16.mxu0 %v4591
  %4655 = vmatpush1.bf16.msra.mxu0 %v4588
  %4656 = vmatprep.subr.bf16.mxu0 0
  %4657 = vmatpush2.bf16.msra.mxu0 0
  %4658 = vmatprep.subr.bf16.mxu0 0
  %4659 = vmatpush2.bf16.msra.mxu0 0
  %4660 = vmatprep.subr.bf16.mxu0 0
  %4661 = vmatpush2.bf16.msra.mxu0 0
  %4662 = vmatprep.subr.bf16.mxu0 0
  %4663 = vmatpush2.bf16.msra.mxu0 0
  %4664 = vmatprep.subr.bf16.mxu0 0
  %4665 = vmatpush2.bf16.msra.mxu0 0
  %4666 = vmatprep.subr.bf16.mxu0 0
  %4667 = vmatpush2.bf16.msra.mxu0 0
  %4668 = vmatprep.subr.bf16.mxu0 0
  %4669 = vmatpush2.bf16.msra.mxu0 0
  %4670 = vmatprep.subr.bf16.mxu0 0
  %4671 = vmatpush2.bf16.msra.mxu0 0
  %4672 = vmatprep.mubr.bf16.mxu0 0
  %4673 = vmatmul.mubr.bf16.gmra.mxu0 %v4579
  %v4674 = vpop.f32.mrf.mxu0
  %v4675 = vadd.f32 0.0, %v4674
  %v4676 = vpop.f32.mrf.mxu0
  %v4677 = vadd.f32 0.0, %v4676
  %v4678 = vpop.f32.mrf.mxu0
  %v4679 = vpop.f32.mrf.mxu0
  %4680 = vdwg.mxu0
  %4681 = vmatprep.subr.bf16.mxu0 0
  %4682 = vmatpush1.bf16.msra.mxu0 0
  %4683 = vmatprep.subr.bf16.mxu0 0
  %4684 = vmatpush1.bf16.msra.mxu0 0
  %4685 = vmatprep.subr.bf16.mxu0 0
  %4686 = vmatpush1.bf16.msra.mxu0 0
  %4687 = vmatprep.subr.bf16.mxu0 0
  %4688 = vmatpush1.bf16.msra.mxu0 0
  %4689 = vmatprep.subr.bf16.mxu0 0
  %4690 = vmatpush1.bf16.msra.mxu0 0
  %4691 = vmatprep.subr.bf16.mxu0 0
  %4692 = vmatpush1.bf16.msra.mxu0 0
  %4693 = vmatprep.subr.bf16.mxu0 0
  %4694 = vmatpush1.bf16.msra.mxu0 0
  %4695 = vmatprep.subr.bf16.mxu0 %v4597
  %4696 = vmatpush1.bf16.msra.mxu0 %v4594
  %4697 = vmatprep.subr.bf16.mxu0 0
  %4698 = vmatpush2.bf16.msra.mxu0 0
  %4699 = vmatprep.subr.bf16.mxu0 0
  %4700 = vmatpush2.bf16.msra.mxu0 0
  %4701 = vmatprep.subr.bf16.mxu0 0
  %4702 = vmatpush2.bf16.msra.mxu0 0
  %4703 = vmatprep.subr.bf16.mxu0 0
  %4704 = vmatpush2.bf16.msra.mxu0 0
  %4705 = vmatprep.subr.bf16.mxu0 0
  %4706 = vmatpush2.bf16.msra.mxu0 0
  %4707 = vmatprep.subr.bf16.mxu0 0
  %4708 = vmatpush2.bf16.msra.mxu0 0
  %4709 = vmatprep.subr.bf16.mxu0 0
  %4710 = vmatpush2.bf16.msra.mxu0 0
  %4711 = vmatprep.subr.bf16.mxu0 0
  %4712 = vmatpush2.bf16.msra.mxu0 0
  %4713 = vmatprep.mubr.bf16.mxu0 0
  %4714 = vmatmul.mubr.bf16.gmra.mxu0 %v4579
  %v4715 = vpop.f32.mrf.mxu0
  %v4716 = vadd.f32 0.0, %v4715
  %v4717 = vpop.f32.mrf.mxu0
  %v4718 = vadd.f32 0.0, %v4717
  %v4719 = vpop.f32.mrf.mxu0
  %v4720 = vpop.f32.mrf.mxu0
  %4721 = vdwg.mxu0
  %v4723 = vsel %vm88, %v4522, 0
  %v4726 = vsel %vm92, %v4529, 0
  %v4729 = vsel %vm92, %v4530, 0
  %v4732 = vsel %vm92, %v4531, 0
  %v4735 = vsel %vm92, %v4532, 0
  %v4738 = vsel %vm92, %v4533, 0
  %v4741 = vsel %vm92, %v4534, 0
  %4743 = vmatprep.subr.bf16.mxu0 0
  %4744 = vmatpush1.bf16.msra.mxu0 0
  %4745 = vmatprep.subr.bf16.mxu0 0
  %4746 = vmatpush1.bf16.msra.mxu0 0
  %4747 = vmatprep.subr.bf16.mxu0 0
  %4748 = vmatpush1.bf16.msra.mxu0 0
  %4749 = vmatprep.subr.bf16.mxu0 0
  %4750 = vmatpush1.bf16.msra.mxu0 0
  %4751 = vmatprep.subr.bf16.mxu0 0
  %4752 = vmatpush1.bf16.msra.mxu0 0
  %4753 = vmatprep.subr.bf16.mxu0 0
  %4754 = vmatpush1.bf16.msra.mxu0 0
  %4755 = vmatprep.subr.bf16.mxu0 0
  %4756 = vmatpush1.bf16.msra.mxu0 0
  %4757 = vmatprep.subr.bf16.mxu0 %v4729
  %4758 = vmatpush1.bf16.msra.mxu0 %v4726
  %4759 = vmatprep.subr.bf16.mxu0 0
  %4760 = vmatpush2.bf16.msra.mxu0 0
  %4761 = vmatprep.subr.bf16.mxu0 0
  %4762 = vmatpush2.bf16.msra.mxu0 0
  %4763 = vmatprep.subr.bf16.mxu0 0
  %4764 = vmatpush2.bf16.msra.mxu0 0
  %4765 = vmatprep.subr.bf16.mxu0 0
  %4766 = vmatpush2.bf16.msra.mxu0 0
  %4767 = vmatprep.subr.bf16.mxu0 0
  %4768 = vmatpush2.bf16.msra.mxu0 0
  %4769 = vmatprep.subr.bf16.mxu0 0
  %4770 = vmatpush2.bf16.msra.mxu0 0
  %4771 = vmatprep.subr.bf16.mxu0 0
  %4772 = vmatpush2.bf16.msra.mxu0 0
  %4773 = vmatprep.subr.bf16.mxu0 0
  %4774 = vmatpush2.bf16.msra.mxu0 0
  %4775 = vmatprep.mubr.bf16.mxu0 0
  %4776 = vmatmul.mubr.bf16.gmra.mxu0 %v4723
  %v4777 = vpop.f32.mrf.mxu0
  %v4778 = vadd.f32 %v4634, %v4777
  %v4779 = vpop.f32.mrf.mxu0
  %v4780 = vadd.f32 %v4636, %v4779
  %v4781 = vpop.f32.mrf.mxu0
  %v4782 = vpop.f32.mrf.mxu0
  %4783 = vdwg.mxu0
  %4784 = vmatprep.subr.bf16.mxu0 0
  %4785 = vmatpush1.bf16.msra.mxu0 0
  %4786 = vmatprep.subr.bf16.mxu0 0
  %4787 = vmatpush1.bf16.msra.mxu0 0
  %4788 = vmatprep.subr.bf16.mxu0 0
  %4789 = vmatpush1.bf16.msra.mxu0 0
  %4790 = vmatprep.subr.bf16.mxu0 0
  %4791 = vmatpush1.bf16.msra.mxu0 0
  %4792 = vmatprep.subr.bf16.mxu0 0
  %4793 = vmatpush1.bf16.msra.mxu0 0
  %4794 = vmatprep.subr.bf16.mxu0 0
  %4795 = vmatpush1.bf16.msra.mxu0 0
  %4796 = vmatprep.subr.bf16.mxu0 0
  %4797 = vmatpush1.bf16.msra.mxu0 0
  %4798 = vmatprep.subr.bf16.mxu0 %v4735
  %4799 = vmatpush1.bf16.msra.mxu0 %v4732
  %4800 = vmatprep.subr.bf16.mxu0 0
  %4801 = vmatpush2.bf16.msra.mxu0 0
  %4802 = vmatprep.subr.bf16.mxu0 0
  %4803 = vmatpush2.bf16.msra.mxu0 0
  %4804 = vmatprep.subr.bf16.mxu0 0
  %4805 = vmatpush2.bf16.msra.mxu0 0
  %4806 = vmatprep.subr.bf16.mxu0 0
  %4807 = vmatpush2.bf16.msra.mxu0 0
  %4808 = vmatprep.subr.bf16.mxu0 0
  %4809 = vmatpush2.bf16.msra.mxu0 0
  %4810 = vmatprep.subr.bf16.mxu0 0
  %4811 = vmatpush2.bf16.msra.mxu0 0
  %4812 = vmatprep.subr.bf16.mxu0 0
  %4813 = vmatpush2.bf16.msra.mxu0 0
  %4814 = vmatprep.subr.bf16.mxu0 0
  %4815 = vmatpush2.bf16.msra.mxu0 0
  %4816 = vmatprep.mubr.bf16.mxu0 0
  %4817 = vmatmul.mubr.bf16.gmra.mxu0 %v4723
  %v4818 = vpop.f32.mrf.mxu0
  %v4819 = vadd.f32 %v4675, %v4818
  %v4820 = vpop.f32.mrf.mxu0
  %v4821 = vadd.f32 %v4677, %v4820
  %v4822 = vpop.f32.mrf.mxu0
  %v4823 = vpop.f32.mrf.mxu0
  %4824 = vdwg.mxu0
  %4825 = vmatprep.subr.bf16.mxu0 0
  %4826 = vmatpush1.bf16.msra.mxu0 0
  %4827 = vmatprep.subr.bf16.mxu0 0
  %4828 = vmatpush1.bf16.msra.mxu0 0
  %4829 = vmatprep.subr.bf16.mxu0 0
  %4830 = vmatpush1.bf16.msra.mxu0 0
  %4831 = vmatprep.subr.bf16.mxu0 0
  %4832 = vmatpush1.bf16.msra.mxu0 0
  %4833 = vmatprep.subr.bf16.mxu0 0
  %4834 = vmatpush1.bf16.msra.mxu0 0
  %4835 = vmatprep.subr.bf16.mxu0 0
  %4836 = vmatpush1.bf16.msra.mxu0 0
  %4837 = vmatprep.subr.bf16.mxu0 0
  %4838 = vmatpush1.bf16.msra.mxu0 0
  %4839 = vmatprep.subr.bf16.mxu0 %v4741
  %4840 = vmatpush1.bf16.msra.mxu0 %v4738
  %4841 = vmatprep.subr.bf16.mxu0 0
  %4842 = vmatpush2.bf16.msra.mxu0 0
  %4843 = vmatprep.subr.bf16.mxu0 0
  %4844 = vmatpush2.bf16.msra.mxu0 0
  %4845 = vmatprep.subr.bf16.mxu0 0
  %4846 = vmatpush2.bf16.msra.mxu0 0
  %4847 = vmatprep.subr.bf16.mxu0 0
  %4848 = vmatpush2.bf16.msra.mxu0 0
  %4849 = vmatprep.subr.bf16.mxu0 0
  %4850 = vmatpush2.bf16.msra.mxu0 0
  %4851 = vmatprep.subr.bf16.mxu0 0
  %4852 = vmatpush2.bf16.msra.mxu0 0
  %4853 = vmatprep.subr.bf16.mxu0 0
  %4854 = vmatpush2.bf16.msra.mxu0 0
  %4855 = vmatprep.subr.bf16.mxu0 0
  %4856 = vmatpush2.bf16.msra.mxu0 0
  %4857 = vmatprep.mubr.bf16.mxu0 0
  %4858 = vmatmul.mubr.bf16.gmra.mxu0 %v4723
  %v4859 = vpop.f32.mrf.mxu0
  %v4860 = vadd.f32 %v4716, %v4859
  %v4861 = vpop.f32.mrf.mxu0
  %v4862 = vadd.f32 %v4718, %v4861
  %v4863 = vpop.f32.mrf.mxu0
  %v4864 = vpop.f32.mrf.mxu0
  %4865 = vdwg.mxu0
  %s4866 = scalar_lea.vmem %s4, 8
  %v4867 = vld [vmem:[%s4866] sm:$0xf]
  %4868 = vrot.lane.b32.xlu0 %v4544, 126
  %v4869 = vpop.permute.xlu0 %4868
  %4870 = vrot.lane.b32.xlu0 %v4545, 126
  %v4871 = vpop.permute.xlu0 %4870
  %4872 = vrot.lane.b32.xlu0 %v4546, 126
  %v4873 = vpop.permute.xlu0 %4872
  %4874 = vrot.lane.b32.xlu0 %v4547, 126
  %v4875 = vpop.permute.xlu0 %4874
  %4876 = vrot.lane.b32.xlu0 %v4548, 126
  %v4877 = vpop.permute.xlu0 %4876
  %4878 = vrot.lane.b32.xlu0 %v4549, 126
  %v4879 = vpop.permute.xlu0 %4878
  %4880 = vrot.lane.b32.xlu0 %v4550, 126
  %v4881 = vpop.permute.xlu0 %4880
  %v4882 = vsel %vm394, %v4869, %v4871
  %v4883 = vsel %vm394, %v4871, %v4873
  %v4884 = vsel %vm394, %v4873, %v4875
  %v4885 = vsel %vm394, %v4875, %v4877
  %v4886 = vsel %vm394, %v4877, %v4879
  %v4887 = vsel %vm394, %v4879, %v4881
  %v4889 = vsel %vm88, %v4867, 0
  %v4892 = vsel %vm92, %v4882, 0
  %v4895 = vsel %vm92, %v4883, 0
  %v4898 = vsel %vm92, %v4884, 0
  %v4901 = vsel %vm92, %v4885, 0
  %v4904 = vsel %vm92, %v4886, 0
  %v4907 = vsel %vm92, %v4887, 0
  %4909 = vmatprep.subr.bf16.mxu0 0
  %4910 = vmatpush1.bf16.msra.mxu0 0
  %4911 = vmatprep.subr.bf16.mxu0 0
  %4912 = vmatpush1.bf16.msra.mxu0 0
  %4913 = vmatprep.subr.bf16.mxu0 0
  %4914 = vmatpush1.bf16.msra.mxu0 0
  %4915 = vmatprep.subr.bf16.mxu0 0
  %4916 = vmatpush1.bf16.msra.mxu0 0
  %4917 = vmatprep.subr.bf16.mxu0 0
  %4918 = vmatpush1.bf16.msra.mxu0 0
  %4919 = vmatprep.subr.bf16.mxu0 0
  %4920 = vmatpush1.bf16.msra.mxu0 0
  %4921 = vmatprep.subr.bf16.mxu0 0
  %4922 = vmatpush1.bf16.msra.mxu0 0
  %4923 = vmatprep.subr.bf16.mxu0 %v4895
  %4924 = vmatpush1.bf16.msra.mxu0 %v4892
  %4925 = vmatprep.subr.bf16.mxu0 0
  %4926 = vmatpush2.bf16.msra.mxu0 0
  %4927 = vmatprep.subr.bf16.mxu0 0
  %4928 = vmatpush2.bf16.msra.mxu0 0
  %4929 = vmatprep.subr.bf16.mxu0 0
  %4930 = vmatpush2.bf16.msra.mxu0 0
  %4931 = vmatprep.subr.bf16.mxu0 0
  %4932 = vmatpush2.bf16.msra.mxu0 0
  %4933 = vmatprep.subr.bf16.mxu0 0
  %4934 = vmatpush2.bf16.msra.mxu0 0
  %4935 = vmatprep.subr.bf16.mxu0 0
  %4936 = vmatpush2.bf16.msra.mxu0 0
  %4937 = vmatprep.subr.bf16.mxu0 0
  %4938 = vmatpush2.bf16.msra.mxu0 0
  %4939 = vmatprep.subr.bf16.mxu0 0
  %4940 = vmatpush2.bf16.msra.mxu0 0
  %4941 = vmatprep.mubr.bf16.mxu0 0
  %4942 = vmatmul.mubr.bf16.gmra.mxu0 %v4889
  %v4943 = vpop.f32.mrf.mxu0
  %v4944 = vadd.f32 0.0, %v4943
  %v4945 = vpop.f32.mrf.mxu0
  %v4946 = vadd.f32 0.0, %v4945
  %v4947 = vpop.f32.mrf.mxu0
  %v4948 = vpop.f32.mrf.mxu0
  %4949 = vdwg.mxu0
  %4950 = vmatprep.subr.bf16.mxu0 0
  %4951 = vmatpush1.bf16.msra.mxu0 0
  %4952 = vmatprep.subr.bf16.mxu0 0
  %4953 = vmatpush1.bf16.msra.mxu0 0
  %4954 = vmatprep.subr.bf16.mxu0 0
  %4955 = vmatpush1.bf16.msra.mxu0 0
  %4956 = vmatprep.subr.bf16.mxu0 0
  %4957 = vmatpush1.bf16.msra.mxu0 0
  %4958 = vmatprep.subr.bf16.mxu0 0
  %4959 = vmatpush1.bf16.msra.mxu0 0
  %4960 = vmatprep.subr.bf16.mxu0 0
  %4961 = vmatpush1.bf16.msra.mxu0 0
  %4962 = vmatprep.subr.bf16.mxu0 0
  %4963 = vmatpush1.bf16.msra.mxu0 0
  %4964 = vmatprep.subr.bf16.mxu0 %v4901
  %4965 = vmatpush1.bf16.msra.mxu0 %v4898
  %4966 = vmatprep.subr.bf16.mxu0 0
  %4967 = vmatpush2.bf16.msra.mxu0 0
  %4968 = vmatprep.subr.bf16.mxu0 0
  %4969 = vmatpush2.bf16.msra.mxu0 0
  %4970 = vmatprep.subr.bf16.mxu0 0
  %4971 = vmatpush2.bf16.msra.mxu0 0
  %4972 = vmatprep.subr.bf16.mxu0 0
  %4973 = vmatpush2.bf16.msra.mxu0 0
  %4974 = vmatprep.subr.bf16.mxu0 0
  %4975 = vmatpush2.bf16.msra.mxu0 0
  %4976 = vmatprep.subr.bf16.mxu0 0
  %4977 = vmatpush2.bf16.msra.mxu0 0
  %4978 = vmatprep.subr.bf16.mxu0 0
  %4979 = vmatpush2.bf16.msra.mxu0 0
  %4980 = vmatprep.subr.bf16.mxu0 0
  %4981 = vmatpush2.bf16.msra.mxu0 0
  %4982 = vmatprep.mubr.bf16.mxu0 0
  %4983 = vmatmul.mubr.bf16.gmra.mxu0 %v4889
  %v4984 = vpop.f32.mrf.mxu0
  %v4985 = vadd.f32 0.0, %v4984
  %v4986 = vpop.f32.mrf.mxu0
  %v4987 = vadd.f32 0.0, %v4986
  %v4988 = vpop.f32.mrf.mxu0
  %v4989 = vpop.f32.mrf.mxu0
  %4990 = vdwg.mxu0
  %4991 = vmatprep.subr.bf16.mxu0 0
  %4992 = vmatpush1.bf16.msra.mxu0 0
  %4993 = vmatprep.subr.bf16.mxu0 0
  %4994 = vmatpush1.bf16.msra.mxu0 0
  %4995 = vmatprep.subr.bf16.mxu0 0
  %4996 = vmatpush1.bf16.msra.mxu0 0
  %4997 = vmatprep.subr.bf16.mxu0 0
  %4998 = vmatpush1.bf16.msra.mxu0 0
  %4999 = vmatprep.subr.bf16.mxu0 0
  %5000 = vmatpush1.bf16.msra.mxu0 0
  %5001 = vmatprep.subr.bf16.mxu0 0
  %5002 = vmatpush1.bf16.msra.mxu0 0
  %5003 = vmatprep.subr.bf16.mxu0 0
  %5004 = vmatpush1.bf16.msra.mxu0 0
  %5005 = vmatprep.subr.bf16.mxu0 %v4907
  %5006 = vmatpush1.bf16.msra.mxu0 %v4904
  %5007 = vmatprep.subr.bf16.mxu0 0
  %5008 = vmatpush2.bf16.msra.mxu0 0
  %5009 = vmatprep.subr.bf16.mxu0 0
  %5010 = vmatpush2.bf16.msra.mxu0 0
  %5011 = vmatprep.subr.bf16.mxu0 0
  %5012 = vmatpush2.bf16.msra.mxu0 0
  %5013 = vmatprep.subr.bf16.mxu0 0
  %5014 = vmatpush2.bf16.msra.mxu0 0
  %5015 = vmatprep.subr.bf16.mxu0 0
  %5016 = vmatpush2.bf16.msra.mxu0 0
  %5017 = vmatprep.subr.bf16.mxu0 0
  %5018 = vmatpush2.bf16.msra.mxu0 0
  %5019 = vmatprep.subr.bf16.mxu0 0
  %5020 = vmatpush2.bf16.msra.mxu0 0
  %5021 = vmatprep.subr.bf16.mxu0 0
  %5022 = vmatpush2.bf16.msra.mxu0 0
  %5023 = vmatprep.mubr.bf16.mxu0 0
  %5024 = vmatmul.mubr.bf16.gmra.mxu0 %v4889
  %v5025 = vpop.f32.mrf.mxu0
  %v5026 = vadd.f32 0.0, %v5025
  %v5027 = vpop.f32.mrf.mxu0
  %v5028 = vadd.f32 0.0, %v5027
  %v5029 = vpop.f32.mrf.mxu0
  %v5030 = vpop.f32.mrf.mxu0
  %5031 = vdwg.mxu0
  %v5032 = vadd.f32 %v4778, %v4944
  %v5033 = vadd.f32 %v4780, %v4946
  %v5034 = vadd.f32 %v4819, %v4985
  %v5035 = vadd.f32 %v4821, %v4987
  %v5036 = vadd.f32 %v4860, %v5026
  %v5037 = vadd.f32 %v4862, %v5028
  %s5038 = scalar_lea.vmem %s4, 12
  %v5039 = vld [vmem:[%s5038] sm:$0xf]
  %5040 = vrot.lane.b32.xlu0 %v4544, 125
  %v5041 = vpop.permute.xlu0 %5040
  %5042 = vrot.lane.b32.xlu0 %v4545, 125
  %v5043 = vpop.permute.xlu0 %5042
  %5044 = vrot.lane.b32.xlu0 %v4546, 125
  %v5045 = vpop.permute.xlu0 %5044
  %5046 = vrot.lane.b32.xlu0 %v4547, 125
  %v5047 = vpop.permute.xlu0 %5046
  %5048 = vrot.lane.b32.xlu0 %v4548, 125
  %v5049 = vpop.permute.xlu0 %5048
  %5050 = vrot.lane.b32.xlu0 %v4549, 125
  %v5051 = vpop.permute.xlu0 %5050
  %5052 = vrot.lane.b32.xlu0 %v4550, 125
  %v5053 = vpop.permute.xlu0 %5052
  %v5054 = vsel %vm567, %v5041, %v5043
  %v5055 = vsel %vm567, %v5043, %v5045
  %v5056 = vsel %vm567, %v5045, %v5047
  %v5057 = vsel %vm567, %v5047, %v5049
  %v5058 = vsel %vm567, %v5049, %v5051
  %v5059 = vsel %vm567, %v5051, %v5053
  %v5061 = vsel %vm88, %v5039, 0
  %v5064 = vsel %vm92, %v5054, 0
  %v5067 = vsel %vm92, %v5055, 0
  %v5070 = vsel %vm92, %v5056, 0
  %v5073 = vsel %vm92, %v5057, 0
  %v5076 = vsel %vm92, %v5058, 0
  %v5079 = vsel %vm92, %v5059, 0
  %5081 = vmatprep.subr.bf16.mxu0 0
  %5082 = vmatpush1.bf16.msra.mxu0 0
  %5083 = vmatprep.subr.bf16.mxu0 0
  %5084 = vmatpush1.bf16.msra.mxu0 0
  %5085 = vmatprep.subr.bf16.mxu0 0
  %5086 = vmatpush1.bf16.msra.mxu0 0
  %5087 = vmatprep.subr.bf16.mxu0 0
  %5088 = vmatpush1.bf16.msra.mxu0 0
  %5089 = vmatprep.subr.bf16.mxu0 0
  %5090 = vmatpush1.bf16.msra.mxu0 0
  %5091 = vmatprep.subr.bf16.mxu0 0
  %5092 = vmatpush1.bf16.msra.mxu0 0
  %5093 = vmatprep.subr.bf16.mxu0 0
  %5094 = vmatpush1.bf16.msra.mxu0 0
  %5095 = vmatprep.subr.bf16.mxu0 %v5067
  %5096 = vmatpush1.bf16.msra.mxu0 %v5064
  %5097 = vmatprep.subr.bf16.mxu0 0
  %5098 = vmatpush2.bf16.msra.mxu0 0
  %5099 = vmatprep.subr.bf16.mxu0 0
  %5100 = vmatpush2.bf16.msra.mxu0 0
  %5101 = vmatprep.subr.bf16.mxu0 0
  %5102 = vmatpush2.bf16.msra.mxu0 0
  %5103 = vmatprep.subr.bf16.mxu0 0
  %5104 = vmatpush2.bf16.msra.mxu0 0
  %5105 = vmatprep.subr.bf16.mxu0 0
  %5106 = vmatpush2.bf16.msra.mxu0 0
  %5107 = vmatprep.subr.bf16.mxu0 0
  %5108 = vmatpush2.bf16.msra.mxu0 0
  %5109 = vmatprep.subr.bf16.mxu0 0
  %5110 = vmatpush2.bf16.msra.mxu0 0
  %5111 = vmatprep.subr.bf16.mxu0 0
  %5112 = vmatpush2.bf16.msra.mxu0 0
  %5113 = vmatprep.mubr.bf16.mxu0 0
  %5114 = vmatmul.mubr.bf16.gmra.mxu0 %v5061
  %v5115 = vpop.f32.mrf.mxu0
  %v5116 = vadd.f32 0.0, %v5115
  %v5117 = vpop.f32.mrf.mxu0
  %v5118 = vadd.f32 0.0, %v5117
  %v5119 = vpop.f32.mrf.mxu0
  %v5120 = vpop.f32.mrf.mxu0
  %5121 = vdwg.mxu0
  %5122 = vmatprep.subr.bf16.mxu0 0
  %5123 = vmatpush1.bf16.msra.mxu0 0
  %5124 = vmatprep.subr.bf16.mxu0 0
  %5125 = vmatpush1.bf16.msra.mxu0 0
  %5126 = vmatprep.subr.bf16.mxu0 0
  %5127 = vmatpush1.bf16.msra.mxu0 0
  %5128 = vmatprep.subr.bf16.mxu0 0
  %5129 = vmatpush1.bf16.msra.mxu0 0
  %5130 = vmatprep.subr.bf16.mxu0 0
  %5131 = vmatpush1.bf16.msra.mxu0 0
  %5132 = vmatprep.subr.bf16.mxu0 0
  %5133 = vmatpush1.bf16.msra.mxu0 0
  %5134 = vmatprep.subr.bf16.mxu0 0
  %5135 = vmatpush1.bf16.msra.mxu0 0
  %5136 = vmatprep.subr.bf16.mxu0 %v5073
  %5137 = vmatpush1.bf16.msra.mxu0 %v5070
  %5138 = vmatprep.subr.bf16.mxu0 0
  %5139 = vmatpush2.bf16.msra.mxu0 0
  %5140 = vmatprep.subr.bf16.mxu0 0
  %5141 = vmatpush2.bf16.msra.mxu0 0
  %5142 = vmatprep.subr.bf16.mxu0 0
  %5143 = vmatpush2.bf16.msra.mxu0 0
  %5144 = vmatprep.subr.bf16.mxu0 0
  %5145 = vmatpush2.bf16.msra.mxu0 0
  %5146 = vmatprep.subr.bf16.mxu0 0
  %5147 = vmatpush2.bf16.msra.mxu0 0
  %5148 = vmatprep.subr.bf16.mxu0 0
  %5149 = vmatpush2.bf16.msra.mxu0 0
  %5150 = vmatprep.subr.bf16.mxu0 0
  %5151 = vmatpush2.bf16.msra.mxu0 0
  %5152 = vmatprep.subr.bf16.mxu0 0
  %5153 = vmatpush2.bf16.msra.mxu0 0
  %5154 = vmatprep.mubr.bf16.mxu0 0
  %5155 = vmatmul.mubr.bf16.gmra.mxu0 %v5061
  %v5156 = vpop.f32.mrf.mxu0
  %v5157 = vadd.f32 0.0, %v5156
  %v5158 = vpop.f32.mrf.mxu0
  %v5159 = vadd.f32 0.0, %v5158
  %v5160 = vpop.f32.mrf.mxu0
  %v5161 = vpop.f32.mrf.mxu0
  %5162 = vdwg.mxu0
  %5163 = vmatprep.subr.bf16.mxu0 0
  %5164 = vmatpush1.bf16.msra.mxu0 0
  %5165 = vmatprep.subr.bf16.mxu0 0
  %5166 = vmatpush1.bf16.msra.mxu0 0
  %5167 = vmatprep.subr.bf16.mxu0 0
  %5168 = vmatpush1.bf16.msra.mxu0 0
  %5169 = vmatprep.subr.bf16.mxu0 0
  %5170 = vmatpush1.bf16.msra.mxu0 0
  %5171 = vmatprep.subr.bf16.mxu0 0
  %5172 = vmatpush1.bf16.msra.mxu0 0
  %5173 = vmatprep.subr.bf16.mxu0 0
  %5174 = vmatpush1.bf16.msra.mxu0 0
  %5175 = vmatprep.subr.bf16.mxu0 0
  %5176 = vmatpush1.bf16.msra.mxu0 0
  %5177 = vmatprep.subr.bf16.mxu0 %v5079
  %5178 = vmatpush1.bf16.msra.mxu0 %v5076
  %5179 = vmatprep.subr.bf16.mxu0 0
  %5180 = vmatpush2.bf16.msra.mxu0 0
  %5181 = vmatprep.subr.bf16.mxu0 0
  %5182 = vmatpush2.bf16.msra.mxu0 0
  %5183 = vmatprep.subr.bf16.mxu0 0
  %5184 = vmatpush2.bf16.msra.mxu0 0
  %5185 = vmatprep.subr.bf16.mxu0 0
  %5186 = vmatpush2.bf16.msra.mxu0 0
  %5187 = vmatprep.subr.bf16.mxu0 0
  %5188 = vmatpush2.bf16.msra.mxu0 0
  %5189 = vmatprep.subr.bf16.mxu0 0
  %5190 = vmatpush2.bf16.msra.mxu0 0
  %5191 = vmatprep.subr.bf16.mxu0 0
  %5192 = vmatpush2.bf16.msra.mxu0 0
  %5193 = vmatprep.subr.bf16.mxu0 0
  %5194 = vmatpush2.bf16.msra.mxu0 0
  %5195 = vmatprep.mubr.bf16.mxu0 0
  %5196 = vmatmul.mubr.bf16.gmra.mxu0 %v5061
  %v5197 = vpop.f32.mrf.mxu0
  %v5198 = vadd.f32 0.0, %v5197
  %v5199 = vpop.f32.mrf.mxu0
  %v5200 = vadd.f32 0.0, %v5199
  %v5201 = vpop.f32.mrf.mxu0
  %v5202 = vpop.f32.mrf.mxu0
  %5203 = vdwg.mxu0
  %v5204 = vadd.f32 %v5032, %v5116
  %v5205 = vadd.f32 %v5033, %v5118
  %v5206 = vadd.f32 %v5034, %v5157
  %v5207 = vadd.f32 %v5035, %v5159
  %v5208 = vadd.f32 %v5036, %v5198
  %v5209 = vadd.f32 %v5037, %v5200
  %s5210 = scalar_lea.vmem %s4, 16
  %v5211 = vld [vmem:[%s5210] sm:$0xf]
  %5212 = vrot.lane.b32.xlu0 %v4544, 124
  %v5213 = vpop.permute.xlu0 %5212
  %5214 = vrot.lane.b32.xlu0 %v4545, 124
  %v5215 = vpop.permute.xlu0 %5214
  %5216 = vrot.lane.b32.xlu0 %v4546, 124
  %v5217 = vpop.permute.xlu0 %5216
  %5218 = vrot.lane.b32.xlu0 %v4547, 124
  %v5219 = vpop.permute.xlu0 %5218
  %5220 = vrot.lane.b32.xlu0 %v4548, 124
  %v5221 = vpop.permute.xlu0 %5220
  %5222 = vrot.lane.b32.xlu0 %v4549, 124
  %v5223 = vpop.permute.xlu0 %5222
  %5224 = vrot.lane.b32.xlu0 %v4550, 124
  %v5225 = vpop.permute.xlu0 %5224
  %v5226 = vsel %vm740, %v5213, %v5215
  %v5227 = vsel %vm740, %v5215, %v5217
  %v5228 = vsel %vm740, %v5217, %v5219
  %v5229 = vsel %vm740, %v5219, %v5221
  %v5230 = vsel %vm740, %v5221, %v5223
  %v5231 = vsel %vm740, %v5223, %v5225
  %v5233 = vsel %vm88, %v5211, 0
  %v5236 = vsel %vm92, %v5226, 0
  %v5239 = vsel %vm92, %v5227, 0
  %v5242 = vsel %vm92, %v5228, 0
  %v5245 = vsel %vm92, %v5229, 0
  %v5248 = vsel %vm92, %v5230, 0
  %v5251 = vsel %vm92, %v5231, 0
  %5253 = vmatprep.subr.bf16.mxu0 0
  %5254 = vmatpush1.bf16.msra.mxu0 0
  %5255 = vmatprep.subr.bf16.mxu0 0
  %5256 = vmatpush1.bf16.msra.mxu0 0
  %5257 = vmatprep.subr.bf16.mxu0 0
  %5258 = vmatpush1.bf16.msra.mxu0 0
  %5259 = vmatprep.subr.bf16.mxu0 0
  %5260 = vmatpush1.bf16.msra.mxu0 0
  %5261 = vmatprep.subr.bf16.mxu0 0
  %5262 = vmatpush1.bf16.msra.mxu0 0
  %5263 = vmatprep.subr.bf16.mxu0 0
  %5264 = vmatpush1.bf16.msra.mxu0 0
  %5265 = vmatprep.subr.bf16.mxu0 0
  %5266 = vmatpush1.bf16.msra.mxu0 0
  %5267 = vmatprep.subr.bf16.mxu0 %v5239
  %5268 = vmatpush1.bf16.msra.mxu0 %v5236
  %5269 = vmatprep.subr.bf16.mxu0 0
  %5270 = vmatpush2.bf16.msra.mxu0 0
  %5271 = vmatprep.subr.bf16.mxu0 0
  %5272 = vmatpush2.bf16.msra.mxu0 0
  %5273 = vmatprep.subr.bf16.mxu0 0
  %5274 = vmatpush2.bf16.msra.mxu0 0
  %5275 = vmatprep.subr.bf16.mxu0 0
  %5276 = vmatpush2.bf16.msra.mxu0 0
  %5277 = vmatprep.subr.bf16.mxu0 0
  %5278 = vmatpush2.bf16.msra.mxu0 0
  %5279 = vmatprep.subr.bf16.mxu0 0
  %5280 = vmatpush2.bf16.msra.mxu0 0
  %5281 = vmatprep.subr.bf16.mxu0 0
  %5282 = vmatpush2.bf16.msra.mxu0 0
  %5283 = vmatprep.subr.bf16.mxu0 0
  %5284 = vmatpush2.bf16.msra.mxu0 0
  %5285 = vmatprep.mubr.bf16.mxu0 0
  %5286 = vmatmul.mubr.bf16.gmra.mxu0 %v5233
  %v5287 = vpop.f32.mrf.mxu0
  %v5288 = vadd.f32 0.0, %v5287
  %v5289 = vpop.f32.mrf.mxu0
  %v5290 = vadd.f32 0.0, %v5289
  %v5291 = vpop.f32.mrf.mxu0
  %v5292 = vpop.f32.mrf.mxu0
  %5293 = vdwg.mxu0
  %5294 = vmatprep.subr.bf16.mxu0 0
  %5295 = vmatpush1.bf16.msra.mxu0 0
  %5296 = vmatprep.subr.bf16.mxu0 0
  %5297 = vmatpush1.bf16.msra.mxu0 0
  %5298 = vmatprep.subr.bf16.mxu0 0
  %5299 = vmatpush1.bf16.msra.mxu0 0
  %5300 = vmatprep.subr.bf16.mxu0 0
  %5301 = vmatpush1.bf16.msra.mxu0 0
  %5302 = vmatprep.subr.bf16.mxu0 0
  %5303 = vmatpush1.bf16.msra.mxu0 0
  %5304 = vmatprep.subr.bf16.mxu0 0
  %5305 = vmatpush1.bf16.msra.mxu0 0
  %5306 = vmatprep.subr.bf16.mxu0 0
  %5307 = vmatpush1.bf16.msra.mxu0 0
  %5308 = vmatprep.subr.bf16.mxu0 %v5245
  %5309 = vmatpush1.bf16.msra.mxu0 %v5242
  %5310 = vmatprep.subr.bf16.mxu0 0
  %5311 = vmatpush2.bf16.msra.mxu0 0
  %5312 = vmatprep.subr.bf16.mxu0 0
  %5313 = vmatpush2.bf16.msra.mxu0 0
  %5314 = vmatprep.subr.bf16.mxu0 0
  %5315 = vmatpush2.bf16.msra.mxu0 0
  %5316 = vmatprep.subr.bf16.mxu0 0
  %5317 = vmatpush2.bf16.msra.mxu0 0
  %5318 = vmatprep.subr.bf16.mxu0 0
  %5319 = vmatpush2.bf16.msra.mxu0 0
  %5320 = vmatprep.subr.bf16.mxu0 0
  %5321 = vmatpush2.bf16.msra.mxu0 0
  %5322 = vmatprep.subr.bf16.mxu0 0
  %5323 = vmatpush2.bf16.msra.mxu0 0
  %5324 = vmatprep.subr.bf16.mxu0 0
  %5325 = vmatpush2.bf16.msra.mxu0 0
  %5326 = vmatprep.mubr.bf16.mxu0 0
  %5327 = vmatmul.mubr.bf16.gmra.mxu0 %v5233
  %v5328 = vpop.f32.mrf.mxu0
  %v5329 = vadd.f32 0.0, %v5328
  %v5330 = vpop.f32.mrf.mxu0
  %v5331 = vadd.f32 0.0, %v5330
  %v5332 = vpop.f32.mrf.mxu0
  %v5333 = vpop.f32.mrf.mxu0
  %5334 = vdwg.mxu0
  %5335 = vmatprep.subr.bf16.mxu0 0
  %5336 = vmatpush1.bf16.msra.mxu0 0
  %5337 = vmatprep.subr.bf16.mxu0 0
  %5338 = vmatpush1.bf16.msra.mxu0 0
  %5339 = vmatprep.subr.bf16.mxu0 0
  %5340 = vmatpush1.bf16.msra.mxu0 0
  %5341 = vmatprep.subr.bf16.mxu0 0
  %5342 = vmatpush1.bf16.msra.mxu0 0
  %5343 = vmatprep.subr.bf16.mxu0 0
  %5344 = vmatpush1.bf16.msra.mxu0 0
  %5345 = vmatprep.subr.bf16.mxu0 0
  %5346 = vmatpush1.bf16.msra.mxu0 0
  %5347 = vmatprep.subr.bf16.mxu0 0
  %5348 = vmatpush1.bf16.msra.mxu0 0
  %5349 = vmatprep.subr.bf16.mxu0 %v5251
  %5350 = vmatpush1.bf16.msra.mxu0 %v5248
  %5351 = vmatprep.subr.bf16.mxu0 0
  %5352 = vmatpush2.bf16.msra.mxu0 0
  %5353 = vmatprep.subr.bf16.mxu0 0
  %5354 = vmatpush2.bf16.msra.mxu0 0
  %5355 = vmatprep.subr.bf16.mxu0 0
  %5356 = vmatpush2.bf16.msra.mxu0 0
  %5357 = vmatprep.subr.bf16.mxu0 0
  %5358 = vmatpush2.bf16.msra.mxu0 0
  %5359 = vmatprep.subr.bf16.mxu0 0
  %5360 = vmatpush2.bf16.msra.mxu0 0
  %5361 = vmatprep.subr.bf16.mxu0 0
  %5362 = vmatpush2.bf16.msra.mxu0 0
  %5363 = vmatprep.subr.bf16.mxu0 0
  %5364 = vmatpush2.bf16.msra.mxu0 0
  %5365 = vmatprep.subr.bf16.mxu0 0
  %5366 = vmatpush2.bf16.msra.mxu0 0
  %5367 = vmatprep.mubr.bf16.mxu0 0
  %5368 = vmatmul.mubr.bf16.gmra.mxu0 %v5233
  %v5369 = vpop.f32.mrf.mxu0
  %v5370 = vadd.f32 0.0, %v5369
  %v5371 = vpop.f32.mrf.mxu0
  %v5372 = vadd.f32 0.0, %v5371
  %v5373 = vpop.f32.mrf.mxu0
  %v5374 = vpop.f32.mrf.mxu0
  %5375 = vdwg.mxu0
  %v5376 = vadd.f32 %v5204, %v5288
  %v5377 = vadd.f32 %v5205, %v5290
  %v5378 = vadd.f32 %v5206, %v5329
  %v5379 = vadd.f32 %v5207, %v5331
  %v5380 = vadd.f32 %v5208, %v5370
  %v5381 = vadd.f32 %v5209, %v5372
  %s5382 = scalar_lea.vmem %s4, 20
  %v5383 = vld [vmem:[%s5382] sm:$0xf]
  %5384 = vrot.lane.b32.xlu0 %v4544, 108
  %v5385 = vpop.permute.xlu0 %5384
  %5386 = vrot.lane.b32.xlu0 %v4545, 108
  %v5387 = vpop.permute.xlu0 %5386
  %5388 = vrot.lane.b32.xlu0 %v4546, 108
  %v5389 = vpop.permute.xlu0 %5388
  %5390 = vrot.lane.b32.xlu0 %v4547, 108
  %v5391 = vpop.permute.xlu0 %5390
  %5392 = vrot.lane.b32.xlu0 %v4548, 108
  %v5393 = vpop.permute.xlu0 %5392
  %5394 = vrot.lane.b32.xlu0 %v4549, 108
  %v5395 = vpop.permute.xlu0 %5394
  %5396 = vrot.lane.b32.xlu0 %v4550, 108
  %v5397 = vpop.permute.xlu0 %5396
  %v5398 = vsel %vm913, %v5385, %v5387
  %v5399 = vsel %vm913, %v5387, %v5389
  %v5400 = vsel %vm913, %v5389, %v5391
  %v5401 = vsel %vm913, %v5391, %v5393
  %v5402 = vsel %vm913, %v5393, %v5395
  %v5403 = vsel %vm913, %v5395, %v5397
  %v5405 = vsel %vm88, %v5383, 0
  %v5408 = vsel %vm92, %v5398, 0
  %v5411 = vsel %vm92, %v5399, 0
  %v5414 = vsel %vm92, %v5400, 0
  %v5417 = vsel %vm92, %v5401, 0
  %v5420 = vsel %vm92, %v5402, 0
  %v5423 = vsel %vm92, %v5403, 0
  %5425 = vmatprep.subr.bf16.mxu0 0
  %5426 = vmatpush1.bf16.msra.mxu0 0
  %5427 = vmatprep.subr.bf16.mxu0 0
  %5428 = vmatpush1.bf16.msra.mxu0 0
  %5429 = vmatprep.subr.bf16.mxu0 0
  %5430 = vmatpush1.bf16.msra.mxu0 0
  %5431 = vmatprep.subr.bf16.mxu0 0
  %5432 = vmatpush1.bf16.msra.mxu0 0
  %5433 = vmatprep.subr.bf16.mxu0 0
  %5434 = vmatpush1.bf16.msra.mxu0 0
  %5435 = vmatprep.subr.bf16.mxu0 0
  %5436 = vmatpush1.bf16.msra.mxu0 0
  %5437 = vmatprep.subr.bf16.mxu0 0
  %5438 = vmatpush1.bf16.msra.mxu0 0
  %5439 = vmatprep.subr.bf16.mxu0 %v5411
  %5440 = vmatpush1.bf16.msra.mxu0 %v5408
  %5441 = vmatprep.subr.bf16.mxu0 0
  %5442 = vmatpush2.bf16.msra.mxu0 0
  %5443 = vmatprep.subr.bf16.mxu0 0
  %5444 = vmatpush2.bf16.msra.mxu0 0
  %5445 = vmatprep.subr.bf16.mxu0 0
  %5446 = vmatpush2.bf16.msra.mxu0 0
  %5447 = vmatprep.subr.bf16.mxu0 0
  %5448 = vmatpush2.bf16.msra.mxu0 0
  %5449 = vmatprep.subr.bf16.mxu0 0
  %5450 = vmatpush2.bf16.msra.mxu0 0
  %5451 = vmatprep.subr.bf16.mxu0 0
  %5452 = vmatpush2.bf16.msra.mxu0 0
  %5453 = vmatprep.subr.bf16.mxu0 0
  %5454 = vmatpush2.bf16.msra.mxu0 0
  %5455 = vmatprep.subr.bf16.mxu0 0
  %5456 = vmatpush2.bf16.msra.mxu0 0
  %5457 = vmatprep.mubr.bf16.mxu0 0
  %5458 = vmatmul.mubr.bf16.gmra.mxu0 %v5405
  %v5459 = vpop.f32.mrf.mxu0
  %v5460 = vadd.f32 0.0, %v5459
  %v5461 = vpop.f32.mrf.mxu0
  %v5462 = vadd.f32 0.0, %v5461
  %v5463 = vpop.f32.mrf.mxu0
  %v5464 = vpop.f32.mrf.mxu0
  %5465 = vdwg.mxu0
  %5466 = vmatprep.subr.bf16.mxu0 0
  %5467 = vmatpush1.bf16.msra.mxu0 0
  %5468 = vmatprep.subr.bf16.mxu0 0
  %5469 = vmatpush1.bf16.msra.mxu0 0
  %5470 = vmatprep.subr.bf16.mxu0 0
  %5471 = vmatpush1.bf16.msra.mxu0 0
  %5472 = vmatprep.subr.bf16.mxu0 0
  %5473 = vmatpush1.bf16.msra.mxu0 0
  %5474 = vmatprep.subr.bf16.mxu0 0
  %5475 = vmatpush1.bf16.msra.mxu0 0
  %5476 = vmatprep.subr.bf16.mxu0 0
  %5477 = vmatpush1.bf16.msra.mxu0 0
  %5478 = vmatprep.subr.bf16.mxu0 0
  %5479 = vmatpush1.bf16.msra.mxu0 0
  %5480 = vmatprep.subr.bf16.mxu0 %v5417
  %5481 = vmatpush1.bf16.msra.mxu0 %v5414
  %5482 = vmatprep.subr.bf16.mxu0 0
  %5483 = vmatpush2.bf16.msra.mxu0 0
  %5484 = vmatprep.subr.bf16.mxu0 0
  %5485 = vmatpush2.bf16.msra.mxu0 0
  %5486 = vmatprep.subr.bf16.mxu0 0
  %5487 = vmatpush2.bf16.msra.mxu0 0
  %5488 = vmatprep.subr.bf16.mxu0 0
  %5489 = vmatpush2.bf16.msra.mxu0 0
  %5490 = vmatprep.subr.bf16.mxu0 0
  %5491 = vmatpush2.bf16.msra.mxu0 0
  %5492 = vmatprep.subr.bf16.mxu0 0
  %5493 = vmatpush2.bf16.msra.mxu0 0
  %5494 = vmatprep.subr.bf16.mxu0 0
  %5495 = vmatpush2.bf16.msra.mxu0 0
  %5496 = vmatprep.subr.bf16.mxu0 0
  %5497 = vmatpush2.bf16.msra.mxu0 0
  %5498 = vmatprep.mubr.bf16.mxu0 0
  %5499 = vmatmul.mubr.bf16.gmra.mxu0 %v5405
  %v5500 = vpop.f32.mrf.mxu0
  %v5501 = vadd.f32 0.0, %v5500
  %v5502 = vpop.f32.mrf.mxu0
  %v5503 = vadd.f32 0.0, %v5502
  %v5504 = vpop.f32.mrf.mxu0
  %v5505 = vpop.f32.mrf.mxu0
  %5506 = vdwg.mxu0
  %5507 = vmatprep.subr.bf16.mxu0 0
  %5508 = vmatpush1.bf16.msra.mxu0 0
  %5509 = vmatprep.subr.bf16.mxu0 0
  %5510 = vmatpush1.bf16.msra.mxu0 0
  %5511 = vmatprep.subr.bf16.mxu0 0
  %5512 = vmatpush1.bf16.msra.mxu0 0
  %5513 = vmatprep.subr.bf16.mxu0 0
  %5514 = vmatpush1.bf16.msra.mxu0 0
  %5515 = vmatprep.subr.bf16.mxu0 0
  %5516 = vmatpush1.bf16.msra.mxu0 0
  %5517 = vmatprep.subr.bf16.mxu0 0
  %5518 = vmatpush1.bf16.msra.mxu0 0
  %5519 = vmatprep.subr.bf16.mxu0 0
  %5520 = vmatpush1.bf16.msra.mxu0 0
  %5521 = vmatprep.subr.bf16.mxu0 %v5423
  %5522 = vmatpush1.bf16.msra.mxu0 %v5420
  %5523 = vmatprep.subr.bf16.mxu0 0
  %5524 = vmatpush2.bf16.msra.mxu0 0
  %5525 = vmatprep.subr.bf16.mxu0 0
  %5526 = vmatpush2.bf16.msra.mxu0 0
  %5527 = vmatprep.subr.bf16.mxu0 0
  %5528 = vmatpush2.bf16.msra.mxu0 0
  %5529 = vmatprep.subr.bf16.mxu0 0
  %5530 = vmatpush2.bf16.msra.mxu0 0
  %5531 = vmatprep.subr.bf16.mxu0 0
  %5532 = vmatpush2.bf16.msra.mxu0 0
  %5533 = vmatprep.subr.bf16.mxu0 0
  %5534 = vmatpush2.bf16.msra.mxu0 0
  %5535 = vmatprep.subr.bf16.mxu0 0
  %5536 = vmatpush2.bf16.msra.mxu0 0
  %5537 = vmatprep.subr.bf16.mxu0 0
  %5538 = vmatpush2.bf16.msra.mxu0 0
  %5539 = vmatprep.mubr.bf16.mxu0 0
  %5540 = vmatmul.mubr.bf16.gmra.mxu0 %v5405
  %v5541 = vpop.f32.mrf.mxu0
  %v5542 = vadd.f32 0.0, %v5541
  %v5543 = vpop.f32.mrf.mxu0
  %v5544 = vadd.f32 0.0, %v5543
  %v5545 = vpop.f32.mrf.mxu0
  %v5546 = vpop.f32.mrf.mxu0
  %5547 = vdwg.mxu0
  %v5548 = vadd.f32 %v5376, %v5460
  %v5549 = vadd.f32 %v5377, %v5462
  %v5550 = vadd.f32 %v5378, %v5501
  %v5551 = vadd.f32 %v5379, %v5503
  %v5552 = vadd.f32 %v5380, %v5542
  %v5553 = vadd.f32 %v5381, %v5544
  %s5554 = scalar_lea.vmem %s4, 24
  %v5555 = vld [vmem:[%s5554] sm:$0xf]
  %5556 = vrot.lane.b32.xlu0 %v4544, 107
  %v5557 = vpop.permute.xlu0 %5556
  %5558 = vrot.lane.b32.xlu0 %v4545, 107
  %v5559 = vpop.permute.xlu0 %5558
  %5560 = vrot.lane.b32.xlu0 %v4546, 107
  %v5561 = vpop.permute.xlu0 %5560
  %5562 = vrot.lane.b32.xlu0 %v4547, 107
  %v5563 = vpop.permute.xlu0 %5562
  %5564 = vrot.lane.b32.xlu0 %v4548, 107
  %v5565 = vpop.permute.xlu0 %5564
  %5566 = vrot.lane.b32.xlu0 %v4549, 107
  %v5567 = vpop.permute.xlu0 %5566
  %5568 = vrot.lane.b32.xlu0 %v4550, 107
  %v5569 = vpop.permute.xlu0 %5568
  %v5570 = vsel %vm1086, %v5557, %v5559
  %v5571 = vsel %vm1086, %v5559, %v5561
  %v5572 = vsel %vm1086, %v5561, %v5563
  %v5573 = vsel %vm1086, %v5563, %v5565
  %v5574 = vsel %vm1086, %v5565, %v5567
  %v5575 = vsel %vm1086, %v5567, %v5569
  %v5577 = vsel %vm88, %v5555, 0
  %v5580 = vsel %vm92, %v5570, 0
  %v5583 = vsel %vm92, %v5571, 0
  %v5586 = vsel %vm92, %v5572, 0
  %v5589 = vsel %vm92, %v5573, 0
  %v5592 = vsel %vm92, %v5574, 0
  %v5595 = vsel %vm92, %v5575, 0
  %5597 = vmatprep.subr.bf16.mxu0 0
  %5598 = vmatpush1.bf16.msra.mxu0 0
  %5599 = vmatprep.subr.bf16.mxu0 0
  %5600 = vmatpush1.bf16.msra.mxu0 0
  %5601 = vmatprep.subr.bf16.mxu0 0
  %5602 = vmatpush1.bf16.msra.mxu0 0
  %5603 = vmatprep.subr.bf16.mxu0 0
  %5604 = vmatpush1.bf16.msra.mxu0 0
  %5605 = vmatprep.subr.bf16.mxu0 0
  %5606 = vmatpush1.bf16.msra.mxu0 0
  %5607 = vmatprep.subr.bf16.mxu0 0
  %5608 = vmatpush1.bf16.msra.mxu0 0
  %5609 = vmatprep.subr.bf16.mxu0 0
  %5610 = vmatpush1.bf16.msra.mxu0 0
  %5611 = vmatprep.subr.bf16.mxu0 %v5583
  %5612 = vmatpush1.bf16.msra.mxu0 %v5580
  %5613 = vmatprep.subr.bf16.mxu0 0
  %5614 = vmatpush2.bf16.msra.mxu0 0
  %5615 = vmatprep.subr.bf16.mxu0 0
  %5616 = vmatpush2.bf16.msra.mxu0 0
  %5617 = vmatprep.subr.bf16.mxu0 0
  %5618 = vmatpush2.bf16.msra.mxu0 0
  %5619 = vmatprep.subr.bf16.mxu0 0
  %5620 = vmatpush2.bf16.msra.mxu0 0
  %5621 = vmatprep.subr.bf16.mxu0 0
  %5622 = vmatpush2.bf16.msra.mxu0 0
  %5623 = vmatprep.subr.bf16.mxu0 0
  %5624 = vmatpush2.bf16.msra.mxu0 0
  %5625 = vmatprep.subr.bf16.mxu0 0
  %5626 = vmatpush2.bf16.msra.mxu0 0
  %5627 = vmatprep.subr.bf16.mxu0 0
  %5628 = vmatpush2.bf16.msra.mxu0 0
  %5629 = vmatprep.mubr.bf16.mxu0 0
  %5630 = vmatmul.mubr.bf16.gmra.mxu0 %v5577
  %v5631 = vpop.f32.mrf.mxu0
  %v5632 = vadd.f32 0.0, %v5631
  %v5633 = vpop.f32.mrf.mxu0
  %v5634 = vadd.f32 0.0, %v5633
  %v5635 = vpop.f32.mrf.mxu0
  %v5636 = vpop.f32.mrf.mxu0
  %5637 = vdwg.mxu0
  %5638 = vmatprep.subr.bf16.mxu0 0
  %5639 = vmatpush1.bf16.msra.mxu0 0
  %5640 = vmatprep.subr.bf16.mxu0 0
  %5641 = vmatpush1.bf16.msra.mxu0 0
  %5642 = vmatprep.subr.bf16.mxu0 0
  %5643 = vmatpush1.bf16.msra.mxu0 0
  %5644 = vmatprep.subr.bf16.mxu0 0
  %5645 = vmatpush1.bf16.msra.mxu0 0
  %5646 = vmatprep.subr.bf16.mxu0 0
  %5647 = vmatpush1.bf16.msra.mxu0 0
  %5648 = vmatprep.subr.bf16.mxu0 0
  %5649 = vmatpush1.bf16.msra.mxu0 0
  %5650 = vmatprep.subr.bf16.mxu0 0
  %5651 = vmatpush1.bf16.msra.mxu0 0
  %5652 = vmatprep.subr.bf16.mxu0 %v5589
  %5653 = vmatpush1.bf16.msra.mxu0 %v5586
  %5654 = vmatprep.subr.bf16.mxu0 0
  %5655 = vmatpush2.bf16.msra.mxu0 0
  %5656 = vmatprep.subr.bf16.mxu0 0
  %5657 = vmatpush2.bf16.msra.mxu0 0
  %5658 = vmatprep.subr.bf16.mxu0 0
  %5659 = vmatpush2.bf16.msra.mxu0 0
  %5660 = vmatprep.subr.bf16.mxu0 0
  %5661 = vmatpush2.bf16.msra.mxu0 0
  %5662 = vmatprep.subr.bf16.mxu0 0
  %5663 = vmatpush2.bf16.msra.mxu0 0
  %5664 = vmatprep.subr.bf16.mxu0 0
  %5665 = vmatpush2.bf16.msra.mxu0 0
  %5666 = vmatprep.subr.bf16.mxu0 0
  %5667 = vmatpush2.bf16.msra.mxu0 0
  %5668 = vmatprep.subr.bf16.mxu0 0
  %5669 = vmatpush2.bf16.msra.mxu0 0
  %5670 = vmatprep.mubr.bf16.mxu0 0
  %5671 = vmatmul.mubr.bf16.gmra.mxu0 %v5577
  %v5672 = vpop.f32.mrf.mxu0
  %v5673 = vadd.f32 0.0, %v5672
  %v5674 = vpop.f32.mrf.mxu0
  %v5675 = vadd.f32 0.0, %v5674
  %v5676 = vpop.f32.mrf.mxu0
  %v5677 = vpop.f32.mrf.mxu0
  %5678 = vdwg.mxu0
  %5679 = vmatprep.subr.bf16.mxu0 0
  %5680 = vmatpush1.bf16.msra.mxu0 0
  %5681 = vmatprep.subr.bf16.mxu0 0
  %5682 = vmatpush1.bf16.msra.mxu0 0
  %5683 = vmatprep.subr.bf16.mxu0 0
  %5684 = vmatpush1.bf16.msra.mxu0 0
  %5685 = vmatprep.subr.bf16.mxu0 0
  %5686 = vmatpush1.bf16.msra.mxu0 0
  %5687 = vmatprep.subr.bf16.mxu0 0
  %5688 = vmatpush1.bf16.msra.mxu0 0
  %5689 = vmatprep.subr.bf16.mxu0 0
  %5690 = vmatpush1.bf16.msra.mxu0 0
  %5691 = vmatprep.subr.bf16.mxu0 0
  %5692 = vmatpush1.bf16.msra.mxu0 0
  %5693 = vmatprep.subr.bf16.mxu0 %v5595
  %5694 = vmatpush1.bf16.msra.mxu0 %v5592
  %5695 = vmatprep.subr.bf16.mxu0 0
  %5696 = vmatpush2.bf16.msra.mxu0 0
  %5697 = vmatprep.subr.bf16.mxu0 0
  %5698 = vmatpush2.bf16.msra.mxu0 0
  %5699 = vmatprep.subr.bf16.mxu0 0
  %5700 = vmatpush2.bf16.msra.mxu0 0
  %5701 = vmatprep.subr.bf16.mxu0 0
  %5702 = vmatpush2.bf16.msra.mxu0 0
  %5703 = vmatprep.subr.bf16.mxu0 0
  %5704 = vmatpush2.bf16.msra.mxu0 0
  %5705 = vmatprep.subr.bf16.mxu0 0
  %5706 = vmatpush2.bf16.msra.mxu0 0
  %5707 = vmatprep.subr.bf16.mxu0 0
  %5708 = vmatpush2.bf16.msra.mxu0 0
  %5709 = vmatprep.subr.bf16.mxu0 0
  %5710 = vmatpush2.bf16.msra.mxu0 0
  %5711 = vmatprep.mubr.bf16.mxu0 0
  %5712 = vmatmul.mubr.bf16.gmra.mxu0 %v5577
  %v5713 = vpop.f32.mrf.mxu0
  %v5714 = vadd.f32 0.0, %v5713
  %v5715 = vpop.f32.mrf.mxu0
  %v5716 = vadd.f32 0.0, %v5715
  %v5717 = vpop.f32.mrf.mxu0
  %v5718 = vpop.f32.mrf.mxu0
  %5719 = vdwg.mxu0
  %v5720 = vadd.f32 %v5548, %v5632
  %v5721 = vadd.f32 %v5549, %v5634
  %v5722 = vadd.f32 %v5550, %v5673
  %v5723 = vadd.f32 %v5551, %v5675
  %v5724 = vadd.f32 %v5552, %v5714
  %v5725 = vadd.f32 %v5553, %v5716
  %s5726 = scalar_lea.vmem %s4, 28
  %v5727 = vld [vmem:[%s5726] sm:$0xf]
  %5728 = vrot.lane.b32.xlu0 %v4544, 106
  %v5729 = vpop.permute.xlu0 %5728
  %5730 = vrot.lane.b32.xlu0 %v4545, 106
  %v5731 = vpop.permute.xlu0 %5730
  %5732 = vrot.lane.b32.xlu0 %v4546, 106
  %v5733 = vpop.permute.xlu0 %5732
  %5734 = vrot.lane.b32.xlu0 %v4547, 106
  %v5735 = vpop.permute.xlu0 %5734
  %5736 = vrot.lane.b32.xlu0 %v4548, 106
  %v5737 = vpop.permute.xlu0 %5736
  %5738 = vrot.lane.b32.xlu0 %v4549, 106
  %v5739 = vpop.permute.xlu0 %5738
  %5740 = vrot.lane.b32.xlu0 %v4550, 106
  %v5741 = vpop.permute.xlu0 %5740
  %v5742 = vsel %vm1259, %v5729, %v5731
  %v5743 = vsel %vm1259, %v5731, %v5733
  %v5744 = vsel %vm1259, %v5733, %v5735
  %v5745 = vsel %vm1259, %v5735, %v5737
  %v5746 = vsel %vm1259, %v5737, %v5739
  %v5747 = vsel %vm1259, %v5739, %v5741
  %v5749 = vsel %vm88, %v5727, 0
  %v5752 = vsel %vm92, %v5742, 0
  %v5755 = vsel %vm92, %v5743, 0
  %v5758 = vsel %vm92, %v5744, 0
  %v5761 = vsel %vm92, %v5745, 0
  %v5764 = vsel %vm92, %v5746, 0
  %v5767 = vsel %vm92, %v5747, 0
  %5769 = vmatprep.subr.bf16.mxu0 0
  %5770 = vmatpush1.bf16.msra.mxu0 0
  %5771 = vmatprep.subr.bf16.mxu0 0
  %5772 = vmatpush1.bf16.msra.mxu0 0
  %5773 = vmatprep.subr.bf16.mxu0 0
  %5774 = vmatpush1.bf16.msra.mxu0 0
  %5775 = vmatprep.subr.bf16.mxu0 0
  %5776 = vmatpush1.bf16.msra.mxu0 0
  %5777 = vmatprep.subr.bf16.mxu0 0
  %5778 = vmatpush1.bf16.msra.mxu0 0
  %5779 = vmatprep.subr.bf16.mxu0 0
  %5780 = vmatpush1.bf16.msra.mxu0 0
  %5781 = vmatprep.subr.bf16.mxu0 0
  %5782 = vmatpush1.bf16.msra.mxu0 0
  %5783 = vmatprep.subr.bf16.mxu0 %v5755
  %5784 = vmatpush1.bf16.msra.mxu0 %v5752
  %5785 = vmatprep.subr.bf16.mxu0 0
  %5786 = vmatpush2.bf16.msra.mxu0 0
  %5787 = vmatprep.subr.bf16.mxu0 0
  %5788 = vmatpush2.bf16.msra.mxu0 0
  %5789 = vmatprep.subr.bf16.mxu0 0
  %5790 = vmatpush2.bf16.msra.mxu0 0
  %5791 = vmatprep.subr.bf16.mxu0 0
  %5792 = vmatpush2.bf16.msra.mxu0 0
  %5793 = vmatprep.subr.bf16.mxu0 0
  %5794 = vmatpush2.bf16.msra.mxu0 0
  %5795 = vmatprep.subr.bf16.mxu0 0
  %5796 = vmatpush2.bf16.msra.mxu0 0
  %5797 = vmatprep.subr.bf16.mxu0 0
  %5798 = vmatpush2.bf16.msra.mxu0 0
  %5799 = vmatprep.subr.bf16.mxu0 0
  %5800 = vmatpush2.bf16.msra.mxu0 0
  %5801 = vmatprep.mubr.bf16.mxu0 0
  %5802 = vmatmul.mubr.bf16.gmra.mxu0 %v5749
  %v5803 = vpop.f32.mrf.mxu0
  %v5804 = vadd.f32 0.0, %v5803
  %v5805 = vpop.f32.mrf.mxu0
  %v5806 = vadd.f32 0.0, %v5805
  %v5807 = vpop.f32.mrf.mxu0
  %v5808 = vpop.f32.mrf.mxu0
  %5809 = vdwg.mxu0
  %5810 = vmatprep.subr.bf16.mxu0 0
  %5811 = vmatpush1.bf16.msra.mxu0 0
  %5812 = vmatprep.subr.bf16.mxu0 0
  %5813 = vmatpush1.bf16.msra.mxu0 0
  %5814 = vmatprep.subr.bf16.mxu0 0
  %5815 = vmatpush1.bf16.msra.mxu0 0
  %5816 = vmatprep.subr.bf16.mxu0 0
  %5817 = vmatpush1.bf16.msra.mxu0 0
  %5818 = vmatprep.subr.bf16.mxu0 0
  %5819 = vmatpush1.bf16.msra.mxu0 0
  %5820 = vmatprep.subr.bf16.mxu0 0
  %5821 = vmatpush1.bf16.msra.mxu0 0
  %5822 = vmatprep.subr.bf16.mxu0 0
  %5823 = vmatpush1.bf16.msra.mxu0 0
  %5824 = vmatprep.subr.bf16.mxu0 %v5761
  %5825 = vmatpush1.bf16.msra.mxu0 %v5758
  %5826 = vmatprep.subr.bf16.mxu0 0
  %5827 = vmatpush2.bf16.msra.mxu0 0
  %5828 = vmatprep.subr.bf16.mxu0 0
  %5829 = vmatpush2.bf16.msra.mxu0 0
  %5830 = vmatprep.subr.bf16.mxu0 0
  %5831 = vmatpush2.bf16.msra.mxu0 0
  %5832 = vmatprep.subr.bf16.mxu0 0
  %5833 = vmatpush2.bf16.msra.mxu0 0
  %5834 = vmatprep.subr.bf16.mxu0 0
  %5835 = vmatpush2.bf16.msra.mxu0 0
  %5836 = vmatprep.subr.bf16.mxu0 0
  %5837 = vmatpush2.bf16.msra.mxu0 0
  %5838 = vmatprep.subr.bf16.mxu0 0
  %5839 = vmatpush2.bf16.msra.mxu0 0
  %5840 = vmatprep.subr.bf16.mxu0 0
  %5841 = vmatpush2.bf16.msra.mxu0 0
  %5842 = vmatprep.mubr.bf16.mxu0 0
  %5843 = vmatmul.mubr.bf16.gmra.mxu0 %v5749
  %v5844 = vpop.f32.mrf.mxu0
  %v5845 = vadd.f32 0.0, %v5844
  %v5846 = vpop.f32.mrf.mxu0
  %v5847 = vadd.f32 0.0, %v5846
  %v5848 = vpop.f32.mrf.mxu0
  %v5849 = vpop.f32.mrf.mxu0
  %5850 = vdwg.mxu0
  %5851 = vmatprep.subr.bf16.mxu0 0
  %5852 = vmatpush1.bf16.msra.mxu0 0
  %5853 = vmatprep.subr.bf16.mxu0 0
  %5854 = vmatpush1.bf16.msra.mxu0 0
  %5855 = vmatprep.subr.bf16.mxu0 0
  %5856 = vmatpush1.bf16.msra.mxu0 0
  %5857 = vmatprep.subr.bf16.mxu0 0
  %5858 = vmatpush1.bf16.msra.mxu0 0
  %5859 = vmatprep.subr.bf16.mxu0 0
  %5860 = vmatpush1.bf16.msra.mxu0 0
  %5861 = vmatprep.subr.bf16.mxu0 0
  %5862 = vmatpush1.bf16.msra.mxu0 0
  %5863 = vmatprep.subr.bf16.mxu0 0
  %5864 = vmatpush1.bf16.msra.mxu0 0
  %5865 = vmatprep.subr.bf16.mxu0 %v5767
  %5866 = vmatpush1.bf16.msra.mxu0 %v5764
  %5867 = vmatprep.subr.bf16.mxu0 0
  %5868 = vmatpush2.bf16.msra.mxu0 0
  %5869 = vmatprep.subr.bf16.mxu0 0
  %5870 = vmatpush2.bf16.msra.mxu0 0
  %5871 = vmatprep.subr.bf16.mxu0 0
  %5872 = vmatpush2.bf16.msra.mxu0 0
  %5873 = vmatprep.subr.bf16.mxu0 0
  %5874 = vmatpush2.bf16.msra.mxu0 0
  %5875 = vmatprep.subr.bf16.mxu0 0
  %5876 = vmatpush2.bf16.msra.mxu0 0
  %5877 = vmatprep.subr.bf16.mxu0 0
  %5878 = vmatpush2.bf16.msra.mxu0 0
  %5879 = vmatprep.subr.bf16.mxu0 0
  %5880 = vmatpush2.bf16.msra.mxu0 0
  %5881 = vmatprep.subr.bf16.mxu0 0
  %5882 = vmatpush2.bf16.msra.mxu0 0
  %5883 = vmatprep.mubr.bf16.mxu0 0
  %5884 = vmatmul.mubr.bf16.gmra.mxu0 %v5749
  %v5885 = vpop.f32.mrf.mxu0
  %v5886 = vadd.f32 0.0, %v5885
  %v5887 = vpop.f32.mrf.mxu0
  %v5888 = vadd.f32 0.0, %v5887
  %v5889 = vpop.f32.mrf.mxu0
  %v5890 = vpop.f32.mrf.mxu0
  %5891 = vdwg.mxu0
  %v5892 = vadd.f32 %v5720, %v5804
  %v5893 = vadd.f32 %v5721, %v5806
  %v5894 = vadd.f32 %v5722, %v5845
  %v5895 = vadd.f32 %v5723, %v5847
  %v5896 = vadd.f32 %v5724, %v5886
  %v5897 = vadd.f32 %v5725, %v5888
  %s5898 = scalar_lea.vmem %s4, 32
  %v5899 = vld [vmem:[%s5898] sm:$0xf]
  %5900 = vrot.lane.b32.xlu0 %v4544, 105
  %v5901 = vpop.permute.xlu0 %5900
  %5902 = vrot.lane.b32.xlu0 %v4545, 105
  %v5903 = vpop.permute.xlu0 %5902
  %5904 = vrot.lane.b32.xlu0 %v4546, 105
  %v5905 = vpop.permute.xlu0 %5904
  %5906 = vrot.lane.b32.xlu0 %v4547, 105
  %v5907 = vpop.permute.xlu0 %5906
  %5908 = vrot.lane.b32.xlu0 %v4548, 105
  %v5909 = vpop.permute.xlu0 %5908
  %5910 = vrot.lane.b32.xlu0 %v4549, 105
  %v5911 = vpop.permute.xlu0 %5910
  %5912 = vrot.lane.b32.xlu0 %v4550, 105
  %v5913 = vpop.permute.xlu0 %5912
  %v5914 = vsel %vm1432, %v5901, %v5903
  %v5915 = vsel %vm1432, %v5903, %v5905
  %v5916 = vsel %vm1432, %v5905, %v5907
  %v5917 = vsel %vm1432, %v5907, %v5909
  %v5918 = vsel %vm1432, %v5909, %v5911
  %v5919 = vsel %vm1432, %v5911, %v5913
  %v5921 = vsel %vm88, %v5899, 0
  %v5924 = vsel %vm92, %v5914, 0
  %v5927 = vsel %vm92, %v5915, 0
  %v5930 = vsel %vm92, %v5916, 0
  %v5933 = vsel %vm92, %v5917, 0
  %v5936 = vsel %vm92, %v5918, 0
  %v5939 = vsel %vm92, %v5919, 0
  %5941 = vmatprep.subr.bf16.mxu0 0
  %5942 = vmatpush1.bf16.msra.mxu0 0
  %5943 = vmatprep.subr.bf16.mxu0 0
  %5944 = vmatpush1.bf16.msra.mxu0 0
  %5945 = vmatprep.subr.bf16.mxu0 0
  %5946 = vmatpush1.bf16.msra.mxu0 0
  %5947 = vmatprep.subr.bf16.mxu0 0
  %5948 = vmatpush1.bf16.msra.mxu0 0
  %5949 = vmatprep.subr.bf16.mxu0 0
  %5950 = vmatpush1.bf16.msra.mxu0 0
  %5951 = vmatprep.subr.bf16.mxu0 0
  %5952 = vmatpush1.bf16.msra.mxu0 0
  %5953 = vmatprep.subr.bf16.mxu0 0
  %5954 = vmatpush1.bf16.msra.mxu0 0
  %5955 = vmatprep.subr.bf16.mxu0 %v5927
  %5956 = vmatpush1.bf16.msra.mxu0 %v5924
  %5957 = vmatprep.subr.bf16.mxu0 0
  %5958 = vmatpush2.bf16.msra.mxu0 0
  %5959 = vmatprep.subr.bf16.mxu0 0
  %5960 = vmatpush2.bf16.msra.mxu0 0
  %5961 = vmatprep.subr.bf16.mxu0 0
  %5962 = vmatpush2.bf16.msra.mxu0 0
  %5963 = vmatprep.subr.bf16.mxu0 0
  %5964 = vmatpush2.bf16.msra.mxu0 0
  %5965 = vmatprep.subr.bf16.mxu0 0
  %5966 = vmatpush2.bf16.msra.mxu0 0
  %5967 = vmatprep.subr.bf16.mxu0 0
  %5968 = vmatpush2.bf16.msra.mxu0 0
  %5969 = vmatprep.subr.bf16.mxu0 0
  %5970 = vmatpush2.bf16.msra.mxu0 0
  %5971 = vmatprep.subr.bf16.mxu0 0
  %5972 = vmatpush2.bf16.msra.mxu0 0
  %5973 = vmatprep.mubr.bf16.mxu0 0
  %5974 = vmatmul.mubr.bf16.gmra.mxu0 %v5921
  %v5975 = vpop.f32.mrf.mxu0
  %v5976 = vadd.f32 0.0, %v5975
  %v5977 = vpop.f32.mrf.mxu0
  %v5978 = vadd.f32 0.0, %v5977
  %v5979 = vpop.f32.mrf.mxu0
  %v5980 = vpop.f32.mrf.mxu0
  %5981 = vdwg.mxu0
  %5982 = vmatprep.subr.bf16.mxu0 0
  %5983 = vmatpush1.bf16.msra.mxu0 0
  %5984 = vmatprep.subr.bf16.mxu0 0
  %5985 = vmatpush1.bf16.msra.mxu0 0
  %5986 = vmatprep.subr.bf16.mxu0 0
  %5987 = vmatpush1.bf16.msra.mxu0 0
  %5988 = vmatprep.subr.bf16.mxu0 0
  %5989 = vmatpush1.bf16.msra.mxu0 0
  %5990 = vmatprep.subr.bf16.mxu0 0
  %5991 = vmatpush1.bf16.msra.mxu0 0
  %5992 = vmatprep.subr.bf16.mxu0 0
  %5993 = vmatpush1.bf16.msra.mxu0 0
  %5994 = vmatprep.subr.bf16.mxu0 0
  %5995 = vmatpush1.bf16.msra.mxu0 0
  %5996 = vmatprep.subr.bf16.mxu0 %v5933
  %5997 = vmatpush1.bf16.msra.mxu0 %v5930
  %5998 = vmatprep.subr.bf16.mxu0 0
  %5999 = vmatpush2.bf16.msra.mxu0 0
  %6000 = vmatprep.subr.bf16.mxu0 0
  %6001 = vmatpush2.bf16.msra.mxu0 0
  %6002 = vmatprep.subr.bf16.mxu0 0
  %6003 = vmatpush2.bf16.msra.mxu0 0
  %6004 = vmatprep.subr.bf16.mxu0 0
  %6005 = vmatpush2.bf16.msra.mxu0 0
  %6006 = vmatprep.subr.bf16.mxu0 0
  %6007 = vmatpush2.bf16.msra.mxu0 0
  %6008 = vmatprep.subr.bf16.mxu0 0
  %6009 = vmatpush2.bf16.msra.mxu0 0
  %6010 = vmatprep.subr.bf16.mxu0 0
  %6011 = vmatpush2.bf16.msra.mxu0 0
  %6012 = vmatprep.subr.bf16.mxu0 0
  %6013 = vmatpush2.bf16.msra.mxu0 0
  %6014 = vmatprep.mubr.bf16.mxu0 0
  %6015 = vmatmul.mubr.bf16.gmra.mxu0 %v5921
  %v6016 = vpop.f32.mrf.mxu0
  %v6017 = vadd.f32 0.0, %v6016
  %v6018 = vpop.f32.mrf.mxu0
  %v6019 = vadd.f32 0.0, %v6018
  %v6020 = vpop.f32.mrf.mxu0
  %v6021 = vpop.f32.mrf.mxu0
  %6022 = vdwg.mxu0
  %6023 = vmatprep.subr.bf16.mxu0 0
  %6024 = vmatpush1.bf16.msra.mxu0 0
  %6025 = vmatprep.subr.bf16.mxu0 0
  %6026 = vmatpush1.bf16.msra.mxu0 0
  %6027 = vmatprep.subr.bf16.mxu0 0
  %6028 = vmatpush1.bf16.msra.mxu0 0
  %6029 = vmatprep.subr.bf16.mxu0 0
  %6030 = vmatpush1.bf16.msra.mxu0 0
  %6031 = vmatprep.subr.bf16.mxu0 0
  %6032 = vmatpush1.bf16.msra.mxu0 0
  %6033 = vmatprep.subr.bf16.mxu0 0
  %6034 = vmatpush1.bf16.msra.mxu0 0
  %6035 = vmatprep.subr.bf16.mxu0 0
  %6036 = vmatpush1.bf16.msra.mxu0 0
  %6037 = vmatprep.subr.bf16.mxu0 %v5939
  %6038 = vmatpush1.bf16.msra.mxu0 %v5936
  %6039 = vmatprep.subr.bf16.mxu0 0
  %6040 = vmatpush2.bf16.msra.mxu0 0
  %6041 = vmatprep.subr.bf16.mxu0 0
  %6042 = vmatpush2.bf16.msra.mxu0 0
  %6043 = vmatprep.subr.bf16.mxu0 0
  %6044 = vmatpush2.bf16.msra.mxu0 0
  %6045 = vmatprep.subr.bf16.mxu0 0
  %6046 = vmatpush2.bf16.msra.mxu0 0
  %6047 = vmatprep.subr.bf16.mxu0 0
  %6048 = vmatpush2.bf16.msra.mxu0 0
  %6049 = vmatprep.subr.bf16.mxu0 0
  %6050 = vmatpush2.bf16.msra.mxu0 0
  %6051 = vmatprep.subr.bf16.mxu0 0
  %6052 = vmatpush2.bf16.msra.mxu0 0
  %6053 = vmatprep.subr.bf16.mxu0 0
  %6054 = vmatpush2.bf16.msra.mxu0 0
  %6055 = vmatprep.mubr.bf16.mxu0 0
  %6056 = vmatmul.mubr.bf16.gmra.mxu0 %v5921
  %v6057 = vpop.f32.mrf.mxu0
  %v6058 = vadd.f32 0.0, %v6057
  %v6059 = vpop.f32.mrf.mxu0
  %v6060 = vadd.f32 0.0, %v6059
  %v6061 = vpop.f32.mrf.mxu0
  %v6062 = vpop.f32.mrf.mxu0
  %6063 = vdwg.mxu0
  %v6064 = vadd.f32 %v5892, %v5976
  %v6065 = vadd.f32 %v5893, %v5978
  %v6066 = vadd.f32 %v5894, %v6017
  %v6067 = vadd.f32 %v5895, %v6019
  %v6068 = vadd.f32 %v5896, %v6058
  %v6069 = vadd.f32 %v5897, %v6060
  %s6070 = scalar_lea.vmem %s4, 36
  %v6071 = vld [vmem:[%s6070] sm:$0xf]
  %6072 = vrot.lane.b32.xlu0 %v4544, 104
  %v6073 = vpop.permute.xlu0 %6072
  %6074 = vrot.lane.b32.xlu0 %v4545, 104
  %v6075 = vpop.permute.xlu0 %6074
  %6076 = vrot.lane.b32.xlu0 %v4546, 104
  %v6077 = vpop.permute.xlu0 %6076
  %6078 = vrot.lane.b32.xlu0 %v4547, 104
  %v6079 = vpop.permute.xlu0 %6078
  %6080 = vrot.lane.b32.xlu0 %v4548, 104
  %v6081 = vpop.permute.xlu0 %6080
  %6082 = vrot.lane.b32.xlu0 %v4549, 104
  %v6083 = vpop.permute.xlu0 %6082
  %6084 = vrot.lane.b32.xlu0 %v4550, 104
  %v6085 = vpop.permute.xlu0 %6084
  %v6086 = vsel %vm1605, %v6073, %v6075
  %v6087 = vsel %vm1605, %v6075, %v6077
  %v6088 = vsel %vm1605, %v6077, %v6079
  %v6089 = vsel %vm1605, %v6079, %v6081
  %v6090 = vsel %vm1605, %v6081, %v6083
  %v6091 = vsel %vm1605, %v6083, %v6085
  %v6093 = vsel %vm88, %v6071, 0
  %v6096 = vsel %vm92, %v6086, 0
  %v6099 = vsel %vm92, %v6087, 0
  %v6102 = vsel %vm92, %v6088, 0
  %v6105 = vsel %vm92, %v6089, 0
  %v6108 = vsel %vm92, %v6090, 0
  %v6111 = vsel %vm92, %v6091, 0
  %6113 = vmatprep.subr.bf16.mxu0 0
  %6114 = vmatpush1.bf16.msra.mxu0 0
  %6115 = vmatprep.subr.bf16.mxu0 0
  %6116 = vmatpush1.bf16.msra.mxu0 0
  %6117 = vmatprep.subr.bf16.mxu0 0
  %6118 = vmatpush1.bf16.msra.mxu0 0
  %6119 = vmatprep.subr.bf16.mxu0 0
  %6120 = vmatpush1.bf16.msra.mxu0 0
  %6121 = vmatprep.subr.bf16.mxu0 0
  %6122 = vmatpush1.bf16.msra.mxu0 0
  %6123 = vmatprep.subr.bf16.mxu0 0
  %6124 = vmatpush1.bf16.msra.mxu0 0
  %6125 = vmatprep.subr.bf16.mxu0 0
  %6126 = vmatpush1.bf16.msra.mxu0 0
  %6127 = vmatprep.subr.bf16.mxu0 %v6099
  %6128 = vmatpush1.bf16.msra.mxu0 %v6096
  %6129 = vmatprep.subr.bf16.mxu0 0
  %6130 = vmatpush2.bf16.msra.mxu0 0
  %6131 = vmatprep.subr.bf16.mxu0 0
  %6132 = vmatpush2.bf16.msra.mxu0 0
  %6133 = vmatprep.subr.bf16.mxu0 0
  %6134 = vmatpush2.bf16.msra.mxu0 0
  %6135 = vmatprep.subr.bf16.mxu0 0
  %6136 = vmatpush2.bf16.msra.mxu0 0
  %6137 = vmatprep.subr.bf16.mxu0 0
  %6138 = vmatpush2.bf16.msra.mxu0 0
  %6139 = vmatprep.subr.bf16.mxu0 0
  %6140 = vmatpush2.bf16.msra.mxu0 0
  %6141 = vmatprep.subr.bf16.mxu0 0
  %6142 = vmatpush2.bf16.msra.mxu0 0
  %6143 = vmatprep.subr.bf16.mxu0 0
  %6144 = vmatpush2.bf16.msra.mxu0 0
  %6145 = vmatprep.mubr.bf16.mxu0 0
  %6146 = vmatmul.mubr.bf16.gmra.mxu0 %v6093
  %v6147 = vpop.f32.mrf.mxu0
  %v6148 = vadd.f32 0.0, %v6147
  %v6149 = vpop.f32.mrf.mxu0
  %v6150 = vadd.f32 0.0, %v6149
  %v6151 = vpop.f32.mrf.mxu0
  %v6152 = vpop.f32.mrf.mxu0
  %6153 = vdwg.mxu0
  %6154 = vmatprep.subr.bf16.mxu0 0
  %6155 = vmatpush1.bf16.msra.mxu0 0
  %6156 = vmatprep.subr.bf16.mxu0 0
  %6157 = vmatpush1.bf16.msra.mxu0 0
  %6158 = vmatprep.subr.bf16.mxu0 0
  %6159 = vmatpush1.bf16.msra.mxu0 0
  %6160 = vmatprep.subr.bf16.mxu0 0
  %6161 = vmatpush1.bf16.msra.mxu0 0
  %6162 = vmatprep.subr.bf16.mxu0 0
  %6163 = vmatpush1.bf16.msra.mxu0 0
  %6164 = vmatprep.subr.bf16.mxu0 0
  %6165 = vmatpush1.bf16.msra.mxu0 0
  %6166 = vmatprep.subr.bf16.mxu0 0
  %6167 = vmatpush1.bf16.msra.mxu0 0
  %6168 = vmatprep.subr.bf16.mxu0 %v6105
  %6169 = vmatpush1.bf16.msra.mxu0 %v6102
  %6170 = vmatprep.subr.bf16.mxu0 0
  %6171 = vmatpush2.bf16.msra.mxu0 0
  %6172 = vmatprep.subr.bf16.mxu0 0
  %6173 = vmatpush2.bf16.msra.mxu0 0
  %6174 = vmatprep.subr.bf16.mxu0 0
  %6175 = vmatpush2.bf16.msra.mxu0 0
  %6176 = vmatprep.subr.bf16.mxu0 0
  %6177 = vmatpush2.bf16.msra.mxu0 0
  %6178 = vmatprep.subr.bf16.mxu0 0
  %6179 = vmatpush2.bf16.msra.mxu0 0
  %6180 = vmatprep.subr.bf16.mxu0 0
  %6181 = vmatpush2.bf16.msra.mxu0 0
  %6182 = vmatprep.subr.bf16.mxu0 0
  %6183 = vmatpush2.bf16.msra.mxu0 0
  %6184 = vmatprep.subr.bf16.mxu0 0
  %6185 = vmatpush2.bf16.msra.mxu0 0
  %6186 = vmatprep.mubr.bf16.mxu0 0
  %6187 = vmatmul.mubr.bf16.gmra.mxu0 %v6093
  %v6188 = vpop.f32.mrf.mxu0
  %v6189 = vadd.f32 0.0, %v6188
  %v6190 = vpop.f32.mrf.mxu0
  %v6191 = vadd.f32 0.0, %v6190
  %v6192 = vpop.f32.mrf.mxu0
  %v6193 = vpop.f32.mrf.mxu0
  %6194 = vdwg.mxu0
  %6195 = vmatprep.subr.bf16.mxu0 0
  %6196 = vmatpush1.bf16.msra.mxu0 0
  %6197 = vmatprep.subr.bf16.mxu0 0
  %6198 = vmatpush1.bf16.msra.mxu0 0
  %6199 = vmatprep.subr.bf16.mxu0 0
  %6200 = vmatpush1.bf16.msra.mxu0 0
  %6201 = vmatprep.subr.bf16.mxu0 0
  %6202 = vmatpush1.bf16.msra.mxu0 0
  %6203 = vmatprep.subr.bf16.mxu0 0
  %6204 = vmatpush1.bf16.msra.mxu0 0
  %6205 = vmatprep.subr.bf16.mxu0 0
  %6206 = vmatpush1.bf16.msra.mxu0 0
  %6207 = vmatprep.subr.bf16.mxu0 0
  %6208 = vmatpush1.bf16.msra.mxu0 0
  %6209 = vmatprep.subr.bf16.mxu0 %v6111
  %6210 = vmatpush1.bf16.msra.mxu0 %v6108
  %6211 = vmatprep.subr.bf16.mxu0 0
  %6212 = vmatpush2.bf16.msra.mxu0 0
  %6213 = vmatprep.subr.bf16.mxu0 0
  %6214 = vmatpush2.bf16.msra.mxu0 0
  %6215 = vmatprep.subr.bf16.mxu0 0
  %6216 = vmatpush2.bf16.msra.mxu0 0
  %6217 = vmatprep.subr.bf16.mxu0 0
  %6218 = vmatpush2.bf16.msra.mxu0 0
  %6219 = vmatprep.subr.bf16.mxu0 0
  %6220 = vmatpush2.bf16.msra.mxu0 0
  %6221 = vmatprep.subr.bf16.mxu0 0
  %6222 = vmatpush2.bf16.msra.mxu0 0
  %6223 = vmatprep.subr.bf16.mxu0 0
  %6224 = vmatpush2.bf16.msra.mxu0 0
  %6225 = vmatprep.subr.bf16.mxu0 0
  %6226 = vmatpush2.bf16.msra.mxu0 0
  %6227 = vmatprep.mubr.bf16.mxu0 0
  %6228 = vmatmul.mubr.bf16.gmra.mxu0 %v6093
  %v6229 = vpop.f32.mrf.mxu0
  %v6230 = vadd.f32 0.0, %v6229
  %v6231 = vpop.f32.mrf.mxu0
  %v6232 = vadd.f32 0.0, %v6231
  %v6233 = vpop.f32.mrf.mxu0
  %v6234 = vpop.f32.mrf.mxu0
  %6235 = vdwg.mxu0
  %v6236 = vadd.f32 %v6064, %v6148
  %v6237 = vadd.f32 %v6065, %v6150
  %v6238 = vadd.f32 %v6066, %v6189
  %v6239 = vadd.f32 %v6067, %v6191
  %v6240 = vadd.f32 %v6068, %v6230
  %v6241 = vadd.f32 %v6069, %v6232
  %s6242 = scalar_lea.vmem %s4, 40
  %v6243 = vld [vmem:[%s6242] sm:$0xf]
  %6244 = vrot.lane.b32.xlu0 %v4544, 88
  %v6245 = vpop.permute.xlu0 %6244
  %6246 = vrot.lane.b32.xlu0 %v4545, 88
  %v6247 = vpop.permute.xlu0 %6246
  %6248 = vrot.lane.b32.xlu0 %v4546, 88
  %v6249 = vpop.permute.xlu0 %6248
  %6250 = vrot.lane.b32.xlu0 %v4547, 88
  %v6251 = vpop.permute.xlu0 %6250
  %6252 = vrot.lane.b32.xlu0 %v4548, 88
  %v6253 = vpop.permute.xlu0 %6252
  %6254 = vrot.lane.b32.xlu0 %v4549, 88
  %v6255 = vpop.permute.xlu0 %6254
  %6256 = vrot.lane.b32.xlu0 %v4550, 88
  %v6257 = vpop.permute.xlu0 %6256
  %v6258 = vsel %vm1778, %v6245, %v6247
  %v6259 = vsel %vm1778, %v6247, %v6249
  %v6260 = vsel %vm1778, %v6249, %v6251
  %v6261 = vsel %vm1778, %v6251, %v6253
  %v6262 = vsel %vm1778, %v6253, %v6255
  %v6263 = vsel %vm1778, %v6255, %v6257
  %v6265 = vsel %vm88, %v6243, 0
  %v6268 = vsel %vm92, %v6258, 0
  %v6271 = vsel %vm92, %v6259, 0
  %v6274 = vsel %vm92, %v6260, 0
  %v6277 = vsel %vm92, %v6261, 0
  %v6280 = vsel %vm92, %v6262, 0
  %v6283 = vsel %vm92, %v6263, 0
  %6285 = vmatprep.subr.bf16.mxu0 0
  %6286 = vmatpush1.bf16.msra.mxu0 0
  %6287 = vmatprep.subr.bf16.mxu0 0
  %6288 = vmatpush1.bf16.msra.mxu0 0
  %6289 = vmatprep.subr.bf16.mxu0 0
  %6290 = vmatpush1.bf16.msra.mxu0 0
  %6291 = vmatprep.subr.bf16.mxu0 0
  %6292 = vmatpush1.bf16.msra.mxu0 0
  %6293 = vmatprep.subr.bf16.mxu0 0
  %6294 = vmatpush1.bf16.msra.mxu0 0
  %6295 = vmatprep.subr.bf16.mxu0 0
  %6296 = vmatpush1.bf16.msra.mxu0 0
  %6297 = vmatprep.subr.bf16.mxu0 0
  %6298 = vmatpush1.bf16.msra.mxu0 0
  %6299 = vmatprep.subr.bf16.mxu0 %v6271
  %6300 = vmatpush1.bf16.msra.mxu0 %v6268
  %6301 = vmatprep.subr.bf16.mxu0 0
  %6302 = vmatpush2.bf16.msra.mxu0 0
  %6303 = vmatprep.subr.bf16.mxu0 0
  %6304 = vmatpush2.bf16.msra.mxu0 0
  %6305 = vmatprep.subr.bf16.mxu0 0
  %6306 = vmatpush2.bf16.msra.mxu0 0
  %6307 = vmatprep.subr.bf16.mxu0 0
  %6308 = vmatpush2.bf16.msra.mxu0 0
  %6309 = vmatprep.subr.bf16.mxu0 0
  %6310 = vmatpush2.bf16.msra.mxu0 0
  %6311 = vmatprep.subr.bf16.mxu0 0
  %6312 = vmatpush2.bf16.msra.mxu0 0
  %6313 = vmatprep.subr.bf16.mxu0 0
  %6314 = vmatpush2.bf16.msra.mxu0 0
  %6315 = vmatprep.subr.bf16.mxu0 0
  %6316 = vmatpush2.bf16.msra.mxu0 0
  %6317 = vmatprep.mubr.bf16.mxu0 0
  %6318 = vmatmul.mubr.bf16.gmra.mxu0 %v6265
  %v6319 = vpop.f32.mrf.mxu0
  %v6320 = vadd.f32 0.0, %v6319
  %v6321 = vpop.f32.mrf.mxu0
  %v6322 = vadd.f32 0.0, %v6321
  %v6323 = vpop.f32.mrf.mxu0
  %v6324 = vpop.f32.mrf.mxu0
  %6325 = vdwg.mxu0
  %6326 = vmatprep.subr.bf16.mxu0 0
  %6327 = vmatpush1.bf16.msra.mxu0 0
  %6328 = vmatprep.subr.bf16.mxu0 0
  %6329 = vmatpush1.bf16.msra.mxu0 0
  %6330 = vmatprep.subr.bf16.mxu0 0
  %6331 = vmatpush1.bf16.msra.mxu0 0
  %6332 = vmatprep.subr.bf16.mxu0 0
  %6333 = vmatpush1.bf16.msra.mxu0 0
  %6334 = vmatprep.subr.bf16.mxu0 0
  %6335 = vmatpush1.bf16.msra.mxu0 0
  %6336 = vmatprep.subr.bf16.mxu0 0
  %6337 = vmatpush1.bf16.msra.mxu0 0
  %6338 = vmatprep.subr.bf16.mxu0 0
  %6339 = vmatpush1.bf16.msra.mxu0 0
  %6340 = vmatprep.subr.bf16.mxu0 %v6277
  %6341 = vmatpush1.bf16.msra.mxu0 %v6274
  %6342 = vmatprep.subr.bf16.mxu0 0
  %6343 = vmatpush2.bf16.msra.mxu0 0
  %6344 = vmatprep.subr.bf16.mxu0 0
  %6345 = vmatpush2.bf16.msra.mxu0 0
  %6346 = vmatprep.subr.bf16.mxu0 0
  %6347 = vmatpush2.bf16.msra.mxu0 0
  %6348 = vmatprep.subr.bf16.mxu0 0
  %6349 = vmatpush2.bf16.msra.mxu0 0
  %6350 = vmatprep.subr.bf16.mxu0 0
  %6351 = vmatpush2.bf16.msra.mxu0 0
  %6352 = vmatprep.subr.bf16.mxu0 0
  %6353 = vmatpush2.bf16.msra.mxu0 0
  %6354 = vmatprep.subr.bf16.mxu0 0
  %6355 = vmatpush2.bf16.msra.mxu0 0
  %6356 = vmatprep.subr.bf16.mxu0 0
  %6357 = vmatpush2.bf16.msra.mxu0 0
  %6358 = vmatprep.mubr.bf16.mxu0 0
  %6359 = vmatmul.mubr.bf16.gmra.mxu0 %v6265
  %v6360 = vpop.f32.mrf.mxu0
  %v6361 = vadd.f32 0.0, %v6360
  %v6362 = vpop.f32.mrf.mxu0
  %v6363 = vadd.f32 0.0, %v6362
  %v6364 = vpop.f32.mrf.mxu0
  %v6365 = vpop.f32.mrf.mxu0
  %6366 = vdwg.mxu0
  %6367 = vmatprep.subr.bf16.mxu0 0
  %6368 = vmatpush1.bf16.msra.mxu0 0
  %6369 = vmatprep.subr.bf16.mxu0 0
  %6370 = vmatpush1.bf16.msra.mxu0 0
  %6371 = vmatprep.subr.bf16.mxu0 0
  %6372 = vmatpush1.bf16.msra.mxu0 0
  %6373 = vmatprep.subr.bf16.mxu0 0
  %6374 = vmatpush1.bf16.msra.mxu0 0
  %6375 = vmatprep.subr.bf16.mxu0 0
  %6376 = vmatpush1.bf16.msra.mxu0 0
  %6377 = vmatprep.subr.bf16.mxu0 0
  %6378 = vmatpush1.bf16.msra.mxu0 0
  %6379 = vmatprep.subr.bf16.mxu0 0
  %6380 = vmatpush1.bf16.msra.mxu0 0
  %6381 = vmatprep.subr.bf16.mxu0 %v6283
  %6382 = vmatpush1.bf16.msra.mxu0 %v6280
  %6383 = vmatprep.subr.bf16.mxu0 0
  %6384 = vmatpush2.bf16.msra.mxu0 0
  %6385 = vmatprep.subr.bf16.mxu0 0
  %6386 = vmatpush2.bf16.msra.mxu0 0
  %6387 = vmatprep.subr.bf16.mxu0 0
  %6388 = vmatpush2.bf16.msra.mxu0 0
  %6389 = vmatprep.subr.bf16.mxu0 0
  %6390 = vmatpush2.bf16.msra.mxu0 0
  %6391 = vmatprep.subr.bf16.mxu0 0
  %6392 = vmatpush2.bf16.msra.mxu0 0
  %6393 = vmatprep.subr.bf16.mxu0 0
  %6394 = vmatpush2.bf16.msra.mxu0 0
  %6395 = vmatprep.subr.bf16.mxu0 0
  %6396 = vmatpush2.bf16.msra.mxu0 0
  %6397 = vmatprep.subr.bf16.mxu0 0
  %6398 = vmatpush2.bf16.msra.mxu0 0
  %6399 = vmatprep.mubr.bf16.mxu0 0
  %6400 = vmatmul.mubr.bf16.gmra.mxu0 %v6265
  %v6401 = vpop.f32.mrf.mxu0
  %v6402 = vadd.f32 0.0, %v6401
  %v6403 = vpop.f32.mrf.mxu0
  %v6404 = vadd.f32 0.0, %v6403
  %v6405 = vpop.f32.mrf.mxu0
  %v6406 = vpop.f32.mrf.mxu0
  %6407 = vdwg.mxu0
  %v6408 = vadd.f32 %v6236, %v6320
  %v6409 = vadd.f32 %v6237, %v6322
  %v6410 = vadd.f32 %v6238, %v6361
  %v6411 = vadd.f32 %v6239, %v6363
  %v6412 = vadd.f32 %v6240, %v6402
  %v6413 = vadd.f32 %v6241, %v6404
  %s6414 = scalar_lea.vmem %s4, 44
  %v6415 = vld [vmem:[%s6414] sm:$0xf]
  %6416 = vrot.lane.b32.xlu0 %v4544, 87
  %v6417 = vpop.permute.xlu0 %6416
  %6418 = vrot.lane.b32.xlu0 %v4545, 87
  %v6419 = vpop.permute.xlu0 %6418
  %6420 = vrot.lane.b32.xlu0 %v4546, 87
  %v6421 = vpop.permute.xlu0 %6420
  %6422 = vrot.lane.b32.xlu0 %v4547, 87
  %v6423 = vpop.permute.xlu0 %6422
  %6424 = vrot.lane.b32.xlu0 %v4548, 87
  %v6425 = vpop.permute.xlu0 %6424
  %6426 = vrot.lane.b32.xlu0 %v4549, 87
  %v6427 = vpop.permute.xlu0 %6426
  %6428 = vrot.lane.b32.xlu0 %v4550, 87
  %v6429 = vpop.permute.xlu0 %6428
  %v6430 = vsel %vm1951, %v6417, %v6419
  %v6431 = vsel %vm1951, %v6419, %v6421
  %v6432 = vsel %vm1951, %v6421, %v6423
  %v6433 = vsel %vm1951, %v6423, %v6425
  %v6434 = vsel %vm1951, %v6425, %v6427
  %v6435 = vsel %vm1951, %v6427, %v6429
  %v6437 = vsel %vm88, %v6415, 0
  %v6440 = vsel %vm92, %v6430, 0
  %v6443 = vsel %vm92, %v6431, 0
  %v6446 = vsel %vm92, %v6432, 0
  %v6449 = vsel %vm92, %v6433, 0
  %v6452 = vsel %vm92, %v6434, 0
  %v6455 = vsel %vm92, %v6435, 0
  %6457 = vmatprep.subr.bf16.mxu0 0
  %6458 = vmatpush1.bf16.msra.mxu0 0
  %6459 = vmatprep.subr.bf16.mxu0 0
  %6460 = vmatpush1.bf16.msra.mxu0 0
  %6461 = vmatprep.subr.bf16.mxu0 0
  %6462 = vmatpush1.bf16.msra.mxu0 0
  %6463 = vmatprep.subr.bf16.mxu0 0
  %6464 = vmatpush1.bf16.msra.mxu0 0
  %6465 = vmatprep.subr.bf16.mxu0 0
  %6466 = vmatpush1.bf16.msra.mxu0 0
  %6467 = vmatprep.subr.bf16.mxu0 0
  %6468 = vmatpush1.bf16.msra.mxu0 0
  %6469 = vmatprep.subr.bf16.mxu0 0
  %6470 = vmatpush1.bf16.msra.mxu0 0
  %6471 = vmatprep.subr.bf16.mxu0 %v6443
  %6472 = vmatpush1.bf16.msra.mxu0 %v6440
  %6473 = vmatprep.subr.bf16.mxu0 0
  %6474 = vmatpush2.bf16.msra.mxu0 0
  %6475 = vmatprep.subr.bf16.mxu0 0
  %6476 = vmatpush2.bf16.msra.mxu0 0
  %6477 = vmatprep.subr.bf16.mxu0 0
  %6478 = vmatpush2.bf16.msra.mxu0 0
  %6479 = vmatprep.subr.bf16.mxu0 0
  %6480 = vmatpush2.bf16.msra.mxu0 0
  %6481 = vmatprep.subr.bf16.mxu0 0
  %6482 = vmatpush2.bf16.msra.mxu0 0
  %6483 = vmatprep.subr.bf16.mxu0 0
  %6484 = vmatpush2.bf16.msra.mxu0 0
  %6485 = vmatprep.subr.bf16.mxu0 0
  %6486 = vmatpush2.bf16.msra.mxu0 0
  %6487 = vmatprep.subr.bf16.mxu0 0
  %6488 = vmatpush2.bf16.msra.mxu0 0
  %6489 = vmatprep.mubr.bf16.mxu0 0
  %6490 = vmatmul.mubr.bf16.gmra.mxu0 %v6437
  %v6491 = vpop.f32.mrf.mxu0
  %v6492 = vadd.f32 0.0, %v6491
  %v6493 = vpop.f32.mrf.mxu0
  %v6494 = vadd.f32 0.0, %v6493
  %v6495 = vpop.f32.mrf.mxu0
  %v6496 = vpop.f32.mrf.mxu0
  %6497 = vdwg.mxu0
  %6498 = vmatprep.subr.bf16.mxu0 0
  %6499 = vmatpush1.bf16.msra.mxu0 0
  %6500 = vmatprep.subr.bf16.mxu0 0
  %6501 = vmatpush1.bf16.msra.mxu0 0
  %6502 = vmatprep.subr.bf16.mxu0 0
  %6503 = vmatpush1.bf16.msra.mxu0 0
  %6504 = vmatprep.subr.bf16.mxu0 0
  %6505 = vmatpush1.bf16.msra.mxu0 0
  %6506 = vmatprep.subr.bf16.mxu0 0
  %6507 = vmatpush1.bf16.msra.mxu0 0
  %6508 = vmatprep.subr.bf16.mxu0 0
  %6509 = vmatpush1.bf16.msra.mxu0 0
  %6510 = vmatprep.subr.bf16.mxu0 0
  %6511 = vmatpush1.bf16.msra.mxu0 0
  %6512 = vmatprep.subr.bf16.mxu0 %v6449
  %6513 = vmatpush1.bf16.msra.mxu0 %v6446
  %6514 = vmatprep.subr.bf16.mxu0 0
  %6515 = vmatpush2.bf16.msra.mxu0 0
  %6516 = vmatprep.subr.bf16.mxu0 0
  %6517 = vmatpush2.bf16.msra.mxu0 0
  %6518 = vmatprep.subr.bf16.mxu0 0
  %6519 = vmatpush2.bf16.msra.mxu0 0
  %6520 = vmatprep.subr.bf16.mxu0 0
  %6521 = vmatpush2.bf16.msra.mxu0 0
  %6522 = vmatprep.subr.bf16.mxu0 0
  %6523 = vmatpush2.bf16.msra.mxu0 0
  %6524 = vmatprep.subr.bf16.mxu0 0
  %6525 = vmatpush2.bf16.msra.mxu0 0
  %6526 = vmatprep.subr.bf16.mxu0 0
  %6527 = vmatpush2.bf16.msra.mxu0 0
  %6528 = vmatprep.subr.bf16.mxu0 0
  %6529 = vmatpush2.bf16.msra.mxu0 0
  %6530 = vmatprep.mubr.bf16.mxu0 0
  %6531 = vmatmul.mubr.bf16.gmra.mxu0 %v6437
  %v6532 = vpop.f32.mrf.mxu0
  %v6533 = vadd.f32 0.0, %v6532
  %v6534 = vpop.f32.mrf.mxu0
  %v6535 = vadd.f32 0.0, %v6534
  %v6536 = vpop.f32.mrf.mxu0
  %v6537 = vpop.f32.mrf.mxu0
  %6538 = vdwg.mxu0
  %6539 = vmatprep.subr.bf16.mxu0 0
  %6540 = vmatpush1.bf16.msra.mxu0 0
  %6541 = vmatprep.subr.bf16.mxu0 0
  %6542 = vmatpush1.bf16.msra.mxu0 0
  %6543 = vmatprep.subr.bf16.mxu0 0
  %6544 = vmatpush1.bf16.msra.mxu0 0
  %6545 = vmatprep.subr.bf16.mxu0 0
  %6546 = vmatpush1.bf16.msra.mxu0 0
  %6547 = vmatprep.subr.bf16.mxu0 0
  %6548 = vmatpush1.bf16.msra.mxu0 0
  %6549 = vmatprep.subr.bf16.mxu0 0
  %6550 = vmatpush1.bf16.msra.mxu0 0
  %6551 = vmatprep.subr.bf16.mxu0 0
  %6552 = vmatpush1.bf16.msra.mxu0 0
  %6553 = vmatprep.subr.bf16.mxu0 %v6455
  %6554 = vmatpush1.bf16.msra.mxu0 %v6452
  %6555 = vmatprep.subr.bf16.mxu0 0
  %6556 = vmatpush2.bf16.msra.mxu0 0
  %6557 = vmatprep.subr.bf16.mxu0 0
  %6558 = vmatpush2.bf16.msra.mxu0 0
  %6559 = vmatprep.subr.bf16.mxu0 0
  %6560 = vmatpush2.bf16.msra.mxu0 0
  %6561 = vmatprep.subr.bf16.mxu0 0
  %6562 = vmatpush2.bf16.msra.mxu0 0
  %6563 = vmatprep.subr.bf16.mxu0 0
  %6564 = vmatpush2.bf16.msra.mxu0 0
  %6565 = vmatprep.subr.bf16.mxu0 0
  %6566 = vmatpush2.bf16.msra.mxu0 0
  %6567 = vmatprep.subr.bf16.mxu0 0
  %6568 = vmatpush2.bf16.msra.mxu0 0
  %6569 = vmatprep.subr.bf16.mxu0 0
  %6570 = vmatpush2.bf16.msra.mxu0 0
  %6571 = vmatprep.mubr.bf16.mxu0 0
  %6572 = vmatmul.mubr.bf16.gmra.mxu0 %v6437
  %v6573 = vpop.f32.mrf.mxu0
  %v6574 = vadd.f32 0.0, %v6573
  %v6575 = vpop.f32.mrf.mxu0
  %v6576 = vadd.f32 0.0, %v6575
  %v6577 = vpop.f32.mrf.mxu0
  %v6578 = vpop.f32.mrf.mxu0
  %6579 = vdwg.mxu0
  %v6580 = vadd.f32 %v6408, %v6492
  %v6581 = vadd.f32 %v6409, %v6494
  %v6582 = vadd.f32 %v6410, %v6533
  %v6583 = vadd.f32 %v6411, %v6535
  %v6584 = vadd.f32 %v6412, %v6574
  %v6585 = vadd.f32 %v6413, %v6576
  %s6586 = scalar_lea.vmem %s4, 48
  %v6587 = vld [vmem:[%s6586] sm:$0xf]
  %6588 = vrot.lane.b32.xlu0 %v4544, 86
  %v6589 = vpop.permute.xlu0 %6588
  %6590 = vrot.lane.b32.xlu0 %v4545, 86
  %v6591 = vpop.permute.xlu0 %6590
  %6592 = vrot.lane.b32.xlu0 %v4546, 86
  %v6593 = vpop.permute.xlu0 %6592
  %6594 = vrot.lane.b32.xlu0 %v4547, 86
  %v6595 = vpop.permute.xlu0 %6594
  %6596 = vrot.lane.b32.xlu0 %v4548, 86
  %v6597 = vpop.permute.xlu0 %6596
  %6598 = vrot.lane.b32.xlu0 %v4549, 86
  %v6599 = vpop.permute.xlu0 %6598
  %6600 = vrot.lane.b32.xlu0 %v4550, 86
  %v6601 = vpop.permute.xlu0 %6600
  %v6602 = vsel %vm2124, %v6589, %v6591
  %v6603 = vsel %vm2124, %v6591, %v6593
  %v6604 = vsel %vm2124, %v6593, %v6595
  %v6605 = vsel %vm2124, %v6595, %v6597
  %v6606 = vsel %vm2124, %v6597, %v6599
  %v6607 = vsel %vm2124, %v6599, %v6601
  %v6609 = vsel %vm88, %v6587, 0
  %v6612 = vsel %vm92, %v6602, 0
  %v6615 = vsel %vm92, %v6603, 0
  %v6618 = vsel %vm92, %v6604, 0
  %v6621 = vsel %vm92, %v6605, 0
  %v6624 = vsel %vm92, %v6606, 0
  %v6627 = vsel %vm92, %v6607, 0
  %6629 = vmatprep.subr.bf16.mxu0 0
  %6630 = vmatpush1.bf16.msra.mxu0 0
  %6631 = vmatprep.subr.bf16.mxu0 0
  %6632 = vmatpush1.bf16.msra.mxu0 0
  %6633 = vmatprep.subr.bf16.mxu0 0
  %6634 = vmatpush1.bf16.msra.mxu0 0
  %6635 = vmatprep.subr.bf16.mxu0 0
  %6636 = vmatpush1.bf16.msra.mxu0 0
  %6637 = vmatprep.subr.bf16.mxu0 0
  %6638 = vmatpush1.bf16.msra.mxu0 0
  %6639 = vmatprep.subr.bf16.mxu0 0
  %6640 = vmatpush1.bf16.msra.mxu0 0
  %6641 = vmatprep.subr.bf16.mxu0 0
  %6642 = vmatpush1.bf16.msra.mxu0 0
  %6643 = vmatprep.subr.bf16.mxu0 %v6615
  %6644 = vmatpush1.bf16.msra.mxu0 %v6612
  %6645 = vmatprep.subr.bf16.mxu0 0
  %6646 = vmatpush2.bf16.msra.mxu0 0
  %6647 = vmatprep.subr.bf16.mxu0 0
  %6648 = vmatpush2.bf16.msra.mxu0 0
  %6649 = vmatprep.subr.bf16.mxu0 0
  %6650 = vmatpush2.bf16.msra.mxu0 0
  %6651 = vmatprep.subr.bf16.mxu0 0
  %6652 = vmatpush2.bf16.msra.mxu0 0
  %6653 = vmatprep.subr.bf16.mxu0 0
  %6654 = vmatpush2.bf16.msra.mxu0 0
  %6655 = vmatprep.subr.bf16.mxu0 0
  %6656 = vmatpush2.bf16.msra.mxu0 0
  %6657 = vmatprep.subr.bf16.mxu0 0
  %6658 = vmatpush2.bf16.msra.mxu0 0
  %6659 = vmatprep.subr.bf16.mxu0 0
  %6660 = vmatpush2.bf16.msra.mxu0 0
  %6661 = vmatprep.mubr.bf16.mxu0 0
  %6662 = vmatmul.mubr.bf16.gmra.mxu0 %v6609
  %v6663 = vpop.f32.mrf.mxu0
  %v6664 = vadd.f32 0.0, %v6663
  %v6665 = vpop.f32.mrf.mxu0
  %v6666 = vadd.f32 0.0, %v6665
  %v6667 = vpop.f32.mrf.mxu0
  %v6668 = vpop.f32.mrf.mxu0
  %6669 = vdwg.mxu0
  %6670 = vmatprep.subr.bf16.mxu0 0
  %6671 = vmatpush1.bf16.msra.mxu0 0
  %6672 = vmatprep.subr.bf16.mxu0 0
  %6673 = vmatpush1.bf16.msra.mxu0 0
  %6674 = vmatprep.subr.bf16.mxu0 0
  %6675 = vmatpush1.bf16.msra.mxu0 0
  %6676 = vmatprep.subr.bf16.mxu0 0
  %6677 = vmatpush1.bf16.msra.mxu0 0
  %6678 = vmatprep.subr.bf16.mxu0 0
  %6679 = vmatpush1.bf16.msra.mxu0 0
  %6680 = vmatprep.subr.bf16.mxu0 0
  %6681 = vmatpush1.bf16.msra.mxu0 0
  %6682 = vmatprep.subr.bf16.mxu0 0
  %6683 = vmatpush1.bf16.msra.mxu0 0
  %6684 = vmatprep.subr.bf16.mxu0 %v6621
  %6685 = vmatpush1.bf16.msra.mxu0 %v6618
  %6686 = vmatprep.subr.bf16.mxu0 0
  %6687 = vmatpush2.bf16.msra.mxu0 0
  %6688 = vmatprep.subr.bf16.mxu0 0
  %6689 = vmatpush2.bf16.msra.mxu0 0
  %6690 = vmatprep.subr.bf16.mxu0 0
  %6691 = vmatpush2.bf16.msra.mxu0 0
  %6692 = vmatprep.subr.bf16.mxu0 0
  %6693 = vmatpush2.bf16.msra.mxu0 0
  %6694 = vmatprep.subr.bf16.mxu0 0
  %6695 = vmatpush2.bf16.msra.mxu0 0
  %6696 = vmatprep.subr.bf16.mxu0 0
  %6697 = vmatpush2.bf16.msra.mxu0 0
  %6698 = vmatprep.subr.bf16.mxu0 0
  %6699 = vmatpush2.bf16.msra.mxu0 0
  %6700 = vmatprep.subr.bf16.mxu0 0
  %6701 = vmatpush2.bf16.msra.mxu0 0
  %6702 = vmatprep.mubr.bf16.mxu0 0
  %6703 = vmatmul.mubr.bf16.gmra.mxu0 %v6609
  %v6704 = vpop.f32.mrf.mxu0
  %v6705 = vadd.f32 0.0, %v6704
  %v6706 = vpop.f32.mrf.mxu0
  %v6707 = vadd.f32 0.0, %v6706
  %v6708 = vpop.f32.mrf.mxu0
  %v6709 = vpop.f32.mrf.mxu0
  %6710 = vdwg.mxu0
  %6711 = vmatprep.subr.bf16.mxu0 0
  %6712 = vmatpush1.bf16.msra.mxu0 0
  %6713 = vmatprep.subr.bf16.mxu0 0
  %6714 = vmatpush1.bf16.msra.mxu0 0
  %6715 = vmatprep.subr.bf16.mxu0 0
  %6716 = vmatpush1.bf16.msra.mxu0 0
  %6717 = vmatprep.subr.bf16.mxu0 0
  %6718 = vmatpush1.bf16.msra.mxu0 0
  %6719 = vmatprep.subr.bf16.mxu0 0
  %6720 = vmatpush1.bf16.msra.mxu0 0
  %6721 = vmatprep.subr.bf16.mxu0 0
  %6722 = vmatpush1.bf16.msra.mxu0 0
  %6723 = vmatprep.subr.bf16.mxu0 0
  %6724 = vmatpush1.bf16.msra.mxu0 0
  %6725 = vmatprep.subr.bf16.mxu0 %v6627
  %6726 = vmatpush1.bf16.msra.mxu0 %v6624
  %6727 = vmatprep.subr.bf16.mxu0 0
  %6728 = vmatpush2.bf16.msra.mxu0 0
  %6729 = vmatprep.subr.bf16.mxu0 0
  %6730 = vmatpush2.bf16.msra.mxu0 0
  %6731 = vmatprep.subr.bf16.mxu0 0
  %6732 = vmatpush2.bf16.msra.mxu0 0
  %6733 = vmatprep.subr.bf16.mxu0 0
  %6734 = vmatpush2.bf16.msra.mxu0 0
  %6735 = vmatprep.subr.bf16.mxu0 0
  %6736 = vmatpush2.bf16.msra.mxu0 0
  %6737 = vmatprep.subr.bf16.mxu0 0
  %6738 = vmatpush2.bf16.msra.mxu0 0
  %6739 = vmatprep.subr.bf16.mxu0 0
  %6740 = vmatpush2.bf16.msra.mxu0 0
  %6741 = vmatprep.subr.bf16.mxu0 0
  %6742 = vmatpush2.bf16.msra.mxu0 0
  %6743 = vmatprep.mubr.bf16.mxu0 0
  %6744 = vmatmul.mubr.bf16.gmra.mxu0 %v6609
  %v6745 = vpop.f32.mrf.mxu0
  %v6746 = vadd.f32 0.0, %v6745
  %v6747 = vpop.f32.mrf.mxu0
  %v6748 = vadd.f32 0.0, %v6747
  %v6749 = vpop.f32.mrf.mxu0
  %v6750 = vpop.f32.mrf.mxu0
  %6751 = vdwg.mxu0
  %v6752 = vadd.f32 %v6580, %v6664
  %v6753 = vadd.f32 %v6581, %v6666
  %v6754 = vadd.f32 %v6582, %v6705
  %v6755 = vadd.f32 %v6583, %v6707
  %v6756 = vadd.f32 %v6584, %v6746
  %v6757 = vadd.f32 %v6585, %v6748
  %s6758 = scalar_lea.vmem %s4, 52
  %v6759 = vld [vmem:[%s6758] sm:$0xf]
  %6760 = vrot.lane.b32.xlu0 %v4544, 85
  %v6761 = vpop.permute.xlu0 %6760
  %6762 = vrot.lane.b32.xlu0 %v4545, 85
  %v6763 = vpop.permute.xlu0 %6762
  %6764 = vrot.lane.b32.xlu0 %v4546, 85
  %v6765 = vpop.permute.xlu0 %6764
  %6766 = vrot.lane.b32.xlu0 %v4547, 85
  %v6767 = vpop.permute.xlu0 %6766
  %6768 = vrot.lane.b32.xlu0 %v4548, 85
  %v6769 = vpop.permute.xlu0 %6768
  %6770 = vrot.lane.b32.xlu0 %v4549, 85
  %v6771 = vpop.permute.xlu0 %6770
  %6772 = vrot.lane.b32.xlu0 %v4550, 85
  %v6773 = vpop.permute.xlu0 %6772
  %v6774 = vsel %vm2297, %v6761, %v6763
  %v6775 = vsel %vm2297, %v6763, %v6765
  %v6776 = vsel %vm2297, %v6765, %v6767
  %v6777 = vsel %vm2297, %v6767, %v6769
  %v6778 = vsel %vm2297, %v6769, %v6771
  %v6779 = vsel %vm2297, %v6771, %v6773
  %v6781 = vsel %vm88, %v6759, 0
  %v6784 = vsel %vm92, %v6774, 0
  %v6787 = vsel %vm92, %v6775, 0
  %v6790 = vsel %vm92, %v6776, 0
  %v6793 = vsel %vm92, %v6777, 0
  %v6796 = vsel %vm92, %v6778, 0
  %v6799 = vsel %vm92, %v6779, 0
  %6801 = vmatprep.subr.bf16.mxu0 0
  %6802 = vmatpush1.bf16.msra.mxu0 0
  %6803 = vmatprep.subr.bf16.mxu0 0
  %6804 = vmatpush1.bf16.msra.mxu0 0
  %6805 = vmatprep.subr.bf16.mxu0 0
  %6806 = vmatpush1.bf16.msra.mxu0 0
  %6807 = vmatprep.subr.bf16.mxu0 0
  %6808 = vmatpush1.bf16.msra.mxu0 0
  %6809 = vmatprep.subr.bf16.mxu0 0
  %6810 = vmatpush1.bf16.msra.mxu0 0
  %6811 = vmatprep.subr.bf16.mxu0 0
  %6812 = vmatpush1.bf16.msra.mxu0 0
  %6813 = vmatprep.subr.bf16.mxu0 0
  %6814 = vmatpush1.bf16.msra.mxu0 0
  %6815 = vmatprep.subr.bf16.mxu0 %v6787
  %6816 = vmatpush1.bf16.msra.mxu0 %v6784
  %6817 = vmatprep.subr.bf16.mxu0 0
  %6818 = vmatpush2.bf16.msra.mxu0 0
  %6819 = vmatprep.subr.bf16.mxu0 0
  %6820 = vmatpush2.bf16.msra.mxu0 0
  %6821 = vmatprep.subr.bf16.mxu0 0
  %6822 = vmatpush2.bf16.msra.mxu0 0
  %6823 = vmatprep.subr.bf16.mxu0 0
  %6824 = vmatpush2.bf16.msra.mxu0 0
  %6825 = vmatprep.subr.bf16.mxu0 0
  %6826 = vmatpush2.bf16.msra.mxu0 0
  %6827 = vmatprep.subr.bf16.mxu0 0
  %6828 = vmatpush2.bf16.msra.mxu0 0
  %6829 = vmatprep.subr.bf16.mxu0 0
  %6830 = vmatpush2.bf16.msra.mxu0 0
  %6831 = vmatprep.subr.bf16.mxu0 0
  %6832 = vmatpush2.bf16.msra.mxu0 0
  %6833 = vmatprep.mubr.bf16.mxu0 0
  %6834 = vmatmul.mubr.bf16.gmra.mxu0 %v6781
  %v6835 = vpop.f32.mrf.mxu0
  %v6836 = vadd.f32 0.0, %v6835
  %v6837 = vpop.f32.mrf.mxu0
  %v6838 = vadd.f32 0.0, %v6837
  %v6839 = vpop.f32.mrf.mxu0
  %v6840 = vpop.f32.mrf.mxu0
  %6841 = vdwg.mxu0
  %6842 = vmatprep.subr.bf16.mxu0 0
  %6843 = vmatpush1.bf16.msra.mxu0 0
  %6844 = vmatprep.subr.bf16.mxu0 0
  %6845 = vmatpush1.bf16.msra.mxu0 0
  %6846 = vmatprep.subr.bf16.mxu0 0
  %6847 = vmatpush1.bf16.msra.mxu0 0
  %6848 = vmatprep.subr.bf16.mxu0 0
  %6849 = vmatpush1.bf16.msra.mxu0 0
  %6850 = vmatprep.subr.bf16.mxu0 0
  %6851 = vmatpush1.bf16.msra.mxu0 0
  %6852 = vmatprep.subr.bf16.mxu0 0
  %6853 = vmatpush1.bf16.msra.mxu0 0
  %6854 = vmatprep.subr.bf16.mxu0 0
  %6855 = vmatpush1.bf16.msra.mxu0 0
  %6856 = vmatprep.subr.bf16.mxu0 %v6793
  %6857 = vmatpush1.bf16.msra.mxu0 %v6790
  %6858 = vmatprep.subr.bf16.mxu0 0
  %6859 = vmatpush2.bf16.msra.mxu0 0
  %6860 = vmatprep.subr.bf16.mxu0 0
  %6861 = vmatpush2.bf16.msra.mxu0 0
  %6862 = vmatprep.subr.bf16.mxu0 0
  %6863 = vmatpush2.bf16.msra.mxu0 0
  %6864 = vmatprep.subr.bf16.mxu0 0
  %6865 = vmatpush2.bf16.msra.mxu0 0
  %6866 = vmatprep.subr.bf16.mxu0 0
  %6867 = vmatpush2.bf16.msra.mxu0 0
  %6868 = vmatprep.subr.bf16.mxu0 0
  %6869 = vmatpush2.bf16.msra.mxu0 0
  %6870 = vmatprep.subr.bf16.mxu0 0
  %6871 = vmatpush2.bf16.msra.mxu0 0
  %6872 = vmatprep.subr.bf16.mxu0 0
  %6873 = vmatpush2.bf16.msra.mxu0 0
  %6874 = vmatprep.mubr.bf16.mxu0 0
  %6875 = vmatmul.mubr.bf16.gmra.mxu0 %v6781
  %v6876 = vpop.f32.mrf.mxu0
  %v6877 = vadd.f32 0.0, %v6876
  %v6878 = vpop.f32.mrf.mxu0
  %v6879 = vadd.f32 0.0, %v6878
  %v6880 = vpop.f32.mrf.mxu0
  %v6881 = vpop.f32.mrf.mxu0
  %6882 = vdwg.mxu0
  %6883 = vmatprep.subr.bf16.mxu0 0
  %6884 = vmatpush1.bf16.msra.mxu0 0
  %6885 = vmatprep.subr.bf16.mxu0 0
  %6886 = vmatpush1.bf16.msra.mxu0 0
  %6887 = vmatprep.subr.bf16.mxu0 0
  %6888 = vmatpush1.bf16.msra.mxu0 0
  %6889 = vmatprep.subr.bf16.mxu0 0
  %6890 = vmatpush1.bf16.msra.mxu0 0
  %6891 = vmatprep.subr.bf16.mxu0 0
  %6892 = vmatpush1.bf16.msra.mxu0 0
  %6893 = vmatprep.subr.bf16.mxu0 0
  %6894 = vmatpush1.bf16.msra.mxu0 0
  %6895 = vmatprep.subr.bf16.mxu0 0
  %6896 = vmatpush1.bf16.msra.mxu0 0
  %6897 = vmatprep.subr.bf16.mxu0 %v6799
  %6898 = vmatpush1.bf16.msra.mxu0 %v6796
  %6899 = vmatprep.subr.bf16.mxu0 0
  %6900 = vmatpush2.bf16.msra.mxu0 0
  %6901 = vmatprep.subr.bf16.mxu0 0
  %6902 = vmatpush2.bf16.msra.mxu0 0
  %6903 = vmatprep.subr.bf16.mxu0 0
  %6904 = vmatpush2.bf16.msra.mxu0 0
  %6905 = vmatprep.subr.bf16.mxu0 0
  %6906 = vmatpush2.bf16.msra.mxu0 0
  %6907 = vmatprep.subr.bf16.mxu0 0
  %6908 = vmatpush2.bf16.msra.mxu0 0
  %6909 = vmatprep.subr.bf16.mxu0 0
  %6910 = vmatpush2.bf16.msra.mxu0 0
  %6911 = vmatprep.subr.bf16.mxu0 0
  %6912 = vmatpush2.bf16.msra.mxu0 0
  %6913 = vmatprep.subr.bf16.mxu0 0
  %6914 = vmatpush2.bf16.msra.mxu0 0
  %6915 = vmatprep.mubr.bf16.mxu0 0
  %6916 = vmatmul.mubr.bf16.gmra.mxu0 %v6781
  %v6917 = vpop.f32.mrf.mxu0
  %v6918 = vadd.f32 0.0, %v6917
  %v6919 = vpop.f32.mrf.mxu0
  %v6920 = vadd.f32 0.0, %v6919
  %v6921 = vpop.f32.mrf.mxu0
  %v6922 = vpop.f32.mrf.mxu0
  %6923 = vdwg.mxu0
  %v6924 = vadd.f32 %v6752, %v6836
  %v6925 = vadd.f32 %v6753, %v6838
  %v6926 = vadd.f32 %v6754, %v6877
  %v6927 = vadd.f32 %v6755, %v6879
  %v6928 = vadd.f32 %v6756, %v6918
  %v6929 = vadd.f32 %v6757, %v6920
  %s6930 = scalar_lea.vmem %s4, 56
  %v6931 = vld [vmem:[%s6930] sm:$0xf]
  %6932 = vrot.lane.b32.xlu0 %v4544, 84
  %v6933 = vpop.permute.xlu0 %6932
  %6934 = vrot.lane.b32.xlu0 %v4545, 84
  %v6935 = vpop.permute.xlu0 %6934
  %6936 = vrot.lane.b32.xlu0 %v4546, 84
  %v6937 = vpop.permute.xlu0 %6936
  %6938 = vrot.lane.b32.xlu0 %v4547, 84
  %v6939 = vpop.permute.xlu0 %6938
  %6940 = vrot.lane.b32.xlu0 %v4548, 84
  %v6941 = vpop.permute.xlu0 %6940
  %6942 = vrot.lane.b32.xlu0 %v4549, 84
  %v6943 = vpop.permute.xlu0 %6942
  %6944 = vrot.lane.b32.xlu0 %v4550, 84
  %v6945 = vpop.permute.xlu0 %6944
  %v6946 = vsel %vm2470, %v6933, %v6935
  %v6947 = vsel %vm2470, %v6935, %v6937
  %v6948 = vsel %vm2470, %v6937, %v6939
  %v6949 = vsel %vm2470, %v6939, %v6941
  %v6950 = vsel %vm2470, %v6941, %v6943
  %v6951 = vsel %vm2470, %v6943, %v6945
  %v6953 = vsel %vm88, %v6931, 0
  %v6956 = vsel %vm92, %v6946, 0
  %v6959 = vsel %vm92, %v6947, 0
  %v6962 = vsel %vm92, %v6948, 0
  %v6965 = vsel %vm92, %v6949, 0
  %v6968 = vsel %vm92, %v6950, 0
  %v6971 = vsel %vm92, %v6951, 0
  %6973 = vmatprep.subr.bf16.mxu0 0
  %6974 = vmatpush1.bf16.msra.mxu0 0
  %6975 = vmatprep.subr.bf16.mxu0 0
  %6976 = vmatpush1.bf16.msra.mxu0 0
  %6977 = vmatprep.subr.bf16.mxu0 0
  %6978 = vmatpush1.bf16.msra.mxu0 0
  %6979 = vmatprep.subr.bf16.mxu0 0
  %6980 = vmatpush1.bf16.msra.mxu0 0
  %6981 = vmatprep.subr.bf16.mxu0 0
  %6982 = vmatpush1.bf16.msra.mxu0 0
  %6983 = vmatprep.subr.bf16.mxu0 0
  %6984 = vmatpush1.bf16.msra.mxu0 0
  %6985 = vmatprep.subr.bf16.mxu0 0
  %6986 = vmatpush1.bf16.msra.mxu0 0
  %6987 = vmatprep.subr.bf16.mxu0 %v6959
  %6988 = vmatpush1.bf16.msra.mxu0 %v6956
  %6989 = vmatprep.subr.bf16.mxu0 0
  %6990 = vmatpush2.bf16.msra.mxu0 0
  %6991 = vmatprep.subr.bf16.mxu0 0
  %6992 = vmatpush2.bf16.msra.mxu0 0
  %6993 = vmatprep.subr.bf16.mxu0 0
  %6994 = vmatpush2.bf16.msra.mxu0 0
  %6995 = vmatprep.subr.bf16.mxu0 0
  %6996 = vmatpush2.bf16.msra.mxu0 0
  %6997 = vmatprep.subr.bf16.mxu0 0
  %6998 = vmatpush2.bf16.msra.mxu0 0
  %6999 = vmatprep.subr.bf16.mxu0 0
  %7000 = vmatpush2.bf16.msra.mxu0 0
  %7001 = vmatprep.subr.bf16.mxu0 0
  %7002 = vmatpush2.bf16.msra.mxu0 0
  %7003 = vmatprep.subr.bf16.mxu0 0
  %7004 = vmatpush2.bf16.msra.mxu0 0
  %7005 = vmatprep.mubr.bf16.mxu0 0
  %7006 = vmatmul.mubr.bf16.gmra.mxu0 %v6953
  %v7007 = vpop.f32.mrf.mxu0
  %v7008 = vadd.f32 0.0, %v7007
  %v7009 = vpop.f32.mrf.mxu0
  %v7010 = vadd.f32 0.0, %v7009
  %v7011 = vpop.f32.mrf.mxu0
  %v7012 = vpop.f32.mrf.mxu0
  %7013 = vdwg.mxu0
  %7014 = vmatprep.subr.bf16.mxu0 0
  %7015 = vmatpush1.bf16.msra.mxu0 0
  %7016 = vmatprep.subr.bf16.mxu0 0
  %7017 = vmatpush1.bf16.msra.mxu0 0
  %7018 = vmatprep.subr.bf16.mxu0 0
  %7019 = vmatpush1.bf16.msra.mxu0 0
  %7020 = vmatprep.subr.bf16.mxu0 0
  %7021 = vmatpush1.bf16.msra.mxu0 0
  %7022 = vmatprep.subr.bf16.mxu0 0
  %7023 = vmatpush1.bf16.msra.mxu0 0
  %7024 = vmatprep.subr.bf16.mxu0 0
  %7025 = vmatpush1.bf16.msra.mxu0 0
  %7026 = vmatprep.subr.bf16.mxu0 0
  %7027 = vmatpush1.bf16.msra.mxu0 0
  %7028 = vmatprep.subr.bf16.mxu0 %v6965
  %7029 = vmatpush1.bf16.msra.mxu0 %v6962
  %7030 = vmatprep.subr.bf16.mxu0 0
  %7031 = vmatpush2.bf16.msra.mxu0 0
  %7032 = vmatprep.subr.bf16.mxu0 0
  %7033 = vmatpush2.bf16.msra.mxu0 0
  %7034 = vmatprep.subr.bf16.mxu0 0
  %7035 = vmatpush2.bf16.msra.mxu0 0
  %7036 = vmatprep.subr.bf16.mxu0 0
  %7037 = vmatpush2.bf16.msra.mxu0 0
  %7038 = vmatprep.subr.bf16.mxu0 0
  %7039 = vmatpush2.bf16.msra.mxu0 0
  %7040 = vmatprep.subr.bf16.mxu0 0
  %7041 = vmatpush2.bf16.msra.mxu0 0
  %7042 = vmatprep.subr.bf16.mxu0 0
  %7043 = vmatpush2.bf16.msra.mxu0 0
  %7044 = vmatprep.subr.bf16.mxu0 0
  %7045 = vmatpush2.bf16.msra.mxu0 0
  %7046 = vmatprep.mubr.bf16.mxu0 0
  %7047 = vmatmul.mubr.bf16.gmra.mxu0 %v6953
  %v7048 = vpop.f32.mrf.mxu0
  %v7049 = vadd.f32 0.0, %v7048
  %v7050 = vpop.f32.mrf.mxu0
  %v7051 = vadd.f32 0.0, %v7050
  %v7052 = vpop.f32.mrf.mxu0
  %v7053 = vpop.f32.mrf.mxu0
  %7054 = vdwg.mxu0
  %7055 = vmatprep.subr.bf16.mxu0 0
  %7056 = vmatpush1.bf16.msra.mxu0 0
  %7057 = vmatprep.subr.bf16.mxu0 0
  %7058 = vmatpush1.bf16.msra.mxu0 0
  %7059 = vmatprep.subr.bf16.mxu0 0
  %7060 = vmatpush1.bf16.msra.mxu0 0
  %7061 = vmatprep.subr.bf16.mxu0 0
  %7062 = vmatpush1.bf16.msra.mxu0 0
  %7063 = vmatprep.subr.bf16.mxu0 0
  %7064 = vmatpush1.bf16.msra.mxu0 0
  %7065 = vmatprep.subr.bf16.mxu0 0
  %7066 = vmatpush1.bf16.msra.mxu0 0
  %7067 = vmatprep.subr.bf16.mxu0 0
  %7068 = vmatpush1.bf16.msra.mxu0 0
  %7069 = vmatprep.subr.bf16.mxu0 %v6971
  %7070 = vmatpush1.bf16.msra.mxu0 %v6968
  %7071 = vmatprep.subr.bf16.mxu0 0
  %7072 = vmatpush2.bf16.msra.mxu0 0
  %7073 = vmatprep.subr.bf16.mxu0 0
  %7074 = vmatpush2.bf16.msra.mxu0 0
  %7075 = vmatprep.subr.bf16.mxu0 0
  %7076 = vmatpush2.bf16.msra.mxu0 0
  %7077 = vmatprep.subr.bf16.mxu0 0
  %7078 = vmatpush2.bf16.msra.mxu0 0
  %7079 = vmatprep.subr.bf16.mxu0 0
  %7080 = vmatpush2.bf16.msra.mxu0 0
  %7081 = vmatprep.subr.bf16.mxu0 0
  %7082 = vmatpush2.bf16.msra.mxu0 0
  %7083 = vmatprep.subr.bf16.mxu0 0
  %7084 = vmatpush2.bf16.msra.mxu0 0
  %7085 = vmatprep.subr.bf16.mxu0 0
  %7086 = vmatpush2.bf16.msra.mxu0 0
  %7087 = vmatprep.mubr.bf16.mxu0 0
  %7088 = vmatmul.mubr.bf16.gmra.mxu0 %v6953
  %v7089 = vpop.f32.mrf.mxu0
  %v7090 = vadd.f32 0.0, %v7089
  %v7091 = vpop.f32.mrf.mxu0
  %v7092 = vadd.f32 0.0, %v7091
  %v7093 = vpop.f32.mrf.mxu0
  %v7094 = vpop.f32.mrf.mxu0
  %7095 = vdwg.mxu0
  %v7096 = vadd.f32 %v6924, %v7008
  %v7097 = vadd.f32 %v6925, %v7010
  %v7098 = vadd.f32 %v6926, %v7049
  %v7099 = vadd.f32 %v6927, %v7051
  %v7100 = vadd.f32 %v6928, %v7090
  %v7101 = vadd.f32 %v6929, %v7092
  %s7102 = scalar_lea.vmem %s4, 60
  %v7103 = vld [vmem:[%s7102] sm:$0xf]
  %7104 = vrot.lane.b32.xlu0 %v4544, 68
  %v7105 = vpop.permute.xlu0 %7104
  %7106 = vrot.lane.b32.xlu0 %v4545, 68
  %v7107 = vpop.permute.xlu0 %7106
  %7108 = vrot.lane.b32.xlu0 %v4546, 68
  %v7109 = vpop.permute.xlu0 %7108
  %7110 = vrot.lane.b32.xlu0 %v4547, 68
  %v7111 = vpop.permute.xlu0 %7110
  %7112 = vrot.lane.b32.xlu0 %v4548, 68
  %v7113 = vpop.permute.xlu0 %7112
  %7114 = vrot.lane.b32.xlu0 %v4549, 68
  %v7115 = vpop.permute.xlu0 %7114
  %7116 = vrot.lane.b32.xlu0 %v4550, 68
  %v7117 = vpop.permute.xlu0 %7116
  %v7118 = vsel %vm2643, %v7105, %v7107
  %v7119 = vsel %vm2643, %v7107, %v7109
  %v7120 = vsel %vm2643, %v7109, %v7111
  %v7121 = vsel %vm2643, %v7111, %v7113
  %v7122 = vsel %vm2643, %v7113, %v7115
  %v7123 = vsel %vm2643, %v7115, %v7117
  %v7125 = vsel %vm88, %v7103, 0
  %v7128 = vsel %vm92, %v7118, 0
  %v7131 = vsel %vm92, %v7119, 0
  %v7134 = vsel %vm92, %v7120, 0
  %v7137 = vsel %vm92, %v7121, 0
  %v7140 = vsel %vm92, %v7122, 0
  %v7143 = vsel %vm92, %v7123, 0
  %7145 = vmatprep.subr.bf16.mxu0 0
  %7146 = vmatpush1.bf16.msra.mxu0 0
  %7147 = vmatprep.subr.bf16.mxu0 0
  %7148 = vmatpush1.bf16.msra.mxu0 0
  %7149 = vmatprep.subr.bf16.mxu0 0
  %7150 = vmatpush1.bf16.msra.mxu0 0
  %7151 = vmatprep.subr.bf16.mxu0 0
  %7152 = vmatpush1.bf16.msra.mxu0 0
  %7153 = vmatprep.subr.bf16.mxu0 0
  %7154 = vmatpush1.bf16.msra.mxu0 0
  %7155 = vmatprep.subr.bf16.mxu0 0
  %7156 = vmatpush1.bf16.msra.mxu0 0
  %7157 = vmatprep.subr.bf16.mxu0 0
  %7158 = vmatpush1.bf16.msra.mxu0 0
  %7159 = vmatprep.subr.bf16.mxu0 %v7131
  %7160 = vmatpush1.bf16.msra.mxu0 %v7128
  %7161 = vmatprep.subr.bf16.mxu0 0
  %7162 = vmatpush2.bf16.msra.mxu0 0
  %7163 = vmatprep.subr.bf16.mxu0 0
  %7164 = vmatpush2.bf16.msra.mxu0 0
  %7165 = vmatprep.subr.bf16.mxu0 0
  %7166 = vmatpush2.bf16.msra.mxu0 0
  %7167 = vmatprep.subr.bf16.mxu0 0
  %7168 = vmatpush2.bf16.msra.mxu0 0
  %7169 = vmatprep.subr.bf16.mxu0 0
  %7170 = vmatpush2.bf16.msra.mxu0 0
  %7171 = vmatprep.subr.bf16.mxu0 0
  %7172 = vmatpush2.bf16.msra.mxu0 0
  %7173 = vmatprep.subr.bf16.mxu0 0
  %7174 = vmatpush2.bf16.msra.mxu0 0
  %7175 = vmatprep.subr.bf16.mxu0 0
  %7176 = vmatpush2.bf16.msra.mxu0 0
  %7177 = vmatprep.mubr.bf16.mxu0 0
  %7178 = vmatmul.mubr.bf16.gmra.mxu0 %v7125
  %v7179 = vpop.f32.mrf.mxu0
  %v7180 = vadd.f32 0.0, %v7179
  %v7181 = vpop.f32.mrf.mxu0
  %v7182 = vadd.f32 0.0, %v7181
  %v7183 = vpop.f32.mrf.mxu0
  %v7184 = vpop.f32.mrf.mxu0
  %7185 = vdwg.mxu0
  %7186 = vmatprep.subr.bf16.mxu0 0
  %7187 = vmatpush1.bf16.msra.mxu0 0
  %7188 = vmatprep.subr.bf16.mxu0 0
  %7189 = vmatpush1.bf16.msra.mxu0 0
  %7190 = vmatprep.subr.bf16.mxu0 0
  %7191 = vmatpush1.bf16.msra.mxu0 0
  %7192 = vmatprep.subr.bf16.mxu0 0
  %7193 = vmatpush1.bf16.msra.mxu0 0
  %7194 = vmatprep.subr.bf16.mxu0 0
  %7195 = vmatpush1.bf16.msra.mxu0 0
  %7196 = vmatprep.subr.bf16.mxu0 0
  %7197 = vmatpush1.bf16.msra.mxu0 0
  %7198 = vmatprep.subr.bf16.mxu0 0
  %7199 = vmatpush1.bf16.msra.mxu0 0
  %7200 = vmatprep.subr.bf16.mxu0 %v7137
  %7201 = vmatpush1.bf16.msra.mxu0 %v7134
  %7202 = vmatprep.subr.bf16.mxu0 0
  %7203 = vmatpush2.bf16.msra.mxu0 0
  %7204 = vmatprep.subr.bf16.mxu0 0
  %7205 = vmatpush2.bf16.msra.mxu0 0
  %7206 = vmatprep.subr.bf16.mxu0 0
  %7207 = vmatpush2.bf16.msra.mxu0 0
  %7208 = vmatprep.subr.bf16.mxu0 0
  %7209 = vmatpush2.bf16.msra.mxu0 0
  %7210 = vmatprep.subr.bf16.mxu0 0
  %7211 = vmatpush2.bf16.msra.mxu0 0
  %7212 = vmatprep.subr.bf16.mxu0 0
  %7213 = vmatpush2.bf16.msra.mxu0 0
  %7214 = vmatprep.subr.bf16.mxu0 0
  %7215 = vmatpush2.bf16.msra.mxu0 0
  %7216 = vmatprep.subr.bf16.mxu0 0
  %7217 = vmatpush2.bf16.msra.mxu0 0
  %7218 = vmatprep.mubr.bf16.mxu0 0
  %7219 = vmatmul.mubr.bf16.gmra.mxu0 %v7125
  %v7220 = vpop.f32.mrf.mxu0
  %v7221 = vadd.f32 0.0, %v7220
  %v7222 = vpop.f32.mrf.mxu0
  %v7223 = vadd.f32 0.0, %v7222
  %v7224 = vpop.f32.mrf.mxu0
  %v7225 = vpop.f32.mrf.mxu0
  %7226 = vdwg.mxu0
  %7227 = vmatprep.subr.bf16.mxu0 0
  %7228 = vmatpush1.bf16.msra.mxu0 0
  %7229 = vmatprep.subr.bf16.mxu0 0
  %7230 = vmatpush1.bf16.msra.mxu0 0
  %7231 = vmatprep.subr.bf16.mxu0 0
  %7232 = vmatpush1.bf16.msra.mxu0 0
  %7233 = vmatprep.subr.bf16.mxu0 0
  %7234 = vmatpush1.bf16.msra.mxu0 0
  %7235 = vmatprep.subr.bf16.mxu0 0
  %7236 = vmatpush1.bf16.msra.mxu0 0
  %7237 = vmatprep.subr.bf16.mxu0 0
  %7238 = vmatpush1.bf16.msra.mxu0 0
  %7239 = vmatprep.subr.bf16.mxu0 0
  %7240 = vmatpush1.bf16.msra.mxu0 0
  %7241 = vmatprep.subr.bf16.mxu0 %v7143
  %7242 = vmatpush1.bf16.msra.mxu0 %v7140
  %7243 = vmatprep.subr.bf16.mxu0 0
  %7244 = vmatpush2.bf16.msra.mxu0 0
  %7245 = vmatprep.subr.bf16.mxu0 0
  %7246 = vmatpush2.bf16.msra.mxu0 0
  %7247 = vmatprep.subr.bf16.mxu0 0
  %7248 = vmatpush2.bf16.msra.mxu0 0
  %7249 = vmatprep.subr.bf16.mxu0 0
  %7250 = vmatpush2.bf16.msra.mxu0 0
  %7251 = vmatprep.subr.bf16.mxu0 0
  %7252 = vmatpush2.bf16.msra.mxu0 0
  %7253 = vmatprep.subr.bf16.mxu0 0
  %7254 = vmatpush2.bf16.msra.mxu0 0
  %7255 = vmatprep.subr.bf16.mxu0 0
  %7256 = vmatpush2.bf16.msra.mxu0 0
  %7257 = vmatprep.subr.bf16.mxu0 0
  %7258 = vmatpush2.bf16.msra.mxu0 0
  %7259 = vmatprep.mubr.bf16.mxu0 0
  %7260 = vmatmul.mubr.bf16.gmra.mxu0 %v7125
  %v7261 = vpop.f32.mrf.mxu0
  %v7262 = vadd.f32 0.0, %v7261
  %v7263 = vpop.f32.mrf.mxu0
  %v7264 = vadd.f32 0.0, %v7263
  %v7265 = vpop.f32.mrf.mxu0
  %v7266 = vpop.f32.mrf.mxu0
  %7267 = vdwg.mxu0
  %v7268 = vadd.f32 %v7096, %v7180
  %v7269 = vadd.f32 %v7097, %v7182
  %v7270 = vadd.f32 %v7098, %v7221
  %v7271 = vadd.f32 %v7099, %v7223
  %v7272 = vadd.f32 %v7100, %v7262
  %v7273 = vadd.f32 %v7101, %v7264
  %s7274 = scalar_lea.vmem %s4, 64
  %v7275 = vld [vmem:[%s7274] sm:$0xf]
  %7276 = vrot.lane.b32.xlu0 %v4544, 67
  %v7277 = vpop.permute.xlu0 %7276
  %7278 = vrot.lane.b32.xlu0 %v4545, 67
  %v7279 = vpop.permute.xlu0 %7278
  %7280 = vrot.lane.b32.xlu0 %v4546, 67
  %v7281 = vpop.permute.xlu0 %7280
  %7282 = vrot.lane.b32.xlu0 %v4547, 67
  %v7283 = vpop.permute.xlu0 %7282
  %7284 = vrot.lane.b32.xlu0 %v4548, 67
  %v7285 = vpop.permute.xlu0 %7284
  %7286 = vrot.lane.b32.xlu0 %v4549, 67
  %v7287 = vpop.permute.xlu0 %7286
  %7288 = vrot.lane.b32.xlu0 %v4550, 67
  %v7289 = vpop.permute.xlu0 %7288
  %v7290 = vsel %vm2816, %v7277, %v7279
  %v7291 = vsel %vm2816, %v7279, %v7281
  %v7292 = vsel %vm2816, %v7281, %v7283
  %v7293 = vsel %vm2816, %v7283, %v7285
  %v7294 = vsel %vm2816, %v7285, %v7287
  %v7295 = vsel %vm2816, %v7287, %v7289
  %v7297 = vsel %vm88, %v7275, 0
  %v7300 = vsel %vm92, %v7290, 0
  %v7303 = vsel %vm92, %v7291, 0
  %v7306 = vsel %vm92, %v7292, 0
  %v7309 = vsel %vm92, %v7293, 0
  %v7312 = vsel %vm92, %v7294, 0
  %v7315 = vsel %vm92, %v7295, 0
  %7317 = vmatprep.subr.bf16.mxu0 0
  %7318 = vmatpush1.bf16.msra.mxu0 0
  %7319 = vmatprep.subr.bf16.mxu0 0
  %7320 = vmatpush1.bf16.msra.mxu0 0
  %7321 = vmatprep.subr.bf16.mxu0 0
  %7322 = vmatpush1.bf16.msra.mxu0 0
  %7323 = vmatprep.subr.bf16.mxu0 0
  %7324 = vmatpush1.bf16.msra.mxu0 0
  %7325 = vmatprep.subr.bf16.mxu0 0
  %7326 = vmatpush1.bf16.msra.mxu0 0
  %7327 = vmatprep.subr.bf16.mxu0 0
  %7328 = vmatpush1.bf16.msra.mxu0 0
  %7329 = vmatprep.subr.bf16.mxu0 0
  %7330 = vmatpush1.bf16.msra.mxu0 0
  %7331 = vmatprep.subr.bf16.mxu0 %v7303
  %7332 = vmatpush1.bf16.msra.mxu0 %v7300
  %7333 = vmatprep.subr.bf16.mxu0 0
  %7334 = vmatpush2.bf16.msra.mxu0 0
  %7335 = vmatprep.subr.bf16.mxu0 0
  %7336 = vmatpush2.bf16.msra.mxu0 0
  %7337 = vmatprep.subr.bf16.mxu0 0
  %7338 = vmatpush2.bf16.msra.mxu0 0
  %7339 = vmatprep.subr.bf16.mxu0 0
  %7340 = vmatpush2.bf16.msra.mxu0 0
  %7341 = vmatprep.subr.bf16.mxu0 0
  %7342 = vmatpush2.bf16.msra.mxu0 0
  %7343 = vmatprep.subr.bf16.mxu0 0
  %7344 = vmatpush2.bf16.msra.mxu0 0
  %7345 = vmatprep.subr.bf16.mxu0 0
  %7346 = vmatpush2.bf16.msra.mxu0 0
  %7347 = vmatprep.subr.bf16.mxu0 0
  %7348 = vmatpush2.bf16.msra.mxu0 0
  %7349 = vmatprep.mubr.bf16.mxu0 0
  %7350 = vmatmul.mubr.bf16.gmra.mxu0 %v7297
  %v7351 = vpop.f32.mrf.mxu0
  %v7352 = vadd.f32 0.0, %v7351
  %v7353 = vpop.f32.mrf.mxu0
  %v7354 = vadd.f32 0.0, %v7353
  %v7355 = vpop.f32.mrf.mxu0
  %v7356 = vpop.f32.mrf.mxu0
  %7357 = vdwg.mxu0
  %7358 = vmatprep.subr.bf16.mxu0 0
  %7359 = vmatpush1.bf16.msra.mxu0 0
  %7360 = vmatprep.subr.bf16.mxu0 0
  %7361 = vmatpush1.bf16.msra.mxu0 0
  %7362 = vmatprep.subr.bf16.mxu0 0
  %7363 = vmatpush1.bf16.msra.mxu0 0
  %7364 = vmatprep.subr.bf16.mxu0 0
  %7365 = vmatpush1.bf16.msra.mxu0 0
  %7366 = vmatprep.subr.bf16.mxu0 0
  %7367 = vmatpush1.bf16.msra.mxu0 0
  %7368 = vmatprep.subr.bf16.mxu0 0
  %7369 = vmatpush1.bf16.msra.mxu0 0
  %7370 = vmatprep.subr.bf16.mxu0 0
  %7371 = vmatpush1.bf16.msra.mxu0 0
  %7372 = vmatprep.subr.bf16.mxu0 %v7309
  %7373 = vmatpush1.bf16.msra.mxu0 %v7306
  %7374 = vmatprep.subr.bf16.mxu0 0
  %7375 = vmatpush2.bf16.msra.mxu0 0
  %7376 = vmatprep.subr.bf16.mxu0 0
  %7377 = vmatpush2.bf16.msra.mxu0 0
  %7378 = vmatprep.subr.bf16.mxu0 0
  %7379 = vmatpush2.bf16.msra.mxu0 0
  %7380 = vmatprep.subr.bf16.mxu0 0
  %7381 = vmatpush2.bf16.msra.mxu0 0
  %7382 = vmatprep.subr.bf16.mxu0 0
  %7383 = vmatpush2.bf16.msra.mxu0 0
  %7384 = vmatprep.subr.bf16.mxu0 0
  %7385 = vmatpush2.bf16.msra.mxu0 0
  %7386 = vmatprep.subr.bf16.mxu0 0
  %7387 = vmatpush2.bf16.msra.mxu0 0
  %7388 = vmatprep.subr.bf16.mxu0 0
  %7389 = vmatpush2.bf16.msra.mxu0 0
  %7390 = vmatprep.mubr.bf16.mxu0 0
  %7391 = vmatmul.mubr.bf16.gmra.mxu0 %v7297
  %v7392 = vpop.f32.mrf.mxu0
  %v7393 = vadd.f32 0.0, %v7392
  %v7394 = vpop.f32.mrf.mxu0
  %v7395 = vadd.f32 0.0, %v7394
  %v7396 = vpop.f32.mrf.mxu0
  %v7397 = vpop.f32.mrf.mxu0
  %7398 = vdwg.mxu0
  %7399 = vmatprep.subr.bf16.mxu0 0
  %7400 = vmatpush1.bf16.msra.mxu0 0
  %7401 = vmatprep.subr.bf16.mxu0 0
  %7402 = vmatpush1.bf16.msra.mxu0 0
  %7403 = vmatprep.subr.bf16.mxu0 0
  %7404 = vmatpush1.bf16.msra.mxu0 0
  %7405 = vmatprep.subr.bf16.mxu0 0
  %7406 = vmatpush1.bf16.msra.mxu0 0
  %7407 = vmatprep.subr.bf16.mxu0 0
  %7408 = vmatpush1.bf16.msra.mxu0 0
  %7409 = vmatprep.subr.bf16.mxu0 0
  %7410 = vmatpush1.bf16.msra.mxu0 0
  %7411 = vmatprep.subr.bf16.mxu0 0
  %7412 = vmatpush1.bf16.msra.mxu0 0
  %7413 = vmatprep.subr.bf16.mxu0 %v7315
  %7414 = vmatpush1.bf16.msra.mxu0 %v7312
  %7415 = vmatprep.subr.bf16.mxu0 0
  %7416 = vmatpush2.bf16.msra.mxu0 0
  %7417 = vmatprep.subr.bf16.mxu0 0
  %7418 = vmatpush2.bf16.msra.mxu0 0
  %7419 = vmatprep.subr.bf16.mxu0 0
  %7420 = vmatpush2.bf16.msra.mxu0 0
  %7421 = vmatprep.subr.bf16.mxu0 0
  %7422 = vmatpush2.bf16.msra.mxu0 0
  %7423 = vmatprep.subr.bf16.mxu0 0
  %7424 = vmatpush2.bf16.msra.mxu0 0
  %7425 = vmatprep.subr.bf16.mxu0 0
  %7426 = vmatpush2.bf16.msra.mxu0 0
  %7427 = vmatprep.subr.bf16.mxu0 0
  %7428 = vmatpush2.bf16.msra.mxu0 0
  %7429 = vmatprep.subr.bf16.mxu0 0
  %7430 = vmatpush2.bf16.msra.mxu0 0
  %7431 = vmatprep.mubr.bf16.mxu0 0
  %7432 = vmatmul.mubr.bf16.gmra.mxu0 %v7297
  %v7433 = vpop.f32.mrf.mxu0
  %v7434 = vadd.f32 0.0, %v7433
  %v7435 = vpop.f32.mrf.mxu0
  %v7436 = vadd.f32 0.0, %v7435
  %v7437 = vpop.f32.mrf.mxu0
  %v7438 = vpop.f32.mrf.mxu0
  %7439 = vdwg.mxu0
  %v7440 = vadd.f32 %v7268, %v7352
  %v7441 = vadd.f32 %v7269, %v7354
  %v7442 = vadd.f32 %v7270, %v7393
  %v7443 = vadd.f32 %v7271, %v7395
  %v7444 = vadd.f32 %v7272, %v7434
  %v7445 = vadd.f32 %v7273, %v7436
  %s7446 = scalar_lea.vmem %s4, 68
  %v7447 = vld [vmem:[%s7446] sm:$0xf]
  %7448 = vrot.lane.b32.xlu0 %v4544, 66
  %v7449 = vpop.permute.xlu0 %7448
  %7450 = vrot.lane.b32.xlu0 %v4545, 66
  %v7451 = vpop.permute.xlu0 %7450
  %7452 = vrot.lane.b32.xlu0 %v4546, 66
  %v7453 = vpop.permute.xlu0 %7452
  %7454 = vrot.lane.b32.xlu0 %v4547, 66
  %v7455 = vpop.permute.xlu0 %7454
  %7456 = vrot.lane.b32.xlu0 %v4548, 66
  %v7457 = vpop.permute.xlu0 %7456
  %7458 = vrot.lane.b32.xlu0 %v4549, 66
  %v7459 = vpop.permute.xlu0 %7458
  %7460 = vrot.lane.b32.xlu0 %v4550, 66
  %v7461 = vpop.permute.xlu0 %7460
  %v7462 = vsel %vm2989, %v7449, %v7451
  %v7463 = vsel %vm2989, %v7451, %v7453
  %v7464 = vsel %vm2989, %v7453, %v7455
  %v7465 = vsel %vm2989, %v7455, %v7457
  %v7466 = vsel %vm2989, %v7457, %v7459
  %v7467 = vsel %vm2989, %v7459, %v7461
  %v7469 = vsel %vm88, %v7447, 0
  %v7472 = vsel %vm92, %v7462, 0
  %v7475 = vsel %vm92, %v7463, 0
  %v7478 = vsel %vm92, %v7464, 0
  %v7481 = vsel %vm92, %v7465, 0
  %v7484 = vsel %vm92, %v7466, 0
  %v7487 = vsel %vm92, %v7467, 0
  %7489 = vmatprep.subr.bf16.mxu0 0
  %7490 = vmatpush1.bf16.msra.mxu0 0
  %7491 = vmatprep.subr.bf16.mxu0 0
  %7492 = vmatpush1.bf16.msra.mxu0 0
  %7493 = vmatprep.subr.bf16.mxu0 0
  %7494 = vmatpush1.bf16.msra.mxu0 0
  %7495 = vmatprep.subr.bf16.mxu0 0
  %7496 = vmatpush1.bf16.msra.mxu0 0
  %7497 = vmatprep.subr.bf16.mxu0 0
  %7498 = vmatpush1.bf16.msra.mxu0 0
  %7499 = vmatprep.subr.bf16.mxu0 0
  %7500 = vmatpush1.bf16.msra.mxu0 0
  %7501 = vmatprep.subr.bf16.mxu0 0
  %7502 = vmatpush1.bf16.msra.mxu0 0
  %7503 = vmatprep.subr.bf16.mxu0 %v7475
  %7504 = vmatpush1.bf16.msra.mxu0 %v7472
  %7505 = vmatprep.subr.bf16.mxu0 0
  %7506 = vmatpush2.bf16.msra.mxu0 0
  %7507 = vmatprep.subr.bf16.mxu0 0
  %7508 = vmatpush2.bf16.msra.mxu0 0
  %7509 = vmatprep.subr.bf16.mxu0 0
  %7510 = vmatpush2.bf16.msra.mxu0 0
  %7511 = vmatprep.subr.bf16.mxu0 0
  %7512 = vmatpush2.bf16.msra.mxu0 0
  %7513 = vmatprep.subr.bf16.mxu0 0
  %7514 = vmatpush2.bf16.msra.mxu0 0
  %7515 = vmatprep.subr.bf16.mxu0 0
  %7516 = vmatpush2.bf16.msra.mxu0 0
  %7517 = vmatprep.subr.bf16.mxu0 0
  %7518 = vmatpush2.bf16.msra.mxu0 0
  %7519 = vmatprep.subr.bf16.mxu0 0
  %7520 = vmatpush2.bf16.msra.mxu0 0
  %7521 = vmatprep.mubr.bf16.mxu0 0
  %7522 = vmatmul.mubr.bf16.gmra.mxu0 %v7469
  %v7523 = vpop.f32.mrf.mxu0
  %v7524 = vadd.f32 0.0, %v7523
  %v7525 = vpop.f32.mrf.mxu0
  %v7526 = vadd.f32 0.0, %v7525
  %v7527 = vpop.f32.mrf.mxu0
  %v7528 = vpop.f32.mrf.mxu0
  %7529 = vdwg.mxu0
  %7530 = vmatprep.subr.bf16.mxu0 0
  %7531 = vmatpush1.bf16.msra.mxu0 0
  %7532 = vmatprep.subr.bf16.mxu0 0
  %7533 = vmatpush1.bf16.msra.mxu0 0
  %7534 = vmatprep.subr.bf16.mxu0 0
  %7535 = vmatpush1.bf16.msra.mxu0 0
  %7536 = vmatprep.subr.bf16.mxu0 0
  %7537 = vmatpush1.bf16.msra.mxu0 0
  %7538 = vmatprep.subr.bf16.mxu0 0
  %7539 = vmatpush1.bf16.msra.mxu0 0
  %7540 = vmatprep.subr.bf16.mxu0 0
  %7541 = vmatpush1.bf16.msra.mxu0 0
  %7542 = vmatprep.subr.bf16.mxu0 0
  %7543 = vmatpush1.bf16.msra.mxu0 0
  %7544 = vmatprep.subr.bf16.mxu0 %v7481
  %7545 = vmatpush1.bf16.msra.mxu0 %v7478
  %7546 = vmatprep.subr.bf16.mxu0 0
  %7547 = vmatpush2.bf16.msra.mxu0 0
  %7548 = vmatprep.subr.bf16.mxu0 0
  %7549 = vmatpush2.bf16.msra.mxu0 0
  %7550 = vmatprep.subr.bf16.mxu0 0
  %7551 = vmatpush2.bf16.msra.mxu0 0
  %7552 = vmatprep.subr.bf16.mxu0 0
  %7553 = vmatpush2.bf16.msra.mxu0 0
  %7554 = vmatprep.subr.bf16.mxu0 0
  %7555 = vmatpush2.bf16.msra.mxu0 0
  %7556 = vmatprep.subr.bf16.mxu0 0
  %7557 = vmatpush2.bf16.msra.mxu0 0
  %7558 = vmatprep.subr.bf16.mxu0 0
  %7559 = vmatpush2.bf16.msra.mxu0 0
  %7560 = vmatprep.subr.bf16.mxu0 0
  %7561 = vmatpush2.bf16.msra.mxu0 0
  %7562 = vmatprep.mubr.bf16.mxu0 0
  %7563 = vmatmul.mubr.bf16.gmra.mxu0 %v7469
  %v7564 = vpop.f32.mrf.mxu0
  %v7565 = vadd.f32 0.0, %v7564
  %v7566 = vpop.f32.mrf.mxu0
  %v7567 = vadd.f32 0.0, %v7566
  %v7568 = vpop.f32.mrf.mxu0
  %v7569 = vpop.f32.mrf.mxu0
  %7570 = vdwg.mxu0
  %7571 = vmatprep.subr.bf16.mxu0 0
  %7572 = vmatpush1.bf16.msra.mxu0 0
  %7573 = vmatprep.subr.bf16.mxu0 0
  %7574 = vmatpush1.bf16.msra.mxu0 0
  %7575 = vmatprep.subr.bf16.mxu0 0
  %7576 = vmatpush1.bf16.msra.mxu0 0
  %7577 = vmatprep.subr.bf16.mxu0 0
  %7578 = vmatpush1.bf16.msra.mxu0 0
  %7579 = vmatprep.subr.bf16.mxu0 0
  %7580 = vmatpush1.bf16.msra.mxu0 0
  %7581 = vmatprep.subr.bf16.mxu0 0
  %7582 = vmatpush1.bf16.msra.mxu0 0
  %7583 = vmatprep.subr.bf16.mxu0 0
  %7584 = vmatpush1.bf16.msra.mxu0 0
  %7585 = vmatprep.subr.bf16.mxu0 %v7487
  %7586 = vmatpush1.bf16.msra.mxu0 %v7484
  %7587 = vmatprep.subr.bf16.mxu0 0
  %7588 = vmatpush2.bf16.msra.mxu0 0
  %7589 = vmatprep.subr.bf16.mxu0 0
  %7590 = vmatpush2.bf16.msra.mxu0 0
  %7591 = vmatprep.subr.bf16.mxu0 0
  %7592 = vmatpush2.bf16.msra.mxu0 0
  %7593 = vmatprep.subr.bf16.mxu0 0
  %7594 = vmatpush2.bf16.msra.mxu0 0
  %7595 = vmatprep.subr.bf16.mxu0 0
  %7596 = vmatpush2.bf16.msra.mxu0 0
  %7597 = vmatprep.subr.bf16.mxu0 0
  %7598 = vmatpush2.bf16.msra.mxu0 0
  %7599 = vmatprep.subr.bf16.mxu0 0
  %7600 = vmatpush2.bf16.msra.mxu0 0
  %7601 = vmatprep.subr.bf16.mxu0 0
  %7602 = vmatpush2.bf16.msra.mxu0 0
  %7603 = vmatprep.mubr.bf16.mxu0 0
  %7604 = vmatmul.mubr.bf16.gmra.mxu0 %v7469
  %v7605 = vpop.f32.mrf.mxu0
  %v7606 = vadd.f32 0.0, %v7605
  %v7607 = vpop.f32.mrf.mxu0
  %v7608 = vadd.f32 0.0, %v7607
  %v7609 = vpop.f32.mrf.mxu0
  %v7610 = vpop.f32.mrf.mxu0
  %7611 = vdwg.mxu0
  %v7612 = vadd.f32 %v7440, %v7524
  %v7613 = vadd.f32 %v7441, %v7526
  %v7614 = vadd.f32 %v7442, %v7565
  %v7615 = vadd.f32 %v7443, %v7567
  %v7616 = vadd.f32 %v7444, %v7606
  %v7617 = vadd.f32 %v7445, %v7608
  %s7618 = scalar_lea.vmem %s4, 72
  %v7619 = vld [vmem:[%s7618] sm:$0xf]
  %7620 = vrot.lane.b32.xlu0 %v4544, 65
  %v7621 = vpop.permute.xlu0 %7620
  %7622 = vrot.lane.b32.xlu0 %v4545, 65
  %v7623 = vpop.permute.xlu0 %7622
  %7624 = vrot.lane.b32.xlu0 %v4546, 65
  %v7625 = vpop.permute.xlu0 %7624
  %7626 = vrot.lane.b32.xlu0 %v4547, 65
  %v7627 = vpop.permute.xlu0 %7626
  %7628 = vrot.lane.b32.xlu0 %v4548, 65
  %v7629 = vpop.permute.xlu0 %7628
  %7630 = vrot.lane.b32.xlu0 %v4549, 65
  %v7631 = vpop.permute.xlu0 %7630
  %7632 = vrot.lane.b32.xlu0 %v4550, 65
  %v7633 = vpop.permute.xlu0 %7632
  %v7634 = vsel %vm3162, %v7621, %v7623
  %v7635 = vsel %vm3162, %v7623, %v7625
  %v7636 = vsel %vm3162, %v7625, %v7627
  %v7637 = vsel %vm3162, %v7627, %v7629
  %v7638 = vsel %vm3162, %v7629, %v7631
  %v7639 = vsel %vm3162, %v7631, %v7633
  %v7641 = vsel %vm88, %v7619, 0
  %v7644 = vsel %vm92, %v7634, 0
  %v7647 = vsel %vm92, %v7635, 0
  %v7650 = vsel %vm92, %v7636, 0
  %v7653 = vsel %vm92, %v7637, 0
  %v7656 = vsel %vm92, %v7638, 0
  %v7659 = vsel %vm92, %v7639, 0
  %7661 = vmatprep.subr.bf16.mxu0 0
  %7662 = vmatpush1.bf16.msra.mxu0 0
  %7663 = vmatprep.subr.bf16.mxu0 0
  %7664 = vmatpush1.bf16.msra.mxu0 0
  %7665 = vmatprep.subr.bf16.mxu0 0
  %7666 = vmatpush1.bf16.msra.mxu0 0
  %7667 = vmatprep.subr.bf16.mxu0 0
  %7668 = vmatpush1.bf16.msra.mxu0 0
  %7669 = vmatprep.subr.bf16.mxu0 0
  %7670 = vmatpush1.bf16.msra.mxu0 0
  %7671 = vmatprep.subr.bf16.mxu0 0
  %7672 = vmatpush1.bf16.msra.mxu0 0
  %7673 = vmatprep.subr.bf16.mxu0 0
  %7674 = vmatpush1.bf16.msra.mxu0 0
  %7675 = vmatprep.subr.bf16.mxu0 %v7647
  %7676 = vmatpush1.bf16.msra.mxu0 %v7644
  %7677 = vmatprep.subr.bf16.mxu0 0
  %7678 = vmatpush2.bf16.msra.mxu0 0
  %7679 = vmatprep.subr.bf16.mxu0 0
  %7680 = vmatpush2.bf16.msra.mxu0 0
  %7681 = vmatprep.subr.bf16.mxu0 0
  %7682 = vmatpush2.bf16.msra.mxu0 0
  %7683 = vmatprep.subr.bf16.mxu0 0
  %7684 = vmatpush2.bf16.msra.mxu0 0
  %7685 = vmatprep.subr.bf16.mxu0 0
  %7686 = vmatpush2.bf16.msra.mxu0 0
  %7687 = vmatprep.subr.bf16.mxu0 0
  %7688 = vmatpush2.bf16.msra.mxu0 0
  %7689 = vmatprep.subr.bf16.mxu0 0
  %7690 = vmatpush2.bf16.msra.mxu0 0
  %7691 = vmatprep.subr.bf16.mxu0 0
  %7692 = vmatpush2.bf16.msra.mxu0 0
  %7693 = vmatprep.mubr.bf16.mxu0 0
  %7694 = vmatmul.mubr.bf16.gmra.mxu0 %v7641
  %v7695 = vpop.f32.mrf.mxu0
  %v7696 = vadd.f32 0.0, %v7695
  %v7697 = vpop.f32.mrf.mxu0
  %v7698 = vadd.f32 0.0, %v7697
  %v7699 = vpop.f32.mrf.mxu0
  %v7700 = vpop.f32.mrf.mxu0
  %7701 = vdwg.mxu0
  %7702 = vmatprep.subr.bf16.mxu0 0
  %7703 = vmatpush1.bf16.msra.mxu0 0
  %7704 = vmatprep.subr.bf16.mxu0 0
  %7705 = vmatpush1.bf16.msra.mxu0 0
  %7706 = vmatprep.subr.bf16.mxu0 0
  %7707 = vmatpush1.bf16.msra.mxu0 0
  %7708 = vmatprep.subr.bf16.mxu0 0
  %7709 = vmatpush1.bf16.msra.mxu0 0
  %7710 = vmatprep.subr.bf16.mxu0 0
  %7711 = vmatpush1.bf16.msra.mxu0 0
  %7712 = vmatprep.subr.bf16.mxu0 0
  %7713 = vmatpush1.bf16.msra.mxu0 0
  %7714 = vmatprep.subr.bf16.mxu0 0
  %7715 = vmatpush1.bf16.msra.mxu0 0
  %7716 = vmatprep.subr.bf16.mxu0 %v7653
  %7717 = vmatpush1.bf16.msra.mxu0 %v7650
  %7718 = vmatprep.subr.bf16.mxu0 0
  %7719 = vmatpush2.bf16.msra.mxu0 0
  %7720 = vmatprep.subr.bf16.mxu0 0
  %7721 = vmatpush2.bf16.msra.mxu0 0
  %7722 = vmatprep.subr.bf16.mxu0 0
  %7723 = vmatpush2.bf16.msra.mxu0 0
  %7724 = vmatprep.subr.bf16.mxu0 0
  %7725 = vmatpush2.bf16.msra.mxu0 0
  %7726 = vmatprep.subr.bf16.mxu0 0
  %7727 = vmatpush2.bf16.msra.mxu0 0
  %7728 = vmatprep.subr.bf16.mxu0 0
  %7729 = vmatpush2.bf16.msra.mxu0 0
  %7730 = vmatprep.subr.bf16.mxu0 0
  %7731 = vmatpush2.bf16.msra.mxu0 0
  %7732 = vmatprep.subr.bf16.mxu0 0
  %7733 = vmatpush2.bf16.msra.mxu0 0
  %7734 = vmatprep.mubr.bf16.mxu0 0
  %7735 = vmatmul.mubr.bf16.gmra.mxu0 %v7641
  %v7736 = vpop.f32.mrf.mxu0
  %v7737 = vadd.f32 0.0, %v7736
  %v7738 = vpop.f32.mrf.mxu0
  %v7739 = vadd.f32 0.0, %v7738
  %v7740 = vpop.f32.mrf.mxu0
  %v7741 = vpop.f32.mrf.mxu0
  %7742 = vdwg.mxu0
  %7743 = vmatprep.subr.bf16.mxu0 0
  %7744 = vmatpush1.bf16.msra.mxu0 0
  %7745 = vmatprep.subr.bf16.mxu0 0
  %7746 = vmatpush1.bf16.msra.mxu0 0
  %7747 = vmatprep.subr.bf16.mxu0 0
  %7748 = vmatpush1.bf16.msra.mxu0 0
  %7749 = vmatprep.subr.bf16.mxu0 0
  %7750 = vmatpush1.bf16.msra.mxu0 0
  %7751 = vmatprep.subr.bf16.mxu0 0
  %7752 = vmatpush1.bf16.msra.mxu0 0
  %7753 = vmatprep.subr.bf16.mxu0 0
  %7754 = vmatpush1.bf16.msra.mxu0 0
  %7755 = vmatprep.subr.bf16.mxu0 0
  %7756 = vmatpush1.bf16.msra.mxu0 0
  %7757 = vmatprep.subr.bf16.mxu0 %v7659
  %7758 = vmatpush1.bf16.msra.mxu0 %v7656
  %7759 = vmatprep.subr.bf16.mxu0 0
  %7760 = vmatpush2.bf16.msra.mxu0 0
  %7761 = vmatprep.subr.bf16.mxu0 0
  %7762 = vmatpush2.bf16.msra.mxu0 0
  %7763 = vmatprep.subr.bf16.mxu0 0
  %7764 = vmatpush2.bf16.msra.mxu0 0
  %7765 = vmatprep.subr.bf16.mxu0 0
  %7766 = vmatpush2.bf16.msra.mxu0 0
  %7767 = vmatprep.subr.bf16.mxu0 0
  %7768 = vmatpush2.bf16.msra.mxu0 0
  %7769 = vmatprep.subr.bf16.mxu0 0
  %7770 = vmatpush2.bf16.msra.mxu0 0
  %7771 = vmatprep.subr.bf16.mxu0 0
  %7772 = vmatpush2.bf16.msra.mxu0 0
  %7773 = vmatprep.subr.bf16.mxu0 0
  %7774 = vmatpush2.bf16.msra.mxu0 0
  %7775 = vmatprep.mubr.bf16.mxu0 0
  %7776 = vmatmul.mubr.bf16.gmra.mxu0 %v7641
  %v7777 = vpop.f32.mrf.mxu0
  %v7778 = vadd.f32 0.0, %v7777
  %v7779 = vpop.f32.mrf.mxu0
  %v7780 = vadd.f32 0.0, %v7779
  %v7781 = vpop.f32.mrf.mxu0
  %v7782 = vpop.f32.mrf.mxu0
  %7783 = vdwg.mxu0
  %v7784 = vadd.f32 %v7612, %v7696
  %v7785 = vadd.f32 %v7613, %v7698
  %v7786 = vadd.f32 %v7614, %v7737
  %v7787 = vadd.f32 %v7615, %v7739
  %v7788 = vadd.f32 %v7616, %v7778
  %v7789 = vadd.f32 %v7617, %v7780
  %s7790 = scalar_lea.vmem %s4, 76
  %v7791 = vld [vmem:[%s7790] sm:$0xf]
  %7792 = vrot.lane.b32.xlu0 %v4544, 64
  %v7793 = vpop.permute.xlu0 %7792
  %7794 = vrot.lane.b32.xlu0 %v4545, 64
  %v7795 = vpop.permute.xlu0 %7794
  %7796 = vrot.lane.b32.xlu0 %v4546, 64
  %v7797 = vpop.permute.xlu0 %7796
  %7798 = vrot.lane.b32.xlu0 %v4547, 64
  %v7799 = vpop.permute.xlu0 %7798
  %7800 = vrot.lane.b32.xlu0 %v4548, 64
  %v7801 = vpop.permute.xlu0 %7800
  %7802 = vrot.lane.b32.xlu0 %v4549, 64
  %v7803 = vpop.permute.xlu0 %7802
  %7804 = vrot.lane.b32.xlu0 %v4550, 64
  %v7805 = vpop.permute.xlu0 %7804
  %v7806 = vsel %vm3335, %v7793, %v7795
  %v7807 = vsel %vm3335, %v7795, %v7797
  %v7808 = vsel %vm3335, %v7797, %v7799
  %v7809 = vsel %vm3335, %v7799, %v7801
  %v7810 = vsel %vm3335, %v7801, %v7803
  %v7811 = vsel %vm3335, %v7803, %v7805
  %v7813 = vsel %vm88, %v7791, 0
  %v7816 = vsel %vm92, %v7806, 0
  %v7819 = vsel %vm92, %v7807, 0
  %v7822 = vsel %vm92, %v7808, 0
  %v7825 = vsel %vm92, %v7809, 0
  %v7828 = vsel %vm92, %v7810, 0
  %v7831 = vsel %vm92, %v7811, 0
  %7833 = vmatprep.subr.bf16.mxu0 0
  %7834 = vmatpush1.bf16.msra.mxu0 0
  %7835 = vmatprep.subr.bf16.mxu0 0
  %7836 = vmatpush1.bf16.msra.mxu0 0
  %7837 = vmatprep.subr.bf16.mxu0 0
  %7838 = vmatpush1.bf16.msra.mxu0 0
  %7839 = vmatprep.subr.bf16.mxu0 0
  %7840 = vmatpush1.bf16.msra.mxu0 0
  %7841 = vmatprep.subr.bf16.mxu0 0
  %7842 = vmatpush1.bf16.msra.mxu0 0
  %7843 = vmatprep.subr.bf16.mxu0 0
  %7844 = vmatpush1.bf16.msra.mxu0 0
  %7845 = vmatprep.subr.bf16.mxu0 0
  %7846 = vmatpush1.bf16.msra.mxu0 0
  %7847 = vmatprep.subr.bf16.mxu0 %v7819
  %7848 = vmatpush1.bf16.msra.mxu0 %v7816
  %7849 = vmatprep.subr.bf16.mxu0 0
  %7850 = vmatpush2.bf16.msra.mxu0 0
  %7851 = vmatprep.subr.bf16.mxu0 0
  %7852 = vmatpush2.bf16.msra.mxu0 0
  %7853 = vmatprep.subr.bf16.mxu0 0
  %7854 = vmatpush2.bf16.msra.mxu0 0
  %7855 = vmatprep.subr.bf16.mxu0 0
  %7856 = vmatpush2.bf16.msra.mxu0 0
  %7857 = vmatprep.subr.bf16.mxu0 0
  %7858 = vmatpush2.bf16.msra.mxu0 0
  %7859 = vmatprep.subr.bf16.mxu0 0
  %7860 = vmatpush2.bf16.msra.mxu0 0
  %7861 = vmatprep.subr.bf16.mxu0 0
  %7862 = vmatpush2.bf16.msra.mxu0 0
  %7863 = vmatprep.subr.bf16.mxu0 0
  %7864 = vmatpush2.bf16.msra.mxu0 0
  %7865 = vmatprep.mubr.bf16.mxu0 0
  %7866 = vmatmul.mubr.bf16.gmra.mxu0 %v7813
  %v7867 = vpop.f32.mrf.mxu0
  %v7868 = vadd.f32 0.0, %v7867
  %v7869 = vpop.f32.mrf.mxu0
  %v7870 = vadd.f32 0.0, %v7869
  %v7871 = vpop.f32.mrf.mxu0
  %v7872 = vpop.f32.mrf.mxu0
  %7873 = vdwg.mxu0
  %7874 = vmatprep.subr.bf16.mxu0 0
  %7875 = vmatpush1.bf16.msra.mxu0 0
  %7876 = vmatprep.subr.bf16.mxu0 0
  %7877 = vmatpush1.bf16.msra.mxu0 0
  %7878 = vmatprep.subr.bf16.mxu0 0
  %7879 = vmatpush1.bf16.msra.mxu0 0
  %7880 = vmatprep.subr.bf16.mxu0 0
  %7881 = vmatpush1.bf16.msra.mxu0 0
  %7882 = vmatprep.subr.bf16.mxu0 0
  %7883 = vmatpush1.bf16.msra.mxu0 0
  %7884 = vmatprep.subr.bf16.mxu0 0
  %7885 = vmatpush1.bf16.msra.mxu0 0
  %7886 = vmatprep.subr.bf16.mxu0 0
  %7887 = vmatpush1.bf16.msra.mxu0 0
  %7888 = vmatprep.subr.bf16.mxu0 %v7825
  %7889 = vmatpush1.bf16.msra.mxu0 %v7822
  %7890 = vmatprep.subr.bf16.mxu0 0
  %7891 = vmatpush2.bf16.msra.mxu0 0
  %7892 = vmatprep.subr.bf16.mxu0 0
  %7893 = vmatpush2.bf16.msra.mxu0 0
  %7894 = vmatprep.subr.bf16.mxu0 0
  %7895 = vmatpush2.bf16.msra.mxu0 0
  %7896 = vmatprep.subr.bf16.mxu0 0
  %7897 = vmatpush2.bf16.msra.mxu0 0
  %7898 = vmatprep.subr.bf16.mxu0 0
  %7899 = vmatpush2.bf16.msra.mxu0 0
  %7900 = vmatprep.subr.bf16.mxu0 0
  %7901 = vmatpush2.bf16.msra.mxu0 0
  %7902 = vmatprep.subr.bf16.mxu0 0
  %7903 = vmatpush2.bf16.msra.mxu0 0
  %7904 = vmatprep.subr.bf16.mxu0 0
  %7905 = vmatpush2.bf16.msra.mxu0 0
  %7906 = vmatprep.mubr.bf16.mxu0 0
  %7907 = vmatmul.mubr.bf16.gmra.mxu0 %v7813
  %v7908 = vpop.f32.mrf.mxu0
  %v7909 = vadd.f32 0.0, %v7908
  %v7910 = vpop.f32.mrf.mxu0
  %v7911 = vadd.f32 0.0, %v7910
  %v7912 = vpop.f32.mrf.mxu0
  %v7913 = vpop.f32.mrf.mxu0
  %7914 = vdwg.mxu0
  %7915 = vmatprep.subr.bf16.mxu0 0
  %7916 = vmatpush1.bf16.msra.mxu0 0
  %7917 = vmatprep.subr.bf16.mxu0 0
  %7918 = vmatpush1.bf16.msra.mxu0 0
  %7919 = vmatprep.subr.bf16.mxu0 0
  %7920 = vmatpush1.bf16.msra.mxu0 0
  %7921 = vmatprep.subr.bf16.mxu0 0
  %7922 = vmatpush1.bf16.msra.mxu0 0
  %7923 = vmatprep.subr.bf16.mxu0 0
  %7924 = vmatpush1.bf16.msra.mxu0 0
  %7925 = vmatprep.subr.bf16.mxu0 0
  %7926 = vmatpush1.bf16.msra.mxu0 0
  %7927 = vmatprep.subr.bf16.mxu0 0
  %7928 = vmatpush1.bf16.msra.mxu0 0
  %7929 = vmatprep.subr.bf16.mxu0 %v7831
  %7930 = vmatpush1.bf16.msra.mxu0 %v7828
  %7931 = vmatprep.subr.bf16.mxu0 0
  %7932 = vmatpush2.bf16.msra.mxu0 0
  %7933 = vmatprep.subr.bf16.mxu0 0
  %7934 = vmatpush2.bf16.msra.mxu0 0
  %7935 = vmatprep.subr.bf16.mxu0 0
  %7936 = vmatpush2.bf16.msra.mxu0 0
  %7937 = vmatprep.subr.bf16.mxu0 0
  %7938 = vmatpush2.bf16.msra.mxu0 0
  %7939 = vmatprep.subr.bf16.mxu0 0
  %7940 = vmatpush2.bf16.msra.mxu0 0
  %7941 = vmatprep.subr.bf16.mxu0 0
  %7942 = vmatpush2.bf16.msra.mxu0 0
  %7943 = vmatprep.subr.bf16.mxu0 0
  %7944 = vmatpush2.bf16.msra.mxu0 0
  %7945 = vmatprep.subr.bf16.mxu0 0
  %7946 = vmatpush2.bf16.msra.mxu0 0
  %7947 = vmatprep.mubr.bf16.mxu0 0
  %7948 = vmatmul.mubr.bf16.gmra.mxu0 %v7813
  %v7949 = vpop.f32.mrf.mxu0
  %v7950 = vadd.f32 0.0, %v7949
  %v7951 = vpop.f32.mrf.mxu0
  %v7952 = vadd.f32 0.0, %v7951
  %v7953 = vpop.f32.mrf.mxu0
  %v7954 = vpop.f32.mrf.mxu0
  %7955 = vdwg.mxu0
  %v7956 = vadd.f32 %v7784, %v7868
  %v7957 = vadd.f32 %v7785, %v7870
  %v7958 = vadd.f32 %v7786, %v7909
  %v7959 = vadd.f32 %v7787, %v7911
  %v7960 = vadd.f32 %v7788, %v7950
  %v7961 = vadd.f32 %v7789, %v7952
  %s7962 = scalar_lea.vmem %s4, 80
  %v7963 = vld [vmem:[%s7962] sm:$0xf]
  %7964 = vrot.lane.b32.xlu0 %v4544, 48
  %v7965 = vpop.permute.xlu0 %7964
  %7966 = vrot.lane.b32.xlu0 %v4545, 48
  %v7967 = vpop.permute.xlu0 %7966
  %7968 = vrot.lane.b32.xlu0 %v4546, 48
  %v7969 = vpop.permute.xlu0 %7968
  %7970 = vrot.lane.b32.xlu0 %v4547, 48
  %v7971 = vpop.permute.xlu0 %7970
  %7972 = vrot.lane.b32.xlu0 %v4548, 48
  %v7973 = vpop.permute.xlu0 %7972
  %7974 = vrot.lane.b32.xlu0 %v4549, 48
  %v7975 = vpop.permute.xlu0 %7974
  %7976 = vrot.lane.b32.xlu0 %v4550, 48
  %v7977 = vpop.permute.xlu0 %7976
  %v7978 = vsel %vm3508, %v7965, %v7967
  %v7979 = vsel %vm3508, %v7967, %v7969
  %v7980 = vsel %vm3508, %v7969, %v7971
  %v7981 = vsel %vm3508, %v7971, %v7973
  %v7982 = vsel %vm3508, %v7973, %v7975
  %v7983 = vsel %vm3508, %v7975, %v7977
  %v7985 = vsel %vm88, %v7963, 0
  %v7988 = vsel %vm92, %v7978, 0
  %v7991 = vsel %vm92, %v7979, 0
  %v7994 = vsel %vm92, %v7980, 0
  %v7997 = vsel %vm92, %v7981, 0
  %v8000 = vsel %vm92, %v7982, 0
  %v8003 = vsel %vm92, %v7983, 0
  %8005 = vmatprep.subr.bf16.mxu0 0
  %8006 = vmatpush1.bf16.msra.mxu0 0
  %8007 = vmatprep.subr.bf16.mxu0 0
  %8008 = vmatpush1.bf16.msra.mxu0 0
  %8009 = vmatprep.subr.bf16.mxu0 0
  %8010 = vmatpush1.bf16.msra.mxu0 0
  %8011 = vmatprep.subr.bf16.mxu0 0
  %8012 = vmatpush1.bf16.msra.mxu0 0
  %8013 = vmatprep.subr.bf16.mxu0 0
  %8014 = vmatpush1.bf16.msra.mxu0 0
  %8015 = vmatprep.subr.bf16.mxu0 0
  %8016 = vmatpush1.bf16.msra.mxu0 0
  %8017 = vmatprep.subr.bf16.mxu0 0
  %8018 = vmatpush1.bf16.msra.mxu0 0
  %8019 = vmatprep.subr.bf16.mxu0 %v7991
  %8020 = vmatpush1.bf16.msra.mxu0 %v7988
  %8021 = vmatprep.subr.bf16.mxu0 0
  %8022 = vmatpush2.bf16.msra.mxu0 0
  %8023 = vmatprep.subr.bf16.mxu0 0
  %8024 = vmatpush2.bf16.msra.mxu0 0
  %8025 = vmatprep.subr.bf16.mxu0 0
  %8026 = vmatpush2.bf16.msra.mxu0 0
  %8027 = vmatprep.subr.bf16.mxu0 0
  %8028 = vmatpush2.bf16.msra.mxu0 0
  %8029 = vmatprep.subr.bf16.mxu0 0
  %8030 = vmatpush2.bf16.msra.mxu0 0
  %8031 = vmatprep.subr.bf16.mxu0 0
  %8032 = vmatpush2.bf16.msra.mxu0 0
  %8033 = vmatprep.subr.bf16.mxu0 0
  %8034 = vmatpush2.bf16.msra.mxu0 0
  %8035 = vmatprep.subr.bf16.mxu0 0
  %8036 = vmatpush2.bf16.msra.mxu0 0
  %8037 = vmatprep.mubr.bf16.mxu0 0
  %8038 = vmatmul.mubr.bf16.gmra.mxu0 %v7985
  %v8039 = vpop.f32.mrf.mxu0
  %v8040 = vadd.f32 0.0, %v8039
  %v8041 = vpop.f32.mrf.mxu0
  %v8042 = vadd.f32 0.0, %v8041
  %v8043 = vpop.f32.mrf.mxu0
  %v8044 = vpop.f32.mrf.mxu0
  %8045 = vdwg.mxu0
  %8046 = vmatprep.subr.bf16.mxu0 0
  %8047 = vmatpush1.bf16.msra.mxu0 0
  %8048 = vmatprep.subr.bf16.mxu0 0
  %8049 = vmatpush1.bf16.msra.mxu0 0
  %8050 = vmatprep.subr.bf16.mxu0 0
  %8051 = vmatpush1.bf16.msra.mxu0 0
  %8052 = vmatprep.subr.bf16.mxu0 0
  %8053 = vmatpush1.bf16.msra.mxu0 0
  %8054 = vmatprep.subr.bf16.mxu0 0
  %8055 = vmatpush1.bf16.msra.mxu0 0
  %8056 = vmatprep.subr.bf16.mxu0 0
  %8057 = vmatpush1.bf16.msra.mxu0 0
  %8058 = vmatprep.subr.bf16.mxu0 0
  %8059 = vmatpush1.bf16.msra.mxu0 0
  %8060 = vmatprep.subr.bf16.mxu0 %v7997
  %8061 = vmatpush1.bf16.msra.mxu0 %v7994
  %8062 = vmatprep.subr.bf16.mxu0 0
  %8063 = vmatpush2.bf16.msra.mxu0 0
  %8064 = vmatprep.subr.bf16.mxu0 0
  %8065 = vmatpush2.bf16.msra.mxu0 0
  %8066 = vmatprep.subr.bf16.mxu0 0
  %8067 = vmatpush2.bf16.msra.mxu0 0
  %8068 = vmatprep.subr.bf16.mxu0 0
  %8069 = vmatpush2.bf16.msra.mxu0 0
  %8070 = vmatprep.subr.bf16.mxu0 0
  %8071 = vmatpush2.bf16.msra.mxu0 0
  %8072 = vmatprep.subr.bf16.mxu0 0
  %8073 = vmatpush2.bf16.msra.mxu0 0
  %8074 = vmatprep.subr.bf16.mxu0 0
  %8075 = vmatpush2.bf16.msra.mxu0 0
  %8076 = vmatprep.subr.bf16.mxu0 0
  %8077 = vmatpush2.bf16.msra.mxu0 0
  %8078 = vmatprep.mubr.bf16.mxu0 0
  %8079 = vmatmul.mubr.bf16.gmra.mxu0 %v7985
  %v8080 = vpop.f32.mrf.mxu0
  %v8081 = vadd.f32 0.0, %v8080
  %v8082 = vpop.f32.mrf.mxu0
  %v8083 = vadd.f32 0.0, %v8082
  %v8084 = vpop.f32.mrf.mxu0
  %v8085 = vpop.f32.mrf.mxu0
  %8086 = vdwg.mxu0
  %8087 = vmatprep.subr.bf16.mxu0 0
  %8088 = vmatpush1.bf16.msra.mxu0 0
  %8089 = vmatprep.subr.bf16.mxu0 0
  %8090 = vmatpush1.bf16.msra.mxu0 0
  %8091 = vmatprep.subr.bf16.mxu0 0
  %8092 = vmatpush1.bf16.msra.mxu0 0
  %8093 = vmatprep.subr.bf16.mxu0 0
  %8094 = vmatpush1.bf16.msra.mxu0 0
  %8095 = vmatprep.subr.bf16.mxu0 0
  %8096 = vmatpush1.bf16.msra.mxu0 0
  %8097 = vmatprep.subr.bf16.mxu0 0
  %8098 = vmatpush1.bf16.msra.mxu0 0
  %8099 = vmatprep.subr.bf16.mxu0 0
  %8100 = vmatpush1.bf16.msra.mxu0 0
  %8101 = vmatprep.subr.bf16.mxu0 %v8003
  %8102 = vmatpush1.bf16.msra.mxu0 %v8000
  %8103 = vmatprep.subr.bf16.mxu0 0
  %8104 = vmatpush2.bf16.msra.mxu0 0
  %8105 = vmatprep.subr.bf16.mxu0 0
  %8106 = vmatpush2.bf16.msra.mxu0 0
  %8107 = vmatprep.subr.bf16.mxu0 0
  %8108 = vmatpush2.bf16.msra.mxu0 0
  %8109 = vmatprep.subr.bf16.mxu0 0
  %8110 = vmatpush2.bf16.msra.mxu0 0
  %8111 = vmatprep.subr.bf16.mxu0 0
  %8112 = vmatpush2.bf16.msra.mxu0 0
  %8113 = vmatprep.subr.bf16.mxu0 0
  %8114 = vmatpush2.bf16.msra.mxu0 0
  %8115 = vmatprep.subr.bf16.mxu0 0
  %8116 = vmatpush2.bf16.msra.mxu0 0
  %8117 = vmatprep.subr.bf16.mxu0 0
  %8118 = vmatpush2.bf16.msra.mxu0 0
  %8119 = vmatprep.mubr.bf16.mxu0 0
  %8120 = vmatmul.mubr.bf16.gmra.mxu0 %v7985
  %v8121 = vpop.f32.mrf.mxu0
  %v8122 = vadd.f32 0.0, %v8121
  %v8123 = vpop.f32.mrf.mxu0
  %v8124 = vadd.f32 0.0, %v8123
  %v8125 = vpop.f32.mrf.mxu0
  %v8126 = vpop.f32.mrf.mxu0
  %8127 = vdwg.mxu0
  %v8128 = vadd.f32 %v7956, %v8040
  %v8129 = vadd.f32 %v7957, %v8042
  %v8130 = vadd.f32 %v7958, %v8081
  %v8131 = vadd.f32 %v7959, %v8083
  %v8132 = vadd.f32 %v7960, %v8122
  %v8133 = vadd.f32 %v7961, %v8124
  %s8134 = scalar_lea.vmem %s4, 84
  %v8135 = vld [vmem:[%s8134] sm:$0xf]
  %8136 = vrot.lane.b32.xlu0 %v4544, 47
  %v8137 = vpop.permute.xlu0 %8136
  %8138 = vrot.lane.b32.xlu0 %v4545, 47
  %v8139 = vpop.permute.xlu0 %8138
  %8140 = vrot.lane.b32.xlu0 %v4546, 47
  %v8141 = vpop.permute.xlu0 %8140
  %8142 = vrot.lane.b32.xlu0 %v4547, 47
  %v8143 = vpop.permute.xlu0 %8142
  %8144 = vrot.lane.b32.xlu0 %v4548, 47
  %v8145 = vpop.permute.xlu0 %8144
  %8146 = vrot.lane.b32.xlu0 %v4549, 47
  %v8147 = vpop.permute.xlu0 %8146
  %8148 = vrot.lane.b32.xlu0 %v4550, 47
  %v8149 = vpop.permute.xlu0 %8148
  %v8150 = vsel %vm3681, %v8137, %v8139
  %v8151 = vsel %vm3681, %v8139, %v8141
  %v8152 = vsel %vm3681, %v8141, %v8143
  %v8153 = vsel %vm3681, %v8143, %v8145
  %v8154 = vsel %vm3681, %v8145, %v8147
  %v8155 = vsel %vm3681, %v8147, %v8149
  %v8157 = vsel %vm88, %v8135, 0
  %v8160 = vsel %vm92, %v8150, 0
  %v8163 = vsel %vm92, %v8151, 0
  %v8166 = vsel %vm92, %v8152, 0
  %v8169 = vsel %vm92, %v8153, 0
  %v8172 = vsel %vm92, %v8154, 0
  %v8175 = vsel %vm92, %v8155, 0
  %8177 = vmatprep.subr.bf16.mxu0 0
  %8178 = vmatpush1.bf16.msra.mxu0 0
  %8179 = vmatprep.subr.bf16.mxu0 0
  %8180 = vmatpush1.bf16.msra.mxu0 0
  %8181 = vmatprep.subr.bf16.mxu0 0
  %8182 = vmatpush1.bf16.msra.mxu0 0
  %8183 = vmatprep.subr.bf16.mxu0 0
  %8184 = vmatpush1.bf16.msra.mxu0 0
  %8185 = vmatprep.subr.bf16.mxu0 0
  %8186 = vmatpush1.bf16.msra.mxu0 0
  %8187 = vmatprep.subr.bf16.mxu0 0
  %8188 = vmatpush1.bf16.msra.mxu0 0
  %8189 = vmatprep.subr.bf16.mxu0 0
  %8190 = vmatpush1.bf16.msra.mxu0 0
  %8191 = vmatprep.subr.bf16.mxu0 %v8163
  %8192 = vmatpush1.bf16.msra.mxu0 %v8160
  %8193 = vmatprep.subr.bf16.mxu0 0
  %8194 = vmatpush2.bf16.msra.mxu0 0
  %8195 = vmatprep.subr.bf16.mxu0 0
  %8196 = vmatpush2.bf16.msra.mxu0 0
  %8197 = vmatprep.subr.bf16.mxu0 0
  %8198 = vmatpush2.bf16.msra.mxu0 0
  %8199 = vmatprep.subr.bf16.mxu0 0
  %8200 = vmatpush2.bf16.msra.mxu0 0
  %8201 = vmatprep.subr.bf16.mxu0 0
  %8202 = vmatpush2.bf16.msra.mxu0 0
  %8203 = vmatprep.subr.bf16.mxu0 0
  %8204 = vmatpush2.bf16.msra.mxu0 0
  %8205 = vmatprep.subr.bf16.mxu0 0
  %8206 = vmatpush2.bf16.msra.mxu0 0
  %8207 = vmatprep.subr.bf16.mxu0 0
  %8208 = vmatpush2.bf16.msra.mxu0 0
  %8209 = vmatprep.mubr.bf16.mxu0 0
  %8210 = vmatmul.mubr.bf16.gmra.mxu0 %v8157
  %v8211 = vpop.f32.mrf.mxu0
  %v8212 = vadd.f32 0.0, %v8211
  %v8213 = vpop.f32.mrf.mxu0
  %v8214 = vadd.f32 0.0, %v8213
  %v8215 = vpop.f32.mrf.mxu0
  %v8216 = vpop.f32.mrf.mxu0
  %8217 = vdwg.mxu0
  %8218 = vmatprep.subr.bf16.mxu0 0
  %8219 = vmatpush1.bf16.msra.mxu0 0
  %8220 = vmatprep.subr.bf16.mxu0 0
  %8221 = vmatpush1.bf16.msra.mxu0 0
  %8222 = vmatprep.subr.bf16.mxu0 0
  %8223 = vmatpush1.bf16.msra.mxu0 0
  %8224 = vmatprep.subr.bf16.mxu0 0
  %8225 = vmatpush1.bf16.msra.mxu0 0
  %8226 = vmatprep.subr.bf16.mxu0 0
  %8227 = vmatpush1.bf16.msra.mxu0 0
  %8228 = vmatprep.subr.bf16.mxu0 0
  %8229 = vmatpush1.bf16.msra.mxu0 0
  %8230 = vmatprep.subr.bf16.mxu0 0
  %8231 = vmatpush1.bf16.msra.mxu0 0
  %8232 = vmatprep.subr.bf16.mxu0 %v8169
  %8233 = vmatpush1.bf16.msra.mxu0 %v8166
  %8234 = vmatprep.subr.bf16.mxu0 0
  %8235 = vmatpush2.bf16.msra.mxu0 0
  %8236 = vmatprep.subr.bf16.mxu0 0
  %8237 = vmatpush2.bf16.msra.mxu0 0
  %8238 = vmatprep.subr.bf16.mxu0 0
  %8239 = vmatpush2.bf16.msra.mxu0 0
  %8240 = vmatprep.subr.bf16.mxu0 0
  %8241 = vmatpush2.bf16.msra.mxu0 0
  %8242 = vmatprep.subr.bf16.mxu0 0
  %8243 = vmatpush2.bf16.msra.mxu0 0
  %8244 = vmatprep.subr.bf16.mxu0 0
  %8245 = vmatpush2.bf16.msra.mxu0 0
  %8246 = vmatprep.subr.bf16.mxu0 0
  %8247 = vmatpush2.bf16.msra.mxu0 0
  %8248 = vmatprep.subr.bf16.mxu0 0
  %8249 = vmatpush2.bf16.msra.mxu0 0
  %8250 = vmatprep.mubr.bf16.mxu0 0
  %8251 = vmatmul.mubr.bf16.gmra.mxu0 %v8157
  %v8252 = vpop.f32.mrf.mxu0
  %v8253 = vadd.f32 0.0, %v8252
  %v8254 = vpop.f32.mrf.mxu0
  %v8255 = vadd.f32 0.0, %v8254
  %v8256 = vpop.f32.mrf.mxu0
  %v8257 = vpop.f32.mrf.mxu0
  %8258 = vdwg.mxu0
  %8259 = vmatprep.subr.bf16.mxu0 0
  %8260 = vmatpush1.bf16.msra.mxu0 0
  %8261 = vmatprep.subr.bf16.mxu0 0
  %8262 = vmatpush1.bf16.msra.mxu0 0
  %8263 = vmatprep.subr.bf16.mxu0 0
  %8264 = vmatpush1.bf16.msra.mxu0 0
  %8265 = vmatprep.subr.bf16.mxu0 0
  %8266 = vmatpush1.bf16.msra.mxu0 0
  %8267 = vmatprep.subr.bf16.mxu0 0
  %8268 = vmatpush1.bf16.msra.mxu0 0
  %8269 = vmatprep.subr.bf16.mxu0 0
  %8270 = vmatpush1.bf16.msra.mxu0 0
  %8271 = vmatprep.subr.bf16.mxu0 0
  %8272 = vmatpush1.bf16.msra.mxu0 0
  %8273 = vmatprep.subr.bf16.mxu0 %v8175
  %8274 = vmatpush1.bf16.msra.mxu0 %v8172
  %8275 = vmatprep.subr.bf16.mxu0 0
  %8276 = vmatpush2.bf16.msra.mxu0 0
  %8277 = vmatprep.subr.bf16.mxu0 0
  %8278 = vmatpush2.bf16.msra.mxu0 0
  %8279 = vmatprep.subr.bf16.mxu0 0
  %8280 = vmatpush2.bf16.msra.mxu0 0
  %8281 = vmatprep.subr.bf16.mxu0 0
  %8282 = vmatpush2.bf16.msra.mxu0 0
  %8283 = vmatprep.subr.bf16.mxu0 0
  %8284 = vmatpush2.bf16.msra.mxu0 0
  %8285 = vmatprep.subr.bf16.mxu0 0
  %8286 = vmatpush2.bf16.msra.mxu0 0
  %8287 = vmatprep.subr.bf16.mxu0 0
  %8288 = vmatpush2.bf16.msra.mxu0 0
  %8289 = vmatprep.subr.bf16.mxu0 0
  %8290 = vmatpush2.bf16.msra.mxu0 0
  %8291 = vmatprep.mubr.bf16.mxu0 0
  %8292 = vmatmul.mubr.bf16.gmra.mxu0 %v8157
  %v8293 = vpop.f32.mrf.mxu0
  %v8294 = vadd.f32 0.0, %v8293
  %v8295 = vpop.f32.mrf.mxu0
  %v8296 = vadd.f32 0.0, %v8295
  %v8297 = vpop.f32.mrf.mxu0
  %v8298 = vpop.f32.mrf.mxu0
  %8299 = vdwg.mxu0
  %v8300 = vadd.f32 %v8128, %v8212
  %v8301 = vadd.f32 %v8129, %v8214
  %v8302 = vadd.f32 %v8130, %v8253
  %v8303 = vadd.f32 %v8131, %v8255
  %v8304 = vadd.f32 %v8132, %v8294
  %v8305 = vadd.f32 %v8133, %v8296
  %s8306 = scalar_lea.vmem %s4, 88
  %v8307 = vld [vmem:[%s8306] sm:$0xf]
  %8308 = vrot.lane.b32.xlu0 %v4544, 46
  %v8309 = vpop.permute.xlu0 %8308
  %8310 = vrot.lane.b32.xlu0 %v4545, 46
  %v8311 = vpop.permute.xlu0 %8310
  %8312 = vrot.lane.b32.xlu0 %v4546, 46
  %v8313 = vpop.permute.xlu0 %8312
  %8314 = vrot.lane.b32.xlu0 %v4547, 46
  %v8315 = vpop.permute.xlu0 %8314
  %8316 = vrot.lane.b32.xlu0 %v4548, 46
  %v8317 = vpop.permute.xlu0 %8316
  %8318 = vrot.lane.b32.xlu0 %v4549, 46
  %v8319 = vpop.permute.xlu0 %8318
  %8320 = vrot.lane.b32.xlu0 %v4550, 46
  %v8321 = vpop.permute.xlu0 %8320
  %v8322 = vsel %vm3854, %v8309, %v8311
  %v8323 = vsel %vm3854, %v8311, %v8313
  %v8324 = vsel %vm3854, %v8313, %v8315
  %v8325 = vsel %vm3854, %v8315, %v8317
  %v8326 = vsel %vm3854, %v8317, %v8319
  %v8327 = vsel %vm3854, %v8319, %v8321
  %v8329 = vsel %vm88, %v8307, 0
  %v8332 = vsel %vm92, %v8322, 0
  %v8335 = vsel %vm92, %v8323, 0
  %v8338 = vsel %vm92, %v8324, 0
  %v8341 = vsel %vm92, %v8325, 0
  %v8344 = vsel %vm92, %v8326, 0
  %v8347 = vsel %vm92, %v8327, 0
  %8349 = vmatprep.subr.bf16.mxu0 0
  %8350 = vmatpush1.bf16.msra.mxu0 0
  %8351 = vmatprep.subr.bf16.mxu0 0
  %8352 = vmatpush1.bf16.msra.mxu0 0
  %8353 = vmatprep.subr.bf16.mxu0 0
  %8354 = vmatpush1.bf16.msra.mxu0 0
  %8355 = vmatprep.subr.bf16.mxu0 0
  %8356 = vmatpush1.bf16.msra.mxu0 0
  %8357 = vmatprep.subr.bf16.mxu0 0
  %8358 = vmatpush1.bf16.msra.mxu0 0
  %8359 = vmatprep.subr.bf16.mxu0 0
  %8360 = vmatpush1.bf16.msra.mxu0 0
  %8361 = vmatprep.subr.bf16.mxu0 0
  %8362 = vmatpush1.bf16.msra.mxu0 0
  %8363 = vmatprep.subr.bf16.mxu0 %v8335
  %8364 = vmatpush1.bf16.msra.mxu0 %v8332
  %8365 = vmatprep.subr.bf16.mxu0 0
  %8366 = vmatpush2.bf16.msra.mxu0 0
  %8367 = vmatprep.subr.bf16.mxu0 0
  %8368 = vmatpush2.bf16.msra.mxu0 0
  %8369 = vmatprep.subr.bf16.mxu0 0
  %8370 = vmatpush2.bf16.msra.mxu0 0
  %8371 = vmatprep.subr.bf16.mxu0 0
  %8372 = vmatpush2.bf16.msra.mxu0 0
  %8373 = vmatprep.subr.bf16.mxu0 0
  %8374 = vmatpush2.bf16.msra.mxu0 0
  %8375 = vmatprep.subr.bf16.mxu0 0
  %8376 = vmatpush2.bf16.msra.mxu0 0
  %8377 = vmatprep.subr.bf16.mxu0 0
  %8378 = vmatpush2.bf16.msra.mxu0 0
  %8379 = vmatprep.subr.bf16.mxu0 0
  %8380 = vmatpush2.bf16.msra.mxu0 0
  %8381 = vmatprep.mubr.bf16.mxu0 0
  %8382 = vmatmul.mubr.bf16.gmra.mxu0 %v8329
  %v8383 = vpop.f32.mrf.mxu0
  %v8384 = vadd.f32 0.0, %v8383
  %v8385 = vpop.f32.mrf.mxu0
  %v8386 = vadd.f32 0.0, %v8385
  %v8387 = vpop.f32.mrf.mxu0
  %v8388 = vpop.f32.mrf.mxu0
  %8389 = vdwg.mxu0
  %8390 = vmatprep.subr.bf16.mxu0 0
  %8391 = vmatpush1.bf16.msra.mxu0 0
  %8392 = vmatprep.subr.bf16.mxu0 0
  %8393 = vmatpush1.bf16.msra.mxu0 0
  %8394 = vmatprep.subr.bf16.mxu0 0
  %8395 = vmatpush1.bf16.msra.mxu0 0
  %8396 = vmatprep.subr.bf16.mxu0 0
  %8397 = vmatpush1.bf16.msra.mxu0 0
  %8398 = vmatprep.subr.bf16.mxu0 0
  %8399 = vmatpush1.bf16.msra.mxu0 0
  %8400 = vmatprep.subr.bf16.mxu0 0
  %8401 = vmatpush1.bf16.msra.mxu0 0
  %8402 = vmatprep.subr.bf16.mxu0 0
  %8403 = vmatpush1.bf16.msra.mxu0 0
  %8404 = vmatprep.subr.bf16.mxu0 %v8341
  %8405 = vmatpush1.bf16.msra.mxu0 %v8338
  %8406 = vmatprep.subr.bf16.mxu0 0
  %8407 = vmatpush2.bf16.msra.mxu0 0
  %8408 = vmatprep.subr.bf16.mxu0 0
  %8409 = vmatpush2.bf16.msra.mxu0 0
  %8410 = vmatprep.subr.bf16.mxu0 0
  %8411 = vmatpush2.bf16.msra.mxu0 0
  %8412 = vmatprep.subr.bf16.mxu0 0
  %8413 = vmatpush2.bf16.msra.mxu0 0
  %8414 = vmatprep.subr.bf16.mxu0 0
  %8415 = vmatpush2.bf16.msra.mxu0 0
  %8416 = vmatprep.subr.bf16.mxu0 0
  %8417 = vmatpush2.bf16.msra.mxu0 0
  %8418 = vmatprep.subr.bf16.mxu0 0
  %8419 = vmatpush2.bf16.msra.mxu0 0
  %8420 = vmatprep.subr.bf16.mxu0 0
  %8421 = vmatpush2.bf16.msra.mxu0 0
  %8422 = vmatprep.mubr.bf16.mxu0 0
  %8423 = vmatmul.mubr.bf16.gmra.mxu0 %v8329
  %v8424 = vpop.f32.mrf.mxu0
  %v8425 = vadd.f32 0.0, %v8424
  %v8426 = vpop.f32.mrf.mxu0
  %v8427 = vadd.f32 0.0, %v8426
  %v8428 = vpop.f32.mrf.mxu0
  %v8429 = vpop.f32.mrf.mxu0
  %8430 = vdwg.mxu0
  %8431 = vmatprep.subr.bf16.mxu0 0
  %8432 = vmatpush1.bf16.msra.mxu0 0
  %8433 = vmatprep.subr.bf16.mxu0 0
  %8434 = vmatpush1.bf16.msra.mxu0 0
  %8435 = vmatprep.subr.bf16.mxu0 0
  %8436 = vmatpush1.bf16.msra.mxu0 0
  %8437 = vmatprep.subr.bf16.mxu0 0
  %8438 = vmatpush1.bf16.msra.mxu0 0
  %8439 = vmatprep.subr.bf16.mxu0 0
  %8440 = vmatpush1.bf16.msra.mxu0 0
  %8441 = vmatprep.subr.bf16.mxu0 0
  %8442 = vmatpush1.bf16.msra.mxu0 0
  %8443 = vmatprep.subr.bf16.mxu0 0
  %8444 = vmatpush1.bf16.msra.mxu0 0
  %8445 = vmatprep.subr.bf16.mxu0 %v8347
  %8446 = vmatpush1.bf16.msra.mxu0 %v8344
  %8447 = vmatprep.subr.bf16.mxu0 0
  %8448 = vmatpush2.bf16.msra.mxu0 0
  %8449 = vmatprep.subr.bf16.mxu0 0
  %8450 = vmatpush2.bf16.msra.mxu0 0
  %8451 = vmatprep.subr.bf16.mxu0 0
  %8452 = vmatpush2.bf16.msra.mxu0 0
  %8453 = vmatprep.subr.bf16.mxu0 0
  %8454 = vmatpush2.bf16.msra.mxu0 0
  %8455 = vmatprep.subr.bf16.mxu0 0
  %8456 = vmatpush2.bf16.msra.mxu0 0
  %8457 = vmatprep.subr.bf16.mxu0 0
  %8458 = vmatpush2.bf16.msra.mxu0 0
  %8459 = vmatprep.subr.bf16.mxu0 0
  %8460 = vmatpush2.bf16.msra.mxu0 0
  %8461 = vmatprep.subr.bf16.mxu0 0
  %8462 = vmatpush2.bf16.msra.mxu0 0
  %8463 = vmatprep.mubr.bf16.mxu0 0
  %8464 = vmatmul.mubr.bf16.gmra.mxu0 %v8329
  %v8465 = vpop.f32.mrf.mxu0
  %v8466 = vadd.f32 0.0, %v8465
  %v8467 = vpop.f32.mrf.mxu0
  %v8468 = vadd.f32 0.0, %v8467
  %v8469 = vpop.f32.mrf.mxu0
  %v8470 = vpop.f32.mrf.mxu0
  %8471 = vdwg.mxu0
  %v8472 = vadd.f32 %v8300, %v8384
  %v8473 = vadd.f32 %v8301, %v8386
  %v8474 = vadd.f32 %v8302, %v8425
  %v8475 = vadd.f32 %v8303, %v8427
  %v8476 = vadd.f32 %v8304, %v8466
  %v8477 = vadd.f32 %v8305, %v8468
  %s8478 = scalar_lea.vmem %s4, 92
  %v8479 = vld [vmem:[%s8478] sm:$0xf]
  %8480 = vrot.lane.b32.xlu0 %v4544, 45
  %v8481 = vpop.permute.xlu0 %8480
  %8482 = vrot.lane.b32.xlu0 %v4545, 45
  %v8483 = vpop.permute.xlu0 %8482
  %8484 = vrot.lane.b32.xlu0 %v4546, 45
  %v8485 = vpop.permute.xlu0 %8484
  %8486 = vrot.lane.b32.xlu0 %v4547, 45
  %v8487 = vpop.permute.xlu0 %8486
  %8488 = vrot.lane.b32.xlu0 %v4548, 45
  %v8489 = vpop.permute.xlu0 %8488
  %8490 = vrot.lane.b32.xlu0 %v4549, 45
  %v8491 = vpop.permute.xlu0 %8490
  %8492 = vrot.lane.b32.xlu0 %v4550, 45
  %v8493 = vpop.permute.xlu0 %8492
  %v8494 = vsel %vm4027, %v8481, %v8483
  %v8495 = vsel %vm4027, %v8483, %v8485
  %v8496 = vsel %vm4027, %v8485, %v8487
  %v8497 = vsel %vm4027, %v8487, %v8489
  %v8498 = vsel %vm4027, %v8489, %v8491
  %v8499 = vsel %vm4027, %v8491, %v8493
  %v8501 = vsel %vm88, %v8479, 0
  %v8504 = vsel %vm92, %v8494, 0
  %v8507 = vsel %vm92, %v8495, 0
  %v8510 = vsel %vm92, %v8496, 0
  %v8513 = vsel %vm92, %v8497, 0
  %v8516 = vsel %vm92, %v8498, 0
  %v8519 = vsel %vm92, %v8499, 0
  %8521 = vmatprep.subr.bf16.mxu0 0
  %8522 = vmatpush1.bf16.msra.mxu0 0
  %8523 = vmatprep.subr.bf16.mxu0 0
  %8524 = vmatpush1.bf16.msra.mxu0 0
  %8525 = vmatprep.subr.bf16.mxu0 0
  %8526 = vmatpush1.bf16.msra.mxu0 0
  %8527 = vmatprep.subr.bf16.mxu0 0
  %8528 = vmatpush1.bf16.msra.mxu0 0
  %8529 = vmatprep.subr.bf16.mxu0 0
  %8530 = vmatpush1.bf16.msra.mxu0 0
  %8531 = vmatprep.subr.bf16.mxu0 0
  %8532 = vmatpush1.bf16.msra.mxu0 0
  %8533 = vmatprep.subr.bf16.mxu0 0
  %8534 = vmatpush1.bf16.msra.mxu0 0
  %8535 = vmatprep.subr.bf16.mxu0 %v8507
  %8536 = vmatpush1.bf16.msra.mxu0 %v8504
  %8537 = vmatprep.subr.bf16.mxu0 0
  %8538 = vmatpush2.bf16.msra.mxu0 0
  %8539 = vmatprep.subr.bf16.mxu0 0
  %8540 = vmatpush2.bf16.msra.mxu0 0
  %8541 = vmatprep.subr.bf16.mxu0 0
  %8542 = vmatpush2.bf16.msra.mxu0 0
  %8543 = vmatprep.subr.bf16.mxu0 0
  %8544 = vmatpush2.bf16.msra.mxu0 0
  %8545 = vmatprep.subr.bf16.mxu0 0
  %8546 = vmatpush2.bf16.msra.mxu0 0
  %8547 = vmatprep.subr.bf16.mxu0 0
  %8548 = vmatpush2.bf16.msra.mxu0 0
  %8549 = vmatprep.subr.bf16.mxu0 0
  %8550 = vmatpush2.bf16.msra.mxu0 0
  %8551 = vmatprep.subr.bf16.mxu0 0
  %8552 = vmatpush2.bf16.msra.mxu0 0
  %8553 = vmatprep.mubr.bf16.mxu0 0
  %8554 = vmatmul.mubr.bf16.gmra.mxu0 %v8501
  %v8555 = vpop.f32.mrf.mxu0
  %v8556 = vadd.f32 0.0, %v8555
  %v8557 = vpop.f32.mrf.mxu0
  %v8558 = vadd.f32 0.0, %v8557
  %v8559 = vpop.f32.mrf.mxu0
  %v8560 = vpop.f32.mrf.mxu0
  %8561 = vdwg.mxu0
  %8562 = vmatprep.subr.bf16.mxu0 0
  %8563 = vmatpush1.bf16.msra.mxu0 0
  %8564 = vmatprep.subr.bf16.mxu0 0
  %8565 = vmatpush1.bf16.msra.mxu0 0
  %8566 = vmatprep.subr.bf16.mxu0 0
  %8567 = vmatpush1.bf16.msra.mxu0 0
  %8568 = vmatprep.subr.bf16.mxu0 0
  %8569 = vmatpush1.bf16.msra.mxu0 0
  %8570 = vmatprep.subr.bf16.mxu0 0
  %8571 = vmatpush1.bf16.msra.mxu0 0
  %8572 = vmatprep.subr.bf16.mxu0 0
  %8573 = vmatpush1.bf16.msra.mxu0 0
  %8574 = vmatprep.subr.bf16.mxu0 0
  %8575 = vmatpush1.bf16.msra.mxu0 0
  %8576 = vmatprep.subr.bf16.mxu0 %v8513
  %8577 = vmatpush1.bf16.msra.mxu0 %v8510
  %8578 = vmatprep.subr.bf16.mxu0 0
  %8579 = vmatpush2.bf16.msra.mxu0 0
  %8580 = vmatprep.subr.bf16.mxu0 0
  %8581 = vmatpush2.bf16.msra.mxu0 0
  %8582 = vmatprep.subr.bf16.mxu0 0
  %8583 = vmatpush2.bf16.msra.mxu0 0
  %8584 = vmatprep.subr.bf16.mxu0 0
  %8585 = vmatpush2.bf16.msra.mxu0 0
  %8586 = vmatprep.subr.bf16.mxu0 0
  %8587 = vmatpush2.bf16.msra.mxu0 0
  %8588 = vmatprep.subr.bf16.mxu0 0
  %8589 = vmatpush2.bf16.msra.mxu0 0
  %8590 = vmatprep.subr.bf16.mxu0 0
  %8591 = vmatpush2.bf16.msra.mxu0 0
  %8592 = vmatprep.subr.bf16.mxu0 0
  %8593 = vmatpush2.bf16.msra.mxu0 0
  %8594 = vmatprep.mubr.bf16.mxu0 0
  %8595 = vmatmul.mubr.bf16.gmra.mxu0 %v8501
  %v8596 = vpop.f32.mrf.mxu0
  %v8597 = vadd.f32 0.0, %v8596
  %v8598 = vpop.f32.mrf.mxu0
  %v8599 = vadd.f32 0.0, %v8598
  %v8600 = vpop.f32.mrf.mxu0
  %v8601 = vpop.f32.mrf.mxu0
  %8602 = vdwg.mxu0
  %8603 = vmatprep.subr.bf16.mxu0 0
  %8604 = vmatpush1.bf16.msra.mxu0 0
  %8605 = vmatprep.subr.bf16.mxu0 0
  %8606 = vmatpush1.bf16.msra.mxu0 0
  %8607 = vmatprep.subr.bf16.mxu0 0
  %8608 = vmatpush1.bf16.msra.mxu0 0
  %8609 = vmatprep.subr.bf16.mxu0 0
  %8610 = vmatpush1.bf16.msra.mxu0 0
  %8611 = vmatprep.subr.bf16.mxu0 0
  %8612 = vmatpush1.bf16.msra.mxu0 0
  %8613 = vmatprep.subr.bf16.mxu0 0
  %8614 = vmatpush1.bf16.msra.mxu0 0
  %8615 = vmatprep.subr.bf16.mxu0 0
  %8616 = vmatpush1.bf16.msra.mxu0 0
  %8617 = vmatprep.subr.bf16.mxu0 %v8519
  %8618 = vmatpush1.bf16.msra.mxu0 %v8516
  %8619 = vmatprep.subr.bf16.mxu0 0
  %8620 = vmatpush2.bf16.msra.mxu0 0
  %8621 = vmatprep.subr.bf16.mxu0 0
  %8622 = vmatpush2.bf16.msra.mxu0 0
  %8623 = vmatprep.subr.bf16.mxu0 0
  %8624 = vmatpush2.bf16.msra.mxu0 0
  %8625 = vmatprep.subr.bf16.mxu0 0
  %8626 = vmatpush2.bf16.msra.mxu0 0
  %8627 = vmatprep.subr.bf16.mxu0 0
  %8628 = vmatpush2.bf16.msra.mxu0 0
  %8629 = vmatprep.subr.bf16.mxu0 0
  %8630 = vmatpush2.bf16.msra.mxu0 0
  %8631 = vmatprep.subr.bf16.mxu0 0
  %8632 = vmatpush2.bf16.msra.mxu0 0
  %8633 = vmatprep.subr.bf16.mxu0 0
  %8634 = vmatpush2.bf16.msra.mxu0 0
  %8635 = vmatprep.mubr.bf16.mxu0 0
  %8636 = vmatmul.mubr.bf16.gmra.mxu0 %v8501
  %v8637 = vpop.f32.mrf.mxu0
  %v8638 = vadd.f32 0.0, %v8637
  %v8639 = vpop.f32.mrf.mxu0
  %v8640 = vadd.f32 0.0, %v8639
  %v8641 = vpop.f32.mrf.mxu0
  %v8642 = vpop.f32.mrf.mxu0
  %8643 = vdwg.mxu0
  %v8644 = vadd.f32 %v8472, %v8556
  %v8645 = vadd.f32 %v8473, %v8558
  %v8646 = vadd.f32 %v8474, %v8597
  %v8647 = vadd.f32 %v8475, %v8599
  %v8648 = vadd.f32 %v8476, %v8638
  %v8649 = vadd.f32 %v8477, %v8640
  %s8650 = scalar_lea.vmem %s4, 96
  %v8651 = vld [vmem:[%s8650] sm:$0xf]
  %8652 = vrot.lane.b32.xlu0 %v4544, 44
  %v8653 = vpop.permute.xlu0 %8652
  %8654 = vrot.lane.b32.xlu0 %v4545, 44
  %v8655 = vpop.permute.xlu0 %8654
  %8656 = vrot.lane.b32.xlu0 %v4546, 44
  %v8657 = vpop.permute.xlu0 %8656
  %8658 = vrot.lane.b32.xlu0 %v4547, 44
  %v8659 = vpop.permute.xlu0 %8658
  %8660 = vrot.lane.b32.xlu0 %v4548, 44
  %v8661 = vpop.permute.xlu0 %8660
  %8662 = vrot.lane.b32.xlu0 %v4549, 44
  %v8663 = vpop.permute.xlu0 %8662
  %8664 = vrot.lane.b32.xlu0 %v4550, 44
  %v8665 = vpop.permute.xlu0 %8664
  %v8666 = vsel %vm4200, %v8653, %v8655
  %v8667 = vsel %vm4200, %v8655, %v8657
  %v8668 = vsel %vm4200, %v8657, %v8659
  %v8669 = vsel %vm4200, %v8659, %v8661
  %v8670 = vsel %vm4200, %v8661, %v8663
  %v8671 = vsel %vm4200, %v8663, %v8665
  %v8673 = vsel %vm88, %v8651, 0
  %v8676 = vsel %vm92, %v8666, 0
  %v8679 = vsel %vm92, %v8667, 0
  %v8682 = vsel %vm92, %v8668, 0
  %v8685 = vsel %vm92, %v8669, 0
  %v8688 = vsel %vm92, %v8670, 0
  %v8691 = vsel %vm92, %v8671, 0
  %8693 = vmatprep.subr.bf16.mxu0 0
  %8694 = vmatpush1.bf16.msra.mxu0 0
  %8695 = vmatprep.subr.bf16.mxu0 0
  %8696 = vmatpush1.bf16.msra.mxu0 0
  %8697 = vmatprep.subr.bf16.mxu0 0
  %8698 = vmatpush1.bf16.msra.mxu0 0
  %8699 = vmatprep.subr.bf16.mxu0 0
  %8700 = vmatpush1.bf16.msra.mxu0 0
  %8701 = vmatprep.subr.bf16.mxu0 0
  %8702 = vmatpush1.bf16.msra.mxu0 0
  %8703 = vmatprep.subr.bf16.mxu0 0
  %8704 = vmatpush1.bf16.msra.mxu0 0
  %8705 = vmatprep.subr.bf16.mxu0 0
  %8706 = vmatpush1.bf16.msra.mxu0 0
  %8707 = vmatprep.subr.bf16.mxu0 %v8679
  %8708 = vmatpush1.bf16.msra.mxu0 %v8676
  %8709 = vmatprep.subr.bf16.mxu0 0
  %8710 = vmatpush2.bf16.msra.mxu0 0
  %8711 = vmatprep.subr.bf16.mxu0 0
  %8712 = vmatpush2.bf16.msra.mxu0 0
  %8713 = vmatprep.subr.bf16.mxu0 0
  %8714 = vmatpush2.bf16.msra.mxu0 0
  %8715 = vmatprep.subr.bf16.mxu0 0
  %8716 = vmatpush2.bf16.msra.mxu0 0
  %8717 = vmatprep.subr.bf16.mxu0 0
  %8718 = vmatpush2.bf16.msra.mxu0 0
  %8719 = vmatprep.subr.bf16.mxu0 0
  %8720 = vmatpush2.bf16.msra.mxu0 0
  %8721 = vmatprep.subr.bf16.mxu0 0
  %8722 = vmatpush2.bf16.msra.mxu0 0
  %8723 = vmatprep.subr.bf16.mxu0 0
  %8724 = vmatpush2.bf16.msra.mxu0 0
  %8725 = vmatprep.mubr.bf16.mxu0 0
  %8726 = vmatmul.mubr.bf16.gmra.mxu0 %v8673
  %v8727 = vpop.f32.mrf.mxu0
  %v8728 = vadd.f32 0.0, %v8727
  %v8729 = vpop.f32.mrf.mxu0
  %v8730 = vadd.f32 0.0, %v8729
  %v8731 = vpop.f32.mrf.mxu0
  %v8732 = vpop.f32.mrf.mxu0
  %8733 = vdwg.mxu0
  %8734 = vmatprep.subr.bf16.mxu0 0
  %8735 = vmatpush1.bf16.msra.mxu0 0
  %8736 = vmatprep.subr.bf16.mxu0 0
  %8737 = vmatpush1.bf16.msra.mxu0 0
  %8738 = vmatprep.subr.bf16.mxu0 0
  %8739 = vmatpush1.bf16.msra.mxu0 0
  %8740 = vmatprep.subr.bf16.mxu0 0
  %8741 = vmatpush1.bf16.msra.mxu0 0
  %8742 = vmatprep.subr.bf16.mxu0 0
  %8743 = vmatpush1.bf16.msra.mxu0 0
  %8744 = vmatprep.subr.bf16.mxu0 0
  %8745 = vmatpush1.bf16.msra.mxu0 0
  %8746 = vmatprep.subr.bf16.mxu0 0
  %8747 = vmatpush1.bf16.msra.mxu0 0
  %8748 = vmatprep.subr.bf16.mxu0 %v8685
  %8749 = vmatpush1.bf16.msra.mxu0 %v8682
  %8750 = vmatprep.subr.bf16.mxu0 0
  %8751 = vmatpush2.bf16.msra.mxu0 0
  %8752 = vmatprep.subr.bf16.mxu0 0
  %8753 = vmatpush2.bf16.msra.mxu0 0
  %8754 = vmatprep.subr.bf16.mxu0 0
  %8755 = vmatpush2.bf16.msra.mxu0 0
  %8756 = vmatprep.subr.bf16.mxu0 0
  %8757 = vmatpush2.bf16.msra.mxu0 0
  %8758 = vmatprep.subr.bf16.mxu0 0
  %8759 = vmatpush2.bf16.msra.mxu0 0
  %8760 = vmatprep.subr.bf16.mxu0 0
  %8761 = vmatpush2.bf16.msra.mxu0 0
  %8762 = vmatprep.subr.bf16.mxu0 0
  %8763 = vmatpush2.bf16.msra.mxu0 0
  %8764 = vmatprep.subr.bf16.mxu0 0
  %8765 = vmatpush2.bf16.msra.mxu0 0
  %8766 = vmatprep.mubr.bf16.mxu0 0
  %8767 = vmatmul.mubr.bf16.gmra.mxu0 %v8673
  %v8768 = vpop.f32.mrf.mxu0
  %v8769 = vadd.f32 0.0, %v8768
  %v8770 = vpop.f32.mrf.mxu0
  %v8771 = vadd.f32 0.0, %v8770
  %v8772 = vpop.f32.mrf.mxu0
  %v8773 = vpop.f32.mrf.mxu0
  %8774 = vdwg.mxu0
  %8775 = vmatprep.subr.bf16.mxu0 0
  %8776 = vmatpush1.bf16.msra.mxu0 0
  %8777 = vmatprep.subr.bf16.mxu0 0
  %8778 = vmatpush1.bf16.msra.mxu0 0
  %8779 = vmatprep.subr.bf16.mxu0 0
  %8780 = vmatpush1.bf16.msra.mxu0 0
  %8781 = vmatprep.subr.bf16.mxu0 0
  %8782 = vmatpush1.bf16.msra.mxu0 0
  %8783 = vmatprep.subr.bf16.mxu0 0
  %8784 = vmatpush1.bf16.msra.mxu0 0
  %8785 = vmatprep.subr.bf16.mxu0 0
  %8786 = vmatpush1.bf16.msra.mxu0 0
  %8787 = vmatprep.subr.bf16.mxu0 0
  %8788 = vmatpush1.bf16.msra.mxu0 0
  %8789 = vmatprep.subr.bf16.mxu0 %v8691
  %8790 = vmatpush1.bf16.msra.mxu0 %v8688
  %8791 = vmatprep.subr.bf16.mxu0 0
  %8792 = vmatpush2.bf16.msra.mxu0 0
  %8793 = vmatprep.subr.bf16.mxu0 0
  %8794 = vmatpush2.bf16.msra.mxu0 0
  %8795 = vmatprep.subr.bf16.mxu0 0
  %8796 = vmatpush2.bf16.msra.mxu0 0
  %8797 = vmatprep.subr.bf16.mxu0 0
  %8798 = vmatpush2.bf16.msra.mxu0 0
  %8799 = vmatprep.subr.bf16.mxu0 0
  %8800 = vmatpush2.bf16.msra.mxu0 0
  %8801 = vmatprep.subr.bf16.mxu0 0
  %8802 = vmatpush2.bf16.msra.mxu0 0
  %8803 = vmatprep.subr.bf16.mxu0 0
  %8804 = vmatpush2.bf16.msra.mxu0 0
  %8805 = vmatprep.subr.bf16.mxu0 0
  %8806 = vmatpush2.bf16.msra.mxu0 0
  %8807 = vmatprep.mubr.bf16.mxu0 0
  %8808 = vmatmul.mubr.bf16.gmra.mxu0 %v8673
  %v8809 = vpop.f32.mrf.mxu0
  %v8810 = vadd.f32 0.0, %v8809
  %v8811 = vpop.f32.mrf.mxu0
  %v8812 = vadd.f32 0.0, %v8811
  %v8813 = vpop.f32.mrf.mxu0
  %v8814 = vpop.f32.mrf.mxu0
  %8815 = vdwg.mxu0
  %v8816 = vadd.f32 %v8644, %v8728
  %v8817 = vadd.f32 %v8645, %v8730
  %v8818 = vadd.f32 %v8646, %v8769
  %v8819 = vadd.f32 %v8647, %v8771
  %v8820 = vadd.f32 %v8648, %v8810
  %v8821 = vadd.f32 %v8649, %v8812
  %vm8822 = vcmp.gt.f32.partialorder %v8816, 0.0
  %vm8823 = vcmp.gt.f32.partialorder %v8817, 0.0
  %vm8824 = vcmp.gt.f32.partialorder %v8818, 0.0
  %vm8825 = vcmp.gt.f32.partialorder %v8819, 0.0
  %vm8826 = vcmp.gt.f32.partialorder %v8820, 0.0
  %vm8827 = vcmp.gt.f32.partialorder %v8821, 0.0
  %v8828 = vmul.f32 %v8816, 0.01
  %v8829 = vmul.f32 %v8817, 0.01
  %v8830 = vmul.f32 %v8818, 0.01
  %v8831 = vmul.f32 %v8819, 0.01
  %v8832 = vmul.f32 %v8820, 0.01
  %v8833 = vmul.f32 %v8821, 0.01
  %v8834 = vsel %vm8822, %v8816, %v8828
  %v8835 = vsel %vm8823, %v8817, %v8829
  %v8836 = vsel %vm8824, %v8818, %v8830
  %v8837 = vsel %vm8825, %v8819, %v8831
  %v8838 = vsel %vm8826, %v8820, %v8832
  %v8839 = vsel %vm8827, %v8821, %v8833
  %v8840 = vmul.f32 %v8834, %v4379
  %v8841 = vmul.f32 %v8835, %v4383
  %v8842 = vmul.f32 %v8836, %v4387
  %v8843 = vmul.f32 %v8837, %v4391
  %v8844 = vmul.f32 %v8838, %v4395
  %v8845 = vmul.f32 %v8839, %v4399
  %v8846 = vadd.f32 %v8840, %v8841
  %v8847 = vadd.f32 %v8846, %v8842
  %v8848 = vadd.f32 %v8847, %v8843
  %v8849 = vadd.f32 %v8848, %v8844
  %v8850 = vadd.f32 %v8849, %v8845
  %8851 = vadd.xlane.f32.xlu0 %v8850
  %v8852 = vpop.xlane.xlu0 %8851
  %v8853 = vmul.f32 %v8840, %v8834
  %v8854 = vmul.f32 %v8841, %v8835
  %v8855 = vmul.f32 %v8842, %v8836
  %v8856 = vmul.f32 %v8843, %v8837
  %v8857 = vmul.f32 %v8844, %v8838
  %v8858 = vmul.f32 %v8845, %v8839
  %v8859 = vadd.f32 %v8853, %v8854
  %v8860 = vadd.f32 %v8859, %v8855
  %v8861 = vadd.f32 %v8860, %v8856
  %v8862 = vadd.f32 %v8861, %v8857
  %v8863 = vadd.f32 %v8862, %v8858
  %8864 = vadd.xlane.f32.xlu0 %v8863
  %v8865 = vpop.xlane.xlu0 %8864
  %v8866 = vmul.f32 %v8852, 0.001953125
  %v8867 = vmul.f32 %v8865, 0.001953125
  %v8868 = vmul.f32 %v8866, %v8866
  %v8869 = vsub.f32 %v8867, %v8868
  %v8870 = vmax.f32 %v8869, 0.0
  %v8871 = vsub.f32 %v8834, %v8866
  %v8872 = vsub.f32 %v8835, %v8866
  %v8873 = vsub.f32 %v8836, %v8866
  %v8874 = vsub.f32 %v8837, %v8866
  %v8875 = vsub.f32 %v8838, %v8866
  %v8876 = vsub.f32 %v8839, %v8866
  %v8877 = vadd.f32 %v8870, 1e-05
  %v8878 = vrsqrt.pop %v8877
  %v8879 = vmul.f32 %v8871, %v8878
  %v8880 = vmul.f32 %v8872, %v8878
  %v8881 = vmul.f32 %v8873, %v8878
  %v8882 = vmul.f32 %v8874, %v8878
  %v8883 = vmul.f32 %v8875, %v8878
  %v8884 = vmul.f32 %v8876, %v8878
  %v8885 = vld [vmem:[%s5] sm:$0xff]
  %8887 = vset.pattern.permute.xlu0 0
  %8888 = vperm.xlu0 %8887, %v8885
  %v8889 = vpop.permute.xlu0 %8888
  %v8891 = vmul.f32 %v8879, %v8889
  %v8892 = vmul.f32 %v8880, %v8889
  %v8893 = vmul.f32 %v8881, %v8889
  %v8894 = vmul.f32 %v8882, %v8889
  %v8895 = vmul.f32 %v8883, %v8889
  %v8896 = vmul.f32 %v8884, %v8889
  %v8897 = vld [vmem:[%s6] sm:$0xff]
  %8899 = vset.pattern.permute.xlu0 0
  %8900 = vperm.xlu0 %8899, %v8897
  %v8901 = vpop.permute.xlu0 %8900
  %v8903 = vadd.f32 %v8891, %v8901
  %v8904 = vadd.f32 %v8892, %v8901
  %v8905 = vadd.f32 %v8893, %v8901
  %v8906 = vadd.f32 %v8894, %v8901
  %v8907 = vadd.f32 %v8895, %v8901
  %v8908 = vadd.f32 %v8896, %v8901
  %8909 = vst [vmem:[%s8] sm:$0xff] %v8903
  %8910 = vst [vmem:[%s8 + $0x8] sm:$0xff] %v8904
  %8911 = vst [vmem:[%s8 + $0x10] sm:$0xff] %v8905
  %8912 = vst [vmem:[%s8 + $0x18] sm:$0xff] %v8906
  %8913 = vst [vmem:[%s8 + $0x20] sm:$0xff] %v8907
  %8914 = vst [vmem:[%s8 + $0x28] sm:$0xff] %v8908
  // Predicated region
  $region34: #{up_forward.1} parent=0 // pred_check
    _
  $region35: #{up_forward.1} parent=0 // pred_check_branch
    %8916 = sbr.rel (0) target = $region37
  $region36: #{up_forward.1} parent=0 // pred_region
    _
  $region37: #{up_forward.1} parent=0 // pred_fallthru
    _
  // Predicated region
  $region38: #{up_forward.1} parent=0 // pred_check
    _
  $region39: #{up_forward.1} parent=0 // pred_check_branch
    %8918 = sbr.rel (0) target = $region41
  $region40: #{up_forward.1} parent=0 // pred_region
    _
  $region41: #{up_forward.1} parent=0 // pred_fallthru
    _

</llo_original>
